<compile_context>
chip_gen: v7x
topology: tpu7x:2x2x1
jax: 0.10.0
libtpu: 0.0.40
codegen_flags: <defaults>
</compile_context>

<pallas_src>
import functools

import jax
import jax.numpy as jnp
from jax.experimental import pallas as pl
from jax.experimental.pallas import tpu as pltpu

_SENT_SQ = 100.0     # squared sentinel; reference masks *distances* to 10.0
_JW_THRESH = 0.15    # bone-weight threshold from the reference
_LANES = 128         # lane-dense fused output width
_BIG = 3.0e38        # init value for running mins (finite, < f32 max)


# -----------------------------------------------------------------------------
# generation-aware knobs
# -----------------------------------------------------------------------------
def _vmem_limit_bytes():
    """~82% of physical VMEM, capped at 104 MiB (v7x: ~52 MiB, v5e/v6e: 104 MiB)."""
    cap = 64 * 1024 * 1024
    try:
        info = pltpu.get_tpu_info()
        cap = int(getattr(info, "vmem_capacity_bytes", cap))
    except Exception:
        pass
    return int(min(cap * 0.82, 104 * 1024 * 1024))


def _num_tensorcores():
    """Best-effort TensorCore count; conservative default 2 (keeps grid >= 2)."""
    try:
        info = pltpu.get_tpu_info()
        for attr in ("num_cores", "tensor_cores", "core_count", "num_tensorcores"):
            v = getattr(info, attr, None)
            if isinstance(v, int) and v > 0:
                return v
    except Exception:
        pass
    try:
        v = getattr(jax.devices()[0], "num_cores", None)
        if isinstance(v, int) and v > 0:
            return v
    except Exception:
        pass
    return 2


def _pick_tb(B, N, min_steps):
    """Batch elements per grid step: amortize the ~0.35 us/step overhead at
    small/moderate N, while keeping >= min_steps grid steps (megacore)."""
    if N > 512 or B < 2:
        return 1
    for cand in (8, 4, 2):
        if B % cand == 0 and (B // cand) >= min_steps:
            return cand
    return 1


def _pick_cb(N):
    """Column-block width for the fused tiled pass over the distance matrix."""
    if N <= 256:
        return N
    for cand in (512, 256, 128):
        if N % cand == 0:
            return cand
    return N   # ragged N: fall back to a single un-tiled block


# -----------------------------------------------------------------------------
# Pallas kernel: chamfer + per-joint masked chamfer + coord SSE, fused output
# -----------------------------------------------------------------------------
def _loss_kernel(gen_ref, tgt_ref, jw_ref, seg_ref, cp_ref, ct_ref, out_ref,
                 *, tb, n_joints, n_points, col_block, use_mxu):
    lane = jax.lax.broadcasted_iota(jnp.int32, (1, _LANES), 1)   # hoisted once
    n_blocks = n_points // col_block

    for t in range(tb):                      # static unrolled loop over batch block
        g = gen_ref[t]                       # (N, K)  generated points (K = 3 or 8)
        tt = tgt_ref[t]                      # (K, N)  target points, transposed
        jwt = jw_ref[t]                      # (N, J)  raw bone weights
        segt = seg_ref[t]                    # (1, N)  segmentation labels (int32)

        if use_mxu:
            gn = jnp.sum(g * g, axis=1, keepdims=True)           # (N, 1)
            tn = jnp.sum(tt * tt, axis=0, keepdims=True)         # (1, N)

        # per-joint row masks (generated-point side), hoisted out of the block loop
        rms = [jwt[:, j:j + 1] > _JW_THRESH for j in range(n_joints)]   # (N, 1) bool

        # running accumulators
        big = jnp.full((n_points, 1), _BIG, jnp.float32)
        row_min_glob = big                                        # (N, 1)
        row_min_joint = [big for _ in range(n_joints)]            # J x (N, 1)
        cham_col = jnp.zeros((1, 1), jnp.float32)
        joint_col = [jnp.zeros((1, 1), jnp.float32) for _ in range(n_joints)]

        # ---- single fused pass over the distance matrix, (N, CB) blocks ---------
        for blk in range(n_blocks):
            c0 = blk * col_block
            c1 = c0 + col_block

            if use_mxu:
                cross = jnp.dot(g, tt[:, c0:c1],
                                preferred_element_type=jnp.float32)       # MXU (N, CB)
                d2 = jnp.maximum(gn + tn[:, c0:c1] - 2.0 * cross, 0.0)
            else:
                dx = g[:, 0:1] - tt[0:1, c0:c1]
                dy = g[:, 1:2] - tt[1:2, c0:c1]
                dz = g[:, 2:3] - tt[2:3, c0:c1]
                d2 = dx * dx + dy * dy + dz * dz                          # (N, CB)

            seg_blk = segt[:, c0:c1]                                      # (1, CB)

            # global chamfer: row-min accumulated, col-min complete per block
            row_min_glob = jnp.minimum(row_min_glob,
                                       jnp.min(d2, axis=1, keepdims=True))
            col_min = jnp.min(d2, axis=0, keepdims=True)                  # (1, CB)
            cham_col = cham_col + jnp.sum(jnp.sqrt(col_min), keepdims=True)

            # per-joint masked chamfer, mask-after-reduce (no (N,CB) masked temps)
            for j in range(n_joints):
                cm = seg_blk == j                                         # (1, CB)
                # row direction: column (target) mask inside the reduce
                mrow = jnp.min(jnp.where(cm, d2, _SENT_SQ),
                               axis=1, keepdims=True)                     # (N, 1)
                row_min_joint[j] = jnp.minimum(row_min_joint[j], mrow)
                # col direction: row (generated) mask inside the reduce
                mcol = jnp.min(jnp.where(rms[j], d2, _SENT_SQ),
                               axis=0, keepdims=True)                     # (1, CB)
                keep = jnp.logical_and(cm, mcol != _SENT_SQ)
                joint_col[j] = joint_col[j] + jnp.sum(
                    jnp.where(keep, jnp.sqrt(mcol), 0.0), keepdims=True)

        # ---- epilogue: sqrt / gate the accumulated row mins ---------------------
        cham = cham_col + jnp.sum(jnp.sqrt(row_min_glob), keepdims=True)  # (1, 1)

        joint_sums = []
        for j in range(n_joints):
            keep = jnp.logical_and(rms[j], row_min_joint[j] != _SENT_SQ)
            jrow = jnp.sum(jnp.where(keep, jnp.sqrt(row_min_joint[j]), 0.0),
                           keepdims=True)
            joint_sums.append(jrow + joint_col[j])                        # (1, 1)

        # ---- coordinate sum of squared errors -----------------------------------
        dc = cp_ref[t] - ct_ref[t]                                        # (C, 3)
        sse = jnp.sum(dc * dc, keepdims=True)                             # (1, 1)

        # ---- assemble one lane-dense (1, 128) output row -------------------------
        row = jnp.where(lane == 0, cham, 0.0)
        row = jnp.where(lane == 1, sse, row)
        for j in range(n_joints):
            row = jnp.where(lane == (2 + j), joint_sums[j], row)
        out_ref[t] = row


def chamfer_joint_mse(gen_pc, target_pc, jw_t, seg_out, coords_pred, coords_target, *, tb):
    """Returns a (B, 128) slab: lane 0 chamfer sum, lane 1 coord SSE, lanes 2..2+J joint sums."""
    B, N, _ = gen_pc.shape
    J = jw_t.shape[-1]
    C = coords_pred.shape[1]
    assert J + 2 <= _LANES, "too many joints for the fused output row"
    assert B % tb == 0

    use_mxu = N > 128
    K = 8 if use_mxu else 3                       # coord dim (zero-padded for the MXU path)
    cb = _pick_cb(N)

    gen_k = gen_pc.astype(jnp.float32)            # (B, N, 3)
    tgt_k = jnp.transpose(target_pc.astype(jnp.float32), (0, 2, 1))   # (B, 3, N)
    if use_mxu:
        gen_k = jnp.concatenate([gen_k, jnp.zeros((B, N, K - 3), jnp.float32)], axis=-1)
        tgt_k = jnp.concatenate([tgt_k, jnp.zeros((B, K - 3, N), jnp.float32)], axis=1)

    kernel = functools.partial(_loss_kernel, tb=tb, n_joints=J, n_points=N,
                               col_block=cb, use_mxu=use_mxu)

    out = pl.pallas_call(
        kernel,
        out_shape=jax.ShapeDtypeStruct((B, 1, _LANES), jnp.float32),
        grid_spec=pltpu.PrefetchScalarGridSpec(
            num_scalar_prefetch=0,
            grid=(B // tb,),
            in_specs=[
                pl.BlockSpec((tb, N, K), lambda b: (b, 0, 0)),   # generated points
                pl.BlockSpec((tb, K, N), lambda b: (b, 0, 0)),   # target points (transposed)
                pl.BlockSpec((tb, N, J), lambda b: (b, 0, 0)),   # gathered bone weights
                pl.BlockSpec((tb, 1, N), lambda b: (b, 0, 0)),   # segmentation labels (int32)
                pl.BlockSpec((tb, C, 3), lambda b: (b, 0, 0)),   # coords pred
                pl.BlockSpec((tb, C, 3), lambda b: (b, 0, 0)),   # coords target
            ],
            out_specs=pl.BlockSpec((tb, 1, _LANES), lambda b: (b, 0, 0)),
        ),
        compiler_params=pltpu.CompilerParams(
            dimension_semantics=("parallel",),
            vmem_limit_bytes=_vmem_limit_bytes()),
    )(gen_k, tgt_k, jw_t.astype(jnp.float32),
      seg_out.astype(jnp.int32)[:, None, :],
      coords_pred.astype(jnp.float32), coords_target.astype(jnp.float32))
    return out[:, 0, :]                                          # (B, 128)


# -----------------------------------------------------------------------------
# Physical loss (tiny (B, 21, x) workload; plain JAX glue)
# -----------------------------------------------------------------------------
_PHYS_TARGETS = jnp.array(
    [[[-1.57, 1.57], [-1.57, 1.57], [-1.57, 1.57]],
     [[-1.05, 1.05], [0, 0], [-0.79, 0.26]],
     [[-0.52, 0.52], [0, 0], [-0.35, 0.79]],
     [[-0.26, 0.26], [0, 0], [0, 0]],
     [[-1.05, 0], [0, 0], [0, 0]],
     [[0, 0], [0, 0], [0, 0]],
     [[-1.05, 0.26], [0, 0], [-0.52, 0.26]],
     [[-0.52, 0], [0, 0], [0, 0]],
     [[-0.52, 0], [0, 0], [0, 0]],
     [[0, 0], [0, 0], [0, 0]],
     [[-1.05, 0.26], [0, 0], [-0.52, 0.26]],
     [[-0.52, 0], [0, 0], [0, 0]],
     [[-0.52, 0], [0, 0], [0, 0]],
     [[0, 0], [0, 0], [0, 0]],
     [[-1.05, 0.26], [0, 0], [-0.52, 0.26]],
     [[-0.52, 0], [0, 0], [0, 0]],
     [[-0.52, 0], [0, 0], [0, 0]],
     [[0, 0], [0, 0], [0, 0]],
     [[-1.05, 0.26], [0, 0], [-0.52, 0.26]],
     [[-0.52, 0], [0, 0], [0, 0]],
     [[-0.52, 0], [0, 0], [0, 0]]], dtype=jnp.float32)      # (21, 3, 2)


def q_to_euler(q):
    # TODO(synk): q_to_euler was not provided in the reference source; this is the
    # standard (w, x, y, z) quaternion -> roll/pitch/yaw conversion, kept in plain JAX.
    w, x, y, z = q[..., 0], q[..., 1], q[..., 2], q[..., 3]
    roll = jnp.arctan2(2.0 * (w * x + y * z), 1.0 - 2.0 * (x * x + y * y))
    pitch = jnp.arcsin(jnp.clip(2.0 * (w * y - z * x), -1.0, 1.0))
    yaw = jnp.arctan2(2.0 * (w * z + x * y), 1.0 - 2.0 * (y * y + z * z))
    return jnp.stack([roll, pitch, yaw], axis=-1)


def physical_loss_jax(quat):
    """quat: (B, 21, 4). Penalize Euler angles outside the per-joint ranges."""
    eul = q_to_euler(quat)                                   # (B, 21, 3)
    tmin = _PHYS_TARGETS[:, :, 0][None]                      # (1, 21, 3)
    tmax = _PHYS_TARGETS[:, :, 1][None]                      # (1, 21, 3)
    lmin = jnp.maximum(tmin - eul, 0.0).mean(axis=0)         # (21, 3) mean over batch
    lmax = jnp.maximum(eul - tmax, 0.0).mean(axis=0)         # (21, 3)
    per_joint = (lmin + lmax).sum(axis=-1)                   # (21,)  x+y+z loss
    return per_joint.mean()                                  # sum over joints / 21


# -----------------------------------------------------------------------------
# Full PointNet loss
# -----------------------------------------------------------------------------
def pointnet_loss_pallas(preds, targets, chamfer_lambda, physical_lambda,
                         joint_lambda, has_anno=None, joint_idxs=None):
    gen_pc = preds[0]          # (B, N, 3)
    out_idxs = preds[1]        # (B, N) int
    coords_pred = preds[2]     # (B, C, 3)
    quat = preds[6]            # (B, 21, 4)
    seg_logits = preds[8]      # (B, N, J)
    bone_weights = preds[9]    # (J, W)
    coords_target = targets[0]
    target_pc = targets[1]     # (B, N, 3)

    if joint_idxs is not None:
        bone_weights = bone_weights[jnp.asarray(joint_idxs)]
    # has_anno / joint_idxs selection of coords_pred only affects expand shapes in the
    # reference loop; the coord MSE itself always uses preds[2], replicated below.

    B, N, _ = gen_pc.shape
    J = bone_weights.shape[0]

    # glue: segmentation argmin (matches reference) + direct (B, N, J) weight gather
    seg_out = jnp.argmin(seg_logits, axis=-1)                 # (B, N) int
    jw_t = bone_weights.T[out_idxs]                           # (B, N, J) raw weights

    tb = _pick_tb(B, N, min_steps=2 if _num_tensorcores() > 1 else 1)
    sums = chamfer_joint_mse(gen_pc, target_pc, jw_t, seg_out,
                             coords_pred, coords_target, tb=tb)   # (B, 128)

    chamfer_loss = jnp.sum(sums[:, 0]) / (B * N)
    coord_loss = jnp.sum(sums[:, 1]) / coords_pred.size
    joint_losses = jnp.sum(sums[:, 2:2 + J], axis=0) / (B * N)    # (J,)
    p_loss = physical_loss_jax(quat)

    loss = (chamfer_lambda * chamfer_loss
            + joint_lambda * joint_losses.mean()
            + coord_loss
            + physical_lambda * p_loss)
    return loss, coord_loss, joint_losses, chamfer_loss, p_loss


class PointNetLoss:
    def __init__(self, chamfer_lambda=0.1, physical_lambda=0.1, joint_lambda=0.1):
        self.chamfer_lambda = chamfer_lambda
        self.physical_lambda = physical_lambda
        self.joint_lambda = joint_lambda

    def __call__(self, input, target, has_anno=None, joint_idxs=None):
        return pointnet_loss_pallas(input, target, self.chamfer_lambda,
                                    self.physical_lambda, self.joint_lambda,
                                    has_anno=has_anno, joint_idxs=joint_idxs)


# -----------------------------------------------------------------------------
# Example run
# -----------------------------------------------------------------------------
def _make_inputs(key, B, N, J, NJ):
    keys = jax.random.split(key, 8)
    gen_pc = jax.random.normal(keys[0], (B, N, 3), jnp.float32)
    target_pc = jax.random.normal(keys[1], (B, N, 3), jnp.float32)
    out_idxs = jax.random.randint(keys[2], (B, N), 0, N)
    coords_pred = jax.random.normal(keys[3], (B, NJ, 3), jnp.float32)
    coords_target = jax.random.normal(keys[4], (B, NJ, 3), jnp.float32)
    quat = jax.random.normal(keys[5], (B, NJ, 4), jnp.float32)
    quat = quat / jnp.linalg.norm(quat, axis=-1, keepdims=True)
    seg_logits = jax.random.normal(keys[6], (B, N, J), jnp.float32)
    bone_weights = jax.random.uniform(keys[7], (J, N), jnp.float32)
    preds = (gen_pc, out_idxs, coords_pred, None, None, None, quat, None,
             seg_logits, bone_weights)
    targets = (coords_target, target_pc)
    return preds, targets


if __name__ == "__main__":
    key = jax.random.PRNGKey(0)
    k1, k2, k3 = jax.random.split(key, 3)
    loss_mod = PointNetLoss()

    # small-N case: per-coordinate broadcast distance path, tb=2 batch blocking, single block
    preds, targets = _make_inputs(k1, B=4, N=128, J=6, NJ=21)
    out1 = loss_mod(preds, targets)

    # moderate-N case: MXU (||g||^2 + ||t||^2 - 2*G@T^T) distance path, single block
    preds2, targets2 = _make_inputs(k2, B=2, N=256, J=6, NJ=21)
    out2 = loss_mod(preds2, targets2)

    # larger-N case: exercises the fused column-tiled pass (CB=256, 2 blocks)
    preds3, targets3 = _make_inputs(k3, B=2, N=512, J=6, NJ=21)
    out3 = loss_mod(preds3, targets3)

    jax.block_until_ready((out1, out2, out3))
    print("KERNEL_OK")
</pallas_src>

<mosaic_0001>
module attributes {stable_mosaic.version = 11 : i64} {
  func.func @_loss_kernel(%arg0: i32, %arg1: memref<2x128x3xf32, #tpu.memory_space<vmem>>, %arg2: memref<2x3x128xf32, #tpu.memory_space<vmem>>, %arg3: memref<2x128x6xf32, #tpu.memory_space<vmem>>, %arg4: memref<2x1x128xi32, #tpu.memory_space<vmem>>, %arg5: memref<2x21x3xf32, #tpu.memory_space<vmem>>, %arg6: memref<2x21x3xf32, #tpu.memory_space<vmem>>, %arg7: memref<2x1x128xf32, #tpu.memory_space<vmem>>) attributes {dimension_semantics = [#tpu.dimension_semantics<parallel>], iteration_bounds = array<i64: 2>, scalar_prefetch = 0 : i64, scratch_operands = 0 : i64, tpu.core_type = #tpu.core_type<tc>, window_params = [{transform_indices = @transform_0, window_bounds = array<i64: 2, 128, 3>}, {transform_indices = @transform_1, window_bounds = array<i64: 2, 3, 128>}, {transform_indices = @transform_2, window_bounds = array<i64: 2, 128, 6>}, {transform_indices = @transform_3, window_bounds = array<i64: 2, 1, 128>}, {transform_indices = @transform_4, window_bounds = array<i64: 2, 21, 3>}, {transform_indices = @transform_5, window_bounds = array<i64: 2, 21, 3>}, {transform_indices = @transform_6, window_bounds = array<i64: 2, 1, 128>}]} {
    %0 = tpu.iota {dimensions = array<i32: 1>} : vector<1x128xi32>
    %c0 = arith.constant 0 : index
    %c0_0 = arith.constant 0 : index
    %c0_1 = arith.constant 0 : index
    %1 = vector.load %arg1[%c0, %c0_0, %c0_1] : memref<2x128x3xf32, #tpu.memory_space<vmem>>, vector<1x128x3xf32>
    %2 = vector.shape_cast %1 : vector<1x128x3xf32> to vector<128x3xf32>
    %c0_2 = arith.constant 0 : index
    %c0_3 = arith.constant 0 : index
    %c0_4 = arith.constant 0 : index
    %3 = vector.load %arg2[%c0_2, %c0_3, %c0_4] : memref<2x3x128xf32, #tpu.memory_space<vmem>>, vector<1x3x128xf32>
    %4 = vector.shape_cast %3 : vector<1x3x128xf32> to vector<3x128xf32>
    %c0_5 = arith.constant 0 : index
    %c0_6 = arith.constant 0 : index
    %c0_7 = arith.constant 0 : index
    %5 = vector.load %arg3[%c0_5, %c0_6, %c0_7] : memref<2x128x6xf32, #tpu.memory_space<vmem>>, vector<1x128x6xf32>
    %6 = vector.shape_cast %5 : vector<1x128x6xf32> to vector<128x6xf32>
    %c0_8 = arith.constant 0 : index
    %c0_9 = arith.constant 0 : index
    %c0_10 = arith.constant 0 : index
    %7 = vector.load %arg4[%c0_8, %c0_9, %c0_10] : memref<2x1x128xi32, #tpu.memory_space<vmem>>, vector<1x1x128xi32>
    %8 = vector.shape_cast %7 : vector<1x1x128xi32> to vector<1x128xi32>
    %9 = vector.extract_strided_slice %6 {offsets = [0, 0], sizes = [128, 1], strides = [1, 1]} : vector<128x6xf32> to vector<128x1xf32>
    %cst = arith.constant 1.500000e-01 : f32
    %10 = vector.broadcast %cst : f32 to vector<128x1xf32>
    %11 = arith.cmpf ogt, %9, %10 : vector<128x1xf32>
    %12 = vector.extract_strided_slice %6 {offsets = [0, 1], sizes = [128, 1], strides = [1, 1]} : vector<128x6xf32> to vector<128x1xf32>
    %cst_11 = arith.constant 1.500000e-01 : f32
    %13 = vector.broadcast %cst_11 : f32 to vector<128x1xf32>
    %14 = arith.cmpf ogt, %12, %13 : vector<128x1xf32>
    %15 = vector.extract_strided_slice %6 {offsets = [0, 2], sizes = [128, 1], strides = [1, 1]} : vector<128x6xf32> to vector<128x1xf32>
    %cst_12 = arith.constant 1.500000e-01 : f32
    %16 = vector.broadcast %cst_12 : f32 to vector<128x1xf32>
    %17 = arith.cmpf ogt, %15, %16 : vector<128x1xf32>
    %18 = vector.extract_strided_slice %6 {offsets = [0, 3], sizes = [128, 1], strides = [1, 1]} : vector<128x6xf32> to vector<128x1xf32>
    %cst_13 = arith.constant 1.500000e-01 : f32
    %19 = vector.broadcast %cst_13 : f32 to vector<128x1xf32>
    %20 = arith.cmpf ogt, %18, %19 : vector<128x1xf32>
    %21 = vector.extract_strided_slice %6 {offsets = [0, 4], sizes = [128, 1], strides = [1, 1]} : vector<128x6xf32> to vector<128x1xf32>
    %cst_14 = arith.constant 1.500000e-01 : f32
    %22 = vector.broadcast %cst_14 : f32 to vector<128x1xf32>
    %23 = arith.cmpf ogt, %21, %22 : vector<128x1xf32>
    %24 = vector.extract_strided_slice %6 {offsets = [0, 5], sizes = [128, 1], strides = [1, 1]} : vector<128x6xf32> to vector<128x1xf32>
    %cst_15 = arith.constant 1.500000e-01 : f32
    %25 = vector.broadcast %cst_15 : f32 to vector<128x1xf32>
    %26 = arith.cmpf ogt, %24, %25 : vector<128x1xf32>
    %cst_16 = arith.constant 3.000000e+38 : f32
    %27 = vector.broadcast %cst_16 : f32 to vector<128x1xf32>
    %cst_17 = arith.constant 0.000000e+00 : f32
    %28 = vector.broadcast %cst_17 : f32 to vector<1x1xf32>
    %cst_18 = arith.constant 0.000000e+00 : f32
    %29 = vector.broadcast %cst_18 : f32 to vector<1x1xf32>
    %cst_19 = arith.constant 0.000000e+00 : f32
    %30 = vector.broadcast %cst_19 : f32 to vector<1x1xf32>
    %cst_20 = arith.constant 0.000000e+00 : f32
    %31 = vector.broadcast %cst_20 : f32 to vector<1x1xf32>
    %cst_21 = arith.constant 0.000000e+00 : f32
    %32 = vector.broadcast %cst_21 : f32 to vector<1x1xf32>
    %cst_22 = arith.constant 0.000000e+00 : f32
    %33 = vector.broadcast %cst_22 : f32 to vector<1x1xf32>
    %cst_23 = arith.constant 0.000000e+00 : f32
    %34 = vector.broadcast %cst_23 : f32 to vector<1x1xf32>
    %35 = vector.extract_strided_slice %2 {offsets = [0, 0], sizes = [128, 1], strides = [1, 1]} : vector<128x3xf32> to vector<128x1xf32>
    %36 = vector.extract_strided_slice %4 {offsets = [0, 0], sizes = [1, 128], strides = [1, 1]} : vector<3x128xf32> to vector<1x128xf32>
    %37 = vector.broadcast %35 : vector<128x1xf32> to vector<128x128xf32>
    %38 = vector.broadcast %36 : vector<1x128xf32> to vector<128x128xf32>
    %39 = arith.subf %37, %38 : vector<128x128xf32>
    %40 = vector.extract_strided_slice %2 {offsets = [0, 1], sizes = [128, 1], strides = [1, 1]} : vector<128x3xf32> to vector<128x1xf32>
    %41 = vector.extract_strided_slice %4 {offsets = [1, 0], sizes = [1, 128], strides = [1, 1]} : vector<3x128xf32> to vector<1x128xf32>
    %42 = vector.broadcast %40 : vector<128x1xf32> to vector<128x128xf32>
    %43 = vector.broadcast %41 : vector<1x128xf32> to vector<128x128xf32>
    %44 = arith.subf %42, %43 : vector<128x128xf32>
    %45 = vector.extract_strided_slice %2 {offsets = [0, 2], sizes = [128, 1], strides = [1, 1]} : vector<128x3xf32> to vector<128x1xf32>
    %46 = vector.extract_strided_slice %4 {offsets = [2, 0], sizes = [1, 128], strides = [1, 1]} : vector<3x128xf32> to vector<1x128xf32>
    %47 = vector.broadcast %45 : vector<128x1xf32> to vector<128x128xf32>
    %48 = vector.broadcast %46 : vector<1x128xf32> to vector<128x128xf32>
    %49 = arith.subf %47, %48 : vector<128x128xf32>
    %50 = arith.mulf %39, %39 : vector<128x128xf32>
    %51 = arith.mulf %44, %44 : vector<128x128xf32>
    %52 = arith.addf %50, %51 : vector<128x128xf32>
    %53 = arith.mulf %49, %49 : vector<128x128xf32>
    %54 = arith.addf %52, %53 : vector<128x128xf32>
    %cst_24 = arith.constant dense<0x7F800000> : vector<128xf32>
    %55 = vector.multi_reduction <minimumf>, %54, %cst_24 [1] : vector<128x128xf32> to vector<128xf32>
    %56 = vector.shape_cast %55 : vector<128xf32> to vector<128x1xf32>
    %57 = arith.minimumf %27, %56 : vector<128x1xf32>
    %cst_25 = arith.constant dense<0x7F800000> : vector<128xf32>
    %58 = vector.multi_reduction <minimumf>, %54, %cst_25 [0] : vector<128x128xf32> to vector<128xf32>
    %59 = vector.shape_cast %58 : vector<128xf32> to vector<1x128xf32>
    %60 = math.sqrt %59 : vector<1x128xf32>
    %61 = vector.shape_cast %60 : vector<1x128xf32> to vector<1x1x128xf32>
    %cst_26 = arith.constant dense<0.000000e+00> : vector<1xf32>
    %62 = vector.multi_reduction <add>, %61, %cst_26 [1, 2] : vector<1x1x128xf32> to vector<1xf32>
    %63 = vector.shape_cast %62 : vector<1xf32> to vector<1x1x1xf32>
    %64 = vector.extract %63[0, 0, 0] : f32 from vector<1x1x1xf32>
    %65 = vector.broadcast %64 : f32 to vector<1x1xf32>
    %66 = arith.addf %28, %65 : vector<1x1xf32>
    %c0_i32 = arith.constant 0 : i32
    %67 = vector.broadcast %c0_i32 : i32 to vector<1x128xi32>
    %68 = arith.cmpi eq, %8, %67 : vector<1x128xi32>
    %cst_27 = arith.constant 1.000000e+02 : f32
    %69 = vector.shape_cast %68 : vector<1x128xi1> to vector<1x128xi1>
    %70 = vector.broadcast %69 : vector<1x128xi1> to vector<128x128xi1>
    %71 = vector.broadcast %cst_27 : f32 to vector<128x128xf32>
    %72 = arith.select %70, %54, %71 : vector<128x128xi1>, vector<128x128xf32>
    %cst_28 = arith.constant dense<0x7F800000> : vector<128xf32>
    %73 = vector.multi_reduction <minimumf>, %72, %cst_28 [1] : vector<128x128xf32> to vector<128xf32>
    %74 = vector.shape_cast %73 : vector<128xf32> to vector<128x1xf32>
    %75 = arith.minimumf %27, %74 : vector<128x1xf32>
    %cst_29 = arith.constant 1.000000e+02 : f32
    %76 = vector.shape_cast %11 : vector<128x1xi1> to vector<128x1xi1>
    %77 = vector.broadcast %76 : vector<128x1xi1> to vector<128x128xi1>
    %78 = vector.broadcast %cst_29 : f32 to vector<128x128xf32>
    %79 = arith.select %77, %54, %78 : vector<128x128xi1>, vector<128x128xf32>
    %cst_30 = arith.constant dense<0x7F800000> : vector<128xf32>
    %80 = vector.multi_reduction <minimumf>, %79, %cst_30 [0] : vector<128x128xf32> to vector<128xf32>
    %81 = vector.shape_cast %80 : vector<128xf32> to vector<1x128xf32>
    %cst_31 = arith.constant 1.000000e+02 : f32
    %82 = vector.broadcast %cst_31 : f32 to vector<1x128xf32>
    %83 = arith.cmpf one, %81, %82 : vector<1x128xf32>
    %84 = arith.andi %68, %83 : vector<1x128xi1>
    %85 = math.sqrt %81 : vector<1x128xf32>
    %cst_32 = arith.constant 0.000000e+00 : f32
    %86 = vector.broadcast %cst_32 : f32 to vector<1x128xf32>
    %87 = arith.select %84, %85, %86 : vector<1x128xi1>, vector<1x128xf32>
    %88 = vector.shape_cast %87 : vector<1x128xf32> to vector<1x1x128xf32>
    %cst_33 = arith.constant dense<0.000000e+00> : vector<1xf32>
    %89 = vector.multi_reduction <add>, %88, %cst_33 [1, 2] : vector<1x1x128xf32> to vector<1xf32>
    %90 = vector.shape_cast %89 : vector<1xf32> to vector<1x1x1xf32>
    %91 = vector.extract %90[0, 0, 0] : f32 from vector<1x1x1xf32>
    %92 = vector.broadcast %91 : f32 to vector<1x1xf32>
    %93 = arith.addf %29, %92 : vector<1x1xf32>
    %c1_i32 = arith.constant 1 : i32
    %94 = vector.broadcast %c1_i32 : i32 to vector<1x128xi32>
    %95 = arith.cmpi eq, %8, %94 : vector<1x128xi32>
    %cst_34 = arith.constant 1.000000e+02 : f32
    %96 = vector.shape_cast %95 : vector<1x128xi1> to vector<1x128xi1>
    %97 = vector.broadcast %96 : vector<1x128xi1> to vector<128x128xi1>
    %98 = vector.broadcast %cst_34 : f32 to vector<128x128xf32>
    %99 = arith.select %97, %54, %98 : vector<128x128xi1>, vector<128x128xf32>
    %cst_35 = arith.constant dense<0x7F800000> : vector<128xf32>
    %100 = vector.multi_reduction <minimumf>, %99, %cst_35 [1] : vector<128x128xf32> to vector<128xf32>
    %101 = vector.shape_cast %100 : vector<128xf32> to vector<128x1xf32>
    %102 = arith.minimumf %27, %101 : vector<128x1xf32>
    %cst_36 = arith.constant 1.000000e+02 : f32
    %103 = vector.shape_cast %14 : vector<128x1xi1> to vector<128x1xi1>
    %104 = vector.broadcast %103 : vector<128x1xi1> to vector<128x128xi1>
    %105 = vector.broadcast %cst_36 : f32 to vector<128x128xf32>
    %106 = arith.select %104, %54, %105 : vector<128x128xi1>, vector<128x128xf32>
    %cst_37 = arith.constant dense<0x7F800000> : vector<128xf32>
    %107 = vector.multi_reduction <minimumf>, %106, %cst_37 [0] : vector<128x128xf32> to vector<128xf32>
    %108 = vector.shape_cast %107 : vector<128xf32> to vector<1x128xf32>
    %cst_38 = arith.constant 1.000000e+02 : f32
    %109 = vector.broadcast %cst_38 : f32 to vector<1x128xf32>
    %110 = arith.cmpf one, %108, %109 : vector<1x128xf32>
    %111 = arith.andi %95, %110 : vector<1x128xi1>
    %112 = math.sqrt %108 : vector<1x128xf32>
    %cst_39 = arith.constant 0.000000e+00 : f32
    %113 = vector.broadcast %cst_39 : f32 to vector<1x128xf32>
    %114 = arith.select %111, %112, %113 : vector<1x128xi1>, vector<1x128xf32>
    %115 = vector.shape_cast %114 : vector<1x128xf32> to vector<1x1x128xf32>
    %cst_40 = arith.constant dense<0.000000e+00> : vector<1xf32>
    %116 = vector.multi_reduction <add>, %115, %cst_40 [1, 2] : vector<1x1x128xf32> to vector<1xf32>
    %117 = vector.shape_cast %116 : vector<1xf32> to vector<1x1x1xf32>
    %118 = vector.extract %117[0, 0, 0] : f32 from vector<1x1x1xf32>
    %119 = vector.broadcast %118 : f32 to vector<1x1xf32>
    %120 = arith.addf %30, %119 : vector<1x1xf32>
    %c2_i32 = arith.constant 2 : i32
    %121 = vector.broadcast %c2_i32 : i32 to vector<1x128xi32>
    %122 = arith.cmpi eq, %8, %121 : vector<1x128xi32>
    %cst_41 = arith.constant 1.000000e+02 : f32
    %123 = vector.shape_cast %122 : vector<1x128xi1> to vector<1x128xi1>
    %124 = vector.broadcast %123 : vector<1x128xi1> to vector<128x128xi1>
    %125 = vector.broadcast %cst_41 : f32 to vector<128x128xf32>
    %126 = arith.select %124, %54, %125 : vector<128x128xi1>, vector<128x128xf32>
    %cst_42 = arith.constant dense<0x7F800000> : vector<128xf32>
    %127 = vector.multi_reduction <minimumf>, %126, %cst_42 [1] : vector<128x128xf32> to vector<128xf32>
    %128 = vector.shape_cast %127 : vector<128xf32> to vector<128x1xf32>
    %129 = arith.minimumf %27, %128 : vector<128x1xf32>
    %cst_43 = arith.constant 1.000000e+02 : f32
    %130 = vector.shape_cast %17 : vector<128x1xi1> to vector<128x1xi1>
    %131 = vector.broadcast %130 : vector<128x1xi1> to vector<128x128xi1>
    %132 = vector.broadcast %cst_43 : f32 to vector<128x128xf32>
    %133 = arith.select %131, %54, %132 : vector<128x128xi1>, vector<128x128xf32>
    %cst_44 = arith.constant dense<0x7F800000> : vector<128xf32>
    %134 = vector.multi_reduction <minimumf>, %133, %cst_44 [0] : vector<128x128xf32> to vector<128xf32>
    %135 = vector.shape_cast %134 : vector<128xf32> to vector<1x128xf32>
    %cst_45 = arith.constant 1.000000e+02 : f32
    %136 = vector.broadcast %cst_45 : f32 to vector<1x128xf32>
    %137 = arith.cmpf one, %135, %136 : vector<1x128xf32>
    %138 = arith.andi %122, %137 : vector<1x128xi1>
    %139 = math.sqrt %135 : vector<1x128xf32>
    %cst_46 = arith.constant 0.000000e+00 : f32
    %140 = vector.broadcast %cst_46 : f32 to vector<1x128xf32>
    %141 = arith.select %138, %139, %140 : vector<1x128xi1>, vector<1x128xf32>
    %142 = vector.shape_cast %141 : vector<1x128xf32> to vector<1x1x128xf32>
    %cst_47 = arith.constant dense<0.000000e+00> : vector<1xf32>
    %143 = vector.multi_reduction <add>, %142, %cst_47 [1, 2] : vector<1x1x128xf32> to vector<1xf32>
    %144 = vector.shape_cast %143 : vector<1xf32> to vector<1x1x1xf32>
    %145 = vector.extract %144[0, 0, 0] : f32 from vector<1x1x1xf32>
    %146 = vector.broadcast %145 : f32 to vector<1x1xf32>
    %147 = arith.addf %31, %146 : vector<1x1xf32>
    %c3_i32 = arith.constant 3 : i32
    %148 = vector.broadcast %c3_i32 : i32 to vector<1x128xi32>
    %149 = arith.cmpi eq, %8, %148 : vector<1x128xi32>
    %cst_48 = arith.constant 1.000000e+02 : f32
    %150 = vector.shape_cast %149 : vector<1x128xi1> to vector<1x128xi1>
    %151 = vector.broadcast %150 : vector<1x128xi1> to vector<128x128xi1>
    %152 = vector.broadcast %cst_48 : f32 to vector<128x128xf32>
    %153 = arith.select %151, %54, %152 : vector<128x128xi1>, vector<128x128xf32>
    %cst_49 = arith.constant dense<0x7F800000> : vector<128xf32>
    %154 = vector.multi_reduction <minimumf>, %153, %cst_49 [1] : vector<128x128xf32> to vector<128xf32>
    %155 = vector.shape_cast %154 : vector<128xf32> to vector<128x1xf32>
    %156 = arith.minimumf %27, %155 : vector<128x1xf32>
    %cst_50 = arith.constant 1.000000e+02 : f32
    %157 = vector.shape_cast %20 : vector<128x1xi1> to vector<128x1xi1>
    %158 = vector.broadcast %157 : vector<128x1xi1> to vector<128x128xi1>
    %159 = vector.broadcast %cst_50 : f32 to vector<128x128xf32>
    %160 = arith.select %158, %54, %159 : vector<128x128xi1>, vector<128x128xf32>
    %cst_51 = arith.constant dense<0x7F800000> : vector<128xf32>
    %161 = vector.multi_reduction <minimumf>, %160, %cst_51 [0] : vector<128x128xf32> to vector<128xf32>
    %162 = vector.shape_cast %161 : vector<128xf32> to vector<1x128xf32>
    %cst_52 = arith.constant 1.000000e+02 : f32
    %163 = vector.broadcast %cst_52 : f32 to vector<1x128xf32>
    %164 = arith.cmpf one, %162, %163 : vector<1x128xf32>
    %165 = arith.andi %149, %164 : vector<1x128xi1>
    %166 = math.sqrt %162 : vector<1x128xf32>
    %cst_53 = arith.constant 0.000000e+00 : f32
    %167 = vector.broadcast %cst_53 : f32 to vector<1x128xf32>
    %168 = arith.select %165, %166, %167 : vector<1x128xi1>, vector<1x128xf32>
    %169 = vector.shape_cast %168 : vector<1x128xf32> to vector<1x1x128xf32>
    %cst_54 = arith.constant dense<0.000000e+00> : vector<1xf32>
    %170 = vector.multi_reduction <add>, %169, %cst_54 [1, 2] : vector<1x1x128xf32> to vector<1xf32>
    %171 = vector.shape_cast %170 : vector<1xf32> to vector<1x1x1xf32>
    %172 = vector.extract %171[0, 0, 0] : f32 from vector<1x1x1xf32>
    %173 = vector.broadcast %172 : f32 to vector<1x1xf32>
    %174 = arith.addf %32, %173 : vector<1x1xf32>
    %c4_i32 = arith.constant 4 : i32
    %175 = vector.broadcast %c4_i32 : i32 to vector<1x128xi32>
    %176 = arith.cmpi eq, %8, %175 : vector<1x128xi32>
    %cst_55 = arith.constant 1.000000e+02 : f32
    %177 = vector.shape_cast %176 : vector<1x128xi1> to vector<1x128xi1>
    %178 = vector.broadcast %177 : vector<1x128xi1> to vector<128x128xi1>
    %179 = vector.broadcast %cst_55 : f32 to vector<128x128xf32>
    %180 = arith.select %178, %54, %179 : vector<128x128xi1>, vector<128x128xf32>
    %cst_56 = arith.constant dense<0x7F800000> : vector<128xf32>
    %181 = vector.multi_reduction <minimumf>, %180, %cst_56 [1] : vector<128x128xf32> to vector<128xf32>
    %182 = vector.shape_cast %181 : vector<128xf32> to vector<128x1xf32>
    %183 = arith.minimumf %27, %182 : vector<128x1xf32>
    %cst_57 = arith.constant 1.000000e+02 : f32
    %184 = vector.shape_cast %23 : vector<128x1xi1> to vector<128x1xi1>
    %185 = vector.broadcast %184 : vector<128x1xi1> to vector<128x128xi1>
    %186 = vector.broadcast %cst_57 : f32 to vector<128x128xf32>
    %187 = arith.select %185, %54, %186 : vector<128x128xi1>, vector<128x128xf32>
    %cst_58 = arith.constant dense<0x7F800000> : vector<128xf32>
    %188 = vector.multi_reduction <minimumf>, %187, %cst_58 [0] : vector<128x128xf32> to vector<128xf32>
    %189 = vector.shape_cast %188 : vector<128xf32> to vector<1x128xf32>
    %cst_59 = arith.constant 1.000000e+02 : f32
    %190 = vector.broadcast %cst_59 : f32 to vector<1x128xf32>
    %191 = arith.cmpf one, %189, %190 : vector<1x128xf32>
    %192 = arith.andi %176, %191 : vector<1x128xi1>
    %193 = math.sqrt %189 : vector<1x128xf32>
    %cst_60 = arith.constant 0.000000e+00 : f32
    %194 = vector.broadcast %cst_60 : f32 to vector<1x128xf32>
    %195 = arith.select %192, %193, %194 : vector<1x128xi1>, vector<1x128xf32>
    %196 = vector.shape_cast %195 : vector<1x128xf32> to vector<1x1x128xf32>
    %cst_61 = arith.constant dense<0.000000e+00> : vector<1xf32>
    %197 = vector.multi_reduction <add>, %196, %cst_61 [1, 2] : vector<1x1x128xf32> to vector<1xf32>
    %198 = vector.shape_cast %197 : vector<1xf32> to vector<1x1x1xf32>
    %199 = vector.extract %198[0, 0, 0] : f32 from vector<1x1x1xf32>
    %200 = vector.broadcast %199 : f32 to vector<1x1xf32>
    %201 = arith.addf %33, %200 : vector<1x1xf32>
    %c5_i32 = arith.constant 5 : i32
    %202 = vector.broadcast %c5_i32 : i32 to vector<1x128xi32>
    %203 = arith.cmpi eq, %8, %202 : vector<1x128xi32>
    %cst_62 = arith.constant 1.000000e+02 : f32
    %204 = vector.shape_cast %203 : vector<1x128xi1> to vector<1x128xi1>
    %205 = vector.broadcast %204 : vector<1x128xi1> to vector<128x128xi1>
    %206 = vector.broadcast %cst_62 : f32 to vector<128x128xf32>
    %207 = arith.select %205, %54, %206 : vector<128x128xi1>, vector<128x128xf32>
    %cst_63 = arith.constant dense<0x7F800000> : vector<128xf32>
    %208 = vector.multi_reduction <minimumf>, %207, %cst_63 [1] : vector<128x128xf32> to vector<128xf32>
    %209 = vector.shape_cast %208 : vector<128xf32> to vector<128x1xf32>
    %210 = arith.minimumf %27, %209 : vector<128x1xf32>
    %cst_64 = arith.constant 1.000000e+02 : f32
    %211 = vector.shape_cast %26 : vector<128x1xi1> to vector<128x1xi1>
    %212 = vector.broadcast %211 : vector<128x1xi1> to vector<128x128xi1>
    %213 = vector.broadcast %cst_64 : f32 to vector<128x128xf32>
    %214 = arith.select %212, %54, %213 : vector<128x128xi1>, vector<128x128xf32>
    %cst_65 = arith.constant dense<0x7F800000> : vector<128xf32>
    %215 = vector.multi_reduction <minimumf>, %214, %cst_65 [0] : vector<128x128xf32> to vector<128xf32>
    %216 = vector.shape_cast %215 : vector<128xf32> to vector<1x128xf32>
    %cst_66 = arith.constant 1.000000e+02 : f32
    %217 = vector.broadcast %cst_66 : f32 to vector<1x128xf32>
    %218 = arith.cmpf one, %216, %217 : vector<1x128xf32>
    %219 = arith.andi %203, %218 : vector<1x128xi1>
    %220 = math.sqrt %216 : vector<1x128xf32>
    %cst_67 = arith.constant 0.000000e+00 : f32
    %221 = vector.broadcast %cst_67 : f32 to vector<1x128xf32>
    %222 = arith.select %219, %220, %221 : vector<1x128xi1>, vector<1x128xf32>
    %223 = vector.shape_cast %222 : vector<1x128xf32> to vector<1x1x128xf32>
    %cst_68 = arith.constant dense<0.000000e+00> : vector<1xf32>
    %224 = vector.multi_reduction <add>, %223, %cst_68 [1, 2] : vector<1x1x128xf32> to vector<1xf32>
    %225 = vector.shape_cast %224 : vector<1xf32> to vector<1x1x1xf32>
    %226 = vector.extract %225[0, 0, 0] : f32 from vector<1x1x1xf32>
    %227 = vector.broadcast %226 : f32 to vector<1x1xf32>
    %228 = arith.addf %34, %227 : vector<1x1xf32>
    %229 = math.sqrt %57 : vector<128x1xf32>
    %230 = vector.shape_cast %229 : vector<128x1xf32> to vector<1x128x1xf32>
    %cst_69 = arith.constant dense<0.000000e+00> : vector<1xf32>
    %231 = vector.multi_reduction <add>, %230, %cst_69 [1, 2] : vector<1x128x1xf32> to vector<1xf32>
    %232 = vector.shape_cast %231 : vector<1xf32> to vector<1x1x1xf32>
    %233 = vector.extract %232[0, 0, 0] : f32 from vector<1x1x1xf32>
    %234 = vector.broadcast %233 : f32 to vector<1x1xf32>
    %235 = arith.addf %66, %234 : vector<1x1xf32>
    %cst_70 = arith.constant 1.000000e+02 : f32
    %236 = vector.broadcast %cst_70 : f32 to vector<128x1xf32>
    %237 = arith.cmpf one, %75, %236 : vector<128x1xf32>
    %238 = arith.andi %11, %237 : vector<128x1xi1>
    %239 = math.sqrt %75 : vector<128x1xf32>
    %cst_71 = arith.constant 0.000000e+00 : f32
    %240 = vector.broadcast %cst_71 : f32 to vector<128x1xf32>
    %241 = arith.select %238, %239, %240 : vector<128x1xi1>, vector<128x1xf32>
    %242 = vector.shape_cast %241 : vector<128x1xf32> to vector<1x128x1xf32>
    %cst_72 = arith.constant dense<0.000000e+00> : vector<1xf32>
    %243 = vector.multi_reduction <add>, %242, %cst_72 [1, 2] : vector<1x128x1xf32> to vector<1xf32>
    %244 = vector.shape_cast %243 : vector<1xf32> to vector<1x1x1xf32>
    %245 = vector.extract %244[0, 0, 0] : f32 from vector<1x1x1xf32>
    %246 = vector.broadcast %245 : f32 to vector<1x1xf32>
    %247 = arith.addf %246, %93 : vector<1x1xf32>
    %cst_73 = arith.constant 1.000000e+02 : f32
    %248 = vector.broadcast %cst_73 : f32 to vector<128x1xf32>
    %249 = arith.cmpf one, %102, %248 : vector<128x1xf32>
    %250 = arith.andi %14, %249 : vector<128x1xi1>
    %251 = math.sqrt %102 : vector<128x1xf32>
    %cst_74 = arith.constant 0.000000e+00 : f32
    %252 = vector.broadcast %cst_74 : f32 to vector<128x1xf32>
    %253 = arith.select %250, %251, %252 : vector<128x1xi1>, vector<128x1xf32>
    %254 = vector.shape_cast %253 : vector<128x1xf32> to vector<1x128x1xf32>
    %cst_75 = arith.constant dense<0.000000e+00> : vector<1xf32>
    %255 = vector.multi_reduction <add>, %254, %cst_75 [1, 2] : vector<1x128x1xf32> to vector<1xf32>
    %256 = vector.shape_cast %255 : vector<1xf32> to vector<1x1x1xf32>
    %257 = vector.extract %256[0, 0, 0] : f32 from vector<1x1x1xf32>
    %258 = vector.broadcast %257 : f32 to vector<1x1xf32>
    %259 = arith.addf %258, %120 : vector<1x1xf32>
    %cst_76 = arith.constant 1.000000e+02 : f32
    %260 = vector.broadcast %cst_76 : f32 to vector<128x1xf32>
    %261 = arith.cmpf one, %129, %260 : vector<128x1xf32>
    %262 = arith.andi %17, %261 : vector<128x1xi1>
    %263 = math.sqrt %129 : vector<128x1xf32>
    %cst_77 = arith.constant 0.000000e+00 : f32
    %264 = vector.broadcast %cst_77 : f32 to vector<128x1xf32>
    %265 = arith.select %262, %263, %264 : vector<128x1xi1>, vector<128x1xf32>
    %266 = vector.shape_cast %265 : vector<128x1xf32> to vector<1x128x1xf32>
    %cst_78 = arith.constant dense<0.000000e+00> : vector<1xf32>
    %267 = vector.multi_reduction <add>, %266, %cst_78 [1, 2] : vector<1x128x1xf32> to vector<1xf32>
    %268 = vector.shape_cast %267 : vector<1xf32> to vector<1x1x1xf32>
    %269 = vector.extract %268[0, 0, 0] : f32 from vector<1x1x1xf32>
    %270 = vector.broadcast %269 : f32 to vector<1x1xf32>
    %271 = arith.addf %270, %147 : vector<1x1xf32>
    %cst_79 = arith.constant 1.000000e+02 : f32
    %272 = vector.broadcast %cst_79 : f32 to vector<128x1xf32>
    %273 = arith.cmpf one, %156, %272 : vector<128x1xf32>
    %274 = arith.andi %20, %273 : vector<128x1xi1>
    %275 = math.sqrt %156 : vector<128x1xf32>
    %cst_80 = arith.constant 0.000000e+00 : f32
    %276 = vector.broadcast %cst_80 : f32 to vector<128x1xf32>
    %277 = arith.select %274, %275, %276 : vector<128x1xi1>, vector<128x1xf32>
    %278 = vector.shape_cast %277 : vector<128x1xf32> to vector<1x128x1xf32>
    %cst_81 = arith.constant dense<0.000000e+00> : vector<1xf32>
    %279 = vector.multi_reduction <add>, %278, %cst_81 [1, 2] : vector<1x128x1xf32> to vector<1xf32>
    %280 = vector.shape_cast %279 : vector<1xf32> to vector<1x1x1xf32>
    %281 = vector.extract %280[0, 0, 0] : f32 from vector<1x1x1xf32>
    %282 = vector.broadcast %281 : f32 to vector<1x1xf32>
    %283 = arith.addf %282, %174 : vector<1x1xf32>
    %cst_82 = arith.constant 1.000000e+02 : f32
    %284 = vector.broadcast %cst_82 : f32 to vector<128x1xf32>
    %285 = arith.cmpf one, %183, %284 : vector<128x1xf32>
    %286 = arith.andi %23, %285 : vector<128x1xi1>
    %287 = math.sqrt %183 : vector<128x1xf32>
    %cst_83 = arith.constant 0.000000e+00 : f32
    %288 = vector.broadcast %cst_83 : f32 to vector<128x1xf32>
    %289 = arith.select %286, %287, %288 : vector<128x1xi1>, vector<128x1xf32>
    %290 = vector.shape_cast %289 : vector<128x1xf32> to vector<1x128x1xf32>
    %cst_84 = arith.constant dense<0.000000e+00> : vector<1xf32>
    %291 = vector.multi_reduction <add>, %290, %cst_84 [1, 2] : vector<1x128x1xf32> to vector<1xf32>
    %292 = vector.shape_cast %291 : vector<1xf32> to vector<1x1x1xf32>
    %293 = vector.extract %292[0, 0, 0] : f32 from vector<1x1x1xf32>
    %294 = vector.broadcast %293 : f32 to vector<1x1xf32>
    %295 = arith.addf %294, %201 : vector<1x1xf32>
    %cst_85 = arith.constant 1.000000e+02 : f32
    %296 = vector.broadcast %cst_85 : f32 to vector<128x1xf32>
    %297 = arith.cmpf one, %210, %296 : vector<128x1xf32>
    %298 = arith.andi %26, %297 : vector<128x1xi1>
    %299 = math.sqrt %210 : vector<128x1xf32>
    %cst_86 = arith.constant 0.000000e+00 : f32
    %300 = vector.broadcast %cst_86 : f32 to vector<128x1xf32>
    %301 = arith.select %298, %299, %300 : vector<128x1xi1>, vector<128x1xf32>
    %302 = vector.shape_cast %301 : vector<128x1xf32> to vector<1x128x1xf32>
    %cst_87 = arith.constant dense<0.000000e+00> : vector<1xf32>
    %303 = vector.multi_reduction <add>, %302, %cst_87 [1, 2] : vector<1x128x1xf32> to vector<1xf32>
    %304 = vector.shape_cast %303 : vector<1xf32> to vector<1x1x1xf32>
    %305 = vector.extract %304[0, 0, 0] : f32 from vector<1x1x1xf32>
    %306 = vector.broadcast %305 : f32 to vector<1x1xf32>
    %307 = arith.addf %306, %228 : vector<1x1xf32>
    %c0_88 = arith.constant 0 : index
    %c0_89 = arith.constant 0 : index
    %c0_90 = arith.constant 0 : index
    %308 = vector.load %arg5[%c0_88, %c0_89, %c0_90] : memref<2x21x3xf32, #tpu.memory_space<vmem>>, vector<1x21x3xf32>
    %309 = vector.shape_cast %308 : vector<1x21x3xf32> to vector<21x3xf32>
    %c0_91 = arith.constant 0 : index
    %c0_92 = arith.constant 0 : index
    %c0_93 = arith.constant 0 : index
    %310 = vector.load %arg6[%c0_91, %c0_92, %c0_93] : memref<2x21x3xf32, #tpu.memory_space<vmem>>, vector<1x21x3xf32>
    %311 = vector.shape_cast %310 : vector<1x21x3xf32> to vector<21x3xf32>
    %312 = arith.subf %309, %311 : vector<21x3xf32>
    %313 = arith.mulf %312, %312 : vector<21x3xf32>
    %314 = vector.shape_cast %313 : vector<21x3xf32> to vector<1x21x3xf32>
    %cst_94 = arith.constant dense<0.000000e+00> : vector<1xf32>
    %315 = vector.multi_reduction <add>, %314, %cst_94 [1, 2] : vector<1x21x3xf32> to vector<1xf32>
    %316 = vector.shape_cast %315 : vector<1xf32> to vector<1x1x1xf32>
    %317 = vector.extract %316[0, 0, 0] : f32 from vector<1x1x1xf32>
    %318 = vector.broadcast %317 : f32 to vector<1x1xf32>
    %c0_i32_95 = arith.constant 0 : i32
    %319 = vector.broadcast %c0_i32_95 : i32 to vector<1x128xi32>
    %320 = arith.cmpi eq, %0, %319 : vector<1x128xi32>
    %cst_96 = arith.constant 0.000000e+00 : f32
    %321 = vector.shape_cast %235 : vector<1x1xf32> to vector<1x1xf32>
    %322 = vector.broadcast %321 : vector<1x1xf32> to vector<1x128xf32>
    %323 = vector.broadcast %cst_96 : f32 to vector<1x128xf32>
    %324 = arith.select %320, %322, %323 : vector<1x128xi1>, vector<1x128xf32>
    %c1_i32_97 = arith.constant 1 : i32
    %325 = vector.broadcast %c1_i32_97 : i32 to vector<1x128xi32>
    %326 = arith.cmpi eq, %0, %325 : vector<1x128xi32>
    %327 = vector.shape_cast %318 : vector<1x1xf32> to vector<1x1xf32>
    %328 = vector.broadcast %327 : vector<1x1xf32> to vector<1x128xf32>
    %329 = arith.select %326, %328, %324 : vector<1x128xi1>, vector<1x128xf32>
    %c2_i32_98 = arith.constant 2 : i32
    %330 = vector.broadcast %c2_i32_98 : i32 to vector<1x128xi32>
    %331 = arith.cmpi eq, %0, %330 : vector<1x128xi32>
    %332 = vector.shape_cast %247 : vector<1x1xf32> to vector<1x1xf32>
    %333 = vector.broadcast %332 : vector<1x1xf32> to vector<1x128xf32>
    %334 = arith.select %331, %333, %329 : vector<1x128xi1>, vector<1x128xf32>
    %c3_i32_99 = arith.constant 3 : i32
    %335 = vector.broadcast %c3_i32_99 : i32 to vector<1x128xi32>
    %336 = arith.cmpi eq, %0, %335 : vector<1x128xi32>
    %337 = vector.shape_cast %259 : vector<1x1xf32> to vector<1x1xf32>
    %338 = vector.broadcast %337 : vector<1x1xf32> to vector<1x128xf32>
    %339 = arith.select %336, %338, %334 : vector<1x128xi1>, vector<1x128xf32>
    %c4_i32_100 = arith.constant 4 : i32
    %340 = vector.broadcast %c4_i32_100 : i32 to vector<1x128xi32>
    %341 = arith.cmpi eq, %0, %340 : vector<1x128xi32>
    %342 = vector.shape_cast %271 : vector<1x1xf32> to vector<1x1xf32>
    %343 = vector.broadcast %342 : vector<1x1xf32> to vector<1x128xf32>
    %344 = arith.select %341, %343, %339 : vector<1x128xi1>, vector<1x128xf32>
    %c5_i32_101 = arith.constant 5 : i32
    %345 = vector.broadcast %c5_i32_101 : i32 to vector<1x128xi32>
    %346 = arith.cmpi eq, %0, %345 : vector<1x128xi32>
    %347 = vector.shape_cast %283 : vector<1x1xf32> to vector<1x1xf32>
    %348 = vector.broadcast %347 : vector<1x1xf32> to vector<1x128xf32>
    %349 = arith.select %346, %348, %344 : vector<1x128xi1>, vector<1x128xf32>
    %c6_i32 = arith.constant 6 : i32
    %350 = vector.broadcast %c6_i32 : i32 to vector<1x128xi32>
    %351 = arith.cmpi eq, %0, %350 : vector<1x128xi32>
    %352 = vector.shape_cast %295 : vector<1x1xf32> to vector<1x1xf32>
    %353 = vector.broadcast %352 : vector<1x1xf32> to vector<1x128xf32>
    %354 = arith.select %351, %353, %349 : vector<1x128xi1>, vector<1x128xf32>
    %c7_i32 = arith.constant 7 : i32
    %355 = vector.broadcast %c7_i32 : i32 to vector<1x128xi32>
    %356 = arith.cmpi eq, %0, %355 : vector<1x128xi32>
    %357 = vector.shape_cast %307 : vector<1x1xf32> to vector<1x1xf32>
    %358 = vector.broadcast %357 : vector<1x1xf32> to vector<1x128xf32>
    %359 = arith.select %356, %358, %354 : vector<1x128xi1>, vector<1x128xf32>
    %c0_102 = arith.constant 0 : index
    %c0_103 = arith.constant 0 : index
    %c0_104 = arith.constant 0 : index
    %360 = vector.load %arg7[%c0_102, %c0_103, %c0_104] : memref<2x1x128xf32, #tpu.memory_space<vmem>>, vector<1x1x128xf32>
    %361 = vector.shape_cast %360 : vector<1x1x128xf32> to vector<1x128xf32>
    %362 = vector.shape_cast %359 : vector<1x128xf32> to vector<1x1x128xf32>
    tpu.vector_store %arg7[%c0_102, %c0_103, %c0_104], %362 {strides = array<i32>} : memref<2x1x128xf32, #tpu.memory_space<vmem>>, vector<1x1x128xf32>,
    %c1 = arith.constant 1 : index
    %c0_105 = arith.constant 0 : index
    %c0_106 = arith.constant 0 : index
    %363 = vector.load %arg1[%c1, %c0_105, %c0_106] : memref<2x128x3xf32, #tpu.memory_space<vmem>>, vector<1x128x3xf32>
    %364 = vector.shape_cast %363 : vector<1x128x3xf32> to vector<128x3xf32>
    %c1_107 = arith.constant 1 : index
    %c0_108 = arith.constant 0 : index
    %c0_109 = arith.constant 0 : index
    %365 = vector.load %arg2[%c1_107, %c0_108, %c0_109] : memref<2x3x128xf32, #tpu.memory_space<vmem>>, vector<1x3x128xf32>
    %366 = vector.shape_cast %365 : vector<1x3x128xf32> to vector<3x128xf32>
    %c1_110 = arith.constant 1 : index
    %c0_111 = arith.constant 0 : index
    %c0_112 = arith.constant 0 : index
    %367 = vector.load %arg3[%c1_110, %c0_111, %c0_112] : memref<2x128x6xf32, #tpu.memory_space<vmem>>, vector<1x128x6xf32>
    %368 = vector.shape_cast %367 : vector<1x128x6xf32> to vector<128x6xf32>
    %c1_113 = arith.constant 1 : index
    %c0_114 = arith.constant 0 : index
    %c0_115 = arith.constant 0 : index
    %369 = vector.load %arg4[%c1_113, %c0_114, %c0_115] : memref<2x1x128xi32, #tpu.memory_space<vmem>>, vector<1x1x128xi32>
    %370 = vector.shape_cast %369 : vector<1x1x128xi32> to vector<1x128xi32>
    %371 = vector.extract_strided_slice %368 {offsets = [0, 0], sizes = [128, 1], strides = [1, 1]} : vector<128x6xf32> to vector<128x1xf32>
    %cst_116 = arith.constant 1.500000e-01 : f32
    %372 = vector.broadcast %cst_116 : f32 to vector<128x1xf32>
    %373 = arith.cmpf ogt, %371, %372 : vector<128x1xf32>
    %374 = vector.extract_strided_slice %368 {offsets = [0, 1], sizes = [128, 1], strides = [1, 1]} : vector<128x6xf32> to vector<128x1xf32>
    %cst_117 = arith.constant 1.500000e-01 : f32
    %375 = vector.broadcast %cst_117 : f32 to vector<128x1xf32>
    %376 = arith.cmpf ogt, %374, %375 : vector<128x1xf32>
    %377 = vector.extract_strided_slice %368 {offsets = [0, 2], sizes = [128, 1], strides = [1, 1]} : vector<128x6xf32> to vector<128x1xf32>
    %cst_118 = arith.constant 1.500000e-01 : f32
    %378 = vector.broadcast %cst_118 : f32 to vector<128x1xf32>
    %379 = arith.cmpf ogt, %377, %378 : vector<128x1xf32>
    %380 = vector.extract_strided_slice %368 {offsets = [0, 3], sizes = [128, 1], strides = [1, 1]} : vector<128x6xf32> to vector<128x1xf32>
    %cst_119 = arith.constant 1.500000e-01 : f32
    %381 = vector.broadcast %cst_119 : f32 to vector<128x1xf32>
    %382 = arith.cmpf ogt, %380, %381 : vector<128x1xf32>
    %383 = vector.extract_strided_slice %368 {offsets = [0, 4], sizes = [128, 1], strides = [1, 1]} : vector<128x6xf32> to vector<128x1xf32>
    %cst_120 = arith.constant 1.500000e-01 : f32
    %384 = vector.broadcast %cst_120 : f32 to vector<128x1xf32>
    %385 = arith.cmpf ogt, %383, %384 : vector<128x1xf32>
    %386 = vector.extract_strided_slice %368 {offsets = [0, 5], sizes = [128, 1], strides = [1, 1]} : vector<128x6xf32> to vector<128x1xf32>
    %cst_121 = arith.constant 1.500000e-01 : f32
    %387 = vector.broadcast %cst_121 : f32 to vector<128x1xf32>
    %388 = arith.cmpf ogt, %386, %387 : vector<128x1xf32>
    %cst_122 = arith.constant 3.000000e+38 : f32
    %389 = vector.broadcast %cst_122 : f32 to vector<128x1xf32>
    %cst_123 = arith.constant 0.000000e+00 : f32
    %390 = vector.broadcast %cst_123 : f32 to vector<1x1xf32>
    %cst_124 = arith.constant 0.000000e+00 : f32
    %391 = vector.broadcast %cst_124 : f32 to vector<1x1xf32>
    %cst_125 = arith.constant 0.000000e+00 : f32
    %392 = vector.broadcast %cst_125 : f32 to vector<1x1xf32>
    %cst_126 = arith.constant 0.000000e+00 : f32
    %393 = vector.broadcast %cst_126 : f32 to vector<1x1xf32>
    %cst_127 = arith.constant 0.000000e+00 : f32
    %394 = vector.broadcast %cst_127 : f32 to vector<1x1xf32>
    %cst_128 = arith.constant 0.000000e+00 : f32
    %395 = vector.broadcast %cst_128 : f32 to vector<1x1xf32>
    %cst_129 = arith.constant 0.000000e+00 : f32
    %396 = vector.broadcast %cst_129 : f32 to vector<1x1xf32>
    %397 = vector.extract_strided_slice %364 {offsets = [0, 0], sizes = [128, 1], strides = [1, 1]} : vector<128x3xf32> to vector<128x1xf32>
    %398 = vector.extract_strided_slice %366 {offsets = [0, 0], sizes = [1, 128], strides = [1, 1]} : vector<3x128xf32> to vector<1x128xf32>
    %399 = vector.broadcast %397 : vector<128x1xf32> to vector<128x128xf32>
    %400 = vector.broadcast %398 : vector<1x128xf32> to vector<128x128xf32>
    %401 = arith.subf %399, %400 : vector<128x128xf32>
    %402 = vector.extract_strided_slice %364 {offsets = [0, 1], sizes = [128, 1], strides = [1, 1]} : vector<128x3xf32> to vector<128x1xf32>
    %403 = vector.extract_strided_slice %366 {offsets = [1, 0], sizes = [1, 128], strides = [1, 1]} : vector<3x128xf32> to vector<1x128xf32>
    %404 = vector.broadcast %402 : vector<128x1xf32> to vector<128x128xf32>
    %405 = vector.broadcast %403 : vector<1x128xf32> to vector<128x128xf32>
    %406 = arith.subf %404, %405 : vector<128x128xf32>
    %407 = vector.extract_strided_slice %364 {offsets = [0, 2], sizes = [128, 1], strides = [1, 1]} : vector<128x3xf32> to vector<128x1xf32>
    %408 = vector.extract_strided_slice %366 {offsets = [2, 0], sizes = [1, 128], strides = [1, 1]} : vector<3x128xf32> to vector<1x128xf32>
    %409 = vector.broadcast %407 : vector<128x1xf32> to vector<128x128xf32>
    %410 = vector.broadcast %408 : vector<1x128xf32> to vector<128x128xf32>
    %411 = arith.subf %409, %410 : vector<128x128xf32>
    %412 = arith.mulf %401, %401 : vector<128x128xf32>
    %413 = arith.mulf %406, %406 : vector<128x128xf32>
    %414 = arith.addf %412, %413 : vector<128x128xf32>
    %415 = arith.mulf %411, %411 : vector<128x128xf32>
    %416 = arith.addf %414, %415 : vector<128x128xf32>
    %cst_130 = arith.constant dense<0x7F800000> : vector<128xf32>
    %417 = vector.multi_reduction <minimumf>, %416, %cst_130 [1] : vector<128x128xf32> to vector<128xf32>
    %418 = vector.shape_cast %417 : vector<128xf32> to vector<128x1xf32>
    %419 = arith.minimumf %389, %418 : vector<128x1xf32>
    %cst_131 = arith.constant dense<0x7F800000> : vector<128xf32>
    %420 = vector.multi_reduction <minimumf>, %416, %cst_131 [0] : vector<128x128xf32> to vector<128xf32>
    %421 = vector.shape_cast %420 : vector<128xf32> to vector<1x128xf32>
    %422 = math.sqrt %421 : vector<1x128xf32>
    %423 = vector.shape_cast %422 : vector<1x128xf32> to vector<1x1x128xf32>
    %cst_132 = arith.constant dense<0.000000e+00> : vector<1xf32>
    %424 = vector.multi_reduction <add>, %423, %cst_132 [1, 2] : vector<1x1x128xf32> to vector<1xf32>
    %425 = vector.shape_cast %424 : vector<1xf32> to vector<1x1x1xf32>
    %426 = vector.extract %425[0, 0, 0] : f32 from vector<1x1x1xf32>
    %427 = vector.broadcast %426 : f32 to vector<1x1xf32>
    %428 = arith.addf %390, %427 : vector<1x1xf32>
    %c0_i32_133 = arith.constant 0 : i32
    %429 = vector.broadcast %c0_i32_133 : i32 to vector<1x128xi32>
    %430 = arith.cmpi eq, %370, %429 : vector<1x128xi32>
    %cst_134 = arith.constant 1.000000e+02 : f32
    %431 = vector.shape_cast %430 : vector<1x128xi1> to vector<1x128xi1>
    %432 = vector.broadcast %431 : vector<1x128xi1> to vector<128x128xi1>
    %433 = vector.broadcast %cst_134 : f32 to vector<128x128xf32>
    %434 = arith.select %432, %416, %433 : vector<128x128xi1>, vector<128x128xf32>
    %cst_135 = arith.constant dense<0x7F800000> : vector<128xf32>
    %435 = vector.multi_reduction <minimumf>, %434, %cst_135 [1] : vector<128x128xf32> to vector<128xf32>
    %436 = vector.shape_cast %435 : vector<128xf32> to vector<128x1xf32>
    %437 = arith.minimumf %389, %436 : vector<128x1xf32>
    %cst_136 = arith.constant 1.000000e+02 : f32
    %438 = vector.shape_cast %373 : vector<128x1xi1> to vector<128x1xi1>
    %439 = vector.broadcast %438 : vector<128x1xi1> to vector<128x128xi1>
    %440 = vector.broadcast %cst_136 : f32 to vector<128x128xf32>
    %441 = arith.select %439, %416, %440 : vector<128x128xi1>, vector<128x128xf32>
    %cst_137 = arith.constant dense<0x7F800000> : vector<128xf32>
    %442 = vector.multi_reduction <minimumf>, %441, %cst_137 [0] : vector<128x128xf32> to vector<128xf32>
    %443 = vector.shape_cast %442 : vector<128xf32> to vector<1x128xf32>
    %cst_138 = arith.constant 1.000000e+02 : f32
    %444 = vector.broadcast %cst_138 : f32 to vector<1x128xf32>
    %445 = arith.cmpf one, %443, %444 : vector<1x128xf32>
    %446 = arith.andi %430, %445 : vector<1x128xi1>
    %447 = math.sqrt %443 : vector<1x128xf32>
    %cst_139 = arith.constant 0.000000e+00 : f32
    %448 = vector.broadcast %cst_139 : f32 to vector<1x128xf32>
    %449 = arith.select %446, %447, %448 : vector<1x128xi1>, vector<1x128xf32>
    %450 = vector.shape_cast %449 : vector<1x128xf32> to vector<1x1x128xf32>
    %cst_140 = arith.constant dense<0.000000e+00> : vector<1xf32>
    %451 = vector.multi_reduction <add>, %450, %cst_140 [1, 2] : vector<1x1x128xf32> to vector<1xf32>
    %452 = vector.shape_cast %451 : vector<1xf32> to vector<1x1x1xf32>
    %453 = vector.extract %452[0, 0, 0] : f32 from vector<1x1x1xf32>
    %454 = vector.broadcast %453 : f32 to vector<1x1xf32>
    %455 = arith.addf %391, %454 : vector<1x1xf32>
    %c1_i32_141 = arith.constant 1 : i32
    %456 = vector.broadcast %c1_i32_141 : i32 to vector<1x128xi32>
    %457 = arith.cmpi eq, %370, %456 : vector<1x128xi32>
    %cst_142 = arith.constant 1.000000e+02 : f32
    %458 = vector.shape_cast %457 : vector<1x128xi1> to vector<1x128xi1>
    %459 = vector.broadcast %458 : vector<1x128xi1> to vector<128x128xi1>
    %460 = vector.broadcast %cst_142 : f32 to vector<128x128xf32>
    %461 = arith.select %459, %416, %460 : vector<128x128xi1>, vector<128x128xf32>
    %cst_143 = arith.constant dense<0x7F800000> : vector<128xf32>
    %462 = vector.multi_reduction <minimumf>, %461, %cst_143 [1] : vector<128x128xf32> to vector<128xf32>
    %463 = vector.shape_cast %462 : vector<128xf32> to vector<128x1xf32>
    %464 = arith.minimumf %389, %463 : vector<128x1xf32>
    %cst_144 = arith.constant 1.000000e+02 : f32
    %465 = vector.shape_cast %376 : vector<128x1xi1> to vector<128x1xi1>
    %466 = vector.broadcast %465 : vector<128x1xi1> to vector<128x128xi1>
    %467 = vector.broadcast %cst_144 : f32 to vector<128x128xf32>
    %468 = arith.select %466, %416, %467 : vector<128x128xi1>, vector<128x128xf32>
    %cst_145 = arith.constant dense<0x7F800000> : vector<128xf32>
    %469 = vector.multi_reduction <minimumf>, %468, %cst_145 [0] : vector<128x128xf32> to vector<128xf32>
    %470 = vector.shape_cast %469 : vector<128xf32> to vector<1x128xf32>
    %cst_146 = arith.constant 1.000000e+02 : f32
    %471 = vector.broadcast %cst_146 : f32 to vector<1x128xf32>
    %472 = arith.cmpf one, %470, %471 : vector<1x128xf32>
    %473 = arith.andi %457, %472 : vector<1x128xi1>
    %474 = math.sqrt %470 : vector<1x128xf32>
    %cst_147 = arith.constant 0.000000e+00 : f32
    %475 = vector.broadcast %cst_147 : f32 to vector<1x128xf32>
    %476 = arith.select %473, %474, %475 : vector<1x128xi1>, vector<1x128xf32>
    %477 = vector.shape_cast %476 : vector<1x128xf32> to vector<1x1x128xf32>
    %cst_148 = arith.constant dense<0.000000e+00> : vector<1xf32>
    %478 = vector.multi_reduction <add>, %477, %cst_148 [1, 2] : vector<1x1x128xf32> to vector<1xf32>
    %479 = vector.shape_cast %478 : vector<1xf32> to vector<1x1x1xf32>
    %480 = vector.extract %479[0, 0, 0] : f32 from vector<1x1x1xf32>
    %481 = vector.broadcast %480 : f32 to vector<1x1xf32>
    %482 = arith.addf %392, %481 : vector<1x1xf32>
    %c2_i32_149 = arith.constant 2 : i32
    %483 = vector.broadcast %c2_i32_149 : i32 to vector<1x128xi32>
    %484 = arith.cmpi eq, %370, %483 : vector<1x128xi32>
    %cst_150 = arith.constant 1.000000e+02 : f32
    %485 = vector.shape_cast %484 : vector<1x128xi1> to vector<1x128xi1>
    %486 = vector.broadcast %485 : vector<1x128xi1> to vector<128x128xi1>
    %487 = vector.broadcast %cst_150 : f32 to vector<128x128xf32>
    %488 = arith.select %486, %416, %487 : vector<128x128xi1>, vector<128x128xf32>
    %cst_151 = arith.constant dense<0x7F800000> : vector<128xf32>
    %489 = vector.multi_reduction <minimumf>, %488, %cst_151 [1] : vector<128x128xf32> to vector<128xf32>
    %490 = vector.shape_cast %489 : vector<128xf32> to vector<128x1xf32>
    %491 = arith.minimumf %389, %490 : vector<128x1xf32>
    %cst_152 = arith.constant 1.000000e+02 : f32
    %492 = vector.shape_cast %379 : vector<128x1xi1> to vector<128x1xi1>
    %493 = vector.broadcast %492 : vector<128x1xi1> to vector<128x128xi1>
    %494 = vector.broadcast %cst_152 : f32 to vector<128x128xf32>
    %495 = arith.select %493, %416, %494 : vector<128x128xi1>, vector<128x128xf32>
    %cst_153 = arith.constant dense<0x7F800000> : vector<128xf32>
    %496 = vector.multi_reduction <minimumf>, %495, %cst_153 [0] : vector<128x128xf32> to vector<128xf32>
    %497 = vector.shape_cast %496 : vector<128xf32> to vector<1x128xf32>
    %cst_154 = arith.constant 1.000000e+02 : f32
    %498 = vector.broadcast %cst_154 : f32 to vector<1x128xf32>
    %499 = arith.cmpf one, %497, %498 : vector<1x128xf32>
    %500 = arith.andi %484, %499 : vector<1x128xi1>
    %501 = math.sqrt %497 : vector<1x128xf32>
    %cst_155 = arith.constant 0.000000e+00 : f32
    %502 = vector.broadcast %cst_155 : f32 to vector<1x128xf32>
    %503 = arith.select %500, %501, %502 : vector<1x128xi1>, vector<1x128xf32>
    %504 = vector.shape_cast %503 : vector<1x128xf32> to vector<1x1x128xf32>
    %cst_156 = arith.constant dense<0.000000e+00> : vector<1xf32>
    %505 = vector.multi_reduction <add>, %504, %cst_156 [1, 2] : vector<1x1x128xf32> to vector<1xf32>
    %506 = vector.shape_cast %505 : vector<1xf32> to vector<1x1x1xf32>
    %507 = vector.extract %506[0, 0, 0] : f32 from vector<1x1x1xf32>
    %508 = vector.broadcast %507 : f32 to vector<1x1xf32>
    %509 = arith.addf %393, %508 : vector<1x1xf32>
    %c3_i32_157 = arith.constant 3 : i32
    %510 = vector.broadcast %c3_i32_157 : i32 to vector<1x128xi32>
    %511 = arith.cmpi eq, %370, %510 : vector<1x128xi32>
    %cst_158 = arith.constant 1.000000e+02 : f32
    %512 = vector.shape_cast %511 : vector<1x128xi1> to vector<1x128xi1>
    %513 = vector.broadcast %512 : vector<1x128xi1> to vector<128x128xi1>
    %514 = vector.broadcast %cst_158 : f32 to vector<128x128xf32>
    %515 = arith.select %513, %416, %514 : vector<128x128xi1>, vector<128x128xf32>
    %cst_159 = arith.constant dense<0x7F800000> : vector<128xf32>
    %516 = vector.multi_reduction <minimumf>, %515, %cst_159 [1] : vector<128x128xf32> to vector<128xf32>
    %517 = vector.shape_cast %516 : vector<128xf32> to vector<128x1xf32>
    %518 = arith.minimumf %389, %517 : vector<128x1xf32>
    %cst_160 = arith.constant 1.000000e+02 : f32
    %519 = vector.shape_cast %382 : vector<128x1xi1> to vector<128x1xi1>
    %520 = vector.broadcast %519 : vector<128x1xi1> to vector<128x128xi1>
    %521 = vector.broadcast %cst_160 : f32 to vector<128x128xf32>
    %522 = arith.select %520, %416, %521 : vector<128x128xi1>, vector<128x128xf32>
    %cst_161 = arith.constant dense<0x7F800000> : vector<128xf32>
    %523 = vector.multi_reduction <minimumf>, %522, %cst_161 [0] : vector<128x128xf32> to vector<128xf32>
    %524 = vector.shape_cast %523 : vector<128xf32> to vector<1x128xf32>
    %cst_162 = arith.constant 1.000000e+02 : f32
    %525 = vector.broadcast %cst_162 : f32 to vector<1x128xf32>
    %526 = arith.cmpf one, %524, %525 : vector<1x128xf32>
    %527 = arith.andi %511, %526 : vector<1x128xi1>
    %528 = math.sqrt %524 : vector<1x128xf32>
    %cst_163 = arith.constant 0.000000e+00 : f32
    %529 = vector.broadcast %cst_163 : f32 to vector<1x128xf32>
    %530 = arith.select %527, %528, %529 : vector<1x128xi1>, vector<1x128xf32>
    %531 = vector.shape_cast %530 : vector<1x128xf32> to vector<1x1x128xf32>
    %cst_164 = arith.constant dense<0.000000e+00> : vector<1xf32>
    %532 = vector.multi_reduction <add>, %531, %cst_164 [1, 2] : vector<1x1x128xf32> to vector<1xf32>
    %533 = vector.shape_cast %532 : vector<1xf32> to vector<1x1x1xf32>
    %534 = vector.extract %533[0, 0, 0] : f32 from vector<1x1x1xf32>
    %535 = vector.broadcast %534 : f32 to vector<1x1xf32>
    %536 = arith.addf %394, %535 : vector<1x1xf32>
    %c4_i32_165 = arith.constant 4 : i32
    %537 = vector.broadcast %c4_i32_165 : i32 to vector<1x128xi32>
    %538 = arith.cmpi eq, %370, %537 : vector<1x128xi32>
    %cst_166 = arith.constant 1.000000e+02 : f32
    %539 = vector.shape_cast %538 : vector<1x128xi1> to vector<1x128xi1>
    %540 = vector.broadcast %539 : vector<1x128xi1> to vector<128x128xi1>
    %541 = vector.broadcast %cst_166 : f32 to vector<128x128xf32>
    %542 = arith.select %540, %416, %541 : vector<128x128xi1>, vector<128x128xf32>
    %cst_167 = arith.constant dense<0x7F800000> : vector<128xf32>
    %543 = vector.multi_reduction <minimumf>, %542, %cst_167 [1] : vector<128x128xf32> to vector<128xf32>
    %544 = vector.shape_cast %543 : vector<128xf32> to vector<128x1xf32>
    %545 = arith.minimumf %389, %544 : vector<128x1xf32>
    %cst_168 = arith.constant 1.000000e+02 : f32
    %546 = vector.shape_cast %385 : vector<128x1xi1> to vector<128x1xi1>
    %547 = vector.broadcast %546 : vector<128x1xi1> to vector<128x128xi1>
    %548 = vector.broadcast %cst_168 : f32 to vector<128x128xf32>
    %549 = arith.select %547, %416, %548 : vector<128x128xi1>, vector<128x128xf32>
    %cst_169 = arith.constant dense<0x7F800000> : vector<128xf32>
    %550 = vector.multi_reduction <minimumf>, %549, %cst_169 [0] : vector<128x128xf32> to vector<128xf32>
    %551 = vector.shape_cast %550 : vector<128xf32> to vector<1x128xf32>
    %cst_170 = arith.constant 1.000000e+02 : f32
    %552 = vector.broadcast %cst_170 : f32 to vector<1x128xf32>
    %553 = arith.cmpf one, %551, %552 : vector<1x128xf32>
    %554 = arith.andi %538, %553 : vector<1x128xi1>
    %555 = math.sqrt %551 : vector<1x128xf32>
    %cst_171 = arith.constant 0.000000e+00 : f32
    %556 = vector.broadcast %cst_171 : f32 to vector<1x128xf32>
    %557 = arith.select %554, %555, %556 : vector<1x128xi1>, vector<1x128xf32>
    %558 = vector.shape_cast %557 : vector<1x128xf32> to vector<1x1x128xf32>
    %cst_172 = arith.constant dense<0.000000e+00> : vector<1xf32>
    %559 = vector.multi_reduction <add>, %558, %cst_172 [1, 2] : vector<1x1x128xf32> to vector<1xf32>
    %560 = vector.shape_cast %559 : vector<1xf32> to vector<1x1x1xf32>
    %561 = vector.extract %560[0, 0, 0] : f32 from vector<1x1x1xf32>
    %562 = vector.broadcast %561 : f32 to vector<1x1xf32>
    %563 = arith.addf %395, %562 : vector<1x1xf32>
    %c5_i32_173 = arith.constant 5 : i32
    %564 = vector.broadcast %c5_i32_173 : i32 to vector<1x128xi32>
    %565 = arith.cmpi eq, %370, %564 : vector<1x128xi32>
    %cst_174 = arith.constant 1.000000e+02 : f32
    %566 = vector.shape_cast %565 : vector<1x128xi1> to vector<1x128xi1>
    %567 = vector.broadcast %566 : vector<1x128xi1> to vector<128x128xi1>
    %568 = vector.broadcast %cst_174 : f32 to vector<128x128xf32>
    %569 = arith.select %567, %416, %568 : vector<128x128xi1>, vector<128x128xf32>
    %cst_175 = arith.constant dense<0x7F800000> : vector<128xf32>
    %570 = vector.multi_reduction <minimumf>, %569, %cst_175 [1] : vector<128x128xf32> to vector<128xf32>
    %571 = vector.shape_cast %570 : vector<128xf32> to vector<128x1xf32>
    %572 = arith.minimumf %389, %571 : vector<128x1xf32>
    %cst_176 = arith.constant 1.000000e+02 : f32
    %573 = vector.shape_cast %388 : vector<128x1xi1> to vector<128x1xi1>
    %574 = vector.broadcast %573 : vector<128x1xi1> to vector<128x128xi1>
    %575 = vector.broadcast %cst_176 : f32 to vector<128x128xf32>
    %576 = arith.select %574, %416, %575 : vector<128x128xi1>, vector<128x128xf32>
    %cst_177 = arith.constant dense<0x7F800000> : vector<128xf32>
    %577 = vector.multi_reduction <minimumf>, %576, %cst_177 [0] : vector<128x128xf32> to vector<128xf32>
    %578 = vector.shape_cast %577 : vector<128xf32> to vector<1x128xf32>
    %cst_178 = arith.constant 1.000000e+02 : f32
    %579 = vector.broadcast %cst_178 : f32 to vector<1x128xf32>
    %580 = arith.cmpf one, %578, %579 : vector<1x128xf32>
    %581 = arith.andi %565, %580 : vector<1x128xi1>
    %582 = math.sqrt %578 : vector<1x128xf32>
    %cst_179 = arith.constant 0.000000e+00 : f32
    %583 = vector.broadcast %cst_179 : f32 to vector<1x128xf32>
    %584 = arith.select %581, %582, %583 : vector<1x128xi1>, vector<1x128xf32>
    %585 = vector.shape_cast %584 : vector<1x128xf32> to vector<1x1x128xf32>
    %cst_180 = arith.constant dense<0.000000e+00> : vector<1xf32>
    %586 = vector.multi_reduction <add>, %585, %cst_180 [1, 2] : vector<1x1x128xf32> to vector<1xf32>
    %587 = vector.shape_cast %586 : vector<1xf32> to vector<1x1x1xf32>
    %588 = vector.extract %587[0, 0, 0] : f32 from vector<1x1x1xf32>
    %589 = vector.broadcast %588 : f32 to vector<1x1xf32>
    %590 = arith.addf %396, %589 : vector<1x1xf32>
    %591 = math.sqrt %419 : vector<128x1xf32>
    %592 = vector.shape_cast %591 : vector<128x1xf32> to vector<1x128x1xf32>
    %cst_181 = arith.constant dense<0.000000e+00> : vector<1xf32>
    %593 = vector.multi_reduction <add>, %592, %cst_181 [1, 2] : vector<1x128x1xf32> to vector<1xf32>
    %594 = vector.shape_cast %593 : vector<1xf32> to vector<1x1x1xf32>
    %595 = vector.extract %594[0, 0, 0] : f32 from vector<1x1x1xf32>
    %596 = vector.broadcast %595 : f32 to vector<1x1xf32>
    %597 = arith.addf %428, %596 : vector<1x1xf32>
    %cst_182 = arith.constant 1.000000e+02 : f32
    %598 = vector.broadcast %cst_182 : f32 to vector<128x1xf32>
    %599 = arith.cmpf one, %437, %598 : vector<128x1xf32>
    %600 = arith.andi %373, %599 : vector<128x1xi1>
    %601 = math.sqrt %437 : vector<128x1xf32>
    %cst_183 = arith.constant 0.000000e+00 : f32
    %602 = vector.broadcast %cst_183 : f32 to vector<128x1xf32>
    %603 = arith.select %600, %601, %602 : vector<128x1xi1>, vector<128x1xf32>
    %604 = vector.shape_cast %603 : vector<128x1xf32> to vector<1x128x1xf32>
    %cst_184 = arith.constant dense<0.000000e+00> : vector<1xf32>
    %605 = vector.multi_reduction <add>, %604, %cst_184 [1, 2] : vector<1x128x1xf32> to vector<1xf32>
    %606 = vector.shape_cast %605 : vector<1xf32> to vector<1x1x1xf32>
    %607 = vector.extract %606[0, 0, 0] : f32 from vector<1x1x1xf32>
    %608 = vector.broadcast %607 : f32 to vector<1x1xf32>
    %609 = arith.addf %608, %455 : vector<1x1xf32>
    %cst_185 = arith.constant 1.000000e+02 : f32
    %610 = vector.broadcast %cst_185 : f32 to vector<128x1xf32>
    %611 = arith.cmpf one, %464, %610 : vector<128x1xf32>
    %612 = arith.andi %376, %611 : vector<128x1xi1>
    %613 = math.sqrt %464 : vector<128x1xf32>
    %cst_186 = arith.constant 0.000000e+00 : f32
    %614 = vector.broadcast %cst_186 : f32 to vector<128x1xf32>
    %615 = arith.select %612, %613, %614 : vector<128x1xi1>, vector<128x1xf32>
    %616 = vector.shape_cast %615 : vector<128x1xf32> to vector<1x128x1xf32>
    %cst_187 = arith.constant dense<0.000000e+00> : vector<1xf32>
    %617 = vector.multi_reduction <add>, %616, %cst_187 [1, 2] : vector<1x128x1xf32> to vector<1xf32>
    %618 = vector.shape_cast %617 : vector<1xf32> to vector<1x1x1xf32>
    %619 = vector.extract %618[0, 0, 0] : f32 from vector<1x1x1xf32>
    %620 = vector.broadcast %619 : f32 to vector<1x1xf32>
    %621 = arith.addf %620, %482 : vector<1x1xf32>
    %cst_188 = arith.constant 1.000000e+02 : f32
    %622 = vector.broadcast %cst_188 : f32 to vector<128x1xf32>
    %623 = arith.cmpf one, %491, %622 : vector<128x1xf32>
    %624 = arith.andi %379, %623 : vector<128x1xi1>
    %625 = math.sqrt %491 : vector<128x1xf32>
    %cst_189 = arith.constant 0.000000e+00 : f32
    %626 = vector.broadcast %cst_189 : f32 to vector<128x1xf32>
    %627 = arith.select %624, %625, %626 : vector<128x1xi1>, vector<128x1xf32>
    %628 = vector.shape_cast %627 : vector<128x1xf32> to vector<1x128x1xf32>
    %cst_190 = arith.constant dense<0.000000e+00> : vector<1xf32>
    %629 = vector.multi_reduction <add>, %628, %cst_190 [1, 2] : vector<1x128x1xf32> to vector<1xf32>
    %630 = vector.shape_cast %629 : vector<1xf32> to vector<1x1x1xf32>
    %631 = vector.extract %630[0, 0, 0] : f32 from vector<1x1x1xf32>
    %632 = vector.broadcast %631 : f32 to vector<1x1xf32>
    %633 = arith.addf %632, %509 : vector<1x1xf32>
    %cst_191 = arith.constant 1.000000e+02 : f32
    %634 = vector.broadcast %cst_191 : f32 to vector<128x1xf32>
    %635 = arith.cmpf one, %518, %634 : vector<128x1xf32>
    %636 = arith.andi %382, %635 : vector<128x1xi1>
    %637 = math.sqrt %518 : vector<128x1xf32>
    %cst_192 = arith.constant 0.000000e+00 : f32
    %638 = vector.broadcast %cst_192 : f32 to vector<128x1xf32>
    %639 = arith.select %636, %637, %638 : vector<128x1xi1>, vector<128x1xf32>
    %640 = vector.shape_cast %639 : vector<128x1xf32> to vector<1x128x1xf32>
    %cst_193 = arith.constant dense<0.000000e+00> : vector<1xf32>
    %641 = vector.multi_reduction <add>, %640, %cst_193 [1, 2] : vector<1x128x1xf32> to vector<1xf32>
    %642 = vector.shape_cast %641 : vector<1xf32> to vector<1x1x1xf32>
    %643 = vector.extract %642[0, 0, 0] : f32 from vector<1x1x1xf32>
    %644 = vector.broadcast %643 : f32 to vector<1x1xf32>
    %645 = arith.addf %644, %536 : vector<1x1xf32>
    %cst_194 = arith.constant 1.000000e+02 : f32
    %646 = vector.broadcast %cst_194 : f32 to vector<128x1xf32>
    %647 = arith.cmpf one, %545, %646 : vector<128x1xf32>
    %648 = arith.andi %385, %647 : vector<128x1xi1>
    %649 = math.sqrt %545 : vector<128x1xf32>
    %cst_195 = arith.constant 0.000000e+00 : f32
    %650 = vector.broadcast %cst_195 : f32 to vector<128x1xf32>
    %651 = arith.select %648, %649, %650 : vector<128x1xi1>, vector<128x1xf32>
    %652 = vector.shape_cast %651 : vector<128x1xf32> to vector<1x128x1xf32>
    %cst_196 = arith.constant dense<0.000000e+00> : vector<1xf32>
    %653 = vector.multi_reduction <add>, %652, %cst_196 [1, 2] : vector<1x128x1xf32> to vector<1xf32>
    %654 = vector.shape_cast %653 : vector<1xf32> to vector<1x1x1xf32>
    %655 = vector.extract %654[0, 0, 0] : f32 from vector<1x1x1xf32>
    %656 = vector.broadcast %655 : f32 to vector<1x1xf32>
    %657 = arith.addf %656, %563 : vector<1x1xf32>
    %cst_197 = arith.constant 1.000000e+02 : f32
    %658 = vector.broadcast %cst_197 : f32 to vector<128x1xf32>
    %659 = arith.cmpf one, %572, %658 : vector<128x1xf32>
    %660 = arith.andi %388, %659 : vector<128x1xi1>
    %661 = math.sqrt %572 : vector<128x1xf32>
    %cst_198 = arith.constant 0.000000e+00 : f32
    %662 = vector.broadcast %cst_198 : f32 to vector<128x1xf32>
    %663 = arith.select %660, %661, %662 : vector<128x1xi1>, vector<128x1xf32>
    %664 = vector.shape_cast %663 : vector<128x1xf32> to vector<1x128x1xf32>
    %cst_199 = arith.constant dense<0.000000e+00> : vector<1xf32>
    %665 = vector.multi_reduction <add>, %664, %cst_199 [1, 2] : vector<1x128x1xf32> to vector<1xf32>
    %666 = vector.shape_cast %665 : vector<1xf32> to vector<1x1x1xf32>
    %667 = vector.extract %666[0, 0, 0] : f32 from vector<1x1x1xf32>
    %668 = vector.broadcast %667 : f32 to vector<1x1xf32>
    %669 = arith.addf %668, %590 : vector<1x1xf32>
    %c1_200 = arith.constant 1 : index
    %c0_201 = arith.constant 0 : index
    %c0_202 = arith.constant 0 : index
    %670 = vector.load %arg5[%c1_200, %c0_201, %c0_202] : memref<2x21x3xf32, #tpu.memory_space<vmem>>, vector<1x21x3xf32>
    %671 = vector.shape_cast %670 : vector<1x21x3xf32> to vector<21x3xf32>
    %c1_203 = arith.constant 1 : index
    %c0_204 = arith.constant 0 : index
    %c0_205 = arith.constant 0 : index
    %672 = vector.load %arg6[%c1_203, %c0_204, %c0_205] : memref<2x21x3xf32, #tpu.memory_space<vmem>>, vector<1x21x3xf32>
    %673 = vector.shape_cast %672 : vector<1x21x3xf32> to vector<21x3xf32>
    %674 = arith.subf %671, %673 : vector<21x3xf32>
    %675 = arith.mulf %674, %674 : vector<21x3xf32>
    %676 = vector.shape_cast %675 : vector<21x3xf32> to vector<1x21x3xf32>
    %cst_206 = arith.constant dense<0.000000e+00> : vector<1xf32>
    %677 = vector.multi_reduction <add>, %676, %cst_206 [1, 2] : vector<1x21x3xf32> to vector<1xf32>
    %678 = vector.shape_cast %677 : vector<1xf32> to vector<1x1x1xf32>
    %679 = vector.extract %678[0, 0, 0] : f32 from vector<1x1x1xf32>
    %680 = vector.broadcast %679 : f32 to vector<1x1xf32>
    %c0_i32_207 = arith.constant 0 : i32
    %681 = vector.broadcast %c0_i32_207 : i32 to vector<1x128xi32>
    %682 = arith.cmpi eq, %0, %681 : vector<1x128xi32>
    %cst_208 = arith.constant 0.000000e+00 : f32
    %683 = vector.shape_cast %597 : vector<1x1xf32> to vector<1x1xf32>
    %684 = vector.broadcast %683 : vector<1x1xf32> to vector<1x128xf32>
    %685 = vector.broadcast %cst_208 : f32 to vector<1x128xf32>
    %686 = arith.select %682, %684, %685 : vector<1x128xi1>, vector<1x128xf32>
    %c1_i32_209 = arith.constant 1 : i32
    %687 = vector.broadcast %c1_i32_209 : i32 to vector<1x128xi32>
    %688 = arith.cmpi eq, %0, %687 : vector<1x128xi32>
    %689 = vector.shape_cast %680 : vector<1x1xf32> to vector<1x1xf32>
    %690 = vector.broadcast %689 : vector<1x1xf32> to vector<1x128xf32>
    %691 = arith.select %688, %690, %686 : vector<1x128xi1>, vector<1x128xf32>
    %c2_i32_210 = arith.constant 2 : i32
    %692 = vector.broadcast %c2_i32_210 : i32 to vector<1x128xi32>
    %693 = arith.cmpi eq, %0, %692 : vector<1x128xi32>
    %694 = vector.shape_cast %609 : vector<1x1xf32> to vector<1x1xf32>
    %695 = vector.broadcast %694 : vector<1x1xf32> to vector<1x128xf32>
    %696 = arith.select %693, %695, %691 : vector<1x128xi1>, vector<1x128xf32>
    %c3_i32_211 = arith.constant 3 : i32
    %697 = vector.broadcast %c3_i32_211 : i32 to vector<1x128xi32>
    %698 = arith.cmpi eq, %0, %697 : vector<1x128xi32>
    %699 = vector.shape_cast %621 : vector<1x1xf32> to vector<1x1xf32>
    %700 = vector.broadcast %699 : vector<1x1xf32> to vector<1x128xf32>
    %701 = arith.select %698, %700, %696 : vector<1x128xi1>, vector<1x128xf32>
    %c4_i32_212 = arith.constant 4 : i32
    %702 = vector.broadcast %c4_i32_212 : i32 to vector<1x128xi32>
    %703 = arith.cmpi eq, %0, %702 : vector<1x128xi32>
    %704 = vector.shape_cast %633 : vector<1x1xf32> to vector<1x1xf32>
    %705 = vector.broadcast %704 : vector<1x1xf32> to vector<1x128xf32>
    %706 = arith.select %703, %705, %701 : vector<1x128xi1>, vector<1x128xf32>
    %c5_i32_213 = arith.constant 5 : i32
    %707 = vector.broadcast %c5_i32_213 : i32 to vector<1x128xi32>
    %708 = arith.cmpi eq, %0, %707 : vector<1x128xi32>
    %709 = vector.shape_cast %645 : vector<1x1xf32> to vector<1x1xf32>
    %710 = vector.broadcast %709 : vector<1x1xf32> to vector<1x128xf32>
    %711 = arith.select %708, %710, %706 : vector<1x128xi1>, vector<1x128xf32>
    %c6_i32_214 = arith.constant 6 : i32
    %712 = vector.broadcast %c6_i32_214 : i32 to vector<1x128xi32>
    %713 = arith.cmpi eq, %0, %712 : vector<1x128xi32>
    %714 = vector.shape_cast %657 : vector<1x1xf32> to vector<1x1xf32>
    %715 = vector.broadcast %714 : vector<1x1xf32> to vector<1x128xf32>
    %716 = arith.select %713, %715, %711 : vector<1x128xi1>, vector<1x128xf32>
    %c7_i32_215 = arith.constant 7 : i32
    %717 = vector.broadcast %c7_i32_215 : i32 to vector<1x128xi32>
    %718 = arith.cmpi eq, %0, %717 : vector<1x128xi32>
    %719 = vector.shape_cast %669 : vector<1x1xf32> to vector<1x1xf32>
    %720 = vector.broadcast %719 : vector<1x1xf32> to vector<1x128xf32>
    %721 = arith.select %718, %720, %716 : vector<1x128xi1>, vector<1x128xf32>
    %c1_216 = arith.constant 1 : index
    %c0_217 = arith.constant 0 : index
    %c0_218 = arith.constant 0 : index
    %722 = vector.load %arg7[%c1_216, %c0_217, %c0_218] : memref<2x1x128xf32, #tpu.memory_space<vmem>>, vector<1x1x128xf32>
    %723 = vector.shape_cast %722 : vector<1x1x128xf32> to vector<1x128xf32>
    %724 = vector.shape_cast %721 : vector<1x128xf32> to vector<1x1x128xf32>
    tpu.vector_store %arg7[%c1_216, %c0_217, %c0_218], %724 {strides = array<i32>} : memref<2x1x128xf32, #tpu.memory_space<vmem>>, vector<1x1x128xf32>,
    return
  }
  func.func @transform_0(%arg0: i32) -> (i32, i32, i32) {
    %c0_i32 = arith.constant 0 : i32
    %c0_i32_0 = arith.constant 0 : i32
    %c0_i32_1 = arith.constant 0 : i32
    return %arg0, %c0_i32, %c0_i32_0 : i32, i32, i32
  }
  func.func @transform_1(%arg0: i32) -> (i32, i32, i32) {
    %c0_i32 = arith.constant 0 : i32
    %c0_i32_0 = arith.constant 0 : i32
    %c0_i32_1 = arith.constant 0 : i32
    return %arg0, %c0_i32, %c0_i32_0 : i32, i32, i32
  }
  func.func @transform_2(%arg0: i32) -> (i32, i32, i32) {
    %c0_i32 = arith.constant 0 : i32
    %c0_i32_0 = arith.constant 0 : i32
    %c0_i32_1 = arith.constant 0 : i32
    return %arg0, %c0_i32, %c0_i32_0 : i32, i32, i32
  }
  func.func @transform_3(%arg0: i32) -> (i32, i32, i32) {
    %c0_i32 = arith.constant 0 : i32
    %c0_i32_0 = arith.constant 0 : i32
    %c0_i32_1 = arith.constant 0 : i32
    return %arg0, %c0_i32, %c0_i32_0 : i32, i32, i32
  }
  func.func @transform_4(%arg0: i32) -> (i32, i32, i32) {
    %c0_i32 = arith.constant 0 : i32
    %c0_i32_0 = arith.constant 0 : i32
    %c0_i32_1 = arith.constant 0 : i32
    return %arg0, %c0_i32, %c0_i32_0 : i32, i32, i32
  }
  func.func @transform_5(%arg0: i32) -> (i32, i32, i32) {
    %c0_i32 = arith.constant 0 : i32
    %c0_i32_0 = arith.constant 0 : i32
    %c0_i32_1 = arith.constant 0 : i32
    return %arg0, %c0_i32, %c0_i32_0 : i32, i32, i32
  }
  func.func @transform_6(%arg0: i32) -> (i32, i32, i32) {
    %c0_i32 = arith.constant 0 : i32
    %c0_i32_0 = arith.constant 0 : i32
    %c0_i32_1 = arith.constant 0 : i32
    return %arg0, %c0_i32, %c0_i32_0 : i32, i32, i32
  }
}

</mosaic_0001>

<llo_original>
// kernel: tpu_custom_call.1
$region0: #{tpu_custom_call.1}
  #allocation0 [shape = 'u32[]', space=smem, size = 0x4, offset = 0x4, fixed_abs, tag = 'smem constant byte address 0x4 - core index']
  #allocation1 [shape = 'u32[144,128]{1,0:T(1,128)}', space=vmem, size = 0x12000, scoped, tag = 'internal scratch']
  %s0 = inlined_call_operand.vmem [shape: f32[4,128,3], index: 0, kind: input, shape index: {}]
  %s1 = inlined_call_operand.vmem [shape: f32[4,3,128], index: 1, kind: input, shape index: {}]
  %s2 = inlined_call_operand.vmem [shape: f32[4,128,6], index: 2, kind: input, shape index: {}]
  %s3 = inlined_call_operand.vmem [shape: s32[4,1,128], index: 3, kind: input, shape index: {}]
  %s4 = inlined_call_operand.vmem [shape: f32[4,21,3], index: 4, kind: input, shape index: {}]
  %s5 = inlined_call_operand.vmem [shape: f32[4,21,3], index: 5, kind: input, shape index: {}]
  %s6 = inlined_call_operand.hbm [shape: f32[4,1,128], index: 6, kind: output, shape index: {}]
  %s7 = sld [smem:[#allocation0]]
  $region57: #{tpu_custom_call.1} parent=0
    _
  %s9 = ssub.s32 1, %s7
  %s10 = scalar_select 0, %s9, %s7
  $region1: #{tpu_custom_call.1} parent=0
    #allocation2 [shape = 'u8[2048]{0}', space=vmem, size = 0x800, scoped, tag = 'output window, operand 0']
    #allocation3 [shape = 's32[2]{0}', space=sflag, size = 0x8, scoped, tag = 'scoped memory for tpu_custom_call.1']
    %11 = vsyncpa [#allocation3], 0
    %s12 = scalar_lea.sflag [#allocation3], 1
    %13 = vsyncpa %s12, 0
    loop: start=0, step=1, limit=4
    $region2: #{tpu_custom_call.1} parent=1 // loop_pre_header
      _
    $region3: #{tpu_custom_call.1} parent=1 // loop_header
      %s15 = sphi 0, %s19
      %p16 = scmp.ge.s32.totalorder %s15, 4
      %s25 = sphi 0, %s27
      %s28 = sphi 0, %s25
      %s29 = sphi 0, %s28
      %s45 = sphi 0, %s29
      %s51 = sphi 0, %s53
      %s54 = sphi 0, %s51
      %s55 = sphi 0, %s54
      %s71 = sphi 0, %s55
      %s77 = sphi 0, %s79
      %s80 = sphi 0, %s77
      %s81 = sphi 0, %s80
      %s97 = sphi 0, %s81
      %s103 = sphi 0, %s105
      %s106 = sphi 0, %s103
      %s107 = sphi 0, %s106
      %s123 = sphi 0, %s107
      %s129 = sphi 0, %s131
      %s132 = sphi 0, %s129
      %s133 = sphi 0, %s132
      %s149 = sphi 0, %s133
      %s155 = sphi 0, %s157
      %s158 = sphi 0, %s155
      %s159 = sphi 0, %s158
      %s175 = sphi 0, %s159
      %s181 = sphi 0, %s183
      %s184 = sphi 0, %s181
      %s185 = sphi 0, %s184
      %s201 = sphi 0, %s185
    $region4: #{tpu_custom_call.1} parent=1 // loop_header_branch
      %18 = sbr.rel (%p16) target = $region8
    $region5: #{tpu_custom_call.1} parent=1 // loop_body
      %s20 = ssub.s32 %s15, 1
      %s21 = ssub.s32 %s15, 2
      %s22 = sadd.s32 %s15, 1
      %s23 = ssub.s32 %s15, %s22
      %p24 = scmp.eq.s32.totalorder %s23, 0
      %s26 = sadd.s32 %s25, 1
      %s27 = scalar_select %p24, %s25, %s26
      %p30 = pneg %p24
      %p31 = scmp.eq.s32.totalorder %s15, 1
      %p32 = por %p30, %p31
      %p33 = scmp.ne.s32.totalorder %s25, %s28
      %p34 = scmp.eq.s32.totalorder %s15, 0
      %p35 = por %p33, %p34
      %p36 = scmp.ne.s32.totalorder %s25, %s28
      %p37 = scmp.eq.s32.totalorder %s20, 1
      %p38 = por %p36, %p37
      %p39 = scmp.ne.s32.totalorder %s28, %s29
      %p40 = scmp.eq.s32.totalorder %s20, 0
      %p41 = por %p39, %p40
      %p42 = scmp.ne.s32.totalorder %s28, %s29
      %p43 = scmp.eq.s32.totalorder %s21, 1
      %p44 = por %p42, %p43
      %p46 = scmp.ne.s32.totalorder %s29, %s45
      %p47 = scmp.eq.s32.totalorder %s21, 0
      %p48 = por %p46, %p47
      %s49 = ssub.s32 %s15, %s22
      %p50 = scmp.eq.s32.totalorder %s49, 0
      %s52 = sadd.s32 %s51, 1
      %s53 = scalar_select %p50, %s51, %s52
      %p56 = pneg %p50
      %p57 = scmp.eq.s32.totalorder %s15, 1
      %p58 = por %p56, %p57
      %p59 = scmp.ne.s32.totalorder %s51, %s54
      %p60 = scmp.eq.s32.totalorder %s15, 0
      %p61 = por %p59, %p60
      %p62 = scmp.ne.s32.totalorder %s51, %s54
      %p63 = scmp.eq.s32.totalorder %s20, 1
      %p64 = por %p62, %p63
      %p65 = scmp.ne.s32.totalorder %s54, %s55
      %p66 = scmp.eq.s32.totalorder %s20, 0
      %p67 = por %p65, %p66
      %p68 = scmp.ne.s32.totalorder %s54, %s55
      %p69 = scmp.eq.s32.totalorder %s21, 1
      %p70 = por %p68, %p69
      %p72 = scmp.ne.s32.totalorder %s55, %s71
      %p73 = scmp.eq.s32.totalorder %s21, 0
      %p74 = por %p72, %p73
      %s75 = ssub.s32 %s15, %s22
      %p76 = scmp.eq.s32.totalorder %s75, 0
      %s78 = sadd.s32 %s77, 1
      %s79 = scalar_select %p76, %s77, %s78
      %p82 = pneg %p76
      %p83 = scmp.eq.s32.totalorder %s15, 1
      %p84 = por %p82, %p83
      %p85 = scmp.ne.s32.totalorder %s77, %s80
      %p86 = scmp.eq.s32.totalorder %s15, 0
      %p87 = por %p85, %p86
      %p88 = scmp.ne.s32.totalorder %s77, %s80
      %p89 = scmp.eq.s32.totalorder %s20, 1
      %p90 = por %p88, %p89
      %p91 = scmp.ne.s32.totalorder %s80, %s81
      %p92 = scmp.eq.s32.totalorder %s20, 0
      %p93 = por %p91, %p92
      %p94 = scmp.ne.s32.totalorder %s80, %s81
      %p95 = scmp.eq.s32.totalorder %s21, 1
      %p96 = por %p94, %p95
      %p98 = scmp.ne.s32.totalorder %s81, %s97
      %p99 = scmp.eq.s32.totalorder %s21, 0
      %p100 = por %p98, %p99
      %s101 = ssub.s32 %s15, %s22
      %p102 = scmp.eq.s32.totalorder %s101, 0
      %s104 = sadd.s32 %s103, 1
      %s105 = scalar_select %p102, %s103, %s104
      %p108 = pneg %p102
      %p109 = scmp.eq.s32.totalorder %s15, 1
      %p110 = por %p108, %p109
      %p111 = scmp.ne.s32.totalorder %s103, %s106
      %p112 = scmp.eq.s32.totalorder %s15, 0
      %p113 = por %p111, %p112
      %p114 = scmp.ne.s32.totalorder %s103, %s106
      %p115 = scmp.eq.s32.totalorder %s20, 1
      %p116 = por %p114, %p115
      %p117 = scmp.ne.s32.totalorder %s106, %s107
      %p118 = scmp.eq.s32.totalorder %s20, 0
      %p119 = por %p117, %p118
      %p120 = scmp.ne.s32.totalorder %s106, %s107
      %p121 = scmp.eq.s32.totalorder %s21, 1
      %p122 = por %p120, %p121
      %p124 = scmp.ne.s32.totalorder %s107, %s123
      %p125 = scmp.eq.s32.totalorder %s21, 0
      %p126 = por %p124, %p125
      %s127 = ssub.s32 %s15, %s22
      %p128 = scmp.eq.s32.totalorder %s127, 0
      %s130 = sadd.s32 %s129, 1
      %s131 = scalar_select %p128, %s129, %s130
      %p134 = pneg %p128
      %p135 = scmp.eq.s32.totalorder %s15, 1
      %p136 = por %p134, %p135
      %p137 = scmp.ne.s32.totalorder %s129, %s132
      %p138 = scmp.eq.s32.totalorder %s15, 0
      %p139 = por %p137, %p138
      %p140 = scmp.ne.s32.totalorder %s129, %s132
      %p141 = scmp.eq.s32.totalorder %s20, 1
      %p142 = por %p140, %p141
      %p143 = scmp.ne.s32.totalorder %s132, %s133
      %p144 = scmp.eq.s32.totalorder %s20, 0
      %p145 = por %p143, %p144
      %p146 = scmp.ne.s32.totalorder %s132, %s133
      %p147 = scmp.eq.s32.totalorder %s21, 1
      %p148 = por %p146, %p147
      %p150 = scmp.ne.s32.totalorder %s133, %s149
      %p151 = scmp.eq.s32.totalorder %s21, 0
      %p152 = por %p150, %p151
      %s153 = ssub.s32 %s15, %s22
      %p154 = scmp.eq.s32.totalorder %s153, 0
      %s156 = sadd.s32 %s155, 1
      %s157 = scalar_select %p154, %s155, %s156
      %p160 = pneg %p154
      %p161 = scmp.eq.s32.totalorder %s15, 1
      %p162 = por %p160, %p161
      %p163 = scmp.ne.s32.totalorder %s155, %s158
      %p164 = scmp.eq.s32.totalorder %s15, 0
      %p165 = por %p163, %p164
      %p166 = scmp.ne.s32.totalorder %s155, %s158
      %p167 = scmp.eq.s32.totalorder %s20, 1
      %p168 = por %p166, %p167
      %p169 = scmp.ne.s32.totalorder %s158, %s159
      %p170 = scmp.eq.s32.totalorder %s20, 0
      %p171 = por %p169, %p170
      %p172 = scmp.ne.s32.totalorder %s158, %s159
      %p173 = scmp.eq.s32.totalorder %s21, 1
      %p174 = por %p172, %p173
      %p176 = scmp.ne.s32.totalorder %s159, %s175
      %p177 = scmp.eq.s32.totalorder %s21, 0
      %p178 = por %p176, %p177
      %s179 = ssub.s32 %s15, %s22
      %p180 = scmp.eq.s32.totalorder %s179, 0
      %s182 = sadd.s32 %s181, 1
      %s183 = scalar_select %p180, %s181, %s182
      %p186 = pneg %p180
      %p187 = scmp.eq.s32.totalorder %s15, 1
      %p188 = por %p186, %p187
      %p189 = scmp.ne.s32.totalorder %s181, %s184
      %p190 = scmp.eq.s32.totalorder %s15, 0
      %p191 = por %p189, %p190
      %p192 = scmp.ne.s32.totalorder %s181, %s184
      %p193 = scmp.eq.s32.totalorder %s20, 1
      %p194 = por %p192, %p193
      %p195 = scmp.ne.s32.totalorder %s184, %s185
      %p196 = scmp.eq.s32.totalorder %s20, 0
      %p197 = por %p195, %p196
      %p198 = scmp.ne.s32.totalorder %s184, %s185
      %p199 = scmp.eq.s32.totalorder %s21, 1
      %p200 = por %p198, %p199
      %p202 = scmp.ne.s32.totalorder %s185, %s201
      %p203 = scmp.eq.s32.totalorder %s21, 0
      %p204 = por %p202, %p203
      %p205 = scmp.le.s32.totalorder 1, %s15
      %p206 = scmp.lt.s32.totalorder %s15, 3
      %p207 = pnand %p205, %p206
      %p208 = pneg %p207
      // Predicated region
      $region9: #{tpu_custom_call.1} parent=5 // pred_check
        _
      $region10: #{tpu_custom_call.1} parent=5 // pred_check_branch
        %210 = sbr.rel (%p207) target = $region12
      $region11: #{tpu_custom_call.1} parent=5 // pred_region
        %s211 = ssub.s32 %s15, 1
      $region12: #{tpu_custom_call.1} parent=5 // pred_fallthru
        _
      %p212 = scmp.lt.s32.totalorder %s15, 2
      // Predicated region
      $region13: #{tpu_custom_call.1} parent=5 // pred_check
        %p213 = pneg %p212
      $region14: #{tpu_custom_call.1} parent=5 // pred_check_branch
        %215 = sbr.rel (%p213) target = $region16
      $region15: #{tpu_custom_call.1} parent=5 // pred_region
        // Predicated region
        $region17: #{tpu_custom_call.1} parent=15 // pred_check
          %p216 = pneg %p35
        $region18: #{tpu_custom_call.1} parent=15 // pred_check_branch
          %218 = sbr.rel (%p216) target = $region20
        $region19: #{tpu_custom_call.1} parent=15 // pred_region
          %s219 = smul.u32 2, %s15
          %p220 = scmp.lt.s32.totalorder %s219, 3
          %s221 = scalar_select %p220, %s219, 3
          %s222 = smul.addr %s221, 16
          %s223 = smul.addr %s222, 8
          %s224 = scalar_lea.vmem %s0, %s223
          %s225 = smul.u32 2, %s15
        $region20: #{tpu_custom_call.1} parent=15 // pred_fallthru
          _
        // Predicated region
        $region21: #{tpu_custom_call.1} parent=15 // pred_check
          %p226 = pneg %p61
        $region22: #{tpu_custom_call.1} parent=15 // pred_check_branch
          %228 = sbr.rel (%p226) target = $region24
        $region23: #{tpu_custom_call.1} parent=15 // pred_region
          %s229 = smul.u32 2, %s15
          %p230 = scmp.lt.s32.totalorder %s229, 3
          %s231 = scalar_select %p230, %s229, 3
          %s232 = smul.addr %s231, 4
          %s233 = scalar_lea.vmem %s1, %s232
          %s234 = smul.u32 2, %s15
        $region24: #{tpu_custom_call.1} parent=15 // pred_fallthru
          _
        // Predicated region
        $region25: #{tpu_custom_call.1} parent=15 // pred_check
          %p235 = pneg %p87
        $region26: #{tpu_custom_call.1} parent=15 // pred_check_branch
          %237 = sbr.rel (%p235) target = $region28
        $region27: #{tpu_custom_call.1} parent=15 // pred_region
          %s238 = smul.u32 2, %s15
          %p239 = scmp.lt.s32.totalorder %s238, 3
          %s240 = scalar_select %p239, %s238, 3
          %s241 = smul.addr %s240, 16
          %s242 = smul.addr %s241, 8
          %s243 = scalar_lea.vmem %s2, %s242
          %s244 = smul.u32 2, %s15
        $region28: #{tpu_custom_call.1} parent=15 // pred_fallthru
          _
        // Predicated region
        $region29: #{tpu_custom_call.1} parent=15 // pred_check
          %p245 = pneg %p113
        $region30: #{tpu_custom_call.1} parent=15 // pred_check_branch
          %247 = sbr.rel (%p245) target = $region32
        $region31: #{tpu_custom_call.1} parent=15 // pred_region
          %s248 = smul.u32 2, %s15
          %p249 = scmp.lt.s32.totalorder %s248, 3
          %s250 = scalar_select %p249, %s248, 3
          %s251 = scalar_lea.vmem %s3, %s250
          %s252 = smul.u32 2, %s15
        $region32: #{tpu_custom_call.1} parent=15 // pred_fallthru
          _
        // Predicated region
        $region33: #{tpu_custom_call.1} parent=15 // pred_check
          %p253 = pneg %p139
        $region34: #{tpu_custom_call.1} parent=15 // pred_check_branch
          %255 = sbr.rel (%p253) target = $region36
        $region35: #{tpu_custom_call.1} parent=15 // pred_region
          %s256 = smul.u32 2, %s15
          %p257 = scmp.lt.s32.totalorder %s256, 3
          %s258 = scalar_select %p257, %s256, 3
          %s259 = smul.addr %s258, 3
          %s260 = smul.addr %s259, 8
          %s261 = scalar_lea.vmem %s4, %s260
          %s262 = smul.u32 2, %s15
        $region36: #{tpu_custom_call.1} parent=15 // pred_fallthru
          _
        // Predicated region
        $region37: #{tpu_custom_call.1} parent=15 // pred_check
          %p263 = pneg %p165
        $region38: #{tpu_custom_call.1} parent=15 // pred_check_branch
          %265 = sbr.rel (%p263) target = $region40
        $region39: #{tpu_custom_call.1} parent=15 // pred_region
          %s266 = smul.u32 2, %s15
          %p267 = scmp.lt.s32.totalorder %s266, 3
          %s268 = scalar_select %p267, %s266, 3
          %s269 = smul.addr %s268, 3
          %s270 = smul.addr %s269, 8
          %s271 = scalar_lea.vmem %s5, %s270
          %s272 = smul.u32 2, %s15
        $region40: #{tpu_custom_call.1} parent=15 // pred_fallthru
          _
      $region16: #{tpu_custom_call.1} parent=5 // pred_fallthru
        _
      %p273 = scmp.le.s32.totalorder 1, %s15
      %p274 = scmp.lt.s32.totalorder %s15, 3
      %p275 = pnand %p273, %p274
      %p276 = pneg %p275
      // Predicated region
      $region41: #{tpu_custom_call.1} parent=5 // pred_check
        _
      $region42: #{tpu_custom_call.1} parent=5 // pred_check_branch
        %278 = sbr.rel (%p275) target = $region44
      $region43: #{tpu_custom_call.1} parent=5 // pred_region
        %s279 = ssub.s32 %s15, 1
        %s280 = smul.u32 2, %s20
        %p281 = scmp.lt.s32.totalorder %s280, 3
        %s282 = scalar_select %p281, %s280, 3
        %s283 = smul.addr %s282, 16
        %s284 = smul.addr %s283, 8
        %s285 = scalar_lea.vmem %s0, %s284
        %p286 = pneg %p41
        %p287 = pneg %p38
        %s288 = smul.u32 2, %s20
        %p289 = scmp.lt.s32.totalorder %s288, 3
        %s290 = scalar_select %p289, %s288, 3
        %s291 = smul.addr %s290, 4
        %s292 = scalar_lea.vmem %s1, %s291
        %p293 = pneg %p67
        %p294 = pneg %p64
        %s295 = smul.u32 2, %s20
        %p296 = scmp.lt.s32.totalorder %s295, 3
        %s297 = scalar_select %p296, %s295, 3
        %s298 = smul.addr %s297, 16
        %s299 = smul.addr %s298, 8
        %s300 = scalar_lea.vmem %s2, %s299
        %p301 = pneg %p93
        %p302 = pneg %p90
        %s303 = smul.u32 2, %s20
        %p304 = scmp.lt.s32.totalorder %s303, 3
        %s305 = scalar_select %p304, %s303, 3
        %s306 = scalar_lea.vmem %s3, %s305
        %p307 = pneg %p119
        %p308 = pneg %p116
        %s309 = smul.u32 2, %s20
        %p310 = scmp.lt.s32.totalorder %s309, 3
        %s311 = scalar_select %p310, %s309, 3
        %s312 = smul.addr %s311, 3
        %s313 = smul.addr %s312, 8
        %s314 = scalar_lea.vmem %s4, %s313
        %p315 = pneg %p145
        %p316 = pneg %p142
        %s317 = smul.u32 2, %s20
        %p318 = scmp.lt.s32.totalorder %s317, 3
        %s319 = scalar_select %p318, %s317, 3
        %s320 = smul.addr %s319, 3
        %s321 = smul.addr %s320, 8
        %s322 = scalar_lea.vmem %s5, %s321
        %p323 = pneg %p171
        %p324 = pneg %p168
        %p325 = pneg %p197
        %p326 = pneg %p194
        %s327 = sand.u32 %s184, 1
        %s328 = scalar_lea.sflag [#allocation3], %s327
        %s329 = sand.u32 %s184, 1
        %s330 = smul.addr %s329, 2
        %s331 = scalar_lea.vmem [#allocation2], %s330
        %s332 = smul.u32 2, %s20
        %p333 = scmp.lt.s32.totalorder %s332, 3
        %s334 = scalar_select %p333, %s332, 3
        %s335 = smul.addr %s334, 16
        %s336 = smul.addr %s335, 8
        %s337 = scalar_lea.vmem %s0, %s336
        %s338 = smul.u32 2, %s20
        %s339 = smul.u32 2, %s20
        %p340 = scmp.lt.s32.totalorder %s339, 3
        %s341 = scalar_select %p340, %s339, 3
        %s342 = smul.addr %s341, 4
        %s343 = scalar_lea.vmem %s1, %s342
        %s344 = smul.u32 2, %s20
        %s345 = smul.u32 2, %s20
        %p346 = scmp.lt.s32.totalorder %s345, 3
        %s347 = scalar_select %p346, %s345, 3
        %s348 = smul.addr %s347, 16
        %s349 = smul.addr %s348, 8
        %s350 = scalar_lea.vmem %s2, %s349
        %s351 = smul.u32 2, %s20
        %s352 = smul.u32 2, %s20
        %p353 = scmp.lt.s32.totalorder %s352, 3
        %s354 = scalar_select %p353, %s352, 3
        %s355 = scalar_lea.vmem %s3, %s354
        %s356 = smul.u32 2, %s20
        %s357 = smul.u32 2, %s20
        %p358 = scmp.lt.s32.totalorder %s357, 3
        %s359 = scalar_select %p358, %s357, 3
        %s360 = smul.addr %s359, 3
        %s361 = smul.addr %s360, 8
        %s362 = scalar_lea.vmem %s4, %s361
        %s363 = smul.u32 2, %s20
        %s364 = smul.u32 2, %s20
        %p365 = scmp.lt.s32.totalorder %s364, 3
        %s366 = scalar_select %p365, %s364, 3
        %s367 = smul.addr %s366, 3
        %s368 = smul.addr %s367, 8
        %s369 = scalar_lea.vmem %s5, %s368
        %s370 = smul.u32 2, %s20
        %s371 = smul.u32 2, %s20
        %v372 = vlaneseq
        %v373 = vand.u32 %v372, 127
        %v374 = vld [vmem:[%s337] sm:$0xff]
        %v375 = vld [vmem:[%s337 + $0x8] sm:$0xff]
        %v376 = vld [vmem:[%s337 + $0x10] sm:$0xff]
        %v377 = vld [vmem:[%s337 + $0x18] sm:$0xff]
        %v378 = vld [vmem:[%s337 + $0x20] sm:$0xff]
        %v379 = vld [vmem:[%s337 + $0x28] sm:$0xff]
        %v380 = vld [vmem:[%s337 + $0x30] sm:$0xff]
        %v381 = vld [vmem:[%s337 + $0x38] sm:$0xff]
        %v382 = vld [vmem:[%s337 + $0x40] sm:$0xff]
        %v383 = vld [vmem:[%s337 + $0x48] sm:$0xff]
        %v384 = vld [vmem:[%s337 + $0x50] sm:$0xff]
        %v385 = vld [vmem:[%s337 + $0x58] sm:$0xff]
        %v386 = vld [vmem:[%s337 + $0x60] sm:$0xff]
        %v387 = vld [vmem:[%s337 + $0x68] sm:$0xff]
        %v388 = vld [vmem:[%s337 + $0x70] sm:$0xff]
        %v389 = vld [vmem:[%s337 + $0x78] sm:$0xff]
        %v390 = vld [vmem:[%s343] sm:$0x7]
        %v391 = vld [vmem:[%s350] sm:$0xff]
        %v392 = vld [vmem:[%s350 + $0x8] sm:$0xff]
        %v393 = vld [vmem:[%s350 + $0x10] sm:$0xff]
        %v394 = vld [vmem:[%s350 + $0x18] sm:$0xff]
        %v395 = vld [vmem:[%s350 + $0x20] sm:$0xff]
        %v396 = vld [vmem:[%s350 + $0x28] sm:$0xff]
        %v397 = vld [vmem:[%s350 + $0x30] sm:$0xff]
        %v398 = vld [vmem:[%s350 + $0x38] sm:$0xff]
        %v399 = vld [vmem:[%s350 + $0x40] sm:$0xff]
        %v400 = vld [vmem:[%s350 + $0x48] sm:$0xff]
        %v401 = vld [vmem:[%s350 + $0x50] sm:$0xff]
        %v402 = vld [vmem:[%s350 + $0x58] sm:$0xff]
        %v403 = vld [vmem:[%s350 + $0x60] sm:$0xff]
        %v404 = vld [vmem:[%s350 + $0x68] sm:$0xff]
        %v405 = vld [vmem:[%s350 + $0x70] sm:$0xff]
        %v406 = vld [vmem:[%s350 + $0x78] sm:$0xff]
        %v407 = vld [vmem:[%s355] sm:$0x1]
        %vm408 = vcmp.gt.f32.partialorder %v391, 0.15
        %vm409 = vcmp.gt.f32.partialorder %v392, 0.15
        %vm410 = vcmp.gt.f32.partialorder %v393, 0.15
        %vm411 = vcmp.gt.f32.partialorder %v394, 0.15
        %vm412 = vcmp.gt.f32.partialorder %v395, 0.15
        %vm413 = vcmp.gt.f32.partialorder %v396, 0.15
        %vm414 = vcmp.gt.f32.partialorder %v397, 0.15
        %vm415 = vcmp.gt.f32.partialorder %v398, 0.15
        %vm416 = vcmp.gt.f32.partialorder %v399, 0.15
        %vm417 = vcmp.gt.f32.partialorder %v400, 0.15
        %vm418 = vcmp.gt.f32.partialorder %v401, 0.15
        %vm419 = vcmp.gt.f32.partialorder %v402, 0.15
        %vm420 = vcmp.gt.f32.partialorder %v403, 0.15
        %vm421 = vcmp.gt.f32.partialorder %v404, 0.15
        %vm422 = vcmp.gt.f32.partialorder %v405, 0.15
        %vm423 = vcmp.gt.f32.partialorder %v406, 0.15
        %425 = vset.pattern.permute.xlu0 0
        %426 = vperm.xlu0 %425, %v374
        %v427 = vpop.permute.xlu0 %426
        %430 = vset.pattern.permute.xlu0 0
        %431 = vperm.xlu0 %430, %v375
        %v432 = vpop.permute.xlu0 %431
        %435 = vset.pattern.permute.xlu0 0
        %436 = vperm.xlu0 %435, %v376
        %v437 = vpop.permute.xlu0 %436
        %440 = vset.pattern.permute.xlu0 0
        %441 = vperm.xlu0 %440, %v377
        %v442 = vpop.permute.xlu0 %441
        %445 = vset.pattern.permute.xlu0 0
        %446 = vperm.xlu0 %445, %v378
        %v447 = vpop.permute.xlu0 %446
        %450 = vset.pattern.permute.xlu0 0
        %451 = vperm.xlu0 %450, %v379
        %v452 = vpop.permute.xlu0 %451
        %455 = vset.pattern.permute.xlu0 0
        %456 = vperm.xlu0 %455, %v380
        %v457 = vpop.permute.xlu0 %456
        %460 = vset.pattern.permute.xlu0 0
        %461 = vperm.xlu0 %460, %v381
        %v462 = vpop.permute.xlu0 %461
        %465 = vset.pattern.permute.xlu0 0
        %466 = vperm.xlu0 %465, %v382
        %v467 = vpop.permute.xlu0 %466
        %470 = vset.pattern.permute.xlu0 0
        %471 = vperm.xlu0 %470, %v383
        %v472 = vpop.permute.xlu0 %471
        %475 = vset.pattern.permute.xlu0 0
        %476 = vperm.xlu0 %475, %v384
        %v477 = vpop.permute.xlu0 %476
        %480 = vset.pattern.permute.xlu0 0
        %481 = vperm.xlu0 %480, %v385
        %v482 = vpop.permute.xlu0 %481
        %485 = vset.pattern.permute.xlu0 0
        %486 = vperm.xlu0 %485, %v386
        %v487 = vpop.permute.xlu0 %486
        %490 = vset.pattern.permute.xlu0 0
        %491 = vperm.xlu0 %490, %v387
        %v492 = vpop.permute.xlu0 %491
        %495 = vset.pattern.permute.xlu0 0
        %496 = vperm.xlu0 %495, %v388
        %v497 = vpop.permute.xlu0 %496
        %500 = vset.pattern.permute.xlu0 0
        %501 = vperm.xlu0 %500, %v389
        %v502 = vpop.permute.xlu0 %501
        %v504 = vlaneseq
        %v505 = vshrl.u32 %v504, 7
        %v506 = vsub.s32 0, %v505
        %v507 = vrot.slane %v390, %v506
        %v508 = vsub.f32 %v427, %v507
        %v509 = vsub.f32 %v432, %v507
        %v510 = vsub.f32 %v437, %v507
        %v511 = vsub.f32 %v442, %v507
        %v512 = vsub.f32 %v447, %v507
        %v513 = vsub.f32 %v452, %v507
        %v514 = vsub.f32 %v457, %v507
        %v515 = vsub.f32 %v462, %v507
        %v516 = vsub.f32 %v467, %v507
        %v517 = vsub.f32 %v472, %v507
        %v518 = vsub.f32 %v477, %v507
        %v519 = vsub.f32 %v482, %v507
        %v520 = vsub.f32 %v487, %v507
        %v521 = vsub.f32 %v492, %v507
        %v522 = vsub.f32 %v497, %v507
        %v523 = vsub.f32 %v502, %v507
        %524 = vset.pattern.permute.xlu0 1
        %525 = vperm.xlu0 %524, %v374
        %v526 = vpop.permute.xlu0 %525
        %528 = vset.pattern.permute.xlu0 1
        %529 = vperm.xlu0 %528, %v375
        %v530 = vpop.permute.xlu0 %529
        %532 = vset.pattern.permute.xlu0 1
        %533 = vperm.xlu0 %532, %v376
        %v534 = vpop.permute.xlu0 %533
        %536 = vset.pattern.permute.xlu0 1
        %537 = vperm.xlu0 %536, %v377
        %v538 = vpop.permute.xlu0 %537
        %540 = vset.pattern.permute.xlu0 1
        %541 = vperm.xlu0 %540, %v378
        %v542 = vpop.permute.xlu0 %541
        %544 = vset.pattern.permute.xlu0 1
        %545 = vperm.xlu0 %544, %v379
        %v546 = vpop.permute.xlu0 %545
        %548 = vset.pattern.permute.xlu0 1
        %549 = vperm.xlu0 %548, %v380
        %v550 = vpop.permute.xlu0 %549
        %552 = vset.pattern.permute.xlu0 1
        %553 = vperm.xlu0 %552, %v381
        %v554 = vpop.permute.xlu0 %553
        %556 = vset.pattern.permute.xlu0 1
        %557 = vperm.xlu0 %556, %v382
        %v558 = vpop.permute.xlu0 %557
        %560 = vset.pattern.permute.xlu0 1
        %561 = vperm.xlu0 %560, %v383
        %v562 = vpop.permute.xlu0 %561
        %564 = vset.pattern.permute.xlu0 1
        %565 = vperm.xlu0 %564, %v384
        %v566 = vpop.permute.xlu0 %565
        %568 = vset.pattern.permute.xlu0 1
        %569 = vperm.xlu0 %568, %v385
        %v570 = vpop.permute.xlu0 %569
        %572 = vset.pattern.permute.xlu0 1
        %573 = vperm.xlu0 %572, %v386
        %v574 = vpop.permute.xlu0 %573
        %576 = vset.pattern.permute.xlu0 1
        %577 = vperm.xlu0 %576, %v387
        %v578 = vpop.permute.xlu0 %577
        %580 = vset.pattern.permute.xlu0 1
        %581 = vperm.xlu0 %580, %v388
        %v582 = vpop.permute.xlu0 %581
        %584 = vset.pattern.permute.xlu0 1
        %585 = vperm.xlu0 %584, %v389
        %v586 = vpop.permute.xlu0 %585
        %v588 = vlaneseq
        %v589 = vshrl.u32 %v588, 7
        %v590 = vsub.s32 1, %v589
        %v591 = vrot.slane %v390, %v590
        %v592 = vsub.f32 %v526, %v591
        %v593 = vsub.f32 %v530, %v591
        %v594 = vsub.f32 %v534, %v591
        %v595 = vsub.f32 %v538, %v591
        %v596 = vsub.f32 %v542, %v591
        %v597 = vsub.f32 %v546, %v591
        %v598 = vsub.f32 %v550, %v591
        %v599 = vsub.f32 %v554, %v591
        %v600 = vsub.f32 %v558, %v591
        %v601 = vsub.f32 %v562, %v591
        %v602 = vsub.f32 %v566, %v591
        %v603 = vsub.f32 %v570, %v591
        %v604 = vsub.f32 %v574, %v591
        %v605 = vsub.f32 %v578, %v591
        %v606 = vsub.f32 %v582, %v591
        %v607 = vsub.f32 %v586, %v591
        %608 = vset.pattern.permute.xlu0 2
        %609 = vperm.xlu0 %608, %v374
        %v610 = vpop.permute.xlu0 %609
        %612 = vset.pattern.permute.xlu0 2
        %613 = vperm.xlu0 %612, %v375
        %v614 = vpop.permute.xlu0 %613
        %616 = vset.pattern.permute.xlu0 2
        %617 = vperm.xlu0 %616, %v376
        %v618 = vpop.permute.xlu0 %617
        %620 = vset.pattern.permute.xlu0 2
        %621 = vperm.xlu0 %620, %v377
        %v622 = vpop.permute.xlu0 %621
        %624 = vset.pattern.permute.xlu0 2
        %625 = vperm.xlu0 %624, %v378
        %v626 = vpop.permute.xlu0 %625
        %628 = vset.pattern.permute.xlu0 2
        %629 = vperm.xlu0 %628, %v379
        %v630 = vpop.permute.xlu0 %629
        %632 = vset.pattern.permute.xlu0 2
        %633 = vperm.xlu0 %632, %v380
        %v634 = vpop.permute.xlu0 %633
        %636 = vset.pattern.permute.xlu0 2
        %637 = vperm.xlu0 %636, %v381
        %v638 = vpop.permute.xlu0 %637
        %640 = vset.pattern.permute.xlu0 2
        %641 = vperm.xlu0 %640, %v382
        %v642 = vpop.permute.xlu0 %641
        %644 = vset.pattern.permute.xlu0 2
        %645 = vperm.xlu0 %644, %v383
        %v646 = vpop.permute.xlu0 %645
        %648 = vset.pattern.permute.xlu0 2
        %649 = vperm.xlu0 %648, %v384
        %v650 = vpop.permute.xlu0 %649
        %652 = vset.pattern.permute.xlu0 2
        %653 = vperm.xlu0 %652, %v385
        %v654 = vpop.permute.xlu0 %653
        %656 = vset.pattern.permute.xlu0 2
        %657 = vperm.xlu0 %656, %v386
        %v658 = vpop.permute.xlu0 %657
        %660 = vset.pattern.permute.xlu0 2
        %661 = vperm.xlu0 %660, %v387
        %v662 = vpop.permute.xlu0 %661
        %664 = vset.pattern.permute.xlu0 2
        %665 = vperm.xlu0 %664, %v388
        %v666 = vpop.permute.xlu0 %665
        %668 = vset.pattern.permute.xlu0 2
        %669 = vperm.xlu0 %668, %v389
        %v670 = vpop.permute.xlu0 %669
        %v672 = vlaneseq
        %v673 = vshrl.u32 %v672, 7
        %v674 = vsub.s32 2, %v673
        %v675 = vrot.slane %v390, %v674
        %v676 = vsub.f32 %v610, %v675
        %v677 = vsub.f32 %v614, %v675
        %v678 = vsub.f32 %v618, %v675
        %v679 = vsub.f32 %v622, %v675
        %v680 = vsub.f32 %v626, %v675
        %v681 = vsub.f32 %v630, %v675
        %v682 = vsub.f32 %v634, %v675
        %v683 = vsub.f32 %v638, %v675
        %v684 = vsub.f32 %v642, %v675
        %v685 = vsub.f32 %v646, %v675
        %v686 = vsub.f32 %v650, %v675
        %v687 = vsub.f32 %v654, %v675
        %v688 = vsub.f32 %v658, %v675
        %v689 = vsub.f32 %v662, %v675
        %v690 = vsub.f32 %v666, %v675
        %v691 = vsub.f32 %v670, %v675
        %v692 = vmul.f32 %v508, %v508
        %v693 = vmul.f32 %v509, %v509
        %v694 = vmul.f32 %v510, %v510
        %v695 = vmul.f32 %v511, %v511
        %v696 = vmul.f32 %v512, %v512
        %v697 = vmul.f32 %v513, %v513
        %v698 = vmul.f32 %v514, %v514
        %v699 = vmul.f32 %v515, %v515
        %v700 = vmul.f32 %v516, %v516
        %v701 = vmul.f32 %v517, %v517
        %v702 = vmul.f32 %v518, %v518
        %v703 = vmul.f32 %v519, %v519
        %v704 = vmul.f32 %v520, %v520
        %v705 = vmul.f32 %v521, %v521
        %v706 = vmul.f32 %v522, %v522
        %v707 = vmul.f32 %v523, %v523
        %v708 = vmul.f32 %v592, %v592
        %v709 = vmul.f32 %v593, %v593
        %v710 = vmul.f32 %v594, %v594
        %v711 = vmul.f32 %v595, %v595
        %v712 = vmul.f32 %v596, %v596
        %v713 = vmul.f32 %v597, %v597
        %v714 = vmul.f32 %v598, %v598
        %v715 = vmul.f32 %v599, %v599
        %v716 = vmul.f32 %v600, %v600
        %v717 = vmul.f32 %v601, %v601
        %v718 = vmul.f32 %v602, %v602
        %v719 = vmul.f32 %v603, %v603
        %v720 = vmul.f32 %v604, %v604
        %v721 = vmul.f32 %v605, %v605
        %v722 = vmul.f32 %v606, %v606
        %v723 = vmul.f32 %v607, %v607
        %v724 = vadd.f32 %v692, %v708
        %v725 = vadd.f32 %v693, %v709
        %v726 = vadd.f32 %v694, %v710
        %v727 = vadd.f32 %v695, %v711
        %v728 = vadd.f32 %v696, %v712
        %v729 = vadd.f32 %v697, %v713
        %v730 = vadd.f32 %v698, %v714
        %v731 = vadd.f32 %v699, %v715
        %v732 = vadd.f32 %v700, %v716
        %v733 = vadd.f32 %v701, %v717
        %v734 = vadd.f32 %v702, %v718
        %v735 = vadd.f32 %v703, %v719
        %v736 = vadd.f32 %v704, %v720
        %v737 = vadd.f32 %v705, %v721
        %v738 = vadd.f32 %v706, %v722
        %v739 = vadd.f32 %v707, %v723
        %v740 = vmul.f32 %v676, %v676
        %v741 = vmul.f32 %v677, %v677
        %v742 = vmul.f32 %v678, %v678
        %v743 = vmul.f32 %v679, %v679
        %v744 = vmul.f32 %v680, %v680
        %v745 = vmul.f32 %v681, %v681
        %v746 = vmul.f32 %v682, %v682
        %v747 = vmul.f32 %v683, %v683
        %v748 = vmul.f32 %v684, %v684
        %v749 = vmul.f32 %v685, %v685
        %v750 = vmul.f32 %v686, %v686
        %v751 = vmul.f32 %v687, %v687
        %v752 = vmul.f32 %v688, %v688
        %v753 = vmul.f32 %v689, %v689
        %v754 = vmul.f32 %v690, %v690
        %v755 = vmul.f32 %v691, %v691
        %v756 = vadd.f32 %v724, %v740
        %v757 = vadd.f32 %v725, %v741
        %v758 = vadd.f32 %v726, %v742
        %v759 = vadd.f32 %v727, %v743
        %v760 = vadd.f32 %v728, %v744
        %v761 = vadd.f32 %v729, %v745
        %v762 = vadd.f32 %v730, %v746
        %v763 = vadd.f32 %v731, %v747
        %v764 = vadd.f32 %v732, %v748
        %v765 = vadd.f32 %v733, %v749
        %v766 = vadd.f32 %v734, %v750
        %v767 = vadd.f32 %v735, %v751
        %v768 = vadd.f32 %v736, %v752
        %v769 = vadd.f32 %v737, %v753
        %v770 = vadd.f32 %v738, %v754
        %v771 = vadd.f32 %v739, %v755
        %772 = vmin.xlane.f32.xlu0 %v756
        %v773 = vpop.xlane.xlu0 %772
        %774 = vmin.xlane.f32.xlu0 %v757
        %v775 = vpop.xlane.xlu0 %774
        %776 = vmin.xlane.f32.xlu0 %v758
        %v777 = vpop.xlane.xlu0 %776
        %778 = vmin.xlane.f32.xlu0 %v759
        %v779 = vpop.xlane.xlu0 %778
        %780 = vmin.xlane.f32.xlu0 %v760
        %v781 = vpop.xlane.xlu0 %780
        %782 = vmin.xlane.f32.xlu0 %v761
        %v783 = vpop.xlane.xlu0 %782
        %784 = vmin.xlane.f32.xlu0 %v762
        %v785 = vpop.xlane.xlu0 %784
        %786 = vmin.xlane.f32.xlu0 %v763
        %v787 = vpop.xlane.xlu0 %786
        %788 = vmin.xlane.f32.xlu0 %v764
        %v789 = vpop.xlane.xlu0 %788
        %790 = vmin.xlane.f32.xlu0 %v765
        %v791 = vpop.xlane.xlu0 %790
        %792 = vmin.xlane.f32.xlu0 %v766
        %v793 = vpop.xlane.xlu0 %792
        %794 = vmin.xlane.f32.xlu0 %v767
        %v795 = vpop.xlane.xlu0 %794
        %796 = vmin.xlane.f32.xlu0 %v768
        %v797 = vpop.xlane.xlu0 %796
        %798 = vmin.xlane.f32.xlu0 %v769
        %v799 = vpop.xlane.xlu0 %798
        %800 = vmin.xlane.f32.xlu0 %v770
        %v801 = vpop.xlane.xlu0 %800
        %802 = vmin.xlane.f32.xlu0 %v771
        %v803 = vpop.xlane.xlu0 %802
        %v804 = vmin.f32 %v773, 3e+38
        %v805 = vmin.f32 %v775, 3e+38
        %v806 = vmin.f32 %v777, 3e+38
        %v807 = vmin.f32 %v779, 3e+38
        %v808 = vmin.f32 %v781, 3e+38
        %v809 = vmin.f32 %v783, 3e+38
        %v810 = vmin.f32 %v785, 3e+38
        %v811 = vmin.f32 %v787, 3e+38
        %v812 = vmin.f32 %v789, 3e+38
        %v813 = vmin.f32 %v791, 3e+38
        %v814 = vmin.f32 %v793, 3e+38
        %v815 = vmin.f32 %v795, 3e+38
        %v816 = vmin.f32 %v797, 3e+38
        %v817 = vmin.f32 %v799, 3e+38
        %v818 = vmin.f32 %v801, 3e+38
        %v819 = vmin.f32 %v803, 3e+38
        %v820 = vmin.f32 %v756, %v760
        %v821 = vmin.f32 %v757, %v761
        %v822 = vmin.f32 %v758, %v762
        %v823 = vmin.f32 %v759, %v763
        %v824 = vmin.f32 %v820, %v764
        %v825 = vmin.f32 %v821, %v765
        %v826 = vmin.f32 %v822, %v766
        %v827 = vmin.f32 %v823, %v767
        %v828 = vmin.f32 %v824, %v768
        %v829 = vmin.f32 %v825, %v769
        %v830 = vmin.f32 %v826, %v770
        %v831 = vmin.f32 %v827, %v771
        %v832 = vmin.f32 %v828, %v829
        %v833 = vmin.f32 %v830, %v831
        %v834 = vmin.f32 %v832, %v833
        %v835 = vrot.slane %v834, 4
        %v836 = vmin.f32 %v834, %v835
        %v837 = vrot.slane %v836, 2
        %v838 = vmin.f32 %v836, %v837
        %v839 = vrot.slane %v838, 1
        %v840 = vmin.f32 %v838, %v839
        %v841 = vrsqrt.pop %v840
        %v842 = vmul.f32 %v840, %v841
        %vm843 = vcmp.eq.f32.partialorder %v840, inf
        %v844 = vsel %vm843, %v840, %v842
        %vm845 = vcmp.eq.f32.partialorder %v840, 0.0
        %v846 = vand.u32 %v840, 2147483648
        %v847 = vsel %vm845, %v846, %v844
        %vm848 = vcmask 1040384
        %v849 = vsel %vm848, %v847, 0.0
        %850 = vadd.xlane.f32.xlu0 %v849
        %v851 = vpop.xlane.xlu0 %850
        %v852 = vrot.slane %v851, 4
        %v853 = vadd.f32 %v851, %v852
        %v854 = vrot.slane %v853, 2
        %v855 = vadd.f32 %v853, %v854
        %v856 = vrot.slane %v855, 1
        %v857 = vadd.f32 %v855, %v856
        %s858 = vtos %v857
        %v859 = vstv %s858
        %v860 = vadd.f32 %v859, 0.0
        %vm861 = vcmp.eq.s32.totalorder %v407, 0
        %v862 = vsel %vm861, 1, 0
        %v863 = vlaneseq
        %v864 = vshrl.u32 %v863, 7
        %v865 = vsub.s32 0, %v864
        %v866 = vrot.slane %v862, %v865
        %vm867 = vcmp.eq.s32.totalorder %v866, 1
        %v868 = vsel %vm867, %v756, 100.0
        %v869 = vsel %vm867, %v757, 100.0
        %v870 = vsel %vm867, %v758, 100.0
        %v871 = vsel %vm867, %v759, 100.0
        %v872 = vsel %vm867, %v760, 100.0
        %v873 = vsel %vm867, %v761, 100.0
        %v874 = vsel %vm867, %v762, 100.0
        %v875 = vsel %vm867, %v763, 100.0
        %v876 = vsel %vm867, %v764, 100.0
        %v877 = vsel %vm867, %v765, 100.0
        %v878 = vsel %vm867, %v766, 100.0
        %v879 = vsel %vm867, %v767, 100.0
        %v880 = vsel %vm867, %v768, 100.0
        %v881 = vsel %vm867, %v769, 100.0
        %v882 = vsel %vm867, %v770, 100.0
        %v883 = vsel %vm867, %v771, 100.0
        %884 = vmin.xlane.f32.xlu0 %v868
        %v885 = vpop.xlane.xlu0 %884
        %886 = vmin.xlane.f32.xlu0 %v869
        %v887 = vpop.xlane.xlu0 %886
        %888 = vmin.xlane.f32.xlu0 %v870
        %v889 = vpop.xlane.xlu0 %888
        %890 = vmin.xlane.f32.xlu0 %v871
        %v891 = vpop.xlane.xlu0 %890
        %892 = vmin.xlane.f32.xlu0 %v872
        %v893 = vpop.xlane.xlu0 %892
        %894 = vmin.xlane.f32.xlu0 %v873
        %v895 = vpop.xlane.xlu0 %894
        %896 = vmin.xlane.f32.xlu0 %v874
        %v897 = vpop.xlane.xlu0 %896
        %898 = vmin.xlane.f32.xlu0 %v875
        %v899 = vpop.xlane.xlu0 %898
        %900 = vmin.xlane.f32.xlu0 %v876
        %v901 = vpop.xlane.xlu0 %900
        %902 = vmin.xlane.f32.xlu0 %v877
        %v903 = vpop.xlane.xlu0 %902
        %904 = vmin.xlane.f32.xlu0 %v878
        %v905 = vpop.xlane.xlu0 %904
        %906 = vmin.xlane.f32.xlu0 %v879
        %v907 = vpop.xlane.xlu0 %906
        %908 = vmin.xlane.f32.xlu0 %v880
        %v909 = vpop.xlane.xlu0 %908
        %910 = vmin.xlane.f32.xlu0 %v881
        %v911 = vpop.xlane.xlu0 %910
        %912 = vmin.xlane.f32.xlu0 %v882
        %v913 = vpop.xlane.xlu0 %912
        %914 = vmin.xlane.f32.xlu0 %v883
        %v915 = vpop.xlane.xlu0 %914
        %v916 = vmin.f32 %v885, 3e+38
        %v917 = vmin.f32 %v887, 3e+38
        %v918 = vmin.f32 %v889, 3e+38
        %v919 = vmin.f32 %v891, 3e+38
        %v920 = vmin.f32 %v893, 3e+38
        %v921 = vmin.f32 %v895, 3e+38
        %v922 = vmin.f32 %v897, 3e+38
        %v923 = vmin.f32 %v899, 3e+38
        %v924 = vmin.f32 %v901, 3e+38
        %v925 = vmin.f32 %v903, 3e+38
        %v926 = vmin.f32 %v905, 3e+38
        %v927 = vmin.f32 %v907, 3e+38
        %v928 = vmin.f32 %v909, 3e+38
        %v929 = vmin.f32 %v911, 3e+38
        %v930 = vmin.f32 %v913, 3e+38
        %v931 = vmin.f32 %v915, 3e+38
        %v932 = vsel %vm408, 1, 0
        %v933 = vsel %vm409, 1, 0
        %v934 = vsel %vm410, 1, 0
        %v935 = vsel %vm411, 1, 0
        %v936 = vsel %vm412, 1, 0
        %v937 = vsel %vm413, 1, 0
        %v938 = vsel %vm414, 1, 0
        %v939 = vsel %vm415, 1, 0
        %v940 = vsel %vm416, 1, 0
        %v941 = vsel %vm417, 1, 0
        %v942 = vsel %vm418, 1, 0
        %v943 = vsel %vm419, 1, 0
        %v944 = vsel %vm420, 1, 0
        %v945 = vsel %vm421, 1, 0
        %v946 = vsel %vm422, 1, 0
        %v947 = vsel %vm423, 1, 0
        %948 = vset.pattern.permute.xlu0 0
        %949 = vperm.xlu0 %948, %v932
        %v950 = vpop.permute.xlu0 %949
        %951 = vset.pattern.permute.xlu0 0
        %952 = vperm.xlu0 %951, %v933
        %v953 = vpop.permute.xlu0 %952
        %954 = vset.pattern.permute.xlu0 0
        %955 = vperm.xlu0 %954, %v934
        %v956 = vpop.permute.xlu0 %955
        %957 = vset.pattern.permute.xlu0 0
        %958 = vperm.xlu0 %957, %v935
        %v959 = vpop.permute.xlu0 %958
        %960 = vset.pattern.permute.xlu0 0
        %961 = vperm.xlu0 %960, %v936
        %v962 = vpop.permute.xlu0 %961
        %963 = vset.pattern.permute.xlu0 0
        %964 = vperm.xlu0 %963, %v937
        %v965 = vpop.permute.xlu0 %964
        %966 = vset.pattern.permute.xlu0 0
        %967 = vperm.xlu0 %966, %v938
        %v968 = vpop.permute.xlu0 %967
        %969 = vset.pattern.permute.xlu0 0
        %970 = vperm.xlu0 %969, %v939
        %v971 = vpop.permute.xlu0 %970
        %972 = vset.pattern.permute.xlu0 0
        %973 = vperm.xlu0 %972, %v940
        %v974 = vpop.permute.xlu0 %973
        %975 = vset.pattern.permute.xlu0 0
        %976 = vperm.xlu0 %975, %v941
        %v977 = vpop.permute.xlu0 %976
        %978 = vset.pattern.permute.xlu0 0
        %979 = vperm.xlu0 %978, %v942
        %v980 = vpop.permute.xlu0 %979
        %981 = vset.pattern.permute.xlu0 0
        %982 = vperm.xlu0 %981, %v943
        %v983 = vpop.permute.xlu0 %982
        %984 = vset.pattern.permute.xlu0 0
        %985 = vperm.xlu0 %984, %v944
        %v986 = vpop.permute.xlu0 %985
        %987 = vset.pattern.permute.xlu0 0
        %988 = vperm.xlu0 %987, %v945
        %v989 = vpop.permute.xlu0 %988
        %990 = vset.pattern.permute.xlu0 0
        %991 = vperm.xlu0 %990, %v946
        %v992 = vpop.permute.xlu0 %991
        %993 = vset.pattern.permute.xlu0 0
        %994 = vperm.xlu0 %993, %v947
        %v995 = vpop.permute.xlu0 %994
        %vm996 = vcmp.eq.s32.totalorder %v950, 1
        %vm997 = vcmp.eq.s32.totalorder %v953, 1
        %vm998 = vcmp.eq.s32.totalorder %v956, 1
        %vm999 = vcmp.eq.s32.totalorder %v959, 1
        %vm1000 = vcmp.eq.s32.totalorder %v962, 1
        %vm1001 = vcmp.eq.s32.totalorder %v965, 1
        %vm1002 = vcmp.eq.s32.totalorder %v968, 1
        %vm1003 = vcmp.eq.s32.totalorder %v971, 1
        %vm1004 = vcmp.eq.s32.totalorder %v974, 1
        %vm1005 = vcmp.eq.s32.totalorder %v977, 1
        %vm1006 = vcmp.eq.s32.totalorder %v980, 1
        %vm1007 = vcmp.eq.s32.totalorder %v983, 1
        %vm1008 = vcmp.eq.s32.totalorder %v986, 1
        %vm1009 = vcmp.eq.s32.totalorder %v989, 1
        %vm1010 = vcmp.eq.s32.totalorder %v992, 1
        %vm1011 = vcmp.eq.s32.totalorder %v995, 1
        %v1012 = vsel %vm996, %v756, 100.0
        %v1013 = vsel %vm997, %v757, 100.0
        %v1014 = vsel %vm998, %v758, 100.0
        %v1015 = vsel %vm999, %v759, 100.0
        %v1016 = vsel %vm1000, %v760, 100.0
        %v1017 = vsel %vm1001, %v761, 100.0
        %v1018 = vsel %vm1002, %v762, 100.0
        %v1019 = vsel %vm1003, %v763, 100.0
        %v1020 = vsel %vm1004, %v764, 100.0
        %v1021 = vsel %vm1005, %v765, 100.0
        %v1022 = vsel %vm1006, %v766, 100.0
        %v1023 = vsel %vm1007, %v767, 100.0
        %v1024 = vsel %vm1008, %v768, 100.0
        %v1025 = vsel %vm1009, %v769, 100.0
        %v1026 = vsel %vm1010, %v770, 100.0
        %v1027 = vsel %vm1011, %v771, 100.0
        %v1028 = vmin.f32 %v1012, %v1016
        %v1029 = vmin.f32 %v1013, %v1017
        %v1030 = vmin.f32 %v1014, %v1018
        %v1031 = vmin.f32 %v1015, %v1019
        %v1032 = vmin.f32 %v1028, %v1020
        %v1033 = vmin.f32 %v1029, %v1021
        %v1034 = vmin.f32 %v1030, %v1022
        %v1035 = vmin.f32 %v1031, %v1023
        %v1036 = vmin.f32 %v1032, %v1024
        %v1037 = vmin.f32 %v1033, %v1025
        %v1038 = vmin.f32 %v1034, %v1026
        %v1039 = vmin.f32 %v1035, %v1027
        %v1040 = vmin.f32 %v1036, %v1037
        %v1041 = vmin.f32 %v1038, %v1039
        %v1042 = vmin.f32 %v1040, %v1041
        %v1043 = vrot.slane %v1042, 4
        %v1044 = vmin.f32 %v1042, %v1043
        %v1045 = vrot.slane %v1044, 2
        %v1046 = vmin.f32 %v1044, %v1045
        %v1047 = vrot.slane %v1046, 1
        %v1048 = vmin.f32 %v1046, %v1047
        %vm1049 = vcmp.ne.f32.partialorder %v1048, 100.0
        %vm1050 = vmand %vm861, %vm1049
        %v1051 = vrsqrt.pop %v1048
        %v1052 = vmul.f32 %v1048, %v1051
        %vm1053 = vcmp.eq.f32.partialorder %v1048, inf
        %v1054 = vsel %vm1053, %v1048, %v1052
        %vm1055 = vcmp.eq.f32.partialorder %v1048, 0.0
        %v1056 = vand.u32 %v1048, 2147483648
        %v1057 = vsel %vm1055, %v1056, %v1054
        %v1058 = vsel %vm1050, %v1057, 0.0
        %v1059 = vsel %vm848, %v1058, 0.0
        %1060 = vadd.xlane.f32.xlu0 %v1059
        %v1061 = vpop.xlane.xlu0 %1060
        %v1062 = vrot.slane %v1061, 4
        %v1063 = vadd.f32 %v1061, %v1062
        %v1064 = vrot.slane %v1063, 2
        %v1065 = vadd.f32 %v1063, %v1064
        %v1066 = vrot.slane %v1065, 1
        %v1067 = vadd.f32 %v1065, %v1066
        %s1068 = vtos %v1067
        %v1069 = vstv %s1068
        %v1070 = vadd.f32 %v1069, 0.0
        %vm1071 = vcmp.eq.s32.totalorder %v407, 1
        %v1072 = vsel %vm1071, 1, 0
        %v1073 = vlaneseq
        %v1074 = vshrl.u32 %v1073, 7
        %v1075 = vsub.s32 0, %v1074
        %v1076 = vrot.slane %v1072, %v1075
        %vm1077 = vcmp.eq.s32.totalorder %v1076, 1
        %v1078 = vsel %vm1077, %v756, 100.0
        %v1079 = vsel %vm1077, %v757, 100.0
        %v1080 = vsel %vm1077, %v758, 100.0
        %v1081 = vsel %vm1077, %v759, 100.0
        %v1082 = vsel %vm1077, %v760, 100.0
        %v1083 = vsel %vm1077, %v761, 100.0
        %v1084 = vsel %vm1077, %v762, 100.0
        %v1085 = vsel %vm1077, %v763, 100.0
        %v1086 = vsel %vm1077, %v764, 100.0
        %v1087 = vsel %vm1077, %v765, 100.0
        %v1088 = vsel %vm1077, %v766, 100.0
        %v1089 = vsel %vm1077, %v767, 100.0
        %v1090 = vsel %vm1077, %v768, 100.0
        %v1091 = vsel %vm1077, %v769, 100.0
        %v1092 = vsel %vm1077, %v770, 100.0
        %v1093 = vsel %vm1077, %v771, 100.0
        %1094 = vmin.xlane.f32.xlu0 %v1078
        %v1095 = vpop.xlane.xlu0 %1094
        %1096 = vmin.xlane.f32.xlu0 %v1079
        %v1097 = vpop.xlane.xlu0 %1096
        %1098 = vmin.xlane.f32.xlu0 %v1080
        %v1099 = vpop.xlane.xlu0 %1098
        %1100 = vmin.xlane.f32.xlu0 %v1081
        %v1101 = vpop.xlane.xlu0 %1100
        %1102 = vmin.xlane.f32.xlu0 %v1082
        %v1103 = vpop.xlane.xlu0 %1102
        %1104 = vmin.xlane.f32.xlu0 %v1083
        %v1105 = vpop.xlane.xlu0 %1104
        %1106 = vmin.xlane.f32.xlu0 %v1084
        %v1107 = vpop.xlane.xlu0 %1106
        %1108 = vmin.xlane.f32.xlu0 %v1085
        %v1109 = vpop.xlane.xlu0 %1108
        %1110 = vmin.xlane.f32.xlu0 %v1086
        %v1111 = vpop.xlane.xlu0 %1110
        %1112 = vmin.xlane.f32.xlu0 %v1087
        %v1113 = vpop.xlane.xlu0 %1112
        %1114 = vmin.xlane.f32.xlu0 %v1088
        %v1115 = vpop.xlane.xlu0 %1114
        %1116 = vmin.xlane.f32.xlu0 %v1089
        %v1117 = vpop.xlane.xlu0 %1116
        %1118 = vmin.xlane.f32.xlu0 %v1090
        %v1119 = vpop.xlane.xlu0 %1118
        %1120 = vmin.xlane.f32.xlu0 %v1091
        %v1121 = vpop.xlane.xlu0 %1120
        %1122 = vmin.xlane.f32.xlu0 %v1092
        %v1123 = vpop.xlane.xlu0 %1122
        %1124 = vmin.xlane.f32.xlu0 %v1093
        %v1125 = vpop.xlane.xlu0 %1124
        %v1126 = vmin.f32 %v1095, 3e+38
        %v1127 = vmin.f32 %v1097, 3e+38
        %v1128 = vmin.f32 %v1099, 3e+38
        %v1129 = vmin.f32 %v1101, 3e+38
        %v1130 = vmin.f32 %v1103, 3e+38
        %v1131 = vmin.f32 %v1105, 3e+38
        %v1132 = vmin.f32 %v1107, 3e+38
        %v1133 = vmin.f32 %v1109, 3e+38
        %v1134 = vmin.f32 %v1111, 3e+38
        %v1135 = vmin.f32 %v1113, 3e+38
        %v1136 = vmin.f32 %v1115, 3e+38
        %v1137 = vmin.f32 %v1117, 3e+38
        %v1138 = vmin.f32 %v1119, 3e+38
        %v1139 = vmin.f32 %v1121, 3e+38
        %v1140 = vmin.f32 %v1123, 3e+38
        %v1141 = vmin.f32 %v1125, 3e+38
        %1142 = vset.pattern.permute.xlu0 1
        %1143 = vperm.xlu0 %1142, %v932
        %v1144 = vpop.permute.xlu0 %1143
        %1145 = vset.pattern.permute.xlu0 1
        %1146 = vperm.xlu0 %1145, %v933
        %v1147 = vpop.permute.xlu0 %1146
        %1148 = vset.pattern.permute.xlu0 1
        %1149 = vperm.xlu0 %1148, %v934
        %v1150 = vpop.permute.xlu0 %1149
        %1151 = vset.pattern.permute.xlu0 1
        %1152 = vperm.xlu0 %1151, %v935
        %v1153 = vpop.permute.xlu0 %1152
        %1154 = vset.pattern.permute.xlu0 1
        %1155 = vperm.xlu0 %1154, %v936
        %v1156 = vpop.permute.xlu0 %1155
        %1157 = vset.pattern.permute.xlu0 1
        %1158 = vperm.xlu0 %1157, %v937
        %v1159 = vpop.permute.xlu0 %1158
        %1160 = vset.pattern.permute.xlu0 1
        %1161 = vperm.xlu0 %1160, %v938
        %v1162 = vpop.permute.xlu0 %1161
        %1163 = vset.pattern.permute.xlu0 1
        %1164 = vperm.xlu0 %1163, %v939
        %v1165 = vpop.permute.xlu0 %1164
        %1166 = vset.pattern.permute.xlu0 1
        %1167 = vperm.xlu0 %1166, %v940
        %v1168 = vpop.permute.xlu0 %1167
        %1169 = vset.pattern.permute.xlu0 1
        %1170 = vperm.xlu0 %1169, %v941
        %v1171 = vpop.permute.xlu0 %1170
        %1172 = vset.pattern.permute.xlu0 1
        %1173 = vperm.xlu0 %1172, %v942
        %v1174 = vpop.permute.xlu0 %1173
        %1175 = vset.pattern.permute.xlu0 1
        %1176 = vperm.xlu0 %1175, %v943
        %v1177 = vpop.permute.xlu0 %1176
        %1178 = vset.pattern.permute.xlu0 1
        %1179 = vperm.xlu0 %1178, %v944
        %v1180 = vpop.permute.xlu0 %1179
        %1181 = vset.pattern.permute.xlu0 1
        %1182 = vperm.xlu0 %1181, %v945
        %v1183 = vpop.permute.xlu0 %1182
        %1184 = vset.pattern.permute.xlu0 1
        %1185 = vperm.xlu0 %1184, %v946
        %v1186 = vpop.permute.xlu0 %1185
        %1187 = vset.pattern.permute.xlu0 1
        %1188 = vperm.xlu0 %1187, %v947
        %v1189 = vpop.permute.xlu0 %1188
        %vm1190 = vcmp.eq.s32.totalorder %v1144, 1
        %vm1191 = vcmp.eq.s32.totalorder %v1147, 1
        %vm1192 = vcmp.eq.s32.totalorder %v1150, 1
        %vm1193 = vcmp.eq.s32.totalorder %v1153, 1
        %vm1194 = vcmp.eq.s32.totalorder %v1156, 1
        %vm1195 = vcmp.eq.s32.totalorder %v1159, 1
        %vm1196 = vcmp.eq.s32.totalorder %v1162, 1
        %vm1197 = vcmp.eq.s32.totalorder %v1165, 1
        %vm1198 = vcmp.eq.s32.totalorder %v1168, 1
        %vm1199 = vcmp.eq.s32.totalorder %v1171, 1
        %vm1200 = vcmp.eq.s32.totalorder %v1174, 1
        %vm1201 = vcmp.eq.s32.totalorder %v1177, 1
        %vm1202 = vcmp.eq.s32.totalorder %v1180, 1
        %vm1203 = vcmp.eq.s32.totalorder %v1183, 1
        %vm1204 = vcmp.eq.s32.totalorder %v1186, 1
        %vm1205 = vcmp.eq.s32.totalorder %v1189, 1
        %v1206 = vsel %vm1190, %v756, 100.0
        %v1207 = vsel %vm1191, %v757, 100.0
        %v1208 = vsel %vm1192, %v758, 100.0
        %v1209 = vsel %vm1193, %v759, 100.0
        %v1210 = vsel %vm1194, %v760, 100.0
        %v1211 = vsel %vm1195, %v761, 100.0
        %v1212 = vsel %vm1196, %v762, 100.0
        %v1213 = vsel %vm1197, %v763, 100.0
        %v1214 = vsel %vm1198, %v764, 100.0
        %v1215 = vsel %vm1199, %v765, 100.0
        %v1216 = vsel %vm1200, %v766, 100.0
        %v1217 = vsel %vm1201, %v767, 100.0
        %v1218 = vsel %vm1202, %v768, 100.0
        %v1219 = vsel %vm1203, %v769, 100.0
        %v1220 = vsel %vm1204, %v770, 100.0
        %v1221 = vsel %vm1205, %v771, 100.0
        %v1222 = vmin.f32 %v1206, %v1210
        %v1223 = vmin.f32 %v1207, %v1211
        %v1224 = vmin.f32 %v1208, %v1212
        %v1225 = vmin.f32 %v1209, %v1213
        %v1226 = vmin.f32 %v1222, %v1214
        %v1227 = vmin.f32 %v1223, %v1215
        %v1228 = vmin.f32 %v1224, %v1216
        %v1229 = vmin.f32 %v1225, %v1217
        %v1230 = vmin.f32 %v1226, %v1218
        %v1231 = vmin.f32 %v1227, %v1219
        %v1232 = vmin.f32 %v1228, %v1220
        %v1233 = vmin.f32 %v1229, %v1221
        %v1234 = vmin.f32 %v1230, %v1231
        %v1235 = vmin.f32 %v1232, %v1233
        %v1236 = vmin.f32 %v1234, %v1235
        %v1237 = vrot.slane %v1236, 4
        %v1238 = vmin.f32 %v1236, %v1237
        %v1239 = vrot.slane %v1238, 2
        %v1240 = vmin.f32 %v1238, %v1239
        %v1241 = vrot.slane %v1240, 1
        %v1242 = vmin.f32 %v1240, %v1241
        %vm1243 = vcmp.ne.f32.partialorder %v1242, 100.0
        %vm1244 = vmand %vm1071, %vm1243
        %v1245 = vrsqrt.pop %v1242
        %v1246 = vmul.f32 %v1242, %v1245
        %vm1247 = vcmp.eq.f32.partialorder %v1242, inf
        %v1248 = vsel %vm1247, %v1242, %v1246
        %vm1249 = vcmp.eq.f32.partialorder %v1242, 0.0
        %v1250 = vand.u32 %v1242, 2147483648
        %v1251 = vsel %vm1249, %v1250, %v1248
        %v1252 = vsel %vm1244, %v1251, 0.0
        %v1253 = vsel %vm848, %v1252, 0.0
        %1254 = vadd.xlane.f32.xlu0 %v1253
        %v1255 = vpop.xlane.xlu0 %1254
        %v1256 = vrot.slane %v1255, 4
        %v1257 = vadd.f32 %v1255, %v1256
        %v1258 = vrot.slane %v1257, 2
        %v1259 = vadd.f32 %v1257, %v1258
        %v1260 = vrot.slane %v1259, 1
        %v1261 = vadd.f32 %v1259, %v1260
        %s1262 = vtos %v1261
        %v1263 = vstv %s1262
        %v1264 = vadd.f32 %v1263, 0.0
        %vm1265 = vcmp.eq.s32.totalorder %v407, 2
        %v1266 = vsel %vm1265, 1, 0
        %v1267 = vlaneseq
        %v1268 = vshrl.u32 %v1267, 7
        %v1269 = vsub.s32 0, %v1268
        %v1270 = vrot.slane %v1266, %v1269
        %vm1271 = vcmp.eq.s32.totalorder %v1270, 1
        %v1272 = vsel %vm1271, %v756, 100.0
        %v1273 = vsel %vm1271, %v757, 100.0
        %v1274 = vsel %vm1271, %v758, 100.0
        %v1275 = vsel %vm1271, %v759, 100.0
        %v1276 = vsel %vm1271, %v760, 100.0
        %v1277 = vsel %vm1271, %v761, 100.0
        %v1278 = vsel %vm1271, %v762, 100.0
        %v1279 = vsel %vm1271, %v763, 100.0
        %v1280 = vsel %vm1271, %v764, 100.0
        %v1281 = vsel %vm1271, %v765, 100.0
        %v1282 = vsel %vm1271, %v766, 100.0
        %v1283 = vsel %vm1271, %v767, 100.0
        %v1284 = vsel %vm1271, %v768, 100.0
        %v1285 = vsel %vm1271, %v769, 100.0
        %v1286 = vsel %vm1271, %v770, 100.0
        %v1287 = vsel %vm1271, %v771, 100.0
        %1288 = vmin.xlane.f32.xlu0 %v1272
        %v1289 = vpop.xlane.xlu0 %1288
        %1290 = vmin.xlane.f32.xlu0 %v1273
        %v1291 = vpop.xlane.xlu0 %1290
        %1292 = vmin.xlane.f32.xlu0 %v1274
        %v1293 = vpop.xlane.xlu0 %1292
        %1294 = vmin.xlane.f32.xlu0 %v1275
        %v1295 = vpop.xlane.xlu0 %1294
        %1296 = vmin.xlane.f32.xlu0 %v1276
        %v1297 = vpop.xlane.xlu0 %1296
        %1298 = vmin.xlane.f32.xlu0 %v1277
        %v1299 = vpop.xlane.xlu0 %1298
        %1300 = vmin.xlane.f32.xlu0 %v1278
        %v1301 = vpop.xlane.xlu0 %1300
        %1302 = vmin.xlane.f32.xlu0 %v1279
        %v1303 = vpop.xlane.xlu0 %1302
        %1304 = vmin.xlane.f32.xlu0 %v1280
        %v1305 = vpop.xlane.xlu0 %1304
        %1306 = vmin.xlane.f32.xlu0 %v1281
        %v1307 = vpop.xlane.xlu0 %1306
        %1308 = vmin.xlane.f32.xlu0 %v1282
        %v1309 = vpop.xlane.xlu0 %1308
        %1310 = vmin.xlane.f32.xlu0 %v1283
        %v1311 = vpop.xlane.xlu0 %1310
        %1312 = vmin.xlane.f32.xlu0 %v1284
        %v1313 = vpop.xlane.xlu0 %1312
        %1314 = vmin.xlane.f32.xlu0 %v1285
        %v1315 = vpop.xlane.xlu0 %1314
        %1316 = vmin.xlane.f32.xlu0 %v1286
        %v1317 = vpop.xlane.xlu0 %1316
        %1318 = vmin.xlane.f32.xlu0 %v1287
        %v1319 = vpop.xlane.xlu0 %1318
        %v1320 = vmin.f32 %v1289, 3e+38
        %v1321 = vmin.f32 %v1291, 3e+38
        %v1322 = vmin.f32 %v1293, 3e+38
        %v1323 = vmin.f32 %v1295, 3e+38
        %v1324 = vmin.f32 %v1297, 3e+38
        %v1325 = vmin.f32 %v1299, 3e+38
        %v1326 = vmin.f32 %v1301, 3e+38
        %v1327 = vmin.f32 %v1303, 3e+38
        %v1328 = vmin.f32 %v1305, 3e+38
        %v1329 = vmin.f32 %v1307, 3e+38
        %v1330 = vmin.f32 %v1309, 3e+38
        %v1331 = vmin.f32 %v1311, 3e+38
        %v1332 = vmin.f32 %v1313, 3e+38
        %v1333 = vmin.f32 %v1315, 3e+38
        %v1334 = vmin.f32 %v1317, 3e+38
        %v1335 = vmin.f32 %v1319, 3e+38
        %1336 = vset.pattern.permute.xlu0 2
        %1337 = vperm.xlu0 %1336, %v932
        %v1338 = vpop.permute.xlu0 %1337
        %1339 = vset.pattern.permute.xlu0 2
        %1340 = vperm.xlu0 %1339, %v933
        %v1341 = vpop.permute.xlu0 %1340
        %1342 = vset.pattern.permute.xlu0 2
        %1343 = vperm.xlu0 %1342, %v934
        %v1344 = vpop.permute.xlu0 %1343
        %1345 = vset.pattern.permute.xlu0 2
        %1346 = vperm.xlu0 %1345, %v935
        %v1347 = vpop.permute.xlu0 %1346
        %1348 = vset.pattern.permute.xlu0 2
        %1349 = vperm.xlu0 %1348, %v936
        %v1350 = vpop.permute.xlu0 %1349
        %1351 = vset.pattern.permute.xlu0 2
        %1352 = vperm.xlu0 %1351, %v937
        %v1353 = vpop.permute.xlu0 %1352
        %1354 = vset.pattern.permute.xlu0 2
        %1355 = vperm.xlu0 %1354, %v938
        %v1356 = vpop.permute.xlu0 %1355
        %1357 = vset.pattern.permute.xlu0 2
        %1358 = vperm.xlu0 %1357, %v939
        %v1359 = vpop.permute.xlu0 %1358
        %1360 = vset.pattern.permute.xlu0 2
        %1361 = vperm.xlu0 %1360, %v940
        %v1362 = vpop.permute.xlu0 %1361
        %1363 = vset.pattern.permute.xlu0 2
        %1364 = vperm.xlu0 %1363, %v941
        %v1365 = vpop.permute.xlu0 %1364
        %1366 = vset.pattern.permute.xlu0 2
        %1367 = vperm.xlu0 %1366, %v942
        %v1368 = vpop.permute.xlu0 %1367
        %1369 = vset.pattern.permute.xlu0 2
        %1370 = vperm.xlu0 %1369, %v943
        %v1371 = vpop.permute.xlu0 %1370
        %1372 = vset.pattern.permute.xlu0 2
        %1373 = vperm.xlu0 %1372, %v944
        %v1374 = vpop.permute.xlu0 %1373
        %1375 = vset.pattern.permute.xlu0 2
        %1376 = vperm.xlu0 %1375, %v945
        %v1377 = vpop.permute.xlu0 %1376
        %1378 = vset.pattern.permute.xlu0 2
        %1379 = vperm.xlu0 %1378, %v946
        %v1380 = vpop.permute.xlu0 %1379
        %1381 = vset.pattern.permute.xlu0 2
        %1382 = vperm.xlu0 %1381, %v947
        %v1383 = vpop.permute.xlu0 %1382
        %vm1384 = vcmp.eq.s32.totalorder %v1338, 1
        %vm1385 = vcmp.eq.s32.totalorder %v1341, 1
        %vm1386 = vcmp.eq.s32.totalorder %v1344, 1
        %vm1387 = vcmp.eq.s32.totalorder %v1347, 1
        %vm1388 = vcmp.eq.s32.totalorder %v1350, 1
        %vm1389 = vcmp.eq.s32.totalorder %v1353, 1
        %vm1390 = vcmp.eq.s32.totalorder %v1356, 1
        %vm1391 = vcmp.eq.s32.totalorder %v1359, 1
        %vm1392 = vcmp.eq.s32.totalorder %v1362, 1
        %vm1393 = vcmp.eq.s32.totalorder %v1365, 1
        %vm1394 = vcmp.eq.s32.totalorder %v1368, 1
        %vm1395 = vcmp.eq.s32.totalorder %v1371, 1
        %vm1396 = vcmp.eq.s32.totalorder %v1374, 1
        %vm1397 = vcmp.eq.s32.totalorder %v1377, 1
        %vm1398 = vcmp.eq.s32.totalorder %v1380, 1
        %vm1399 = vcmp.eq.s32.totalorder %v1383, 1
        %v1400 = vsel %vm1384, %v756, 100.0
        %v1401 = vsel %vm1385, %v757, 100.0
        %v1402 = vsel %vm1386, %v758, 100.0
        %v1403 = vsel %vm1387, %v759, 100.0
        %v1404 = vsel %vm1388, %v760, 100.0
        %v1405 = vsel %vm1389, %v761, 100.0
        %v1406 = vsel %vm1390, %v762, 100.0
        %v1407 = vsel %vm1391, %v763, 100.0
        %v1408 = vsel %vm1392, %v764, 100.0
        %v1409 = vsel %vm1393, %v765, 100.0
        %v1410 = vsel %vm1394, %v766, 100.0
        %v1411 = vsel %vm1395, %v767, 100.0
        %v1412 = vsel %vm1396, %v768, 100.0
        %v1413 = vsel %vm1397, %v769, 100.0
        %v1414 = vsel %vm1398, %v770, 100.0
        %v1415 = vsel %vm1399, %v771, 100.0
        %v1416 = vmin.f32 %v1400, %v1404
        %v1417 = vmin.f32 %v1401, %v1405
        %v1418 = vmin.f32 %v1402, %v1406
        %v1419 = vmin.f32 %v1403, %v1407
        %v1420 = vmin.f32 %v1416, %v1408
        %v1421 = vmin.f32 %v1417, %v1409
        %v1422 = vmin.f32 %v1418, %v1410
        %v1423 = vmin.f32 %v1419, %v1411
        %v1424 = vmin.f32 %v1420, %v1412
        %v1425 = vmin.f32 %v1421, %v1413
        %v1426 = vmin.f32 %v1422, %v1414
        %v1427 = vmin.f32 %v1423, %v1415
        %v1428 = vmin.f32 %v1424, %v1425
        %v1429 = vmin.f32 %v1426, %v1427
        %v1430 = vmin.f32 %v1428, %v1429
        %v1431 = vrot.slane %v1430, 4
        %v1432 = vmin.f32 %v1430, %v1431
        %v1433 = vrot.slane %v1432, 2
        %v1434 = vmin.f32 %v1432, %v1433
        %v1435 = vrot.slane %v1434, 1
        %v1436 = vmin.f32 %v1434, %v1435
        %vm1437 = vcmp.ne.f32.partialorder %v1436, 100.0
        %vm1438 = vmand %vm1265, %vm1437
        %v1439 = vrsqrt.pop %v1436
        %v1440 = vmul.f32 %v1436, %v1439
        %vm1441 = vcmp.eq.f32.partialorder %v1436, inf
        %v1442 = vsel %vm1441, %v1436, %v1440
        %vm1443 = vcmp.eq.f32.partialorder %v1436, 0.0
        %v1444 = vand.u32 %v1436, 2147483648
        %v1445 = vsel %vm1443, %v1444, %v1442
        %v1446 = vsel %vm1438, %v1445, 0.0
        %v1447 = vsel %vm848, %v1446, 0.0
        %1448 = vadd.xlane.f32.xlu0 %v1447
        %v1449 = vpop.xlane.xlu0 %1448
        %v1450 = vrot.slane %v1449, 4
        %v1451 = vadd.f32 %v1449, %v1450
        %v1452 = vrot.slane %v1451, 2
        %v1453 = vadd.f32 %v1451, %v1452
        %v1454 = vrot.slane %v1453, 1
        %v1455 = vadd.f32 %v1453, %v1454
        %s1456 = vtos %v1455
        %v1457 = vstv %s1456
        %v1458 = vadd.f32 %v1457, 0.0
        %vm1459 = vcmp.eq.s32.totalorder %v407, 3
        %v1460 = vsel %vm1459, 1, 0
        %v1461 = vlaneseq
        %v1462 = vshrl.u32 %v1461, 7
        %v1463 = vsub.s32 0, %v1462
        %v1464 = vrot.slane %v1460, %v1463
        %vm1465 = vcmp.eq.s32.totalorder %v1464, 1
        %v1466 = vsel %vm1465, %v756, 100.0
        %v1467 = vsel %vm1465, %v757, 100.0
        %v1468 = vsel %vm1465, %v758, 100.0
        %v1469 = vsel %vm1465, %v759, 100.0
        %v1470 = vsel %vm1465, %v760, 100.0
        %v1471 = vsel %vm1465, %v761, 100.0
        %v1472 = vsel %vm1465, %v762, 100.0
        %v1473 = vsel %vm1465, %v763, 100.0
        %v1474 = vsel %vm1465, %v764, 100.0
        %v1475 = vsel %vm1465, %v765, 100.0
        %v1476 = vsel %vm1465, %v766, 100.0
        %v1477 = vsel %vm1465, %v767, 100.0
        %v1478 = vsel %vm1465, %v768, 100.0
        %v1479 = vsel %vm1465, %v769, 100.0
        %v1480 = vsel %vm1465, %v770, 100.0
        %v1481 = vsel %vm1465, %v771, 100.0
        %1482 = vmin.xlane.f32.xlu0 %v1466
        %v1483 = vpop.xlane.xlu0 %1482
        %1484 = vmin.xlane.f32.xlu0 %v1467
        %v1485 = vpop.xlane.xlu0 %1484
        %1486 = vmin.xlane.f32.xlu0 %v1468
        %v1487 = vpop.xlane.xlu0 %1486
        %1488 = vmin.xlane.f32.xlu0 %v1469
        %v1489 = vpop.xlane.xlu0 %1488
        %1490 = vmin.xlane.f32.xlu0 %v1470
        %v1491 = vpop.xlane.xlu0 %1490
        %1492 = vmin.xlane.f32.xlu0 %v1471
        %v1493 = vpop.xlane.xlu0 %1492
        %1494 = vmin.xlane.f32.xlu0 %v1472
        %v1495 = vpop.xlane.xlu0 %1494
        %1496 = vmin.xlane.f32.xlu0 %v1473
        %v1497 = vpop.xlane.xlu0 %1496
        %1498 = vmin.xlane.f32.xlu0 %v1474
        %v1499 = vpop.xlane.xlu0 %1498
        %1500 = vmin.xlane.f32.xlu0 %v1475
        %v1501 = vpop.xlane.xlu0 %1500
        %1502 = vmin.xlane.f32.xlu0 %v1476
        %v1503 = vpop.xlane.xlu0 %1502
        %1504 = vmin.xlane.f32.xlu0 %v1477
        %v1505 = vpop.xlane.xlu0 %1504
        %1506 = vmin.xlane.f32.xlu0 %v1478
        %v1507 = vpop.xlane.xlu0 %1506
        %1508 = vmin.xlane.f32.xlu0 %v1479
        %v1509 = vpop.xlane.xlu0 %1508
        %1510 = vmin.xlane.f32.xlu0 %v1480
        %v1511 = vpop.xlane.xlu0 %1510
        %1512 = vmin.xlane.f32.xlu0 %v1481
        %v1513 = vpop.xlane.xlu0 %1512
        %v1514 = vmin.f32 %v1483, 3e+38
        %v1515 = vmin.f32 %v1485, 3e+38
        %v1516 = vmin.f32 %v1487, 3e+38
        %v1517 = vmin.f32 %v1489, 3e+38
        %v1518 = vmin.f32 %v1491, 3e+38
        %v1519 = vmin.f32 %v1493, 3e+38
        %v1520 = vmin.f32 %v1495, 3e+38
        %v1521 = vmin.f32 %v1497, 3e+38
        %v1522 = vmin.f32 %v1499, 3e+38
        %v1523 = vmin.f32 %v1501, 3e+38
        %v1524 = vmin.f32 %v1503, 3e+38
        %v1525 = vmin.f32 %v1505, 3e+38
        %v1526 = vmin.f32 %v1507, 3e+38
        %v1527 = vmin.f32 %v1509, 3e+38
        %v1528 = vmin.f32 %v1511, 3e+38
        %v1529 = vmin.f32 %v1513, 3e+38
        %1530 = vset.pattern.permute.xlu0 3
        %1531 = vperm.xlu0 %1530, %v932
        %v1532 = vpop.permute.xlu0 %1531
        %1533 = vset.pattern.permute.xlu0 3
        %1534 = vperm.xlu0 %1533, %v933
        %v1535 = vpop.permute.xlu0 %1534
        %1536 = vset.pattern.permute.xlu0 3
        %1537 = vperm.xlu0 %1536, %v934
        %v1538 = vpop.permute.xlu0 %1537
        %1539 = vset.pattern.permute.xlu0 3
        %1540 = vperm.xlu0 %1539, %v935
        %v1541 = vpop.permute.xlu0 %1540
        %1542 = vset.pattern.permute.xlu0 3
        %1543 = vperm.xlu0 %1542, %v936
        %v1544 = vpop.permute.xlu0 %1543
        %1545 = vset.pattern.permute.xlu0 3
        %1546 = vperm.xlu0 %1545, %v937
        %v1547 = vpop.permute.xlu0 %1546
        %1548 = vset.pattern.permute.xlu0 3
        %1549 = vperm.xlu0 %1548, %v938
        %v1550 = vpop.permute.xlu0 %1549
        %1551 = vset.pattern.permute.xlu0 3
        %1552 = vperm.xlu0 %1551, %v939
        %v1553 = vpop.permute.xlu0 %1552
        %1554 = vset.pattern.permute.xlu0 3
        %1555 = vperm.xlu0 %1554, %v940
        %v1556 = vpop.permute.xlu0 %1555
        %1557 = vset.pattern.permute.xlu0 3
        %1558 = vperm.xlu0 %1557, %v941
        %v1559 = vpop.permute.xlu0 %1558
        %1560 = vset.pattern.permute.xlu0 3
        %1561 = vperm.xlu0 %1560, %v942
        %v1562 = vpop.permute.xlu0 %1561
        %1563 = vset.pattern.permute.xlu0 3
        %1564 = vperm.xlu0 %1563, %v943
        %v1565 = vpop.permute.xlu0 %1564
        %1566 = vset.pattern.permute.xlu0 3
        %1567 = vperm.xlu0 %1566, %v944
        %v1568 = vpop.permute.xlu0 %1567
        %1569 = vset.pattern.permute.xlu0 3
        %1570 = vperm.xlu0 %1569, %v945
        %v1571 = vpop.permute.xlu0 %1570
        %1572 = vset.pattern.permute.xlu0 3
        %1573 = vperm.xlu0 %1572, %v946
        %v1574 = vpop.permute.xlu0 %1573
        %1575 = vset.pattern.permute.xlu0 3
        %1576 = vperm.xlu0 %1575, %v947
        %v1577 = vpop.permute.xlu0 %1576
        %vm1578 = vcmp.eq.s32.totalorder %v1532, 1
        %vm1579 = vcmp.eq.s32.totalorder %v1535, 1
        %vm1580 = vcmp.eq.s32.totalorder %v1538, 1
        %vm1581 = vcmp.eq.s32.totalorder %v1541, 1
        %vm1582 = vcmp.eq.s32.totalorder %v1544, 1
        %vm1583 = vcmp.eq.s32.totalorder %v1547, 1
        %vm1584 = vcmp.eq.s32.totalorder %v1550, 1
        %vm1585 = vcmp.eq.s32.totalorder %v1553, 1
        %vm1586 = vcmp.eq.s32.totalorder %v1556, 1
        %vm1587 = vcmp.eq.s32.totalorder %v1559, 1
        %vm1588 = vcmp.eq.s32.totalorder %v1562, 1
        %vm1589 = vcmp.eq.s32.totalorder %v1565, 1
        %vm1590 = vcmp.eq.s32.totalorder %v1568, 1
        %vm1591 = vcmp.eq.s32.totalorder %v1571, 1
        %vm1592 = vcmp.eq.s32.totalorder %v1574, 1
        %vm1593 = vcmp.eq.s32.totalorder %v1577, 1
        %v1594 = vsel %vm1578, %v756, 100.0
        %v1595 = vsel %vm1579, %v757, 100.0
        %v1596 = vsel %vm1580, %v758, 100.0
        %v1597 = vsel %vm1581, %v759, 100.0
        %v1598 = vsel %vm1582, %v760, 100.0
        %v1599 = vsel %vm1583, %v761, 100.0
        %v1600 = vsel %vm1584, %v762, 100.0
        %v1601 = vsel %vm1585, %v763, 100.0
        %v1602 = vsel %vm1586, %v764, 100.0
        %v1603 = vsel %vm1587, %v765, 100.0
        %v1604 = vsel %vm1588, %v766, 100.0
        %v1605 = vsel %vm1589, %v767, 100.0
        %v1606 = vsel %vm1590, %v768, 100.0
        %v1607 = vsel %vm1591, %v769, 100.0
        %v1608 = vsel %vm1592, %v770, 100.0
        %v1609 = vsel %vm1593, %v771, 100.0
        %v1610 = vmin.f32 %v1594, %v1598
        %v1611 = vmin.f32 %v1595, %v1599
        %v1612 = vmin.f32 %v1596, %v1600
        %v1613 = vmin.f32 %v1597, %v1601
        %v1614 = vmin.f32 %v1610, %v1602
        %v1615 = vmin.f32 %v1611, %v1603
        %v1616 = vmin.f32 %v1612, %v1604
        %v1617 = vmin.f32 %v1613, %v1605
        %v1618 = vmin.f32 %v1614, %v1606
        %v1619 = vmin.f32 %v1615, %v1607
        %v1620 = vmin.f32 %v1616, %v1608
        %v1621 = vmin.f32 %v1617, %v1609
        %v1622 = vmin.f32 %v1618, %v1619
        %v1623 = vmin.f32 %v1620, %v1621
        %v1624 = vmin.f32 %v1622, %v1623
        %v1625 = vrot.slane %v1624, 4
        %v1626 = vmin.f32 %v1624, %v1625
        %v1627 = vrot.slane %v1626, 2
        %v1628 = vmin.f32 %v1626, %v1627
        %v1629 = vrot.slane %v1628, 1
        %v1630 = vmin.f32 %v1628, %v1629
        %vm1631 = vcmp.ne.f32.partialorder %v1630, 100.0
        %vm1632 = vmand %vm1459, %vm1631
        %v1633 = vrsqrt.pop %v1630
        %v1634 = vmul.f32 %v1630, %v1633
        %vm1635 = vcmp.eq.f32.partialorder %v1630, inf
        %v1636 = vsel %vm1635, %v1630, %v1634
        %vm1637 = vcmp.eq.f32.partialorder %v1630, 0.0
        %v1638 = vand.u32 %v1630, 2147483648
        %v1639 = vsel %vm1637, %v1638, %v1636
        %v1640 = vsel %vm1632, %v1639, 0.0
        %v1641 = vsel %vm848, %v1640, 0.0
        %1642 = vadd.xlane.f32.xlu0 %v1641
        %v1643 = vpop.xlane.xlu0 %1642
        %v1644 = vrot.slane %v1643, 4
        %v1645 = vadd.f32 %v1643, %v1644
        %v1646 = vrot.slane %v1645, 2
        %v1647 = vadd.f32 %v1645, %v1646
        %v1648 = vrot.slane %v1647, 1
        %v1649 = vadd.f32 %v1647, %v1648
        %s1650 = vtos %v1649
        %v1651 = vstv %s1650
        %v1652 = vadd.f32 %v1651, 0.0
        %vm1653 = vcmp.eq.s32.totalorder %v407, 4
        %v1654 = vsel %vm1653, 1, 0
        %v1655 = vlaneseq
        %v1656 = vshrl.u32 %v1655, 7
        %v1657 = vsub.s32 0, %v1656
        %v1658 = vrot.slane %v1654, %v1657
        %vm1659 = vcmp.eq.s32.totalorder %v1658, 1
        %v1660 = vsel %vm1659, %v756, 100.0
        %v1661 = vsel %vm1659, %v757, 100.0
        %v1662 = vsel %vm1659, %v758, 100.0
        %v1663 = vsel %vm1659, %v759, 100.0
        %v1664 = vsel %vm1659, %v760, 100.0
        %v1665 = vsel %vm1659, %v761, 100.0
        %v1666 = vsel %vm1659, %v762, 100.0
        %v1667 = vsel %vm1659, %v763, 100.0
        %v1668 = vsel %vm1659, %v764, 100.0
        %v1669 = vsel %vm1659, %v765, 100.0
        %v1670 = vsel %vm1659, %v766, 100.0
        %v1671 = vsel %vm1659, %v767, 100.0
        %v1672 = vsel %vm1659, %v768, 100.0
        %v1673 = vsel %vm1659, %v769, 100.0
        %v1674 = vsel %vm1659, %v770, 100.0
        %v1675 = vsel %vm1659, %v771, 100.0
        %1676 = vmin.xlane.f32.xlu0 %v1660
        %v1677 = vpop.xlane.xlu0 %1676
        %1678 = vmin.xlane.f32.xlu0 %v1661
        %v1679 = vpop.xlane.xlu0 %1678
        %1680 = vmin.xlane.f32.xlu0 %v1662
        %v1681 = vpop.xlane.xlu0 %1680
        %1682 = vmin.xlane.f32.xlu0 %v1663
        %v1683 = vpop.xlane.xlu0 %1682
        %1684 = vmin.xlane.f32.xlu0 %v1664
        %v1685 = vpop.xlane.xlu0 %1684
        %1686 = vmin.xlane.f32.xlu0 %v1665
        %v1687 = vpop.xlane.xlu0 %1686
        %1688 = vmin.xlane.f32.xlu0 %v1666
        %v1689 = vpop.xlane.xlu0 %1688
        %1690 = vmin.xlane.f32.xlu0 %v1667
        %v1691 = vpop.xlane.xlu0 %1690
        %1692 = vmin.xlane.f32.xlu0 %v1668
        %v1693 = vpop.xlane.xlu0 %1692
        %1694 = vmin.xlane.f32.xlu0 %v1669
        %v1695 = vpop.xlane.xlu0 %1694
        %1696 = vmin.xlane.f32.xlu0 %v1670
        %v1697 = vpop.xlane.xlu0 %1696
        %1698 = vmin.xlane.f32.xlu0 %v1671
        %v1699 = vpop.xlane.xlu0 %1698
        %1700 = vmin.xlane.f32.xlu0 %v1672
        %v1701 = vpop.xlane.xlu0 %1700
        %1702 = vmin.xlane.f32.xlu0 %v1673
        %v1703 = vpop.xlane.xlu0 %1702
        %1704 = vmin.xlane.f32.xlu0 %v1674
        %v1705 = vpop.xlane.xlu0 %1704
        %1706 = vmin.xlane.f32.xlu0 %v1675
        %v1707 = vpop.xlane.xlu0 %1706
        %v1708 = vmin.f32 %v1677, 3e+38
        %v1709 = vmin.f32 %v1679, 3e+38
        %v1710 = vmin.f32 %v1681, 3e+38
        %v1711 = vmin.f32 %v1683, 3e+38
        %v1712 = vmin.f32 %v1685, 3e+38
        %v1713 = vmin.f32 %v1687, 3e+38
        %v1714 = vmin.f32 %v1689, 3e+38
        %v1715 = vmin.f32 %v1691, 3e+38
        %v1716 = vmin.f32 %v1693, 3e+38
        %v1717 = vmin.f32 %v1695, 3e+38
        %v1718 = vmin.f32 %v1697, 3e+38
        %v1719 = vmin.f32 %v1699, 3e+38
        %v1720 = vmin.f32 %v1701, 3e+38
        %v1721 = vmin.f32 %v1703, 3e+38
        %v1722 = vmin.f32 %v1705, 3e+38
        %v1723 = vmin.f32 %v1707, 3e+38
        %1724 = vset.pattern.permute.xlu0 4
        %1725 = vperm.xlu0 %1724, %v932
        %v1726 = vpop.permute.xlu0 %1725
        %1727 = vset.pattern.permute.xlu0 4
        %1728 = vperm.xlu0 %1727, %v933
        %v1729 = vpop.permute.xlu0 %1728
        %1730 = vset.pattern.permute.xlu0 4
        %1731 = vperm.xlu0 %1730, %v934
        %v1732 = vpop.permute.xlu0 %1731
        %1733 = vset.pattern.permute.xlu0 4
        %1734 = vperm.xlu0 %1733, %v935
        %v1735 = vpop.permute.xlu0 %1734
        %1736 = vset.pattern.permute.xlu0 4
        %1737 = vperm.xlu0 %1736, %v936
        %v1738 = vpop.permute.xlu0 %1737
        %1739 = vset.pattern.permute.xlu0 4
        %1740 = vperm.xlu0 %1739, %v937
        %v1741 = vpop.permute.xlu0 %1740
        %1742 = vset.pattern.permute.xlu0 4
        %1743 = vperm.xlu0 %1742, %v938
        %v1744 = vpop.permute.xlu0 %1743
        %1745 = vset.pattern.permute.xlu0 4
        %1746 = vperm.xlu0 %1745, %v939
        %v1747 = vpop.permute.xlu0 %1746
        %1748 = vset.pattern.permute.xlu0 4
        %1749 = vperm.xlu0 %1748, %v940
        %v1750 = vpop.permute.xlu0 %1749
        %1751 = vset.pattern.permute.xlu0 4
        %1752 = vperm.xlu0 %1751, %v941
        %v1753 = vpop.permute.xlu0 %1752
        %1754 = vset.pattern.permute.xlu0 4
        %1755 = vperm.xlu0 %1754, %v942
        %v1756 = vpop.permute.xlu0 %1755
        %1757 = vset.pattern.permute.xlu0 4
        %1758 = vperm.xlu0 %1757, %v943
        %v1759 = vpop.permute.xlu0 %1758
        %1760 = vset.pattern.permute.xlu0 4
        %1761 = vperm.xlu0 %1760, %v944
        %v1762 = vpop.permute.xlu0 %1761
        %1763 = vset.pattern.permute.xlu0 4
        %1764 = vperm.xlu0 %1763, %v945
        %v1765 = vpop.permute.xlu0 %1764
        %1766 = vset.pattern.permute.xlu0 4
        %1767 = vperm.xlu0 %1766, %v946
        %v1768 = vpop.permute.xlu0 %1767
        %1769 = vset.pattern.permute.xlu0 4
        %1770 = vperm.xlu0 %1769, %v947
        %v1771 = vpop.permute.xlu0 %1770
        %vm1772 = vcmp.eq.s32.totalorder %v1726, 1
        %vm1773 = vcmp.eq.s32.totalorder %v1729, 1
        %vm1774 = vcmp.eq.s32.totalorder %v1732, 1
        %vm1775 = vcmp.eq.s32.totalorder %v1735, 1
        %vm1776 = vcmp.eq.s32.totalorder %v1738, 1
        %vm1777 = vcmp.eq.s32.totalorder %v1741, 1
        %vm1778 = vcmp.eq.s32.totalorder %v1744, 1
        %vm1779 = vcmp.eq.s32.totalorder %v1747, 1
        %vm1780 = vcmp.eq.s32.totalorder %v1750, 1
        %vm1781 = vcmp.eq.s32.totalorder %v1753, 1
        %vm1782 = vcmp.eq.s32.totalorder %v1756, 1
        %vm1783 = vcmp.eq.s32.totalorder %v1759, 1
        %vm1784 = vcmp.eq.s32.totalorder %v1762, 1
        %vm1785 = vcmp.eq.s32.totalorder %v1765, 1
        %vm1786 = vcmp.eq.s32.totalorder %v1768, 1
        %vm1787 = vcmp.eq.s32.totalorder %v1771, 1
        %v1788 = vsel %vm1772, %v756, 100.0
        %v1789 = vsel %vm1773, %v757, 100.0
        %v1790 = vsel %vm1774, %v758, 100.0
        %v1791 = vsel %vm1775, %v759, 100.0
        %v1792 = vsel %vm1776, %v760, 100.0
        %v1793 = vsel %vm1777, %v761, 100.0
        %v1794 = vsel %vm1778, %v762, 100.0
        %v1795 = vsel %vm1779, %v763, 100.0
        %v1796 = vsel %vm1780, %v764, 100.0
        %v1797 = vsel %vm1781, %v765, 100.0
        %v1798 = vsel %vm1782, %v766, 100.0
        %v1799 = vsel %vm1783, %v767, 100.0
        %v1800 = vsel %vm1784, %v768, 100.0
        %v1801 = vsel %vm1785, %v769, 100.0
        %v1802 = vsel %vm1786, %v770, 100.0
        %v1803 = vsel %vm1787, %v771, 100.0
        %v1804 = vmin.f32 %v1788, %v1792
        %v1805 = vmin.f32 %v1789, %v1793
        %v1806 = vmin.f32 %v1790, %v1794
        %v1807 = vmin.f32 %v1791, %v1795
        %v1808 = vmin.f32 %v1804, %v1796
        %v1809 = vmin.f32 %v1805, %v1797
        %v1810 = vmin.f32 %v1806, %v1798
        %v1811 = vmin.f32 %v1807, %v1799
        %v1812 = vmin.f32 %v1808, %v1800
        %v1813 = vmin.f32 %v1809, %v1801
        %v1814 = vmin.f32 %v1810, %v1802
        %v1815 = vmin.f32 %v1811, %v1803
        %v1816 = vmin.f32 %v1812, %v1813
        %v1817 = vmin.f32 %v1814, %v1815
        %v1818 = vmin.f32 %v1816, %v1817
        %v1819 = vrot.slane %v1818, 4
        %v1820 = vmin.f32 %v1818, %v1819
        %v1821 = vrot.slane %v1820, 2
        %v1822 = vmin.f32 %v1820, %v1821
        %v1823 = vrot.slane %v1822, 1
        %v1824 = vmin.f32 %v1822, %v1823
        %vm1825 = vcmp.ne.f32.partialorder %v1824, 100.0
        %vm1826 = vmand %vm1653, %vm1825
        %v1827 = vrsqrt.pop %v1824
        %v1828 = vmul.f32 %v1824, %v1827
        %vm1829 = vcmp.eq.f32.partialorder %v1824, inf
        %v1830 = vsel %vm1829, %v1824, %v1828
        %vm1831 = vcmp.eq.f32.partialorder %v1824, 0.0
        %v1832 = vand.u32 %v1824, 2147483648
        %v1833 = vsel %vm1831, %v1832, %v1830
        %v1834 = vsel %vm1826, %v1833, 0.0
        %v1835 = vsel %vm848, %v1834, 0.0
        %1836 = vadd.xlane.f32.xlu0 %v1835
        %v1837 = vpop.xlane.xlu0 %1836
        %v1838 = vrot.slane %v1837, 4
        %v1839 = vadd.f32 %v1837, %v1838
        %v1840 = vrot.slane %v1839, 2
        %v1841 = vadd.f32 %v1839, %v1840
        %v1842 = vrot.slane %v1841, 1
        %v1843 = vadd.f32 %v1841, %v1842
        %s1844 = vtos %v1843
        %v1845 = vstv %s1844
        %v1846 = vadd.f32 %v1845, 0.0
        %vm1847 = vcmp.eq.s32.totalorder %v407, 5
        %v1848 = vsel %vm1847, 1, 0
        %v1849 = vlaneseq
        %v1850 = vshrl.u32 %v1849, 7
        %v1851 = vsub.s32 0, %v1850
        %v1852 = vrot.slane %v1848, %v1851
        %vm1853 = vcmp.eq.s32.totalorder %v1852, 1
        %v1854 = vsel %vm1853, %v756, 100.0
        %v1855 = vsel %vm1853, %v757, 100.0
        %v1856 = vsel %vm1853, %v758, 100.0
        %v1857 = vsel %vm1853, %v759, 100.0
        %v1858 = vsel %vm1853, %v760, 100.0
        %v1859 = vsel %vm1853, %v761, 100.0
        %v1860 = vsel %vm1853, %v762, 100.0
        %v1861 = vsel %vm1853, %v763, 100.0
        %v1862 = vsel %vm1853, %v764, 100.0
        %v1863 = vsel %vm1853, %v765, 100.0
        %v1864 = vsel %vm1853, %v766, 100.0
        %v1865 = vsel %vm1853, %v767, 100.0
        %v1866 = vsel %vm1853, %v768, 100.0
        %v1867 = vsel %vm1853, %v769, 100.0
        %v1868 = vsel %vm1853, %v770, 100.0
        %v1869 = vsel %vm1853, %v771, 100.0
        %1870 = vmin.xlane.f32.xlu0 %v1854
        %v1871 = vpop.xlane.xlu0 %1870
        %1872 = vmin.xlane.f32.xlu0 %v1855
        %v1873 = vpop.xlane.xlu0 %1872
        %1874 = vmin.xlane.f32.xlu0 %v1856
        %v1875 = vpop.xlane.xlu0 %1874
        %1876 = vmin.xlane.f32.xlu0 %v1857
        %v1877 = vpop.xlane.xlu0 %1876
        %1878 = vmin.xlane.f32.xlu0 %v1858
        %v1879 = vpop.xlane.xlu0 %1878
        %1880 = vmin.xlane.f32.xlu0 %v1859
        %v1881 = vpop.xlane.xlu0 %1880
        %1882 = vmin.xlane.f32.xlu0 %v1860
        %v1883 = vpop.xlane.xlu0 %1882
        %1884 = vmin.xlane.f32.xlu0 %v1861
        %v1885 = vpop.xlane.xlu0 %1884
        %1886 = vmin.xlane.f32.xlu0 %v1862
        %v1887 = vpop.xlane.xlu0 %1886
        %1888 = vmin.xlane.f32.xlu0 %v1863
        %v1889 = vpop.xlane.xlu0 %1888
        %1890 = vmin.xlane.f32.xlu0 %v1864
        %v1891 = vpop.xlane.xlu0 %1890
        %1892 = vmin.xlane.f32.xlu0 %v1865
        %v1893 = vpop.xlane.xlu0 %1892
        %1894 = vmin.xlane.f32.xlu0 %v1866
        %v1895 = vpop.xlane.xlu0 %1894
        %1896 = vmin.xlane.f32.xlu0 %v1867
        %v1897 = vpop.xlane.xlu0 %1896
        %1898 = vmin.xlane.f32.xlu0 %v1868
        %v1899 = vpop.xlane.xlu0 %1898
        %1900 = vmin.xlane.f32.xlu0 %v1869
        %v1901 = vpop.xlane.xlu0 %1900
        %v1902 = vmin.f32 %v1871, 3e+38
        %v1903 = vmin.f32 %v1873, 3e+38
        %v1904 = vmin.f32 %v1875, 3e+38
        %v1905 = vmin.f32 %v1877, 3e+38
        %v1906 = vmin.f32 %v1879, 3e+38
        %v1907 = vmin.f32 %v1881, 3e+38
        %v1908 = vmin.f32 %v1883, 3e+38
        %v1909 = vmin.f32 %v1885, 3e+38
        %v1910 = vmin.f32 %v1887, 3e+38
        %v1911 = vmin.f32 %v1889, 3e+38
        %v1912 = vmin.f32 %v1891, 3e+38
        %v1913 = vmin.f32 %v1893, 3e+38
        %v1914 = vmin.f32 %v1895, 3e+38
        %v1915 = vmin.f32 %v1897, 3e+38
        %v1916 = vmin.f32 %v1899, 3e+38
        %v1917 = vmin.f32 %v1901, 3e+38
        %1918 = vset.pattern.permute.xlu0 5
        %1919 = vperm.xlu0 %1918, %v932
        %v1920 = vpop.permute.xlu0 %1919
        %1921 = vset.pattern.permute.xlu0 5
        %1922 = vperm.xlu0 %1921, %v933
        %v1923 = vpop.permute.xlu0 %1922
        %1924 = vset.pattern.permute.xlu0 5
        %1925 = vperm.xlu0 %1924, %v934
        %v1926 = vpop.permute.xlu0 %1925
        %1927 = vset.pattern.permute.xlu0 5
        %1928 = vperm.xlu0 %1927, %v935
        %v1929 = vpop.permute.xlu0 %1928
        %1930 = vset.pattern.permute.xlu0 5
        %1931 = vperm.xlu0 %1930, %v936
        %v1932 = vpop.permute.xlu0 %1931
        %1933 = vset.pattern.permute.xlu0 5
        %1934 = vperm.xlu0 %1933, %v937
        %v1935 = vpop.permute.xlu0 %1934
        %1936 = vset.pattern.permute.xlu0 5
        %1937 = vperm.xlu0 %1936, %v938
        %v1938 = vpop.permute.xlu0 %1937
        %1939 = vset.pattern.permute.xlu0 5
        %1940 = vperm.xlu0 %1939, %v939
        %v1941 = vpop.permute.xlu0 %1940
        %1942 = vset.pattern.permute.xlu0 5
        %1943 = vperm.xlu0 %1942, %v940
        %v1944 = vpop.permute.xlu0 %1943
        %1945 = vset.pattern.permute.xlu0 5
        %1946 = vperm.xlu0 %1945, %v941
        %v1947 = vpop.permute.xlu0 %1946
        %1948 = vset.pattern.permute.xlu0 5
        %1949 = vperm.xlu0 %1948, %v942
        %v1950 = vpop.permute.xlu0 %1949
        %1951 = vset.pattern.permute.xlu0 5
        %1952 = vperm.xlu0 %1951, %v943
        %v1953 = vpop.permute.xlu0 %1952
        %1954 = vset.pattern.permute.xlu0 5
        %1955 = vperm.xlu0 %1954, %v944
        %v1956 = vpop.permute.xlu0 %1955
        %1957 = vset.pattern.permute.xlu0 5
        %1958 = vperm.xlu0 %1957, %v945
        %v1959 = vpop.permute.xlu0 %1958
        %1960 = vset.pattern.permute.xlu0 5
        %1961 = vperm.xlu0 %1960, %v946
        %v1962 = vpop.permute.xlu0 %1961
        %1963 = vset.pattern.permute.xlu0 5
        %1964 = vperm.xlu0 %1963, %v947
        %v1965 = vpop.permute.xlu0 %1964
        %vm1966 = vcmp.eq.s32.totalorder %v1920, 1
        %vm1967 = vcmp.eq.s32.totalorder %v1923, 1
        %vm1968 = vcmp.eq.s32.totalorder %v1926, 1
        %vm1969 = vcmp.eq.s32.totalorder %v1929, 1
        %vm1970 = vcmp.eq.s32.totalorder %v1932, 1
        %vm1971 = vcmp.eq.s32.totalorder %v1935, 1
        %vm1972 = vcmp.eq.s32.totalorder %v1938, 1
        %vm1973 = vcmp.eq.s32.totalorder %v1941, 1
        %vm1974 = vcmp.eq.s32.totalorder %v1944, 1
        %vm1975 = vcmp.eq.s32.totalorder %v1947, 1
        %vm1976 = vcmp.eq.s32.totalorder %v1950, 1
        %vm1977 = vcmp.eq.s32.totalorder %v1953, 1
        %vm1978 = vcmp.eq.s32.totalorder %v1956, 1
        %vm1979 = vcmp.eq.s32.totalorder %v1959, 1
        %vm1980 = vcmp.eq.s32.totalorder %v1962, 1
        %vm1981 = vcmp.eq.s32.totalorder %v1965, 1
        %v1982 = vsel %vm1966, %v756, 100.0
        %v1983 = vsel %vm1967, %v757, 100.0
        %v1984 = vsel %vm1968, %v758, 100.0
        %v1985 = vsel %vm1969, %v759, 100.0
        %v1986 = vsel %vm1970, %v760, 100.0
        %v1987 = vsel %vm1971, %v761, 100.0
        %v1988 = vsel %vm1972, %v762, 100.0
        %v1989 = vsel %vm1973, %v763, 100.0
        %v1990 = vsel %vm1974, %v764, 100.0
        %v1991 = vsel %vm1975, %v765, 100.0
        %v1992 = vsel %vm1976, %v766, 100.0
        %v1993 = vsel %vm1977, %v767, 100.0
        %v1994 = vsel %vm1978, %v768, 100.0
        %v1995 = vsel %vm1979, %v769, 100.0
        %v1996 = vsel %vm1980, %v770, 100.0
        %v1997 = vsel %vm1981, %v771, 100.0
        %v1998 = vmin.f32 %v1982, %v1986
        %v1999 = vmin.f32 %v1983, %v1987
        %v2000 = vmin.f32 %v1984, %v1988
        %v2001 = vmin.f32 %v1985, %v1989
        %v2002 = vmin.f32 %v1998, %v1990
        %v2003 = vmin.f32 %v1999, %v1991
        %v2004 = vmin.f32 %v2000, %v1992
        %v2005 = vmin.f32 %v2001, %v1993
        %v2006 = vmin.f32 %v2002, %v1994
        %v2007 = vmin.f32 %v2003, %v1995
        %v2008 = vmin.f32 %v2004, %v1996
        %v2009 = vmin.f32 %v2005, %v1997
        %v2010 = vmin.f32 %v2006, %v2007
        %v2011 = vmin.f32 %v2008, %v2009
        %v2012 = vmin.f32 %v2010, %v2011
        %v2013 = vrot.slane %v2012, 4
        %v2014 = vmin.f32 %v2012, %v2013
        %v2015 = vrot.slane %v2014, 2
        %v2016 = vmin.f32 %v2014, %v2015
        %v2017 = vrot.slane %v2016, 1
        %v2018 = vmin.f32 %v2016, %v2017
        %vm2019 = vcmp.ne.f32.partialorder %v2018, 100.0
        %vm2020 = vmand %vm1847, %vm2019
        %v2021 = vrsqrt.pop %v2018
        %v2022 = vmul.f32 %v2018, %v2021
        %vm2023 = vcmp.eq.f32.partialorder %v2018, inf
        %v2024 = vsel %vm2023, %v2018, %v2022
        %vm2025 = vcmp.eq.f32.partialorder %v2018, 0.0
        %v2026 = vand.u32 %v2018, 2147483648
        %v2027 = vsel %vm2025, %v2026, %v2024
        %v2028 = vsel %vm2020, %v2027, 0.0
        %v2029 = vsel %vm848, %v2028, 0.0
        %2030 = vadd.xlane.f32.xlu0 %v2029
        %v2031 = vpop.xlane.xlu0 %2030
        %v2032 = vrot.slane %v2031, 4
        %v2033 = vadd.f32 %v2031, %v2032
        %v2034 = vrot.slane %v2033, 2
        %v2035 = vadd.f32 %v2033, %v2034
        %v2036 = vrot.slane %v2035, 1
        %v2037 = vadd.f32 %v2035, %v2036
        %s2038 = vtos %v2037
        %v2039 = vstv %s2038
        %v2040 = vadd.f32 %v2039, 0.0
        %v2041 = vrsqrt.pop %v804
        %v2042 = vmul.f32 %v804, %v2041
        %vm2043 = vcmp.eq.f32.partialorder %v804, inf
        %v2044 = vsel %vm2043, %v804, %v2042
        %vm2045 = vcmp.eq.f32.partialorder %v804, 0.0
        %v2046 = vand.u32 %v804, 2147483648
        %v2047 = vsel %vm2045, %v2046, %v2044
        %v2048 = vrsqrt.pop %v805
        %v2049 = vmul.f32 %v805, %v2048
        %vm2050 = vcmp.eq.f32.partialorder %v805, inf
        %v2051 = vsel %vm2050, %v805, %v2049
        %vm2052 = vcmp.eq.f32.partialorder %v805, 0.0
        %v2053 = vand.u32 %v805, 2147483648
        %v2054 = vsel %vm2052, %v2053, %v2051
        %v2055 = vrsqrt.pop %v806
        %v2056 = vmul.f32 %v806, %v2055
        %vm2057 = vcmp.eq.f32.partialorder %v806, inf
        %v2058 = vsel %vm2057, %v806, %v2056
        %vm2059 = vcmp.eq.f32.partialorder %v806, 0.0
        %v2060 = vand.u32 %v806, 2147483648
        %v2061 = vsel %vm2059, %v2060, %v2058
        %v2062 = vrsqrt.pop %v807
        %v2063 = vmul.f32 %v807, %v2062
        %vm2064 = vcmp.eq.f32.partialorder %v807, inf
        %v2065 = vsel %vm2064, %v807, %v2063
        %vm2066 = vcmp.eq.f32.partialorder %v807, 0.0
        %v2067 = vand.u32 %v807, 2147483648
        %v2068 = vsel %vm2066, %v2067, %v2065
        %v2069 = vrsqrt.pop %v808
        %v2070 = vmul.f32 %v808, %v2069
        %vm2071 = vcmp.eq.f32.partialorder %v808, inf
        %v2072 = vsel %vm2071, %v808, %v2070
        %vm2073 = vcmp.eq.f32.partialorder %v808, 0.0
        %v2074 = vand.u32 %v808, 2147483648
        %v2075 = vsel %vm2073, %v2074, %v2072
        %v2076 = vrsqrt.pop %v809
        %v2077 = vmul.f32 %v809, %v2076
        %vm2078 = vcmp.eq.f32.partialorder %v809, inf
        %v2079 = vsel %vm2078, %v809, %v2077
        %vm2080 = vcmp.eq.f32.partialorder %v809, 0.0
        %v2081 = vand.u32 %v809, 2147483648
        %v2082 = vsel %vm2080, %v2081, %v2079
        %v2083 = vrsqrt.pop %v810
        %v2084 = vmul.f32 %v810, %v2083
        %vm2085 = vcmp.eq.f32.partialorder %v810, inf
        %v2086 = vsel %vm2085, %v810, %v2084
        %vm2087 = vcmp.eq.f32.partialorder %v810, 0.0
        %v2088 = vand.u32 %v810, 2147483648
        %v2089 = vsel %vm2087, %v2088, %v2086
        %v2090 = vrsqrt.pop %v811
        %v2091 = vmul.f32 %v811, %v2090
        %vm2092 = vcmp.eq.f32.partialorder %v811, inf
        %v2093 = vsel %vm2092, %v811, %v2091
        %vm2094 = vcmp.eq.f32.partialorder %v811, 0.0
        %v2095 = vand.u32 %v811, 2147483648
        %v2096 = vsel %vm2094, %v2095, %v2093
        %v2097 = vrsqrt.pop %v812
        %v2098 = vmul.f32 %v812, %v2097
        %vm2099 = vcmp.eq.f32.partialorder %v812, inf
        %v2100 = vsel %vm2099, %v812, %v2098
        %vm2101 = vcmp.eq.f32.partialorder %v812, 0.0
        %v2102 = vand.u32 %v812, 2147483648
        %v2103 = vsel %vm2101, %v2102, %v2100
        %v2104 = vrsqrt.pop %v813
        %v2105 = vmul.f32 %v813, %v2104
        %vm2106 = vcmp.eq.f32.partialorder %v813, inf
        %v2107 = vsel %vm2106, %v813, %v2105
        %vm2108 = vcmp.eq.f32.partialorder %v813, 0.0
        %v2109 = vand.u32 %v813, 2147483648
        %v2110 = vsel %vm2108, %v2109, %v2107
        %v2111 = vrsqrt.pop %v814
        %v2112 = vmul.f32 %v814, %v2111
        %vm2113 = vcmp.eq.f32.partialorder %v814, inf
        %v2114 = vsel %vm2113, %v814, %v2112
        %vm2115 = vcmp.eq.f32.partialorder %v814, 0.0
        %v2116 = vand.u32 %v814, 2147483648
        %v2117 = vsel %vm2115, %v2116, %v2114
        %v2118 = vrsqrt.pop %v815
        %v2119 = vmul.f32 %v815, %v2118
        %vm2120 = vcmp.eq.f32.partialorder %v815, inf
        %v2121 = vsel %vm2120, %v815, %v2119
        %vm2122 = vcmp.eq.f32.partialorder %v815, 0.0
        %v2123 = vand.u32 %v815, 2147483648
        %v2124 = vsel %vm2122, %v2123, %v2121
        %v2125 = vrsqrt.pop %v816
        %v2126 = vmul.f32 %v816, %v2125
        %vm2127 = vcmp.eq.f32.partialorder %v816, inf
        %v2128 = vsel %vm2127, %v816, %v2126
        %vm2129 = vcmp.eq.f32.partialorder %v816, 0.0
        %v2130 = vand.u32 %v816, 2147483648
        %v2131 = vsel %vm2129, %v2130, %v2128
        %v2132 = vrsqrt.pop %v817
        %v2133 = vmul.f32 %v817, %v2132
        %vm2134 = vcmp.eq.f32.partialorder %v817, inf
        %v2135 = vsel %vm2134, %v817, %v2133
        %vm2136 = vcmp.eq.f32.partialorder %v817, 0.0
        %v2137 = vand.u32 %v817, 2147483648
        %v2138 = vsel %vm2136, %v2137, %v2135
        %v2139 = vrsqrt.pop %v818
        %v2140 = vmul.f32 %v818, %v2139
        %vm2141 = vcmp.eq.f32.partialorder %v818, inf
        %v2142 = vsel %vm2141, %v818, %v2140
        %vm2143 = vcmp.eq.f32.partialorder %v818, 0.0
        %v2144 = vand.u32 %v818, 2147483648
        %v2145 = vsel %vm2143, %v2144, %v2142
        %v2146 = vrsqrt.pop %v819
        %v2147 = vmul.f32 %v819, %v2146
        %vm2148 = vcmp.eq.f32.partialorder %v819, inf
        %v2149 = vsel %vm2148, %v819, %v2147
        %vm2150 = vcmp.eq.f32.partialorder %v819, 0.0
        %v2151 = vand.u32 %v819, 2147483648
        %v2152 = vsel %vm2150, %v2151, %v2149
        %vm2153 = vcmask 7168
        %v2154 = vsel %vm2153, %v2047, 0.0
        %v2155 = vsel %vm2153, %v2054, 0.0
        %v2156 = vadd.f32 %v2154, %v2155
        %v2157 = vsel %vm2153, %v2061, 0.0
        %v2158 = vadd.f32 %v2156, %v2157
        %v2159 = vsel %vm2153, %v2068, 0.0
        %v2160 = vadd.f32 %v2158, %v2159
        %v2161 = vsel %vm2153, %v2075, 0.0
        %v2162 = vadd.f32 %v2160, %v2161
        %v2163 = vsel %vm2153, %v2082, 0.0
        %v2164 = vadd.f32 %v2162, %v2163
        %v2165 = vsel %vm2153, %v2089, 0.0
        %v2166 = vadd.f32 %v2164, %v2165
        %v2167 = vsel %vm2153, %v2096, 0.0
        %v2168 = vadd.f32 %v2166, %v2167
        %v2169 = vsel %vm2153, %v2103, 0.0
        %v2170 = vadd.f32 %v2168, %v2169
        %v2171 = vsel %vm2153, %v2110, 0.0
        %v2172 = vadd.f32 %v2170, %v2171
        %v2173 = vsel %vm2153, %v2117, 0.0
        %v2174 = vadd.f32 %v2172, %v2173
        %v2175 = vsel %vm2153, %v2124, 0.0
        %v2176 = vadd.f32 %v2174, %v2175
        %v2177 = vsel %vm2153, %v2131, 0.0
        %v2178 = vadd.f32 %v2176, %v2177
        %v2179 = vsel %vm2153, %v2138, 0.0
        %v2180 = vadd.f32 %v2178, %v2179
        %v2181 = vsel %vm2153, %v2145, 0.0
        %v2182 = vadd.f32 %v2180, %v2181
        %v2183 = vsel %vm2153, %v2152, 0.0
        %v2184 = vadd.f32 %v2182, %v2183
        %2185 = vadd.xlane.f32.xlu0 %v2184
        %v2186 = vpop.xlane.xlu0 %2185
        %v2187 = vrot.slane %v2186, 4
        %v2188 = vadd.f32 %v2186, %v2187
        %v2189 = vrot.slane %v2188, 2
        %v2190 = vadd.f32 %v2188, %v2189
        %v2191 = vrot.slane %v2190, 1
        %v2192 = vadd.f32 %v2190, %v2191
        %s2193 = vtos %v2192
        %v2194 = vstv %s2193
        %v2195 = vadd.f32 %v860, %v2194
        %vm2196 = vcmp.ne.f32.partialorder %v916, 100.0
        %vm2197 = vcmp.ne.f32.partialorder %v917, 100.0
        %vm2198 = vcmp.ne.f32.partialorder %v918, 100.0
        %vm2199 = vcmp.ne.f32.partialorder %v919, 100.0
        %vm2200 = vcmp.ne.f32.partialorder %v920, 100.0
        %vm2201 = vcmp.ne.f32.partialorder %v921, 100.0
        %vm2202 = vcmp.ne.f32.partialorder %v922, 100.0
        %vm2203 = vcmp.ne.f32.partialorder %v923, 100.0
        %vm2204 = vcmp.ne.f32.partialorder %v924, 100.0
        %vm2205 = vcmp.ne.f32.partialorder %v925, 100.0
        %vm2206 = vcmp.ne.f32.partialorder %v926, 100.0
        %vm2207 = vcmp.ne.f32.partialorder %v927, 100.0
        %vm2208 = vcmp.ne.f32.partialorder %v928, 100.0
        %vm2209 = vcmp.ne.f32.partialorder %v929, 100.0
        %vm2210 = vcmp.ne.f32.partialorder %v930, 100.0
        %vm2211 = vcmp.ne.f32.partialorder %v931, 100.0
        %vm2212 = vmand %vm408, %vm2196
        %vm2213 = vmand %vm409, %vm2197
        %vm2214 = vmand %vm410, %vm2198
        %vm2215 = vmand %vm411, %vm2199
        %vm2216 = vmand %vm412, %vm2200
        %vm2217 = vmand %vm413, %vm2201
        %vm2218 = vmand %vm414, %vm2202
        %vm2219 = vmand %vm415, %vm2203
        %vm2220 = vmand %vm416, %vm2204
        %vm2221 = vmand %vm417, %vm2205
        %vm2222 = vmand %vm418, %vm2206
        %vm2223 = vmand %vm419, %vm2207
        %vm2224 = vmand %vm420, %vm2208
        %vm2225 = vmand %vm421, %vm2209
        %vm2226 = vmand %vm422, %vm2210
        %vm2227 = vmand %vm423, %vm2211
        %v2228 = vrsqrt.pop %v916
        %v2229 = vmul.f32 %v916, %v2228
        %vm2230 = vcmp.eq.f32.partialorder %v916, inf
        %v2231 = vsel %vm2230, %v916, %v2229
        %vm2232 = vcmp.eq.f32.partialorder %v916, 0.0
        %v2233 = vand.u32 %v916, 2147483648
        %v2234 = vsel %vm2232, %v2233, %v2231
        %v2235 = vrsqrt.pop %v917
        %v2236 = vmul.f32 %v917, %v2235
        %vm2237 = vcmp.eq.f32.partialorder %v917, inf
        %v2238 = vsel %vm2237, %v917, %v2236
        %vm2239 = vcmp.eq.f32.partialorder %v917, 0.0
        %v2240 = vand.u32 %v917, 2147483648
        %v2241 = vsel %vm2239, %v2240, %v2238
        %v2242 = vrsqrt.pop %v918
        %v2243 = vmul.f32 %v918, %v2242
        %vm2244 = vcmp.eq.f32.partialorder %v918, inf
        %v2245 = vsel %vm2244, %v918, %v2243
        %vm2246 = vcmp.eq.f32.partialorder %v918, 0.0
        %v2247 = vand.u32 %v918, 2147483648
        %v2248 = vsel %vm2246, %v2247, %v2245
        %v2249 = vrsqrt.pop %v919
        %v2250 = vmul.f32 %v919, %v2249
        %vm2251 = vcmp.eq.f32.partialorder %v919, inf
        %v2252 = vsel %vm2251, %v919, %v2250
        %vm2253 = vcmp.eq.f32.partialorder %v919, 0.0
        %v2254 = vand.u32 %v919, 2147483648
        %v2255 = vsel %vm2253, %v2254, %v2252
        %v2256 = vrsqrt.pop %v920
        %v2257 = vmul.f32 %v920, %v2256
        %vm2258 = vcmp.eq.f32.partialorder %v920, inf
        %v2259 = vsel %vm2258, %v920, %v2257
        %vm2260 = vcmp.eq.f32.partialorder %v920, 0.0
        %v2261 = vand.u32 %v920, 2147483648
        %v2262 = vsel %vm2260, %v2261, %v2259
        %v2263 = vrsqrt.pop %v921
        %v2264 = vmul.f32 %v921, %v2263
        %vm2265 = vcmp.eq.f32.partialorder %v921, inf
        %v2266 = vsel %vm2265, %v921, %v2264
        %vm2267 = vcmp.eq.f32.partialorder %v921, 0.0
        %v2268 = vand.u32 %v921, 2147483648
        %v2269 = vsel %vm2267, %v2268, %v2266
        %v2270 = vrsqrt.pop %v922
        %v2271 = vmul.f32 %v922, %v2270
        %vm2272 = vcmp.eq.f32.partialorder %v922, inf
        %v2273 = vsel %vm2272, %v922, %v2271
        %vm2274 = vcmp.eq.f32.partialorder %v922, 0.0
        %v2275 = vand.u32 %v922, 2147483648
        %v2276 = vsel %vm2274, %v2275, %v2273
        %v2277 = vrsqrt.pop %v923
        %v2278 = vmul.f32 %v923, %v2277
        %vm2279 = vcmp.eq.f32.partialorder %v923, inf
        %v2280 = vsel %vm2279, %v923, %v2278
        %vm2281 = vcmp.eq.f32.partialorder %v923, 0.0
        %v2282 = vand.u32 %v923, 2147483648
        %v2283 = vsel %vm2281, %v2282, %v2280
        %v2284 = vrsqrt.pop %v924
        %v2285 = vmul.f32 %v924, %v2284
        %vm2286 = vcmp.eq.f32.partialorder %v924, inf
        %v2287 = vsel %vm2286, %v924, %v2285
        %vm2288 = vcmp.eq.f32.partialorder %v924, 0.0
        %v2289 = vand.u32 %v924, 2147483648
        %v2290 = vsel %vm2288, %v2289, %v2287
        %v2291 = vrsqrt.pop %v925
        %v2292 = vmul.f32 %v925, %v2291
        %vm2293 = vcmp.eq.f32.partialorder %v925, inf
        %v2294 = vsel %vm2293, %v925, %v2292
        %vm2295 = vcmp.eq.f32.partialorder %v925, 0.0
        %v2296 = vand.u32 %v925, 2147483648
        %v2297 = vsel %vm2295, %v2296, %v2294
        %v2298 = vrsqrt.pop %v926
        %v2299 = vmul.f32 %v926, %v2298
        %vm2300 = vcmp.eq.f32.partialorder %v926, inf
        %v2301 = vsel %vm2300, %v926, %v2299
        %vm2302 = vcmp.eq.f32.partialorder %v926, 0.0
        %v2303 = vand.u32 %v926, 2147483648
        %v2304 = vsel %vm2302, %v2303, %v2301
        %v2305 = vrsqrt.pop %v927
        %v2306 = vmul.f32 %v927, %v2305
        %vm2307 = vcmp.eq.f32.partialorder %v927, inf
        %v2308 = vsel %vm2307, %v927, %v2306
        %vm2309 = vcmp.eq.f32.partialorder %v927, 0.0
        %v2310 = vand.u32 %v927, 2147483648
        %v2311 = vsel %vm2309, %v2310, %v2308
        %v2312 = vrsqrt.pop %v928
        %v2313 = vmul.f32 %v928, %v2312
        %vm2314 = vcmp.eq.f32.partialorder %v928, inf
        %v2315 = vsel %vm2314, %v928, %v2313
        %vm2316 = vcmp.eq.f32.partialorder %v928, 0.0
        %v2317 = vand.u32 %v928, 2147483648
        %v2318 = vsel %vm2316, %v2317, %v2315
        %v2319 = vrsqrt.pop %v929
        %v2320 = vmul.f32 %v929, %v2319
        %vm2321 = vcmp.eq.f32.partialorder %v929, inf
        %v2322 = vsel %vm2321, %v929, %v2320
        %vm2323 = vcmp.eq.f32.partialorder %v929, 0.0
        %v2324 = vand.u32 %v929, 2147483648
        %v2325 = vsel %vm2323, %v2324, %v2322
        %v2326 = vrsqrt.pop %v930
        %v2327 = vmul.f32 %v930, %v2326
        %vm2328 = vcmp.eq.f32.partialorder %v930, inf
        %v2329 = vsel %vm2328, %v930, %v2327
        %vm2330 = vcmp.eq.f32.partialorder %v930, 0.0
        %v2331 = vand.u32 %v930, 2147483648
        %v2332 = vsel %vm2330, %v2331, %v2329
        %v2333 = vrsqrt.pop %v931
        %v2334 = vmul.f32 %v931, %v2333
        %vm2335 = vcmp.eq.f32.partialorder %v931, inf
        %v2336 = vsel %vm2335, %v931, %v2334
        %vm2337 = vcmp.eq.f32.partialorder %v931, 0.0
        %v2338 = vand.u32 %v931, 2147483648
        %v2339 = vsel %vm2337, %v2338, %v2336
        %v2340 = vsel %vm2212, %v2234, 0.0
        %v2341 = vsel %vm2213, %v2241, 0.0
        %v2342 = vsel %vm2214, %v2248, 0.0
        %v2343 = vsel %vm2215, %v2255, 0.0
        %v2344 = vsel %vm2216, %v2262, 0.0
        %v2345 = vsel %vm2217, %v2269, 0.0
        %v2346 = vsel %vm2218, %v2276, 0.0
        %v2347 = vsel %vm2219, %v2283, 0.0
        %v2348 = vsel %vm2220, %v2290, 0.0
        %v2349 = vsel %vm2221, %v2297, 0.0
        %v2350 = vsel %vm2222, %v2304, 0.0
        %v2351 = vsel %vm2223, %v2311, 0.0
        %v2352 = vsel %vm2224, %v2318, 0.0
        %v2353 = vsel %vm2225, %v2325, 0.0
        %v2354 = vsel %vm2226, %v2332, 0.0
        %v2355 = vsel %vm2227, %v2339, 0.0
        %v2356 = vsel %vm2153, %v2340, 0.0
        %v2357 = vsel %vm2153, %v2341, 0.0
        %v2358 = vadd.f32 %v2356, %v2357
        %v2359 = vsel %vm2153, %v2342, 0.0
        %v2360 = vadd.f32 %v2358, %v2359
        %v2361 = vsel %vm2153, %v2343, 0.0
        %v2362 = vadd.f32 %v2360, %v2361
        %v2363 = vsel %vm2153, %v2344, 0.0
        %v2364 = vadd.f32 %v2362, %v2363
        %v2365 = vsel %vm2153, %v2345, 0.0
        %v2366 = vadd.f32 %v2364, %v2365
        %v2367 = vsel %vm2153, %v2346, 0.0
        %v2368 = vadd.f32 %v2366, %v2367
        %v2369 = vsel %vm2153, %v2347, 0.0
        %v2370 = vadd.f32 %v2368, %v2369
        %v2371 = vsel %vm2153, %v2348, 0.0
        %v2372 = vadd.f32 %v2370, %v2371
        %v2373 = vsel %vm2153, %v2349, 0.0
        %v2374 = vadd.f32 %v2372, %v2373
        %v2375 = vsel %vm2153, %v2350, 0.0
        %v2376 = vadd.f32 %v2374, %v2375
        %v2377 = vsel %vm2153, %v2351, 0.0
        %v2378 = vadd.f32 %v2376, %v2377
        %v2379 = vsel %vm2153, %v2352, 0.0
        %v2380 = vadd.f32 %v2378, %v2379
        %v2381 = vsel %vm2153, %v2353, 0.0
        %v2382 = vadd.f32 %v2380, %v2381
        %v2383 = vsel %vm2153, %v2354, 0.0
        %v2384 = vadd.f32 %v2382, %v2383
        %v2385 = vsel %vm2153, %v2355, 0.0
        %v2386 = vadd.f32 %v2384, %v2385
        %2387 = vadd.xlane.f32.xlu0 %v2386
        %v2388 = vpop.xlane.xlu0 %2387
        %v2389 = vrot.slane %v2388, 4
        %v2390 = vadd.f32 %v2388, %v2389
        %v2391 = vrot.slane %v2390, 2
        %v2392 = vadd.f32 %v2390, %v2391
        %v2393 = vrot.slane %v2392, 1
        %v2394 = vadd.f32 %v2392, %v2393
        %s2395 = vtos %v2394
        %v2396 = vstv %s2395
        %v2397 = vadd.f32 %v2396, %v1070
        %vm2398 = vcmp.ne.f32.partialorder %v1126, 100.0
        %vm2399 = vcmp.ne.f32.partialorder %v1127, 100.0
        %vm2400 = vcmp.ne.f32.partialorder %v1128, 100.0
        %vm2401 = vcmp.ne.f32.partialorder %v1129, 100.0
        %vm2402 = vcmp.ne.f32.partialorder %v1130, 100.0
        %vm2403 = vcmp.ne.f32.partialorder %v1131, 100.0
        %vm2404 = vcmp.ne.f32.partialorder %v1132, 100.0
        %vm2405 = vcmp.ne.f32.partialorder %v1133, 100.0
        %vm2406 = vcmp.ne.f32.partialorder %v1134, 100.0
        %vm2407 = vcmp.ne.f32.partialorder %v1135, 100.0
        %vm2408 = vcmp.ne.f32.partialorder %v1136, 100.0
        %vm2409 = vcmp.ne.f32.partialorder %v1137, 100.0
        %vm2410 = vcmp.ne.f32.partialorder %v1138, 100.0
        %vm2411 = vcmp.ne.f32.partialorder %v1139, 100.0
        %vm2412 = vcmp.ne.f32.partialorder %v1140, 100.0
        %vm2413 = vcmp.ne.f32.partialorder %v1141, 100.0
        %vm2414 = vmand %vm408, %vm2398
        %vm2415 = vmand %vm409, %vm2399
        %vm2416 = vmand %vm410, %vm2400
        %vm2417 = vmand %vm411, %vm2401
        %vm2418 = vmand %vm412, %vm2402
        %vm2419 = vmand %vm413, %vm2403
        %vm2420 = vmand %vm414, %vm2404
        %vm2421 = vmand %vm415, %vm2405
        %vm2422 = vmand %vm416, %vm2406
        %vm2423 = vmand %vm417, %vm2407
        %vm2424 = vmand %vm418, %vm2408
        %vm2425 = vmand %vm419, %vm2409
        %vm2426 = vmand %vm420, %vm2410
        %vm2427 = vmand %vm421, %vm2411
        %vm2428 = vmand %vm422, %vm2412
        %vm2429 = vmand %vm423, %vm2413
        %v2430 = vrsqrt.pop %v1126
        %v2431 = vmul.f32 %v1126, %v2430
        %vm2432 = vcmp.eq.f32.partialorder %v1126, inf
        %v2433 = vsel %vm2432, %v1126, %v2431
        %vm2434 = vcmp.eq.f32.partialorder %v1126, 0.0
        %v2435 = vand.u32 %v1126, 2147483648
        %v2436 = vsel %vm2434, %v2435, %v2433
        %v2437 = vrsqrt.pop %v1127
        %v2438 = vmul.f32 %v1127, %v2437
        %vm2439 = vcmp.eq.f32.partialorder %v1127, inf
        %v2440 = vsel %vm2439, %v1127, %v2438
        %vm2441 = vcmp.eq.f32.partialorder %v1127, 0.0
        %v2442 = vand.u32 %v1127, 2147483648
        %v2443 = vsel %vm2441, %v2442, %v2440
        %v2444 = vrsqrt.pop %v1128
        %v2445 = vmul.f32 %v1128, %v2444
        %vm2446 = vcmp.eq.f32.partialorder %v1128, inf
        %v2447 = vsel %vm2446, %v1128, %v2445
        %vm2448 = vcmp.eq.f32.partialorder %v1128, 0.0
        %v2449 = vand.u32 %v1128, 2147483648
        %v2450 = vsel %vm2448, %v2449, %v2447
        %v2451 = vrsqrt.pop %v1129
        %v2452 = vmul.f32 %v1129, %v2451
        %vm2453 = vcmp.eq.f32.partialorder %v1129, inf
        %v2454 = vsel %vm2453, %v1129, %v2452
        %vm2455 = vcmp.eq.f32.partialorder %v1129, 0.0
        %v2456 = vand.u32 %v1129, 2147483648
        %v2457 = vsel %vm2455, %v2456, %v2454
        %v2458 = vrsqrt.pop %v1130
        %v2459 = vmul.f32 %v1130, %v2458
        %vm2460 = vcmp.eq.f32.partialorder %v1130, inf
        %v2461 = vsel %vm2460, %v1130, %v2459
        %vm2462 = vcmp.eq.f32.partialorder %v1130, 0.0
        %v2463 = vand.u32 %v1130, 2147483648
        %v2464 = vsel %vm2462, %v2463, %v2461
        %v2465 = vrsqrt.pop %v1131
        %v2466 = vmul.f32 %v1131, %v2465
        %vm2467 = vcmp.eq.f32.partialorder %v1131, inf
        %v2468 = vsel %vm2467, %v1131, %v2466
        %vm2469 = vcmp.eq.f32.partialorder %v1131, 0.0
        %v2470 = vand.u32 %v1131, 2147483648
        %v2471 = vsel %vm2469, %v2470, %v2468
        %v2472 = vrsqrt.pop %v1132
        %v2473 = vmul.f32 %v1132, %v2472
        %vm2474 = vcmp.eq.f32.partialorder %v1132, inf
        %v2475 = vsel %vm2474, %v1132, %v2473
        %vm2476 = vcmp.eq.f32.partialorder %v1132, 0.0
        %v2477 = vand.u32 %v1132, 2147483648
        %v2478 = vsel %vm2476, %v2477, %v2475
        %v2479 = vrsqrt.pop %v1133
        %v2480 = vmul.f32 %v1133, %v2479
        %vm2481 = vcmp.eq.f32.partialorder %v1133, inf
        %v2482 = vsel %vm2481, %v1133, %v2480
        %vm2483 = vcmp.eq.f32.partialorder %v1133, 0.0
        %v2484 = vand.u32 %v1133, 2147483648
        %v2485 = vsel %vm2483, %v2484, %v2482
        %v2486 = vrsqrt.pop %v1134
        %v2487 = vmul.f32 %v1134, %v2486
        %vm2488 = vcmp.eq.f32.partialorder %v1134, inf
        %v2489 = vsel %vm2488, %v1134, %v2487
        %vm2490 = vcmp.eq.f32.partialorder %v1134, 0.0
        %v2491 = vand.u32 %v1134, 2147483648
        %v2492 = vsel %vm2490, %v2491, %v2489
        %v2493 = vrsqrt.pop %v1135
        %v2494 = vmul.f32 %v1135, %v2493
        %vm2495 = vcmp.eq.f32.partialorder %v1135, inf
        %v2496 = vsel %vm2495, %v1135, %v2494
        %vm2497 = vcmp.eq.f32.partialorder %v1135, 0.0
        %v2498 = vand.u32 %v1135, 2147483648
        %v2499 = vsel %vm2497, %v2498, %v2496
        %v2500 = vrsqrt.pop %v1136
        %v2501 = vmul.f32 %v1136, %v2500
        %vm2502 = vcmp.eq.f32.partialorder %v1136, inf
        %v2503 = vsel %vm2502, %v1136, %v2501
        %vm2504 = vcmp.eq.f32.partialorder %v1136, 0.0
        %v2505 = vand.u32 %v1136, 2147483648
        %v2506 = vsel %vm2504, %v2505, %v2503
        %v2507 = vrsqrt.pop %v1137
        %v2508 = vmul.f32 %v1137, %v2507
        %vm2509 = vcmp.eq.f32.partialorder %v1137, inf
        %v2510 = vsel %vm2509, %v1137, %v2508
        %vm2511 = vcmp.eq.f32.partialorder %v1137, 0.0
        %v2512 = vand.u32 %v1137, 2147483648
        %v2513 = vsel %vm2511, %v2512, %v2510
        %v2514 = vrsqrt.pop %v1138
        %v2515 = vmul.f32 %v1138, %v2514
        %vm2516 = vcmp.eq.f32.partialorder %v1138, inf
        %v2517 = vsel %vm2516, %v1138, %v2515
        %vm2518 = vcmp.eq.f32.partialorder %v1138, 0.0
        %v2519 = vand.u32 %v1138, 2147483648
        %v2520 = vsel %vm2518, %v2519, %v2517
        %v2521 = vrsqrt.pop %v1139
        %v2522 = vmul.f32 %v1139, %v2521
        %vm2523 = vcmp.eq.f32.partialorder %v1139, inf
        %v2524 = vsel %vm2523, %v1139, %v2522
        %vm2525 = vcmp.eq.f32.partialorder %v1139, 0.0
        %v2526 = vand.u32 %v1139, 2147483648
        %v2527 = vsel %vm2525, %v2526, %v2524
        %v2528 = vrsqrt.pop %v1140
        %v2529 = vmul.f32 %v1140, %v2528
        %vm2530 = vcmp.eq.f32.partialorder %v1140, inf
        %v2531 = vsel %vm2530, %v1140, %v2529
        %vm2532 = vcmp.eq.f32.partialorder %v1140, 0.0
        %v2533 = vand.u32 %v1140, 2147483648
        %v2534 = vsel %vm2532, %v2533, %v2531
        %v2535 = vrsqrt.pop %v1141
        %v2536 = vmul.f32 %v1141, %v2535
        %vm2537 = vcmp.eq.f32.partialorder %v1141, inf
        %v2538 = vsel %vm2537, %v1141, %v2536
        %vm2539 = vcmp.eq.f32.partialorder %v1141, 0.0
        %v2540 = vand.u32 %v1141, 2147483648
        %v2541 = vsel %vm2539, %v2540, %v2538
        %v2542 = vsel %vm2414, %v2436, 0.0
        %v2543 = vsel %vm2415, %v2443, 0.0
        %v2544 = vsel %vm2416, %v2450, 0.0
        %v2545 = vsel %vm2417, %v2457, 0.0
        %v2546 = vsel %vm2418, %v2464, 0.0
        %v2547 = vsel %vm2419, %v2471, 0.0
        %v2548 = vsel %vm2420, %v2478, 0.0
        %v2549 = vsel %vm2421, %v2485, 0.0
        %v2550 = vsel %vm2422, %v2492, 0.0
        %v2551 = vsel %vm2423, %v2499, 0.0
        %v2552 = vsel %vm2424, %v2506, 0.0
        %v2553 = vsel %vm2425, %v2513, 0.0
        %v2554 = vsel %vm2426, %v2520, 0.0
        %v2555 = vsel %vm2427, %v2527, 0.0
        %v2556 = vsel %vm2428, %v2534, 0.0
        %v2557 = vsel %vm2429, %v2541, 0.0
        %2574 = vrot.lane.b32.xlu0 %v2542, 127
        %v2575 = vpop.permute.xlu0 %2574
        %2576 = vrot.lane.b32.xlu0 %v2543, 127
        %v2577 = vpop.permute.xlu0 %2576
        %2578 = vrot.lane.b32.xlu0 %v2544, 127
        %v2579 = vpop.permute.xlu0 %2578
        %2580 = vrot.lane.b32.xlu0 %v2545, 127
        %v2581 = vpop.permute.xlu0 %2580
        %2582 = vrot.lane.b32.xlu0 %v2546, 127
        %v2583 = vpop.permute.xlu0 %2582
        %2584 = vrot.lane.b32.xlu0 %v2547, 127
        %v2585 = vpop.permute.xlu0 %2584
        %2586 = vrot.lane.b32.xlu0 %v2548, 127
        %v2587 = vpop.permute.xlu0 %2586
        %2588 = vrot.lane.b32.xlu0 %v2549, 127
        %v2589 = vpop.permute.xlu0 %2588
        %2590 = vrot.lane.b32.xlu0 %v2550, 127
        %v2591 = vpop.permute.xlu0 %2590
        %2592 = vrot.lane.b32.xlu0 %v2551, 127
        %v2593 = vpop.permute.xlu0 %2592
        %2594 = vrot.lane.b32.xlu0 %v2552, 127
        %v2595 = vpop.permute.xlu0 %2594
        %2596 = vrot.lane.b32.xlu0 %v2553, 127
        %v2597 = vpop.permute.xlu0 %2596
        %2598 = vrot.lane.b32.xlu0 %v2554, 127
        %v2599 = vpop.permute.xlu0 %2598
        %2600 = vrot.lane.b32.xlu0 %v2555, 127
        %v2601 = vpop.permute.xlu0 %2600
        %2602 = vrot.lane.b32.xlu0 %v2556, 127
        %v2603 = vpop.permute.xlu0 %2602
        %2604 = vrot.lane.b32.xlu0 %v2557, 127
        %v2605 = vpop.permute.xlu0 %2604
        %v2622 = vsel %vm2153, %v2575, 0.0
        %v2623 = vsel %vm2153, %v2577, 0.0
        %v2624 = vadd.f32 %v2622, %v2623
        %v2625 = vsel %vm2153, %v2579, 0.0
        %v2626 = vadd.f32 %v2624, %v2625
        %v2627 = vsel %vm2153, %v2581, 0.0
        %v2628 = vadd.f32 %v2626, %v2627
        %v2629 = vsel %vm2153, %v2583, 0.0
        %v2630 = vadd.f32 %v2628, %v2629
        %v2631 = vsel %vm2153, %v2585, 0.0
        %v2632 = vadd.f32 %v2630, %v2631
        %v2633 = vsel %vm2153, %v2587, 0.0
        %v2634 = vadd.f32 %v2632, %v2633
        %v2635 = vsel %vm2153, %v2589, 0.0
        %v2636 = vadd.f32 %v2634, %v2635
        %v2637 = vsel %vm2153, %v2591, 0.0
        %v2638 = vadd.f32 %v2636, %v2637
        %v2639 = vsel %vm2153, %v2593, 0.0
        %v2640 = vadd.f32 %v2638, %v2639
        %v2641 = vsel %vm2153, %v2595, 0.0
        %v2642 = vadd.f32 %v2640, %v2641
        %v2643 = vsel %vm2153, %v2597, 0.0
        %v2644 = vadd.f32 %v2642, %v2643
        %v2645 = vsel %vm2153, %v2599, 0.0
        %v2646 = vadd.f32 %v2644, %v2645
        %v2647 = vsel %vm2153, %v2601, 0.0
        %v2648 = vadd.f32 %v2646, %v2647
        %v2649 = vsel %vm2153, %v2603, 0.0
        %v2650 = vadd.f32 %v2648, %v2649
        %v2651 = vsel %vm2153, %v2605, 0.0
        %v2652 = vadd.f32 %v2650, %v2651
        %2653 = vadd.xlane.f32.xlu0 %v2652
        %v2654 = vpop.xlane.xlu0 %2653
        %v2655 = vrot.slane %v2654, 4
        %v2656 = vadd.f32 %v2654, %v2655
        %v2657 = vrot.slane %v2656, 2
        %v2658 = vadd.f32 %v2656, %v2657
        %v2659 = vrot.slane %v2658, 1
        %v2660 = vadd.f32 %v2658, %v2659
        %s2661 = vtos %v2660
        %v2662 = vstv %s2661
        %v2663 = vadd.f32 %v2662, %v1264
        %vm2664 = vcmp.ne.f32.partialorder %v1320, 100.0
        %vm2665 = vcmp.ne.f32.partialorder %v1321, 100.0
        %vm2666 = vcmp.ne.f32.partialorder %v1322, 100.0
        %vm2667 = vcmp.ne.f32.partialorder %v1323, 100.0
        %vm2668 = vcmp.ne.f32.partialorder %v1324, 100.0
        %vm2669 = vcmp.ne.f32.partialorder %v1325, 100.0
        %vm2670 = vcmp.ne.f32.partialorder %v1326, 100.0
        %vm2671 = vcmp.ne.f32.partialorder %v1327, 100.0
        %vm2672 = vcmp.ne.f32.partialorder %v1328, 100.0
        %vm2673 = vcmp.ne.f32.partialorder %v1329, 100.0
        %vm2674 = vcmp.ne.f32.partialorder %v1330, 100.0
        %vm2675 = vcmp.ne.f32.partialorder %v1331, 100.0
        %vm2676 = vcmp.ne.f32.partialorder %v1332, 100.0
        %vm2677 = vcmp.ne.f32.partialorder %v1333, 100.0
        %vm2678 = vcmp.ne.f32.partialorder %v1334, 100.0
        %vm2679 = vcmp.ne.f32.partialorder %v1335, 100.0
        %vm2680 = vmand %vm408, %vm2664
        %vm2681 = vmand %vm409, %vm2665
        %vm2682 = vmand %vm410, %vm2666
        %vm2683 = vmand %vm411, %vm2667
        %vm2684 = vmand %vm412, %vm2668
        %vm2685 = vmand %vm413, %vm2669
        %vm2686 = vmand %vm414, %vm2670
        %vm2687 = vmand %vm415, %vm2671
        %vm2688 = vmand %vm416, %vm2672
        %vm2689 = vmand %vm417, %vm2673
        %vm2690 = vmand %vm418, %vm2674
        %vm2691 = vmand %vm419, %vm2675
        %vm2692 = vmand %vm420, %vm2676
        %vm2693 = vmand %vm421, %vm2677
        %vm2694 = vmand %vm422, %vm2678
        %vm2695 = vmand %vm423, %vm2679
        %v2696 = vrsqrt.pop %v1320
        %v2697 = vmul.f32 %v1320, %v2696
        %vm2698 = vcmp.eq.f32.partialorder %v1320, inf
        %v2699 = vsel %vm2698, %v1320, %v2697
        %vm2700 = vcmp.eq.f32.partialorder %v1320, 0.0
        %v2701 = vand.u32 %v1320, 2147483648
        %v2702 = vsel %vm2700, %v2701, %v2699
        %v2703 = vrsqrt.pop %v1321
        %v2704 = vmul.f32 %v1321, %v2703
        %vm2705 = vcmp.eq.f32.partialorder %v1321, inf
        %v2706 = vsel %vm2705, %v1321, %v2704
        %vm2707 = vcmp.eq.f32.partialorder %v1321, 0.0
        %v2708 = vand.u32 %v1321, 2147483648
        %v2709 = vsel %vm2707, %v2708, %v2706
        %v2710 = vrsqrt.pop %v1322
        %v2711 = vmul.f32 %v1322, %v2710
        %vm2712 = vcmp.eq.f32.partialorder %v1322, inf
        %v2713 = vsel %vm2712, %v1322, %v2711
        %vm2714 = vcmp.eq.f32.partialorder %v1322, 0.0
        %v2715 = vand.u32 %v1322, 2147483648
        %v2716 = vsel %vm2714, %v2715, %v2713
        %v2717 = vrsqrt.pop %v1323
        %v2718 = vmul.f32 %v1323, %v2717
        %vm2719 = vcmp.eq.f32.partialorder %v1323, inf
        %v2720 = vsel %vm2719, %v1323, %v2718
        %vm2721 = vcmp.eq.f32.partialorder %v1323, 0.0
        %v2722 = vand.u32 %v1323, 2147483648
        %v2723 = vsel %vm2721, %v2722, %v2720
        %v2724 = vrsqrt.pop %v1324
        %v2725 = vmul.f32 %v1324, %v2724
        %vm2726 = vcmp.eq.f32.partialorder %v1324, inf
        %v2727 = vsel %vm2726, %v1324, %v2725
        %vm2728 = vcmp.eq.f32.partialorder %v1324, 0.0
        %v2729 = vand.u32 %v1324, 2147483648
        %v2730 = vsel %vm2728, %v2729, %v2727
        %v2731 = vrsqrt.pop %v1325
        %v2732 = vmul.f32 %v1325, %v2731
        %vm2733 = vcmp.eq.f32.partialorder %v1325, inf
        %v2734 = vsel %vm2733, %v1325, %v2732
        %vm2735 = vcmp.eq.f32.partialorder %v1325, 0.0
        %v2736 = vand.u32 %v1325, 2147483648
        %v2737 = vsel %vm2735, %v2736, %v2734
        %v2738 = vrsqrt.pop %v1326
        %v2739 = vmul.f32 %v1326, %v2738
        %vm2740 = vcmp.eq.f32.partialorder %v1326, inf
        %v2741 = vsel %vm2740, %v1326, %v2739
        %vm2742 = vcmp.eq.f32.partialorder %v1326, 0.0
        %v2743 = vand.u32 %v1326, 2147483648
        %v2744 = vsel %vm2742, %v2743, %v2741
        %v2745 = vrsqrt.pop %v1327
        %v2746 = vmul.f32 %v1327, %v2745
        %vm2747 = vcmp.eq.f32.partialorder %v1327, inf
        %v2748 = vsel %vm2747, %v1327, %v2746
        %vm2749 = vcmp.eq.f32.partialorder %v1327, 0.0
        %v2750 = vand.u32 %v1327, 2147483648
        %v2751 = vsel %vm2749, %v2750, %v2748
        %v2752 = vrsqrt.pop %v1328
        %v2753 = vmul.f32 %v1328, %v2752
        %vm2754 = vcmp.eq.f32.partialorder %v1328, inf
        %v2755 = vsel %vm2754, %v1328, %v2753
        %vm2756 = vcmp.eq.f32.partialorder %v1328, 0.0
        %v2757 = vand.u32 %v1328, 2147483648
        %v2758 = vsel %vm2756, %v2757, %v2755
        %v2759 = vrsqrt.pop %v1329
        %v2760 = vmul.f32 %v1329, %v2759
        %vm2761 = vcmp.eq.f32.partialorder %v1329, inf
        %v2762 = vsel %vm2761, %v1329, %v2760
        %vm2763 = vcmp.eq.f32.partialorder %v1329, 0.0
        %v2764 = vand.u32 %v1329, 2147483648
        %v2765 = vsel %vm2763, %v2764, %v2762
        %v2766 = vrsqrt.pop %v1330
        %v2767 = vmul.f32 %v1330, %v2766
        %vm2768 = vcmp.eq.f32.partialorder %v1330, inf
        %v2769 = vsel %vm2768, %v1330, %v2767
        %vm2770 = vcmp.eq.f32.partialorder %v1330, 0.0
        %v2771 = vand.u32 %v1330, 2147483648
        %v2772 = vsel %vm2770, %v2771, %v2769
        %v2773 = vrsqrt.pop %v1331
        %v2774 = vmul.f32 %v1331, %v2773
        %vm2775 = vcmp.eq.f32.partialorder %v1331, inf
        %v2776 = vsel %vm2775, %v1331, %v2774
        %vm2777 = vcmp.eq.f32.partialorder %v1331, 0.0
        %v2778 = vand.u32 %v1331, 2147483648
        %v2779 = vsel %vm2777, %v2778, %v2776
        %v2780 = vrsqrt.pop %v1332
        %v2781 = vmul.f32 %v1332, %v2780
        %vm2782 = vcmp.eq.f32.partialorder %v1332, inf
        %v2783 = vsel %vm2782, %v1332, %v2781
        %vm2784 = vcmp.eq.f32.partialorder %v1332, 0.0
        %v2785 = vand.u32 %v1332, 2147483648
        %v2786 = vsel %vm2784, %v2785, %v2783
        %v2787 = vrsqrt.pop %v1333
        %v2788 = vmul.f32 %v1333, %v2787
        %vm2789 = vcmp.eq.f32.partialorder %v1333, inf
        %v2790 = vsel %vm2789, %v1333, %v2788
        %vm2791 = vcmp.eq.f32.partialorder %v1333, 0.0
        %v2792 = vand.u32 %v1333, 2147483648
        %v2793 = vsel %vm2791, %v2792, %v2790
        %v2794 = vrsqrt.pop %v1334
        %v2795 = vmul.f32 %v1334, %v2794
        %vm2796 = vcmp.eq.f32.partialorder %v1334, inf
        %v2797 = vsel %vm2796, %v1334, %v2795
        %vm2798 = vcmp.eq.f32.partialorder %v1334, 0.0
        %v2799 = vand.u32 %v1334, 2147483648
        %v2800 = vsel %vm2798, %v2799, %v2797
        %v2801 = vrsqrt.pop %v1335
        %v2802 = vmul.f32 %v1335, %v2801
        %vm2803 = vcmp.eq.f32.partialorder %v1335, inf
        %v2804 = vsel %vm2803, %v1335, %v2802
        %vm2805 = vcmp.eq.f32.partialorder %v1335, 0.0
        %v2806 = vand.u32 %v1335, 2147483648
        %v2807 = vsel %vm2805, %v2806, %v2804
        %v2808 = vsel %vm2680, %v2702, 0.0
        %v2809 = vsel %vm2681, %v2709, 0.0
        %v2810 = vsel %vm2682, %v2716, 0.0
        %v2811 = vsel %vm2683, %v2723, 0.0
        %v2812 = vsel %vm2684, %v2730, 0.0
        %v2813 = vsel %vm2685, %v2737, 0.0
        %v2814 = vsel %vm2686, %v2744, 0.0
        %v2815 = vsel %vm2687, %v2751, 0.0
        %v2816 = vsel %vm2688, %v2758, 0.0
        %v2817 = vsel %vm2689, %v2765, 0.0
        %v2818 = vsel %vm2690, %v2772, 0.0
        %v2819 = vsel %vm2691, %v2779, 0.0
        %v2820 = vsel %vm2692, %v2786, 0.0
        %v2821 = vsel %vm2693, %v2793, 0.0
        %v2822 = vsel %vm2694, %v2800, 0.0
        %v2823 = vsel %vm2695, %v2807, 0.0
        %2840 = vrot.lane.b32.xlu0 %v2808, 126
        %v2841 = vpop.permute.xlu0 %2840
        %2842 = vrot.lane.b32.xlu0 %v2809, 126
        %v2843 = vpop.permute.xlu0 %2842
        %2844 = vrot.lane.b32.xlu0 %v2810, 126
        %v2845 = vpop.permute.xlu0 %2844
        %2846 = vrot.lane.b32.xlu0 %v2811, 126
        %v2847 = vpop.permute.xlu0 %2846
        %2848 = vrot.lane.b32.xlu0 %v2812, 126
        %v2849 = vpop.permute.xlu0 %2848
        %2850 = vrot.lane.b32.xlu0 %v2813, 126
        %v2851 = vpop.permute.xlu0 %2850
        %2852 = vrot.lane.b32.xlu0 %v2814, 126
        %v2853 = vpop.permute.xlu0 %2852
        %2854 = vrot.lane.b32.xlu0 %v2815, 126
        %v2855 = vpop.permute.xlu0 %2854
        %2856 = vrot.lane.b32.xlu0 %v2816, 126
        %v2857 = vpop.permute.xlu0 %2856
        %2858 = vrot.lane.b32.xlu0 %v2817, 126
        %v2859 = vpop.permute.xlu0 %2858
        %2860 = vrot.lane.b32.xlu0 %v2818, 126
        %v2861 = vpop.permute.xlu0 %2860
        %2862 = vrot.lane.b32.xlu0 %v2819, 126
        %v2863 = vpop.permute.xlu0 %2862
        %2864 = vrot.lane.b32.xlu0 %v2820, 126
        %v2865 = vpop.permute.xlu0 %2864
        %2866 = vrot.lane.b32.xlu0 %v2821, 126
        %v2867 = vpop.permute.xlu0 %2866
        %2868 = vrot.lane.b32.xlu0 %v2822, 126
        %v2869 = vpop.permute.xlu0 %2868
        %2870 = vrot.lane.b32.xlu0 %v2823, 126
        %v2871 = vpop.permute.xlu0 %2870
        %v2888 = vsel %vm2153, %v2841, 0.0
        %v2889 = vsel %vm2153, %v2843, 0.0
        %v2890 = vadd.f32 %v2888, %v2889
        %v2891 = vsel %vm2153, %v2845, 0.0
        %v2892 = vadd.f32 %v2890, %v2891
        %v2893 = vsel %vm2153, %v2847, 0.0
        %v2894 = vadd.f32 %v2892, %v2893
        %v2895 = vsel %vm2153, %v2849, 0.0
        %v2896 = vadd.f32 %v2894, %v2895
        %v2897 = vsel %vm2153, %v2851, 0.0
        %v2898 = vadd.f32 %v2896, %v2897
        %v2899 = vsel %vm2153, %v2853, 0.0
        %v2900 = vadd.f32 %v2898, %v2899
        %v2901 = vsel %vm2153, %v2855, 0.0
        %v2902 = vadd.f32 %v2900, %v2901
        %v2903 = vsel %vm2153, %v2857, 0.0
        %v2904 = vadd.f32 %v2902, %v2903
        %v2905 = vsel %vm2153, %v2859, 0.0
        %v2906 = vadd.f32 %v2904, %v2905
        %v2907 = vsel %vm2153, %v2861, 0.0
        %v2908 = vadd.f32 %v2906, %v2907
        %v2909 = vsel %vm2153, %v2863, 0.0
        %v2910 = vadd.f32 %v2908, %v2909
        %v2911 = vsel %vm2153, %v2865, 0.0
        %v2912 = vadd.f32 %v2910, %v2911
        %v2913 = vsel %vm2153, %v2867, 0.0
        %v2914 = vadd.f32 %v2912, %v2913
        %v2915 = vsel %vm2153, %v2869, 0.0
        %v2916 = vadd.f32 %v2914, %v2915
        %v2917 = vsel %vm2153, %v2871, 0.0
        %v2918 = vadd.f32 %v2916, %v2917
        %2919 = vadd.xlane.f32.xlu0 %v2918
        %v2920 = vpop.xlane.xlu0 %2919
        %v2921 = vrot.slane %v2920, 4
        %v2922 = vadd.f32 %v2920, %v2921
        %v2923 = vrot.slane %v2922, 2
        %v2924 = vadd.f32 %v2922, %v2923
        %v2925 = vrot.slane %v2924, 1
        %v2926 = vadd.f32 %v2924, %v2925
        %s2927 = vtos %v2926
        %v2928 = vstv %s2927
        %v2929 = vadd.f32 %v2928, %v1458
        %vm2930 = vcmp.ne.f32.partialorder %v1514, 100.0
        %vm2931 = vcmp.ne.f32.partialorder %v1515, 100.0
        %vm2932 = vcmp.ne.f32.partialorder %v1516, 100.0
        %vm2933 = vcmp.ne.f32.partialorder %v1517, 100.0
        %vm2934 = vcmp.ne.f32.partialorder %v1518, 100.0
        %vm2935 = vcmp.ne.f32.partialorder %v1519, 100.0
        %vm2936 = vcmp.ne.f32.partialorder %v1520, 100.0
        %vm2937 = vcmp.ne.f32.partialorder %v1521, 100.0
        %vm2938 = vcmp.ne.f32.partialorder %v1522, 100.0
        %vm2939 = vcmp.ne.f32.partialorder %v1523, 100.0
        %vm2940 = vcmp.ne.f32.partialorder %v1524, 100.0
        %vm2941 = vcmp.ne.f32.partialorder %v1525, 100.0
        %vm2942 = vcmp.ne.f32.partialorder %v1526, 100.0
        %vm2943 = vcmp.ne.f32.partialorder %v1527, 100.0
        %vm2944 = vcmp.ne.f32.partialorder %v1528, 100.0
        %vm2945 = vcmp.ne.f32.partialorder %v1529, 100.0
        %vm2946 = vmand %vm408, %vm2930
        %vm2947 = vmand %vm409, %vm2931
        %vm2948 = vmand %vm410, %vm2932
        %vm2949 = vmand %vm411, %vm2933
        %vm2950 = vmand %vm412, %vm2934
        %vm2951 = vmand %vm413, %vm2935
        %vm2952 = vmand %vm414, %vm2936
        %vm2953 = vmand %vm415, %vm2937
        %vm2954 = vmand %vm416, %vm2938
        %vm2955 = vmand %vm417, %vm2939
        %vm2956 = vmand %vm418, %vm2940
        %vm2957 = vmand %vm419, %vm2941
        %vm2958 = vmand %vm420, %vm2942
        %vm2959 = vmand %vm421, %vm2943
        %vm2960 = vmand %vm422, %vm2944
        %vm2961 = vmand %vm423, %vm2945
        %v2962 = vrsqrt.pop %v1514
        %v2963 = vmul.f32 %v1514, %v2962
        %vm2964 = vcmp.eq.f32.partialorder %v1514, inf
        %v2965 = vsel %vm2964, %v1514, %v2963
        %vm2966 = vcmp.eq.f32.partialorder %v1514, 0.0
        %v2967 = vand.u32 %v1514, 2147483648
        %v2968 = vsel %vm2966, %v2967, %v2965
        %v2969 = vrsqrt.pop %v1515
        %v2970 = vmul.f32 %v1515, %v2969
        %vm2971 = vcmp.eq.f32.partialorder %v1515, inf
        %v2972 = vsel %vm2971, %v1515, %v2970
        %vm2973 = vcmp.eq.f32.partialorder %v1515, 0.0
        %v2974 = vand.u32 %v1515, 2147483648
        %v2975 = vsel %vm2973, %v2974, %v2972
        %v2976 = vrsqrt.pop %v1516
        %v2977 = vmul.f32 %v1516, %v2976
        %vm2978 = vcmp.eq.f32.partialorder %v1516, inf
        %v2979 = vsel %vm2978, %v1516, %v2977
        %vm2980 = vcmp.eq.f32.partialorder %v1516, 0.0
        %v2981 = vand.u32 %v1516, 2147483648
        %v2982 = vsel %vm2980, %v2981, %v2979
        %v2983 = vrsqrt.pop %v1517
        %v2984 = vmul.f32 %v1517, %v2983
        %vm2985 = vcmp.eq.f32.partialorder %v1517, inf
        %v2986 = vsel %vm2985, %v1517, %v2984
        %vm2987 = vcmp.eq.f32.partialorder %v1517, 0.0
        %v2988 = vand.u32 %v1517, 2147483648
        %v2989 = vsel %vm2987, %v2988, %v2986
        %v2990 = vrsqrt.pop %v1518
        %v2991 = vmul.f32 %v1518, %v2990
        %vm2992 = vcmp.eq.f32.partialorder %v1518, inf
        %v2993 = vsel %vm2992, %v1518, %v2991
        %vm2994 = vcmp.eq.f32.partialorder %v1518, 0.0
        %v2995 = vand.u32 %v1518, 2147483648
        %v2996 = vsel %vm2994, %v2995, %v2993
        %v2997 = vrsqrt.pop %v1519
        %v2998 = vmul.f32 %v1519, %v2997
        %vm2999 = vcmp.eq.f32.partialorder %v1519, inf
        %v3000 = vsel %vm2999, %v1519, %v2998
        %vm3001 = vcmp.eq.f32.partialorder %v1519, 0.0
        %v3002 = vand.u32 %v1519, 2147483648
        %v3003 = vsel %vm3001, %v3002, %v3000
        %v3004 = vrsqrt.pop %v1520
        %v3005 = vmul.f32 %v1520, %v3004
        %vm3006 = vcmp.eq.f32.partialorder %v1520, inf
        %v3007 = vsel %vm3006, %v1520, %v3005
        %vm3008 = vcmp.eq.f32.partialorder %v1520, 0.0
        %v3009 = vand.u32 %v1520, 2147483648
        %v3010 = vsel %vm3008, %v3009, %v3007
        %v3011 = vrsqrt.pop %v1521
        %v3012 = vmul.f32 %v1521, %v3011
        %vm3013 = vcmp.eq.f32.partialorder %v1521, inf
        %v3014 = vsel %vm3013, %v1521, %v3012
        %vm3015 = vcmp.eq.f32.partialorder %v1521, 0.0
        %v3016 = vand.u32 %v1521, 2147483648
        %v3017 = vsel %vm3015, %v3016, %v3014
        %v3018 = vrsqrt.pop %v1522
        %v3019 = vmul.f32 %v1522, %v3018
        %vm3020 = vcmp.eq.f32.partialorder %v1522, inf
        %v3021 = vsel %vm3020, %v1522, %v3019
        %vm3022 = vcmp.eq.f32.partialorder %v1522, 0.0
        %v3023 = vand.u32 %v1522, 2147483648
        %v3024 = vsel %vm3022, %v3023, %v3021
        %v3025 = vrsqrt.pop %v1523
        %v3026 = vmul.f32 %v1523, %v3025
        %vm3027 = vcmp.eq.f32.partialorder %v1523, inf
        %v3028 = vsel %vm3027, %v1523, %v3026
        %vm3029 = vcmp.eq.f32.partialorder %v1523, 0.0
        %v3030 = vand.u32 %v1523, 2147483648
        %v3031 = vsel %vm3029, %v3030, %v3028
        %v3032 = vrsqrt.pop %v1524
        %v3033 = vmul.f32 %v1524, %v3032
        %vm3034 = vcmp.eq.f32.partialorder %v1524, inf
        %v3035 = vsel %vm3034, %v1524, %v3033
        %vm3036 = vcmp.eq.f32.partialorder %v1524, 0.0
        %v3037 = vand.u32 %v1524, 2147483648
        %v3038 = vsel %vm3036, %v3037, %v3035
        %v3039 = vrsqrt.pop %v1525
        %v3040 = vmul.f32 %v1525, %v3039
        %vm3041 = vcmp.eq.f32.partialorder %v1525, inf
        %v3042 = vsel %vm3041, %v1525, %v3040
        %vm3043 = vcmp.eq.f32.partialorder %v1525, 0.0
        %v3044 = vand.u32 %v1525, 2147483648
        %v3045 = vsel %vm3043, %v3044, %v3042
        %v3046 = vrsqrt.pop %v1526
        %v3047 = vmul.f32 %v1526, %v3046
        %vm3048 = vcmp.eq.f32.partialorder %v1526, inf
        %v3049 = vsel %vm3048, %v1526, %v3047
        %vm3050 = vcmp.eq.f32.partialorder %v1526, 0.0
        %v3051 = vand.u32 %v1526, 2147483648
        %v3052 = vsel %vm3050, %v3051, %v3049
        %v3053 = vrsqrt.pop %v1527
        %v3054 = vmul.f32 %v1527, %v3053
        %vm3055 = vcmp.eq.f32.partialorder %v1527, inf
        %v3056 = vsel %vm3055, %v1527, %v3054
        %vm3057 = vcmp.eq.f32.partialorder %v1527, 0.0
        %v3058 = vand.u32 %v1527, 2147483648
        %v3059 = vsel %vm3057, %v3058, %v3056
        %v3060 = vrsqrt.pop %v1528
        %v3061 = vmul.f32 %v1528, %v3060
        %vm3062 = vcmp.eq.f32.partialorder %v1528, inf
        %v3063 = vsel %vm3062, %v1528, %v3061
        %vm3064 = vcmp.eq.f32.partialorder %v1528, 0.0
        %v3065 = vand.u32 %v1528, 2147483648
        %v3066 = vsel %vm3064, %v3065, %v3063
        %v3067 = vrsqrt.pop %v1529
        %v3068 = vmul.f32 %v1529, %v3067
        %vm3069 = vcmp.eq.f32.partialorder %v1529, inf
        %v3070 = vsel %vm3069, %v1529, %v3068
        %vm3071 = vcmp.eq.f32.partialorder %v1529, 0.0
        %v3072 = vand.u32 %v1529, 2147483648
        %v3073 = vsel %vm3071, %v3072, %v3070
        %v3074 = vsel %vm2946, %v2968, 0.0
        %v3075 = vsel %vm2947, %v2975, 0.0
        %v3076 = vsel %vm2948, %v2982, 0.0
        %v3077 = vsel %vm2949, %v2989, 0.0
        %v3078 = vsel %vm2950, %v2996, 0.0
        %v3079 = vsel %vm2951, %v3003, 0.0
        %v3080 = vsel %vm2952, %v3010, 0.0
        %v3081 = vsel %vm2953, %v3017, 0.0
        %v3082 = vsel %vm2954, %v3024, 0.0
        %v3083 = vsel %vm2955, %v3031, 0.0
        %v3084 = vsel %vm2956, %v3038, 0.0
        %v3085 = vsel %vm2957, %v3045, 0.0
        %v3086 = vsel %vm2958, %v3052, 0.0
        %v3087 = vsel %vm2959, %v3059, 0.0
        %v3088 = vsel %vm2960, %v3066, 0.0
        %v3089 = vsel %vm2961, %v3073, 0.0
        %3106 = vrot.lane.b32.xlu0 %v3074, 125
        %v3107 = vpop.permute.xlu0 %3106
        %3108 = vrot.lane.b32.xlu0 %v3075, 125
        %v3109 = vpop.permute.xlu0 %3108
        %3110 = vrot.lane.b32.xlu0 %v3076, 125
        %v3111 = vpop.permute.xlu0 %3110
        %3112 = vrot.lane.b32.xlu0 %v3077, 125
        %v3113 = vpop.permute.xlu0 %3112
        %3114 = vrot.lane.b32.xlu0 %v3078, 125
        %v3115 = vpop.permute.xlu0 %3114
        %3116 = vrot.lane.b32.xlu0 %v3079, 125
        %v3117 = vpop.permute.xlu0 %3116
        %3118 = vrot.lane.b32.xlu0 %v3080, 125
        %v3119 = vpop.permute.xlu0 %3118
        %3120 = vrot.lane.b32.xlu0 %v3081, 125
        %v3121 = vpop.permute.xlu0 %3120
        %3122 = vrot.lane.b32.xlu0 %v3082, 125
        %v3123 = vpop.permute.xlu0 %3122
        %3124 = vrot.lane.b32.xlu0 %v3083, 125
        %v3125 = vpop.permute.xlu0 %3124
        %3126 = vrot.lane.b32.xlu0 %v3084, 125
        %v3127 = vpop.permute.xlu0 %3126
        %3128 = vrot.lane.b32.xlu0 %v3085, 125
        %v3129 = vpop.permute.xlu0 %3128
        %3130 = vrot.lane.b32.xlu0 %v3086, 125
        %v3131 = vpop.permute.xlu0 %3130
        %3132 = vrot.lane.b32.xlu0 %v3087, 125
        %v3133 = vpop.permute.xlu0 %3132
        %3134 = vrot.lane.b32.xlu0 %v3088, 125
        %v3135 = vpop.permute.xlu0 %3134
        %3136 = vrot.lane.b32.xlu0 %v3089, 125
        %v3137 = vpop.permute.xlu0 %3136
        %v3154 = vsel %vm2153, %v3107, 0.0
        %v3155 = vsel %vm2153, %v3109, 0.0
        %v3156 = vadd.f32 %v3154, %v3155
        %v3157 = vsel %vm2153, %v3111, 0.0
        %v3158 = vadd.f32 %v3156, %v3157
        %v3159 = vsel %vm2153, %v3113, 0.0
        %v3160 = vadd.f32 %v3158, %v3159
        %v3161 = vsel %vm2153, %v3115, 0.0
        %v3162 = vadd.f32 %v3160, %v3161
        %v3163 = vsel %vm2153, %v3117, 0.0
        %v3164 = vadd.f32 %v3162, %v3163
        %v3165 = vsel %vm2153, %v3119, 0.0
        %v3166 = vadd.f32 %v3164, %v3165
        %v3167 = vsel %vm2153, %v3121, 0.0
        %v3168 = vadd.f32 %v3166, %v3167
        %v3169 = vsel %vm2153, %v3123, 0.0
        %v3170 = vadd.f32 %v3168, %v3169
        %v3171 = vsel %vm2153, %v3125, 0.0
        %v3172 = vadd.f32 %v3170, %v3171
        %v3173 = vsel %vm2153, %v3127, 0.0
        %v3174 = vadd.f32 %v3172, %v3173
        %v3175 = vsel %vm2153, %v3129, 0.0
        %v3176 = vadd.f32 %v3174, %v3175
        %v3177 = vsel %vm2153, %v3131, 0.0
        %v3178 = vadd.f32 %v3176, %v3177
        %v3179 = vsel %vm2153, %v3133, 0.0
        %v3180 = vadd.f32 %v3178, %v3179
        %v3181 = vsel %vm2153, %v3135, 0.0
        %v3182 = vadd.f32 %v3180, %v3181
        %v3183 = vsel %vm2153, %v3137, 0.0
        %v3184 = vadd.f32 %v3182, %v3183
        %3185 = vadd.xlane.f32.xlu0 %v3184
        %v3186 = vpop.xlane.xlu0 %3185
        %v3187 = vrot.slane %v3186, 4
        %v3188 = vadd.f32 %v3186, %v3187
        %v3189 = vrot.slane %v3188, 2
        %v3190 = vadd.f32 %v3188, %v3189
        %v3191 = vrot.slane %v3190, 1
        %v3192 = vadd.f32 %v3190, %v3191
        %s3193 = vtos %v3192
        %v3194 = vstv %s3193
        %v3195 = vadd.f32 %v3194, %v1652
        %vm3196 = vcmp.ne.f32.partialorder %v1708, 100.0
        %vm3197 = vcmp.ne.f32.partialorder %v1709, 100.0
        %vm3198 = vcmp.ne.f32.partialorder %v1710, 100.0
        %vm3199 = vcmp.ne.f32.partialorder %v1711, 100.0
        %vm3200 = vcmp.ne.f32.partialorder %v1712, 100.0
        %vm3201 = vcmp.ne.f32.partialorder %v1713, 100.0
        %vm3202 = vcmp.ne.f32.partialorder %v1714, 100.0
        %vm3203 = vcmp.ne.f32.partialorder %v1715, 100.0
        %vm3204 = vcmp.ne.f32.partialorder %v1716, 100.0
        %vm3205 = vcmp.ne.f32.partialorder %v1717, 100.0
        %vm3206 = vcmp.ne.f32.partialorder %v1718, 100.0
        %vm3207 = vcmp.ne.f32.partialorder %v1719, 100.0
        %vm3208 = vcmp.ne.f32.partialorder %v1720, 100.0
        %vm3209 = vcmp.ne.f32.partialorder %v1721, 100.0
        %vm3210 = vcmp.ne.f32.partialorder %v1722, 100.0
        %vm3211 = vcmp.ne.f32.partialorder %v1723, 100.0
        %vm3212 = vmand %vm408, %vm3196
        %vm3213 = vmand %vm409, %vm3197
        %vm3214 = vmand %vm410, %vm3198
        %vm3215 = vmand %vm411, %vm3199
        %vm3216 = vmand %vm412, %vm3200
        %vm3217 = vmand %vm413, %vm3201
        %vm3218 = vmand %vm414, %vm3202
        %vm3219 = vmand %vm415, %vm3203
        %vm3220 = vmand %vm416, %vm3204
        %vm3221 = vmand %vm417, %vm3205
        %vm3222 = vmand %vm418, %vm3206
        %vm3223 = vmand %vm419, %vm3207
        %vm3224 = vmand %vm420, %vm3208
        %vm3225 = vmand %vm421, %vm3209
        %vm3226 = vmand %vm422, %vm3210
        %vm3227 = vmand %vm423, %vm3211
        %v3228 = vrsqrt.pop %v1708
        %v3229 = vmul.f32 %v1708, %v3228
        %vm3230 = vcmp.eq.f32.partialorder %v1708, inf
        %v3231 = vsel %vm3230, %v1708, %v3229
        %vm3232 = vcmp.eq.f32.partialorder %v1708, 0.0
        %v3233 = vand.u32 %v1708, 2147483648
        %v3234 = vsel %vm3232, %v3233, %v3231
        %v3235 = vrsqrt.pop %v1709
        %v3236 = vmul.f32 %v1709, %v3235
        %vm3237 = vcmp.eq.f32.partialorder %v1709, inf
        %v3238 = vsel %vm3237, %v1709, %v3236
        %vm3239 = vcmp.eq.f32.partialorder %v1709, 0.0
        %v3240 = vand.u32 %v1709, 2147483648
        %v3241 = vsel %vm3239, %v3240, %v3238
        %v3242 = vrsqrt.pop %v1710
        %v3243 = vmul.f32 %v1710, %v3242
        %vm3244 = vcmp.eq.f32.partialorder %v1710, inf
        %v3245 = vsel %vm3244, %v1710, %v3243
        %vm3246 = vcmp.eq.f32.partialorder %v1710, 0.0
        %v3247 = vand.u32 %v1710, 2147483648
        %v3248 = vsel %vm3246, %v3247, %v3245
        %v3249 = vrsqrt.pop %v1711
        %v3250 = vmul.f32 %v1711, %v3249
        %vm3251 = vcmp.eq.f32.partialorder %v1711, inf
        %v3252 = vsel %vm3251, %v1711, %v3250
        %vm3253 = vcmp.eq.f32.partialorder %v1711, 0.0
        %v3254 = vand.u32 %v1711, 2147483648
        %v3255 = vsel %vm3253, %v3254, %v3252
        %v3256 = vrsqrt.pop %v1712
        %v3257 = vmul.f32 %v1712, %v3256
        %vm3258 = vcmp.eq.f32.partialorder %v1712, inf
        %v3259 = vsel %vm3258, %v1712, %v3257
        %vm3260 = vcmp.eq.f32.partialorder %v1712, 0.0
        %v3261 = vand.u32 %v1712, 2147483648
        %v3262 = vsel %vm3260, %v3261, %v3259
        %v3263 = vrsqrt.pop %v1713
        %v3264 = vmul.f32 %v1713, %v3263
        %vm3265 = vcmp.eq.f32.partialorder %v1713, inf
        %v3266 = vsel %vm3265, %v1713, %v3264
        %vm3267 = vcmp.eq.f32.partialorder %v1713, 0.0
        %v3268 = vand.u32 %v1713, 2147483648
        %v3269 = vsel %vm3267, %v3268, %v3266
        %v3270 = vrsqrt.pop %v1714
        %v3271 = vmul.f32 %v1714, %v3270
        %vm3272 = vcmp.eq.f32.partialorder %v1714, inf
        %v3273 = vsel %vm3272, %v1714, %v3271
        %vm3274 = vcmp.eq.f32.partialorder %v1714, 0.0
        %v3275 = vand.u32 %v1714, 2147483648
        %v3276 = vsel %vm3274, %v3275, %v3273
        %v3277 = vrsqrt.pop %v1715
        %v3278 = vmul.f32 %v1715, %v3277
        %vm3279 = vcmp.eq.f32.partialorder %v1715, inf
        %v3280 = vsel %vm3279, %v1715, %v3278
        %vm3281 = vcmp.eq.f32.partialorder %v1715, 0.0
        %v3282 = vand.u32 %v1715, 2147483648
        %v3283 = vsel %vm3281, %v3282, %v3280
        %v3284 = vrsqrt.pop %v1716
        %v3285 = vmul.f32 %v1716, %v3284
        %vm3286 = vcmp.eq.f32.partialorder %v1716, inf
        %v3287 = vsel %vm3286, %v1716, %v3285
        %vm3288 = vcmp.eq.f32.partialorder %v1716, 0.0
        %v3289 = vand.u32 %v1716, 2147483648
        %v3290 = vsel %vm3288, %v3289, %v3287
        %v3291 = vrsqrt.pop %v1717
        %v3292 = vmul.f32 %v1717, %v3291
        %vm3293 = vcmp.eq.f32.partialorder %v1717, inf
        %v3294 = vsel %vm3293, %v1717, %v3292
        %vm3295 = vcmp.eq.f32.partialorder %v1717, 0.0
        %v3296 = vand.u32 %v1717, 2147483648
        %v3297 = vsel %vm3295, %v3296, %v3294
        %v3298 = vrsqrt.pop %v1718
        %v3299 = vmul.f32 %v1718, %v3298
        %vm3300 = vcmp.eq.f32.partialorder %v1718, inf
        %v3301 = vsel %vm3300, %v1718, %v3299
        %vm3302 = vcmp.eq.f32.partialorder %v1718, 0.0
        %v3303 = vand.u32 %v1718, 2147483648
        %v3304 = vsel %vm3302, %v3303, %v3301
        %v3305 = vrsqrt.pop %v1719
        %v3306 = vmul.f32 %v1719, %v3305
        %vm3307 = vcmp.eq.f32.partialorder %v1719, inf
        %v3308 = vsel %vm3307, %v1719, %v3306
        %vm3309 = vcmp.eq.f32.partialorder %v1719, 0.0
        %v3310 = vand.u32 %v1719, 2147483648
        %v3311 = vsel %vm3309, %v3310, %v3308
        %v3312 = vrsqrt.pop %v1720
        %v3313 = vmul.f32 %v1720, %v3312
        %vm3314 = vcmp.eq.f32.partialorder %v1720, inf
        %v3315 = vsel %vm3314, %v1720, %v3313
        %vm3316 = vcmp.eq.f32.partialorder %v1720, 0.0
        %v3317 = vand.u32 %v1720, 2147483648
        %v3318 = vsel %vm3316, %v3317, %v3315
        %v3319 = vrsqrt.pop %v1721
        %v3320 = vmul.f32 %v1721, %v3319
        %vm3321 = vcmp.eq.f32.partialorder %v1721, inf
        %v3322 = vsel %vm3321, %v1721, %v3320
        %vm3323 = vcmp.eq.f32.partialorder %v1721, 0.0
        %v3324 = vand.u32 %v1721, 2147483648
        %v3325 = vsel %vm3323, %v3324, %v3322
        %v3326 = vrsqrt.pop %v1722
        %v3327 = vmul.f32 %v1722, %v3326
        %vm3328 = vcmp.eq.f32.partialorder %v1722, inf
        %v3329 = vsel %vm3328, %v1722, %v3327
        %vm3330 = vcmp.eq.f32.partialorder %v1722, 0.0
        %v3331 = vand.u32 %v1722, 2147483648
        %v3332 = vsel %vm3330, %v3331, %v3329
        %v3333 = vrsqrt.pop %v1723
        %v3334 = vmul.f32 %v1723, %v3333
        %vm3335 = vcmp.eq.f32.partialorder %v1723, inf
        %v3336 = vsel %vm3335, %v1723, %v3334
        %vm3337 = vcmp.eq.f32.partialorder %v1723, 0.0
        %v3338 = vand.u32 %v1723, 2147483648
        %v3339 = vsel %vm3337, %v3338, %v3336
        %v3340 = vsel %vm3212, %v3234, 0.0
        %v3341 = vsel %vm3213, %v3241, 0.0
        %v3342 = vsel %vm3214, %v3248, 0.0
        %v3343 = vsel %vm3215, %v3255, 0.0
        %v3344 = vsel %vm3216, %v3262, 0.0
        %v3345 = vsel %vm3217, %v3269, 0.0
        %v3346 = vsel %vm3218, %v3276, 0.0
        %v3347 = vsel %vm3219, %v3283, 0.0
        %v3348 = vsel %vm3220, %v3290, 0.0
        %v3349 = vsel %vm3221, %v3297, 0.0
        %v3350 = vsel %vm3222, %v3304, 0.0
        %v3351 = vsel %vm3223, %v3311, 0.0
        %v3352 = vsel %vm3224, %v3318, 0.0
        %v3353 = vsel %vm3225, %v3325, 0.0
        %v3354 = vsel %vm3226, %v3332, 0.0
        %v3355 = vsel %vm3227, %v3339, 0.0
        %3372 = vrot.lane.b32.xlu0 %v3340, 124
        %v3373 = vpop.permute.xlu0 %3372
        %3374 = vrot.lane.b32.xlu0 %v3341, 124
        %v3375 = vpop.permute.xlu0 %3374
        %3376 = vrot.lane.b32.xlu0 %v3342, 124
        %v3377 = vpop.permute.xlu0 %3376
        %3378 = vrot.lane.b32.xlu0 %v3343, 124
        %v3379 = vpop.permute.xlu0 %3378
        %3380 = vrot.lane.b32.xlu0 %v3344, 124
        %v3381 = vpop.permute.xlu0 %3380
        %3382 = vrot.lane.b32.xlu0 %v3345, 124
        %v3383 = vpop.permute.xlu0 %3382
        %3384 = vrot.lane.b32.xlu0 %v3346, 124
        %v3385 = vpop.permute.xlu0 %3384
        %3386 = vrot.lane.b32.xlu0 %v3347, 124
        %v3387 = vpop.permute.xlu0 %3386
        %3388 = vrot.lane.b32.xlu0 %v3348, 124
        %v3389 = vpop.permute.xlu0 %3388
        %3390 = vrot.lane.b32.xlu0 %v3349, 124
        %v3391 = vpop.permute.xlu0 %3390
        %3392 = vrot.lane.b32.xlu0 %v3350, 124
        %v3393 = vpop.permute.xlu0 %3392
        %3394 = vrot.lane.b32.xlu0 %v3351, 124
        %v3395 = vpop.permute.xlu0 %3394
        %3396 = vrot.lane.b32.xlu0 %v3352, 124
        %v3397 = vpop.permute.xlu0 %3396
        %3398 = vrot.lane.b32.xlu0 %v3353, 124
        %v3399 = vpop.permute.xlu0 %3398
        %3400 = vrot.lane.b32.xlu0 %v3354, 124
        %v3401 = vpop.permute.xlu0 %3400
        %3402 = vrot.lane.b32.xlu0 %v3355, 124
        %v3403 = vpop.permute.xlu0 %3402
        %v3420 = vsel %vm2153, %v3373, 0.0
        %v3421 = vsel %vm2153, %v3375, 0.0
        %v3422 = vadd.f32 %v3420, %v3421
        %v3423 = vsel %vm2153, %v3377, 0.0
        %v3424 = vadd.f32 %v3422, %v3423
        %v3425 = vsel %vm2153, %v3379, 0.0
        %v3426 = vadd.f32 %v3424, %v3425
        %v3427 = vsel %vm2153, %v3381, 0.0
        %v3428 = vadd.f32 %v3426, %v3427
        %v3429 = vsel %vm2153, %v3383, 0.0
        %v3430 = vadd.f32 %v3428, %v3429
        %v3431 = vsel %vm2153, %v3385, 0.0
        %v3432 = vadd.f32 %v3430, %v3431
        %v3433 = vsel %vm2153, %v3387, 0.0
        %v3434 = vadd.f32 %v3432, %v3433
        %v3435 = vsel %vm2153, %v3389, 0.0
        %v3436 = vadd.f32 %v3434, %v3435
        %v3437 = vsel %vm2153, %v3391, 0.0
        %v3438 = vadd.f32 %v3436, %v3437
        %v3439 = vsel %vm2153, %v3393, 0.0
        %v3440 = vadd.f32 %v3438, %v3439
        %v3441 = vsel %vm2153, %v3395, 0.0
        %v3442 = vadd.f32 %v3440, %v3441
        %v3443 = vsel %vm2153, %v3397, 0.0
        %v3444 = vadd.f32 %v3442, %v3443
        %v3445 = vsel %vm2153, %v3399, 0.0
        %v3446 = vadd.f32 %v3444, %v3445
        %v3447 = vsel %vm2153, %v3401, 0.0
        %v3448 = vadd.f32 %v3446, %v3447
        %v3449 = vsel %vm2153, %v3403, 0.0
        %v3450 = vadd.f32 %v3448, %v3449
        %3451 = vadd.xlane.f32.xlu0 %v3450
        %v3452 = vpop.xlane.xlu0 %3451
        %v3453 = vrot.slane %v3452, 4
        %v3454 = vadd.f32 %v3452, %v3453
        %v3455 = vrot.slane %v3454, 2
        %v3456 = vadd.f32 %v3454, %v3455
        %v3457 = vrot.slane %v3456, 1
        %v3458 = vadd.f32 %v3456, %v3457
        %s3459 = vtos %v3458
        %v3460 = vstv %s3459
        %v3461 = vadd.f32 %v3460, %v1846
        %vm3462 = vcmp.ne.f32.partialorder %v1902, 100.0
        %vm3463 = vcmp.ne.f32.partialorder %v1903, 100.0
        %vm3464 = vcmp.ne.f32.partialorder %v1904, 100.0
        %vm3465 = vcmp.ne.f32.partialorder %v1905, 100.0
        %vm3466 = vcmp.ne.f32.partialorder %v1906, 100.0
        %vm3467 = vcmp.ne.f32.partialorder %v1907, 100.0
        %vm3468 = vcmp.ne.f32.partialorder %v1908, 100.0
        %vm3469 = vcmp.ne.f32.partialorder %v1909, 100.0
        %vm3470 = vcmp.ne.f32.partialorder %v1910, 100.0
        %vm3471 = vcmp.ne.f32.partialorder %v1911, 100.0
        %vm3472 = vcmp.ne.f32.partialorder %v1912, 100.0
        %vm3473 = vcmp.ne.f32.partialorder %v1913, 100.0
        %vm3474 = vcmp.ne.f32.partialorder %v1914, 100.0
        %vm3475 = vcmp.ne.f32.partialorder %v1915, 100.0
        %vm3476 = vcmp.ne.f32.partialorder %v1916, 100.0
        %vm3477 = vcmp.ne.f32.partialorder %v1917, 100.0
        %vm3478 = vmand %vm408, %vm3462
        %vm3479 = vmand %vm409, %vm3463
        %vm3480 = vmand %vm410, %vm3464
        %vm3481 = vmand %vm411, %vm3465
        %vm3482 = vmand %vm412, %vm3466
        %vm3483 = vmand %vm413, %vm3467
        %vm3484 = vmand %vm414, %vm3468
        %vm3485 = vmand %vm415, %vm3469
        %vm3486 = vmand %vm416, %vm3470
        %vm3487 = vmand %vm417, %vm3471
        %vm3488 = vmand %vm418, %vm3472
        %vm3489 = vmand %vm419, %vm3473
        %vm3490 = vmand %vm420, %vm3474
        %vm3491 = vmand %vm421, %vm3475
        %vm3492 = vmand %vm422, %vm3476
        %vm3493 = vmand %vm423, %vm3477
        %v3494 = vrsqrt.pop %v1902
        %v3495 = vmul.f32 %v1902, %v3494
        %vm3496 = vcmp.eq.f32.partialorder %v1902, inf
        %v3497 = vsel %vm3496, %v1902, %v3495
        %vm3498 = vcmp.eq.f32.partialorder %v1902, 0.0
        %v3499 = vand.u32 %v1902, 2147483648
        %v3500 = vsel %vm3498, %v3499, %v3497
        %v3501 = vrsqrt.pop %v1903
        %v3502 = vmul.f32 %v1903, %v3501
        %vm3503 = vcmp.eq.f32.partialorder %v1903, inf
        %v3504 = vsel %vm3503, %v1903, %v3502
        %vm3505 = vcmp.eq.f32.partialorder %v1903, 0.0
        %v3506 = vand.u32 %v1903, 2147483648
        %v3507 = vsel %vm3505, %v3506, %v3504
        %v3508 = vrsqrt.pop %v1904
        %v3509 = vmul.f32 %v1904, %v3508
        %vm3510 = vcmp.eq.f32.partialorder %v1904, inf
        %v3511 = vsel %vm3510, %v1904, %v3509
        %vm3512 = vcmp.eq.f32.partialorder %v1904, 0.0
        %v3513 = vand.u32 %v1904, 2147483648
        %v3514 = vsel %vm3512, %v3513, %v3511
        %v3515 = vrsqrt.pop %v1905
        %v3516 = vmul.f32 %v1905, %v3515
        %vm3517 = vcmp.eq.f32.partialorder %v1905, inf
        %v3518 = vsel %vm3517, %v1905, %v3516
        %vm3519 = vcmp.eq.f32.partialorder %v1905, 0.0
        %v3520 = vand.u32 %v1905, 2147483648
        %v3521 = vsel %vm3519, %v3520, %v3518
        %v3522 = vrsqrt.pop %v1906
        %v3523 = vmul.f32 %v1906, %v3522
        %vm3524 = vcmp.eq.f32.partialorder %v1906, inf
        %v3525 = vsel %vm3524, %v1906, %v3523
        %vm3526 = vcmp.eq.f32.partialorder %v1906, 0.0
        %v3527 = vand.u32 %v1906, 2147483648
        %v3528 = vsel %vm3526, %v3527, %v3525
        %v3529 = vrsqrt.pop %v1907
        %v3530 = vmul.f32 %v1907, %v3529
        %vm3531 = vcmp.eq.f32.partialorder %v1907, inf
        %v3532 = vsel %vm3531, %v1907, %v3530
        %vm3533 = vcmp.eq.f32.partialorder %v1907, 0.0
        %v3534 = vand.u32 %v1907, 2147483648
        %v3535 = vsel %vm3533, %v3534, %v3532
        %v3536 = vrsqrt.pop %v1908
        %v3537 = vmul.f32 %v1908, %v3536
        %vm3538 = vcmp.eq.f32.partialorder %v1908, inf
        %v3539 = vsel %vm3538, %v1908, %v3537
        %vm3540 = vcmp.eq.f32.partialorder %v1908, 0.0
        %v3541 = vand.u32 %v1908, 2147483648
        %v3542 = vsel %vm3540, %v3541, %v3539
        %v3543 = vrsqrt.pop %v1909
        %v3544 = vmul.f32 %v1909, %v3543
        %vm3545 = vcmp.eq.f32.partialorder %v1909, inf
        %v3546 = vsel %vm3545, %v1909, %v3544
        %vm3547 = vcmp.eq.f32.partialorder %v1909, 0.0
        %v3548 = vand.u32 %v1909, 2147483648
        %v3549 = vsel %vm3547, %v3548, %v3546
        %v3550 = vrsqrt.pop %v1910
        %v3551 = vmul.f32 %v1910, %v3550
        %vm3552 = vcmp.eq.f32.partialorder %v1910, inf
        %v3553 = vsel %vm3552, %v1910, %v3551
        %vm3554 = vcmp.eq.f32.partialorder %v1910, 0.0
        %v3555 = vand.u32 %v1910, 2147483648
        %v3556 = vsel %vm3554, %v3555, %v3553
        %v3557 = vrsqrt.pop %v1911
        %v3558 = vmul.f32 %v1911, %v3557
        %vm3559 = vcmp.eq.f32.partialorder %v1911, inf
        %v3560 = vsel %vm3559, %v1911, %v3558
        %vm3561 = vcmp.eq.f32.partialorder %v1911, 0.0
        %v3562 = vand.u32 %v1911, 2147483648
        %v3563 = vsel %vm3561, %v3562, %v3560
        %v3564 = vrsqrt.pop %v1912
        %v3565 = vmul.f32 %v1912, %v3564
        %vm3566 = vcmp.eq.f32.partialorder %v1912, inf
        %v3567 = vsel %vm3566, %v1912, %v3565
        %vm3568 = vcmp.eq.f32.partialorder %v1912, 0.0
        %v3569 = vand.u32 %v1912, 2147483648
        %v3570 = vsel %vm3568, %v3569, %v3567
        %v3571 = vrsqrt.pop %v1913
        %v3572 = vmul.f32 %v1913, %v3571
        %vm3573 = vcmp.eq.f32.partialorder %v1913, inf
        %v3574 = vsel %vm3573, %v1913, %v3572
        %vm3575 = vcmp.eq.f32.partialorder %v1913, 0.0
        %v3576 = vand.u32 %v1913, 2147483648
        %v3577 = vsel %vm3575, %v3576, %v3574
        %v3578 = vrsqrt.pop %v1914
        %v3579 = vmul.f32 %v1914, %v3578
        %vm3580 = vcmp.eq.f32.partialorder %v1914, inf
        %v3581 = vsel %vm3580, %v1914, %v3579
        %vm3582 = vcmp.eq.f32.partialorder %v1914, 0.0
        %v3583 = vand.u32 %v1914, 2147483648
        %v3584 = vsel %vm3582, %v3583, %v3581
        %v3585 = vrsqrt.pop %v1915
        %v3586 = vmul.f32 %v1915, %v3585
        %vm3587 = vcmp.eq.f32.partialorder %v1915, inf
        %v3588 = vsel %vm3587, %v1915, %v3586
        %vm3589 = vcmp.eq.f32.partialorder %v1915, 0.0
        %v3590 = vand.u32 %v1915, 2147483648
        %v3591 = vsel %vm3589, %v3590, %v3588
        %v3592 = vrsqrt.pop %v1916
        %v3593 = vmul.f32 %v1916, %v3592
        %vm3594 = vcmp.eq.f32.partialorder %v1916, inf
        %v3595 = vsel %vm3594, %v1916, %v3593
        %vm3596 = vcmp.eq.f32.partialorder %v1916, 0.0
        %v3597 = vand.u32 %v1916, 2147483648
        %v3598 = vsel %vm3596, %v3597, %v3595
        %v3599 = vrsqrt.pop %v1917
        %v3600 = vmul.f32 %v1917, %v3599
        %vm3601 = vcmp.eq.f32.partialorder %v1917, inf
        %v3602 = vsel %vm3601, %v1917, %v3600
        %vm3603 = vcmp.eq.f32.partialorder %v1917, 0.0
        %v3604 = vand.u32 %v1917, 2147483648
        %v3605 = vsel %vm3603, %v3604, %v3602
        %v3606 = vsel %vm3478, %v3500, 0.0
        %v3607 = vsel %vm3479, %v3507, 0.0
        %v3608 = vsel %vm3480, %v3514, 0.0
        %v3609 = vsel %vm3481, %v3521, 0.0
        %v3610 = vsel %vm3482, %v3528, 0.0
        %v3611 = vsel %vm3483, %v3535, 0.0
        %v3612 = vsel %vm3484, %v3542, 0.0
        %v3613 = vsel %vm3485, %v3549, 0.0
        %v3614 = vsel %vm3486, %v3556, 0.0
        %v3615 = vsel %vm3487, %v3563, 0.0
        %v3616 = vsel %vm3488, %v3570, 0.0
        %v3617 = vsel %vm3489, %v3577, 0.0
        %v3618 = vsel %vm3490, %v3584, 0.0
        %v3619 = vsel %vm3491, %v3591, 0.0
        %v3620 = vsel %vm3492, %v3598, 0.0
        %v3621 = vsel %vm3493, %v3605, 0.0
        %3638 = vrot.lane.b32.xlu0 %v3606, 123
        %v3639 = vpop.permute.xlu0 %3638
        %3640 = vrot.lane.b32.xlu0 %v3607, 123
        %v3641 = vpop.permute.xlu0 %3640
        %3642 = vrot.lane.b32.xlu0 %v3608, 123
        %v3643 = vpop.permute.xlu0 %3642
        %3644 = vrot.lane.b32.xlu0 %v3609, 123
        %v3645 = vpop.permute.xlu0 %3644
        %3646 = vrot.lane.b32.xlu0 %v3610, 123
        %v3647 = vpop.permute.xlu0 %3646
        %3648 = vrot.lane.b32.xlu0 %v3611, 123
        %v3649 = vpop.permute.xlu0 %3648
        %3650 = vrot.lane.b32.xlu0 %v3612, 123
        %v3651 = vpop.permute.xlu0 %3650
        %3652 = vrot.lane.b32.xlu0 %v3613, 123
        %v3653 = vpop.permute.xlu0 %3652
        %3654 = vrot.lane.b32.xlu0 %v3614, 123
        %v3655 = vpop.permute.xlu0 %3654
        %3656 = vrot.lane.b32.xlu0 %v3615, 123
        %v3657 = vpop.permute.xlu0 %3656
        %3658 = vrot.lane.b32.xlu0 %v3616, 123
        %v3659 = vpop.permute.xlu0 %3658
        %3660 = vrot.lane.b32.xlu0 %v3617, 123
        %v3661 = vpop.permute.xlu0 %3660
        %3662 = vrot.lane.b32.xlu0 %v3618, 123
        %v3663 = vpop.permute.xlu0 %3662
        %3664 = vrot.lane.b32.xlu0 %v3619, 123
        %v3665 = vpop.permute.xlu0 %3664
        %3666 = vrot.lane.b32.xlu0 %v3620, 123
        %v3667 = vpop.permute.xlu0 %3666
        %3668 = vrot.lane.b32.xlu0 %v3621, 123
        %v3669 = vpop.permute.xlu0 %3668
        %v3686 = vsel %vm2153, %v3639, 0.0
        %v3687 = vsel %vm2153, %v3641, 0.0
        %v3688 = vadd.f32 %v3686, %v3687
        %v3689 = vsel %vm2153, %v3643, 0.0
        %v3690 = vadd.f32 %v3688, %v3689
        %v3691 = vsel %vm2153, %v3645, 0.0
        %v3692 = vadd.f32 %v3690, %v3691
        %v3693 = vsel %vm2153, %v3647, 0.0
        %v3694 = vadd.f32 %v3692, %v3693
        %v3695 = vsel %vm2153, %v3649, 0.0
        %v3696 = vadd.f32 %v3694, %v3695
        %v3697 = vsel %vm2153, %v3651, 0.0
        %v3698 = vadd.f32 %v3696, %v3697
        %v3699 = vsel %vm2153, %v3653, 0.0
        %v3700 = vadd.f32 %v3698, %v3699
        %v3701 = vsel %vm2153, %v3655, 0.0
        %v3702 = vadd.f32 %v3700, %v3701
        %v3703 = vsel %vm2153, %v3657, 0.0
        %v3704 = vadd.f32 %v3702, %v3703
        %v3705 = vsel %vm2153, %v3659, 0.0
        %v3706 = vadd.f32 %v3704, %v3705
        %v3707 = vsel %vm2153, %v3661, 0.0
        %v3708 = vadd.f32 %v3706, %v3707
        %v3709 = vsel %vm2153, %v3663, 0.0
        %v3710 = vadd.f32 %v3708, %v3709
        %v3711 = vsel %vm2153, %v3665, 0.0
        %v3712 = vadd.f32 %v3710, %v3711
        %v3713 = vsel %vm2153, %v3667, 0.0
        %v3714 = vadd.f32 %v3712, %v3713
        %v3715 = vsel %vm2153, %v3669, 0.0
        %v3716 = vadd.f32 %v3714, %v3715
        %3717 = vadd.xlane.f32.xlu0 %v3716
        %v3718 = vpop.xlane.xlu0 %3717
        %v3719 = vrot.slane %v3718, 4
        %v3720 = vadd.f32 %v3718, %v3719
        %v3721 = vrot.slane %v3720, 2
        %v3722 = vadd.f32 %v3720, %v3721
        %v3723 = vrot.slane %v3722, 1
        %v3724 = vadd.f32 %v3722, %v3723
        %s3725 = vtos %v3724
        %v3726 = vstv %s3725
        %v3727 = vadd.f32 %v3726, %v2040
        %v3728 = vld [vmem:[%s362] sm:$0xff]
        %v3729 = vld [vmem:[%s362 + $0x8] sm:$0xff]
        %v3730 = vld [vmem:[%s362 + $0x10] sm:$0x1f]
        %v3731 = vld [vmem:[%s369] sm:$0xff]
        %v3732 = vld [vmem:[%s369 + $0x8] sm:$0xff]
        %v3733 = vld [vmem:[%s369 + $0x10] sm:$0x1f]
        %v3734 = vsub.f32 %v3728, %v3731
        %v3735 = vsub.f32 %v3729, %v3732
        %v3736 = vsub.f32 %v3730, %v3733
        %v3737 = vmul.f32 %v3734, %v3734
        %v3738 = vmul.f32 %v3735, %v3735
        %v3739 = vmul.f32 %v3736, %v3736
        %vm3740 = vcmask 23552
        %v3741 = vsel %vm3740, %v3737, 0.0
        %v3742 = vsel %vm3740, %v3738, 0.0
        %v3743 = vadd.f32 %v3741, %v3742
        %vm3744 = vcmask 20480
        %v3745 = vsel %vm3744, %v3739, 0.0
        %v3746 = vadd.f32 %v3743, %v3745
        %3747 = vadd.xlane.f32.xlu0 %v3746
        %v3748 = vpop.xlane.xlu0 %3747
        %v3749 = vrot.slane %v3748, 4
        %v3750 = vadd.f32 %v3748, %v3749
        %v3751 = vrot.slane %v3750, 2
        %v3752 = vadd.f32 %v3750, %v3751
        %v3753 = vrot.slane %v3752, 1
        %v3754 = vadd.f32 %v3752, %v3753
        %s3755 = vtos %v3754
        %vm3756 = vcmp.eq.s32.totalorder %v373, 0
        %v3757 = vsel %vm3756, %v2195, 0.0
        %vm3758 = vcmp.eq.s32.totalorder %v373, 1
        %v3759 = vstv %s3755
        %v3760 = vsel %vm3758, %v3759, %v3757
        %vm3761 = vcmp.eq.s32.totalorder %v373, 2
        %v3762 = vsel %vm3761, %v2397, %v3760
        %vm3763 = vcmp.eq.s32.totalorder %v373, 3
        %v3764 = vsel %vm3763, %v2663, %v3762
        %vm3765 = vcmp.eq.s32.totalorder %v373, 4
        %v3766 = vsel %vm3765, %v2929, %v3764
        %vm3767 = vcmp.eq.s32.totalorder %v373, 5
        %v3768 = vsel %vm3767, %v3195, %v3766
        %vm3769 = vcmp.eq.s32.totalorder %v373, 6
        %v3770 = vsel %vm3769, %v3461, %v3768
        %vm3771 = vcmp.eq.s32.totalorder %v373, 7
        %v3772 = vsel %vm3771, %v3727, %v3770
        %3773 = vst [vmem:[%s331] sm:$0x1] %v3772
        %s3774 = scalar_lea.vmem %s337, 128
        %v3775 = vld [vmem:[%s3774] sm:$0xff]
        %v3776 = vld [vmem:[%s3774 + $0x8] sm:$0xff]
        %v3777 = vld [vmem:[%s3774 + $0x10] sm:$0xff]
        %v3778 = vld [vmem:[%s3774 + $0x18] sm:$0xff]
        %v3779 = vld [vmem:[%s3774 + $0x20] sm:$0xff]
        %v3780 = vld [vmem:[%s3774 + $0x28] sm:$0xff]
        %v3781 = vld [vmem:[%s3774 + $0x30] sm:$0xff]
        %v3782 = vld [vmem:[%s3774 + $0x38] sm:$0xff]
        %v3783 = vld [vmem:[%s3774 + $0x40] sm:$0xff]
        %v3784 = vld [vmem:[%s3774 + $0x48] sm:$0xff]
        %v3785 = vld [vmem:[%s3774 + $0x50] sm:$0xff]
        %v3786 = vld [vmem:[%s3774 + $0x58] sm:$0xff]
        %v3787 = vld [vmem:[%s3774 + $0x60] sm:$0xff]
        %v3788 = vld [vmem:[%s3774 + $0x68] sm:$0xff]
        %v3789 = vld [vmem:[%s3774 + $0x70] sm:$0xff]
        %v3790 = vld [vmem:[%s3774 + $0x78] sm:$0xff]
        %s3791 = scalar_lea.vmem %s343, 4
        %v3792 = vld [vmem:[%s3791] sm:$0x7]
        %s3793 = scalar_lea.vmem %s350, 128
        %v3794 = vld [vmem:[%s3793] sm:$0xff]
        %v3795 = vld [vmem:[%s3793 + $0x8] sm:$0xff]
        %v3796 = vld [vmem:[%s3793 + $0x10] sm:$0xff]
        %v3797 = vld [vmem:[%s3793 + $0x18] sm:$0xff]
        %v3798 = vld [vmem:[%s3793 + $0x20] sm:$0xff]
        %v3799 = vld [vmem:[%s3793 + $0x28] sm:$0xff]
        %v3800 = vld [vmem:[%s3793 + $0x30] sm:$0xff]
        %v3801 = vld [vmem:[%s3793 + $0x38] sm:$0xff]
        %v3802 = vld [vmem:[%s3793 + $0x40] sm:$0xff]
        %v3803 = vld [vmem:[%s3793 + $0x48] sm:$0xff]
        %v3804 = vld [vmem:[%s3793 + $0x50] sm:$0xff]
        %v3805 = vld [vmem:[%s3793 + $0x58] sm:$0xff]
        %v3806 = vld [vmem:[%s3793 + $0x60] sm:$0xff]
        %v3807 = vld [vmem:[%s3793 + $0x68] sm:$0xff]
        %v3808 = vld [vmem:[%s3793 + $0x70] sm:$0xff]
        %v3809 = vld [vmem:[%s3793 + $0x78] sm:$0xff]
        %s3810 = scalar_lea.vmem %s355, 1
        %v3811 = vld [vmem:[%s3810] sm:$0x1]
        %vm3812 = vcmp.gt.f32.partialorder %v3794, 0.15
        %vm3813 = vcmp.gt.f32.partialorder %v3795, 0.15
        %vm3814 = vcmp.gt.f32.partialorder %v3796, 0.15
        %vm3815 = vcmp.gt.f32.partialorder %v3797, 0.15
        %vm3816 = vcmp.gt.f32.partialorder %v3798, 0.15
        %vm3817 = vcmp.gt.f32.partialorder %v3799, 0.15
        %vm3818 = vcmp.gt.f32.partialorder %v3800, 0.15
        %vm3819 = vcmp.gt.f32.partialorder %v3801, 0.15
        %vm3820 = vcmp.gt.f32.partialorder %v3802, 0.15
        %vm3821 = vcmp.gt.f32.partialorder %v3803, 0.15
        %vm3822 = vcmp.gt.f32.partialorder %v3804, 0.15
        %vm3823 = vcmp.gt.f32.partialorder %v3805, 0.15
        %vm3824 = vcmp.gt.f32.partialorder %v3806, 0.15
        %vm3825 = vcmp.gt.f32.partialorder %v3807, 0.15
        %vm3826 = vcmp.gt.f32.partialorder %v3808, 0.15
        %vm3827 = vcmp.gt.f32.partialorder %v3809, 0.15
        %3829 = vset.pattern.permute.xlu0 0
        %3830 = vperm.xlu0 %3829, %v3775
        %v3831 = vpop.permute.xlu0 %3830
        %3834 = vset.pattern.permute.xlu0 0
        %3835 = vperm.xlu0 %3834, %v3776
        %v3836 = vpop.permute.xlu0 %3835
        %3839 = vset.pattern.permute.xlu0 0
        %3840 = vperm.xlu0 %3839, %v3777
        %v3841 = vpop.permute.xlu0 %3840
        %3844 = vset.pattern.permute.xlu0 0
        %3845 = vperm.xlu0 %3844, %v3778
        %v3846 = vpop.permute.xlu0 %3845
        %3849 = vset.pattern.permute.xlu0 0
        %3850 = vperm.xlu0 %3849, %v3779
        %v3851 = vpop.permute.xlu0 %3850
        %3854 = vset.pattern.permute.xlu0 0
        %3855 = vperm.xlu0 %3854, %v3780
        %v3856 = vpop.permute.xlu0 %3855
        %3859 = vset.pattern.permute.xlu0 0
        %3860 = vperm.xlu0 %3859, %v3781
        %v3861 = vpop.permute.xlu0 %3860
        %3864 = vset.pattern.permute.xlu0 0
        %3865 = vperm.xlu0 %3864, %v3782
        %v3866 = vpop.permute.xlu0 %3865
        %3869 = vset.pattern.permute.xlu0 0
        %3870 = vperm.xlu0 %3869, %v3783
        %v3871 = vpop.permute.xlu0 %3870
        %3874 = vset.pattern.permute.xlu0 0
        %3875 = vperm.xlu0 %3874, %v3784
        %v3876 = vpop.permute.xlu0 %3875
        %3879 = vset.pattern.permute.xlu0 0
        %3880 = vperm.xlu0 %3879, %v3785
        %v3881 = vpop.permute.xlu0 %3880
        %3884 = vset.pattern.permute.xlu0 0
        %3885 = vperm.xlu0 %3884, %v3786
        %v3886 = vpop.permute.xlu0 %3885
        %3889 = vset.pattern.permute.xlu0 0
        %3890 = vperm.xlu0 %3889, %v3787
        %v3891 = vpop.permute.xlu0 %3890
        %3894 = vset.pattern.permute.xlu0 0
        %3895 = vperm.xlu0 %3894, %v3788
        %v3896 = vpop.permute.xlu0 %3895
        %3899 = vset.pattern.permute.xlu0 0
        %3900 = vperm.xlu0 %3899, %v3789
        %v3901 = vpop.permute.xlu0 %3900
        %3904 = vset.pattern.permute.xlu0 0
        %3905 = vperm.xlu0 %3904, %v3790
        %v3906 = vpop.permute.xlu0 %3905
        %v3908 = vlaneseq
        %v3909 = vshrl.u32 %v3908, 7
        %v3910 = vsub.s32 0, %v3909
        %v3911 = vrot.slane %v3792, %v3910
        %v3912 = vsub.f32 %v3831, %v3911
        %v3913 = vsub.f32 %v3836, %v3911
        %v3914 = vsub.f32 %v3841, %v3911
        %v3915 = vsub.f32 %v3846, %v3911
        %v3916 = vsub.f32 %v3851, %v3911
        %v3917 = vsub.f32 %v3856, %v3911
        %v3918 = vsub.f32 %v3861, %v3911
        %v3919 = vsub.f32 %v3866, %v3911
        %v3920 = vsub.f32 %v3871, %v3911
        %v3921 = vsub.f32 %v3876, %v3911
        %v3922 = vsub.f32 %v3881, %v3911
        %v3923 = vsub.f32 %v3886, %v3911
        %v3924 = vsub.f32 %v3891, %v3911
        %v3925 = vsub.f32 %v3896, %v3911
        %v3926 = vsub.f32 %v3901, %v3911
        %v3927 = vsub.f32 %v3906, %v3911
        %3928 = vset.pattern.permute.xlu0 1
        %3929 = vperm.xlu0 %3928, %v3775
        %v3930 = vpop.permute.xlu0 %3929
        %3932 = vset.pattern.permute.xlu0 1
        %3933 = vperm.xlu0 %3932, %v3776
        %v3934 = vpop.permute.xlu0 %3933
        %3936 = vset.pattern.permute.xlu0 1
        %3937 = vperm.xlu0 %3936, %v3777
        %v3938 = vpop.permute.xlu0 %3937
        %3940 = vset.pattern.permute.xlu0 1
        %3941 = vperm.xlu0 %3940, %v3778
        %v3942 = vpop.permute.xlu0 %3941
        %3944 = vset.pattern.permute.xlu0 1
        %3945 = vperm.xlu0 %3944, %v3779
        %v3946 = vpop.permute.xlu0 %3945
        %3948 = vset.pattern.permute.xlu0 1
        %3949 = vperm.xlu0 %3948, %v3780
        %v3950 = vpop.permute.xlu0 %3949
        %3952 = vset.pattern.permute.xlu0 1
        %3953 = vperm.xlu0 %3952, %v3781
        %v3954 = vpop.permute.xlu0 %3953
        %3956 = vset.pattern.permute.xlu0 1
        %3957 = vperm.xlu0 %3956, %v3782
        %v3958 = vpop.permute.xlu0 %3957
        %3960 = vset.pattern.permute.xlu0 1
        %3961 = vperm.xlu0 %3960, %v3783
        %v3962 = vpop.permute.xlu0 %3961
        %3964 = vset.pattern.permute.xlu0 1
        %3965 = vperm.xlu0 %3964, %v3784
        %v3966 = vpop.permute.xlu0 %3965
        %3968 = vset.pattern.permute.xlu0 1
        %3969 = vperm.xlu0 %3968, %v3785
        %v3970 = vpop.permute.xlu0 %3969
        %3972 = vset.pattern.permute.xlu0 1
        %3973 = vperm.xlu0 %3972, %v3786
        %v3974 = vpop.permute.xlu0 %3973
        %3976 = vset.pattern.permute.xlu0 1
        %3977 = vperm.xlu0 %3976, %v3787
        %v3978 = vpop.permute.xlu0 %3977
        %3980 = vset.pattern.permute.xlu0 1
        %3981 = vperm.xlu0 %3980, %v3788
        %v3982 = vpop.permute.xlu0 %3981
        %3984 = vset.pattern.permute.xlu0 1
        %3985 = vperm.xlu0 %3984, %v3789
        %v3986 = vpop.permute.xlu0 %3985
        %3988 = vset.pattern.permute.xlu0 1
        %3989 = vperm.xlu0 %3988, %v3790
        %v3990 = vpop.permute.xlu0 %3989
        %v3992 = vlaneseq
        %v3993 = vshrl.u32 %v3992, 7
        %v3994 = vsub.s32 1, %v3993
        %v3995 = vrot.slane %v3792, %v3994
        %v3996 = vsub.f32 %v3930, %v3995
        %v3997 = vsub.f32 %v3934, %v3995
        %v3998 = vsub.f32 %v3938, %v3995
        %v3999 = vsub.f32 %v3942, %v3995
        %v4000 = vsub.f32 %v3946, %v3995
        %v4001 = vsub.f32 %v3950, %v3995
        %v4002 = vsub.f32 %v3954, %v3995
        %v4003 = vsub.f32 %v3958, %v3995
        %v4004 = vsub.f32 %v3962, %v3995
        %v4005 = vsub.f32 %v3966, %v3995
        %v4006 = vsub.f32 %v3970, %v3995
        %v4007 = vsub.f32 %v3974, %v3995
        %v4008 = vsub.f32 %v3978, %v3995
        %v4009 = vsub.f32 %v3982, %v3995
        %v4010 = vsub.f32 %v3986, %v3995
        %v4011 = vsub.f32 %v3990, %v3995
        %4012 = vset.pattern.permute.xlu0 2
        %4013 = vperm.xlu0 %4012, %v3775
        %v4014 = vpop.permute.xlu0 %4013
        %4016 = vset.pattern.permute.xlu0 2
        %4017 = vperm.xlu0 %4016, %v3776
        %v4018 = vpop.permute.xlu0 %4017
        %4020 = vset.pattern.permute.xlu0 2
        %4021 = vperm.xlu0 %4020, %v3777
        %v4022 = vpop.permute.xlu0 %4021
        %4024 = vset.pattern.permute.xlu0 2
        %4025 = vperm.xlu0 %4024, %v3778
        %v4026 = vpop.permute.xlu0 %4025
        %4028 = vset.pattern.permute.xlu0 2
        %4029 = vperm.xlu0 %4028, %v3779
        %v4030 = vpop.permute.xlu0 %4029
        %4032 = vset.pattern.permute.xlu0 2
        %4033 = vperm.xlu0 %4032, %v3780
        %v4034 = vpop.permute.xlu0 %4033
        %4036 = vset.pattern.permute.xlu0 2
        %4037 = vperm.xlu0 %4036, %v3781
        %v4038 = vpop.permute.xlu0 %4037
        %4040 = vset.pattern.permute.xlu0 2
        %4041 = vperm.xlu0 %4040, %v3782
        %v4042 = vpop.permute.xlu0 %4041
        %4044 = vset.pattern.permute.xlu0 2
        %4045 = vperm.xlu0 %4044, %v3783
        %v4046 = vpop.permute.xlu0 %4045
        %4048 = vset.pattern.permute.xlu0 2
        %4049 = vperm.xlu0 %4048, %v3784
        %v4050 = vpop.permute.xlu0 %4049
        %4052 = vset.pattern.permute.xlu0 2
        %4053 = vperm.xlu0 %4052, %v3785
        %v4054 = vpop.permute.xlu0 %4053
        %4056 = vset.pattern.permute.xlu0 2
        %4057 = vperm.xlu0 %4056, %v3786
        %v4058 = vpop.permute.xlu0 %4057
        %4060 = vset.pattern.permute.xlu0 2
        %4061 = vperm.xlu0 %4060, %v3787
        %v4062 = vpop.permute.xlu0 %4061
        %4064 = vset.pattern.permute.xlu0 2
        %4065 = vperm.xlu0 %4064, %v3788
        %v4066 = vpop.permute.xlu0 %4065
        %4068 = vset.pattern.permute.xlu0 2
        %4069 = vperm.xlu0 %4068, %v3789
        %v4070 = vpop.permute.xlu0 %4069
        %4072 = vset.pattern.permute.xlu0 2
        %4073 = vperm.xlu0 %4072, %v3790
        %v4074 = vpop.permute.xlu0 %4073
        %v4076 = vlaneseq
        %v4077 = vshrl.u32 %v4076, 7
        %v4078 = vsub.s32 2, %v4077
        %v4079 = vrot.slane %v3792, %v4078
        %v4080 = vsub.f32 %v4014, %v4079
        %v4081 = vsub.f32 %v4018, %v4079
        %v4082 = vsub.f32 %v4022, %v4079
        %v4083 = vsub.f32 %v4026, %v4079
        %v4084 = vsub.f32 %v4030, %v4079
        %v4085 = vsub.f32 %v4034, %v4079
        %v4086 = vsub.f32 %v4038, %v4079
        %v4087 = vsub.f32 %v4042, %v4079
        %v4088 = vsub.f32 %v4046, %v4079
        %v4089 = vsub.f32 %v4050, %v4079
        %v4090 = vsub.f32 %v4054, %v4079
        %v4091 = vsub.f32 %v4058, %v4079
        %v4092 = vsub.f32 %v4062, %v4079
        %v4093 = vsub.f32 %v4066, %v4079
        %v4094 = vsub.f32 %v4070, %v4079
        %v4095 = vsub.f32 %v4074, %v4079
        %v4096 = vmul.f32 %v3912, %v3912
        %v4097 = vmul.f32 %v3913, %v3913
        %v4098 = vmul.f32 %v3914, %v3914
        %v4099 = vmul.f32 %v3915, %v3915
        %v4100 = vmul.f32 %v3916, %v3916
        %v4101 = vmul.f32 %v3917, %v3917
        %v4102 = vmul.f32 %v3918, %v3918
        %v4103 = vmul.f32 %v3919, %v3919
        %v4104 = vmul.f32 %v3920, %v3920
        %v4105 = vmul.f32 %v3921, %v3921
        %v4106 = vmul.f32 %v3922, %v3922
        %v4107 = vmul.f32 %v3923, %v3923
        %v4108 = vmul.f32 %v3924, %v3924
        %v4109 = vmul.f32 %v3925, %v3925
        %v4110 = vmul.f32 %v3926, %v3926
        %v4111 = vmul.f32 %v3927, %v3927
        %v4112 = vmul.f32 %v3996, %v3996
        %v4113 = vmul.f32 %v3997, %v3997
        %v4114 = vmul.f32 %v3998, %v3998
        %v4115 = vmul.f32 %v3999, %v3999
        %v4116 = vmul.f32 %v4000, %v4000
        %v4117 = vmul.f32 %v4001, %v4001
        %v4118 = vmul.f32 %v4002, %v4002
        %v4119 = vmul.f32 %v4003, %v4003
        %v4120 = vmul.f32 %v4004, %v4004
        %v4121 = vmul.f32 %v4005, %v4005
        %v4122 = vmul.f32 %v4006, %v4006
        %v4123 = vmul.f32 %v4007, %v4007
        %v4124 = vmul.f32 %v4008, %v4008
        %v4125 = vmul.f32 %v4009, %v4009
        %v4126 = vmul.f32 %v4010, %v4010
        %v4127 = vmul.f32 %v4011, %v4011
        %v4128 = vadd.f32 %v4096, %v4112
        %v4129 = vadd.f32 %v4097, %v4113
        %v4130 = vadd.f32 %v4098, %v4114
        %v4131 = vadd.f32 %v4099, %v4115
        %v4132 = vadd.f32 %v4100, %v4116
        %v4133 = vadd.f32 %v4101, %v4117
        %v4134 = vadd.f32 %v4102, %v4118
        %v4135 = vadd.f32 %v4103, %v4119
        %v4136 = vadd.f32 %v4104, %v4120
        %v4137 = vadd.f32 %v4105, %v4121
        %v4138 = vadd.f32 %v4106, %v4122
        %v4139 = vadd.f32 %v4107, %v4123
        %v4140 = vadd.f32 %v4108, %v4124
        %v4141 = vadd.f32 %v4109, %v4125
        %v4142 = vadd.f32 %v4110, %v4126
        %v4143 = vadd.f32 %v4111, %v4127
        %v4144 = vmul.f32 %v4080, %v4080
        %v4145 = vmul.f32 %v4081, %v4081
        %v4146 = vmul.f32 %v4082, %v4082
        %v4147 = vmul.f32 %v4083, %v4083
        %v4148 = vmul.f32 %v4084, %v4084
        %v4149 = vmul.f32 %v4085, %v4085
        %v4150 = vmul.f32 %v4086, %v4086
        %v4151 = vmul.f32 %v4087, %v4087
        %v4152 = vmul.f32 %v4088, %v4088
        %v4153 = vmul.f32 %v4089, %v4089
        %v4154 = vmul.f32 %v4090, %v4090
        %v4155 = vmul.f32 %v4091, %v4091
        %v4156 = vmul.f32 %v4092, %v4092
        %v4157 = vmul.f32 %v4093, %v4093
        %v4158 = vmul.f32 %v4094, %v4094
        %v4159 = vmul.f32 %v4095, %v4095
        %v4160 = vadd.f32 %v4128, %v4144
        %v4161 = vadd.f32 %v4129, %v4145
        %v4162 = vadd.f32 %v4130, %v4146
        %v4163 = vadd.f32 %v4131, %v4147
        %v4164 = vadd.f32 %v4132, %v4148
        %v4165 = vadd.f32 %v4133, %v4149
        %v4166 = vadd.f32 %v4134, %v4150
        %v4167 = vadd.f32 %v4135, %v4151
        %v4168 = vadd.f32 %v4136, %v4152
        %v4169 = vadd.f32 %v4137, %v4153
        %v4170 = vadd.f32 %v4138, %v4154
        %v4171 = vadd.f32 %v4139, %v4155
        %v4172 = vadd.f32 %v4140, %v4156
        %v4173 = vadd.f32 %v4141, %v4157
        %v4174 = vadd.f32 %v4142, %v4158
        %v4175 = vadd.f32 %v4143, %v4159
        %4176 = vmin.xlane.f32.xlu0 %v4160
        %v4177 = vpop.xlane.xlu0 %4176
        %4178 = vmin.xlane.f32.xlu0 %v4161
        %v4179 = vpop.xlane.xlu0 %4178
        %4180 = vmin.xlane.f32.xlu0 %v4162
        %v4181 = vpop.xlane.xlu0 %4180
        %4182 = vmin.xlane.f32.xlu0 %v4163
        %v4183 = vpop.xlane.xlu0 %4182
        %4184 = vmin.xlane.f32.xlu0 %v4164
        %v4185 = vpop.xlane.xlu0 %4184
        %4186 = vmin.xlane.f32.xlu0 %v4165
        %v4187 = vpop.xlane.xlu0 %4186
        %4188 = vmin.xlane.f32.xlu0 %v4166
        %v4189 = vpop.xlane.xlu0 %4188
        %4190 = vmin.xlane.f32.xlu0 %v4167
        %v4191 = vpop.xlane.xlu0 %4190
        %4192 = vmin.xlane.f32.xlu0 %v4168
        %v4193 = vpop.xlane.xlu0 %4192
        %4194 = vmin.xlane.f32.xlu0 %v4169
        %v4195 = vpop.xlane.xlu0 %4194
        %4196 = vmin.xlane.f32.xlu0 %v4170
        %v4197 = vpop.xlane.xlu0 %4196
        %4198 = vmin.xlane.f32.xlu0 %v4171
        %v4199 = vpop.xlane.xlu0 %4198
        %4200 = vmin.xlane.f32.xlu0 %v4172
        %v4201 = vpop.xlane.xlu0 %4200
        %4202 = vmin.xlane.f32.xlu0 %v4173
        %v4203 = vpop.xlane.xlu0 %4202
        %4204 = vmin.xlane.f32.xlu0 %v4174
        %v4205 = vpop.xlane.xlu0 %4204
        %4206 = vmin.xlane.f32.xlu0 %v4175
        %v4207 = vpop.xlane.xlu0 %4206
        %v4208 = vmin.f32 %v4177, 3e+38
        %v4209 = vmin.f32 %v4179, 3e+38
        %v4210 = vmin.f32 %v4181, 3e+38
        %v4211 = vmin.f32 %v4183, 3e+38
        %v4212 = vmin.f32 %v4185, 3e+38
        %v4213 = vmin.f32 %v4187, 3e+38
        %v4214 = vmin.f32 %v4189, 3e+38
        %v4215 = vmin.f32 %v4191, 3e+38
        %v4216 = vmin.f32 %v4193, 3e+38
        %v4217 = vmin.f32 %v4195, 3e+38
        %v4218 = vmin.f32 %v4197, 3e+38
        %v4219 = vmin.f32 %v4199, 3e+38
        %v4220 = vmin.f32 %v4201, 3e+38
        %v4221 = vmin.f32 %v4203, 3e+38
        %v4222 = vmin.f32 %v4205, 3e+38
        %v4223 = vmin.f32 %v4207, 3e+38
        %v4224 = vmin.f32 %v4160, %v4164
        %v4225 = vmin.f32 %v4161, %v4165
        %v4226 = vmin.f32 %v4162, %v4166
        %v4227 = vmin.f32 %v4163, %v4167
        %v4228 = vmin.f32 %v4224, %v4168
        %v4229 = vmin.f32 %v4225, %v4169
        %v4230 = vmin.f32 %v4226, %v4170
        %v4231 = vmin.f32 %v4227, %v4171
        %v4232 = vmin.f32 %v4228, %v4172
        %v4233 = vmin.f32 %v4229, %v4173
        %v4234 = vmin.f32 %v4230, %v4174
        %v4235 = vmin.f32 %v4231, %v4175
        %v4236 = vmin.f32 %v4232, %v4233
        %v4237 = vmin.f32 %v4234, %v4235
        %v4238 = vmin.f32 %v4236, %v4237
        %v4239 = vrot.slane %v4238, 4
        %v4240 = vmin.f32 %v4238, %v4239
        %v4241 = vrot.slane %v4240, 2
        %v4242 = vmin.f32 %v4240, %v4241
        %v4243 = vrot.slane %v4242, 1
        %v4244 = vmin.f32 %v4242, %v4243
        %v4245 = vrsqrt.pop %v4244
        %v4246 = vmul.f32 %v4244, %v4245
        %vm4247 = vcmp.eq.f32.partialorder %v4244, inf
        %v4248 = vsel %vm4247, %v4244, %v4246
        %vm4249 = vcmp.eq.f32.partialorder %v4244, 0.0
        %v4250 = vand.u32 %v4244, 2147483648
        %v4251 = vsel %vm4249, %v4250, %v4248
        %v4252 = vsel %vm848, %v4251, 0.0
        %4253 = vadd.xlane.f32.xlu0 %v4252
        %v4254 = vpop.xlane.xlu0 %4253
        %v4255 = vrot.slane %v4254, 4
        %v4256 = vadd.f32 %v4254, %v4255
        %v4257 = vrot.slane %v4256, 2
        %v4258 = vadd.f32 %v4256, %v4257
        %v4259 = vrot.slane %v4258, 1
        %v4260 = vadd.f32 %v4258, %v4259
        %s4261 = vtos %v4260
        %v4262 = vstv %s4261
        %v4263 = vadd.f32 %v4262, 0.0
        %vm4264 = vcmp.eq.s32.totalorder %v3811, 0
        %v4265 = vsel %vm4264, 1, 0
        %v4266 = vlaneseq
        %v4267 = vshrl.u32 %v4266, 7
        %v4268 = vsub.s32 0, %v4267
        %v4269 = vrot.slane %v4265, %v4268
        %vm4270 = vcmp.eq.s32.totalorder %v4269, 1
        %v4271 = vsel %vm4270, %v4160, 100.0
        %v4272 = vsel %vm4270, %v4161, 100.0
        %v4273 = vsel %vm4270, %v4162, 100.0
        %v4274 = vsel %vm4270, %v4163, 100.0
        %v4275 = vsel %vm4270, %v4164, 100.0
        %v4276 = vsel %vm4270, %v4165, 100.0
        %v4277 = vsel %vm4270, %v4166, 100.0
        %v4278 = vsel %vm4270, %v4167, 100.0
        %v4279 = vsel %vm4270, %v4168, 100.0
        %v4280 = vsel %vm4270, %v4169, 100.0
        %v4281 = vsel %vm4270, %v4170, 100.0
        %v4282 = vsel %vm4270, %v4171, 100.0
        %v4283 = vsel %vm4270, %v4172, 100.0
        %v4284 = vsel %vm4270, %v4173, 100.0
        %v4285 = vsel %vm4270, %v4174, 100.0
        %v4286 = vsel %vm4270, %v4175, 100.0
        %4287 = vmin.xlane.f32.xlu0 %v4271
        %v4288 = vpop.xlane.xlu0 %4287
        %4289 = vmin.xlane.f32.xlu0 %v4272
        %v4290 = vpop.xlane.xlu0 %4289
        %4291 = vmin.xlane.f32.xlu0 %v4273
        %v4292 = vpop.xlane.xlu0 %4291
        %4293 = vmin.xlane.f32.xlu0 %v4274
        %v4294 = vpop.xlane.xlu0 %4293
        %4295 = vmin.xlane.f32.xlu0 %v4275
        %v4296 = vpop.xlane.xlu0 %4295
        %4297 = vmin.xlane.f32.xlu0 %v4276
        %v4298 = vpop.xlane.xlu0 %4297
        %4299 = vmin.xlane.f32.xlu0 %v4277
        %v4300 = vpop.xlane.xlu0 %4299
        %4301 = vmin.xlane.f32.xlu0 %v4278
        %v4302 = vpop.xlane.xlu0 %4301
        %4303 = vmin.xlane.f32.xlu0 %v4279
        %v4304 = vpop.xlane.xlu0 %4303
        %4305 = vmin.xlane.f32.xlu0 %v4280
        %v4306 = vpop.xlane.xlu0 %4305
        %4307 = vmin.xlane.f32.xlu0 %v4281
        %v4308 = vpop.xlane.xlu0 %4307
        %4309 = vmin.xlane.f32.xlu0 %v4282
        %v4310 = vpop.xlane.xlu0 %4309
        %4311 = vmin.xlane.f32.xlu0 %v4283
        %v4312 = vpop.xlane.xlu0 %4311
        %4313 = vmin.xlane.f32.xlu0 %v4284
        %v4314 = vpop.xlane.xlu0 %4313
        %4315 = vmin.xlane.f32.xlu0 %v4285
        %v4316 = vpop.xlane.xlu0 %4315
        %4317 = vmin.xlane.f32.xlu0 %v4286
        %v4318 = vpop.xlane.xlu0 %4317
        %v4319 = vmin.f32 %v4288, 3e+38
        %v4320 = vmin.f32 %v4290, 3e+38
        %v4321 = vmin.f32 %v4292, 3e+38
        %v4322 = vmin.f32 %v4294, 3e+38
        %v4323 = vmin.f32 %v4296, 3e+38
        %v4324 = vmin.f32 %v4298, 3e+38
        %v4325 = vmin.f32 %v4300, 3e+38
        %v4326 = vmin.f32 %v4302, 3e+38
        %v4327 = vmin.f32 %v4304, 3e+38
        %v4328 = vmin.f32 %v4306, 3e+38
        %v4329 = vmin.f32 %v4308, 3e+38
        %v4330 = vmin.f32 %v4310, 3e+38
        %v4331 = vmin.f32 %v4312, 3e+38
        %v4332 = vmin.f32 %v4314, 3e+38
        %v4333 = vmin.f32 %v4316, 3e+38
        %v4334 = vmin.f32 %v4318, 3e+38
        %v4335 = vsel %vm3812, 1, 0
        %v4336 = vsel %vm3813, 1, 0
        %v4337 = vsel %vm3814, 1, 0
        %v4338 = vsel %vm3815, 1, 0
        %v4339 = vsel %vm3816, 1, 0
        %v4340 = vsel %vm3817, 1, 0
        %v4341 = vsel %vm3818, 1, 0
        %v4342 = vsel %vm3819, 1, 0
        %v4343 = vsel %vm3820, 1, 0
        %v4344 = vsel %vm3821, 1, 0
        %v4345 = vsel %vm3822, 1, 0
        %v4346 = vsel %vm3823, 1, 0
        %v4347 = vsel %vm3824, 1, 0
        %v4348 = vsel %vm3825, 1, 0
        %v4349 = vsel %vm3826, 1, 0
        %v4350 = vsel %vm3827, 1, 0
        %4351 = vset.pattern.permute.xlu0 0
        %4352 = vperm.xlu0 %4351, %v4335
        %v4353 = vpop.permute.xlu0 %4352
        %4354 = vset.pattern.permute.xlu0 0
        %4355 = vperm.xlu0 %4354, %v4336
        %v4356 = vpop.permute.xlu0 %4355
        %4357 = vset.pattern.permute.xlu0 0
        %4358 = vperm.xlu0 %4357, %v4337
        %v4359 = vpop.permute.xlu0 %4358
        %4360 = vset.pattern.permute.xlu0 0
        %4361 = vperm.xlu0 %4360, %v4338
        %v4362 = vpop.permute.xlu0 %4361
        %4363 = vset.pattern.permute.xlu0 0
        %4364 = vperm.xlu0 %4363, %v4339
        %v4365 = vpop.permute.xlu0 %4364
        %4366 = vset.pattern.permute.xlu0 0
        %4367 = vperm.xlu0 %4366, %v4340
        %v4368 = vpop.permute.xlu0 %4367
        %4369 = vset.pattern.permute.xlu0 0
        %4370 = vperm.xlu0 %4369, %v4341
        %v4371 = vpop.permute.xlu0 %4370
        %4372 = vset.pattern.permute.xlu0 0
        %4373 = vperm.xlu0 %4372, %v4342
        %v4374 = vpop.permute.xlu0 %4373
        %4375 = vset.pattern.permute.xlu0 0
        %4376 = vperm.xlu0 %4375, %v4343
        %v4377 = vpop.permute.xlu0 %4376
        %4378 = vset.pattern.permute.xlu0 0
        %4379 = vperm.xlu0 %4378, %v4344
        %v4380 = vpop.permute.xlu0 %4379
        %4381 = vset.pattern.permute.xlu0 0
        %4382 = vperm.xlu0 %4381, %v4345
        %v4383 = vpop.permute.xlu0 %4382
        %4384 = vset.pattern.permute.xlu0 0
        %4385 = vperm.xlu0 %4384, %v4346
        %v4386 = vpop.permute.xlu0 %4385
        %4387 = vset.pattern.permute.xlu0 0
        %4388 = vperm.xlu0 %4387, %v4347
        %v4389 = vpop.permute.xlu0 %4388
        %4390 = vset.pattern.permute.xlu0 0
        %4391 = vperm.xlu0 %4390, %v4348
        %v4392 = vpop.permute.xlu0 %4391
        %4393 = vset.pattern.permute.xlu0 0
        %4394 = vperm.xlu0 %4393, %v4349
        %v4395 = vpop.permute.xlu0 %4394
        %4396 = vset.pattern.permute.xlu0 0
        %4397 = vperm.xlu0 %4396, %v4350
        %v4398 = vpop.permute.xlu0 %4397
        %vm4399 = vcmp.eq.s32.totalorder %v4353, 1
        %vm4400 = vcmp.eq.s32.totalorder %v4356, 1
        %vm4401 = vcmp.eq.s32.totalorder %v4359, 1
        %vm4402 = vcmp.eq.s32.totalorder %v4362, 1
        %vm4403 = vcmp.eq.s32.totalorder %v4365, 1
        %vm4404 = vcmp.eq.s32.totalorder %v4368, 1
        %vm4405 = vcmp.eq.s32.totalorder %v4371, 1
        %vm4406 = vcmp.eq.s32.totalorder %v4374, 1
        %vm4407 = vcmp.eq.s32.totalorder %v4377, 1
        %vm4408 = vcmp.eq.s32.totalorder %v4380, 1
        %vm4409 = vcmp.eq.s32.totalorder %v4383, 1
        %vm4410 = vcmp.eq.s32.totalorder %v4386, 1
        %vm4411 = vcmp.eq.s32.totalorder %v4389, 1
        %vm4412 = vcmp.eq.s32.totalorder %v4392, 1
        %vm4413 = vcmp.eq.s32.totalorder %v4395, 1
        %vm4414 = vcmp.eq.s32.totalorder %v4398, 1
        %v4415 = vsel %vm4399, %v4160, 100.0
        %v4416 = vsel %vm4400, %v4161, 100.0
        %v4417 = vsel %vm4401, %v4162, 100.0
        %v4418 = vsel %vm4402, %v4163, 100.0
        %v4419 = vsel %vm4403, %v4164, 100.0
        %v4420 = vsel %vm4404, %v4165, 100.0
        %v4421 = vsel %vm4405, %v4166, 100.0
        %v4422 = vsel %vm4406, %v4167, 100.0
        %v4423 = vsel %vm4407, %v4168, 100.0
        %v4424 = vsel %vm4408, %v4169, 100.0
        %v4425 = vsel %vm4409, %v4170, 100.0
        %v4426 = vsel %vm4410, %v4171, 100.0
        %v4427 = vsel %vm4411, %v4172, 100.0
        %v4428 = vsel %vm4412, %v4173, 100.0
        %v4429 = vsel %vm4413, %v4174, 100.0
        %v4430 = vsel %vm4414, %v4175, 100.0
        %v4431 = vmin.f32 %v4415, %v4419
        %v4432 = vmin.f32 %v4416, %v4420
        %v4433 = vmin.f32 %v4417, %v4421
        %v4434 = vmin.f32 %v4418, %v4422
        %v4435 = vmin.f32 %v4431, %v4423
        %v4436 = vmin.f32 %v4432, %v4424
        %v4437 = vmin.f32 %v4433, %v4425
        %v4438 = vmin.f32 %v4434, %v4426
        %v4439 = vmin.f32 %v4435, %v4427
        %v4440 = vmin.f32 %v4436, %v4428
        %v4441 = vmin.f32 %v4437, %v4429
        %v4442 = vmin.f32 %v4438, %v4430
        %v4443 = vmin.f32 %v4439, %v4440
        %v4444 = vmin.f32 %v4441, %v4442
        %v4445 = vmin.f32 %v4443, %v4444
        %v4446 = vrot.slane %v4445, 4
        %v4447 = vmin.f32 %v4445, %v4446
        %v4448 = vrot.slane %v4447, 2
        %v4449 = vmin.f32 %v4447, %v4448
        %v4450 = vrot.slane %v4449, 1
        %v4451 = vmin.f32 %v4449, %v4450
        %vm4452 = vcmp.ne.f32.partialorder %v4451, 100.0
        %vm4453 = vmand %vm4264, %vm4452
        %v4454 = vrsqrt.pop %v4451
        %v4455 = vmul.f32 %v4451, %v4454
        %vm4456 = vcmp.eq.f32.partialorder %v4451, inf
        %v4457 = vsel %vm4456, %v4451, %v4455
        %vm4458 = vcmp.eq.f32.partialorder %v4451, 0.0
        %v4459 = vand.u32 %v4451, 2147483648
        %v4460 = vsel %vm4458, %v4459, %v4457
        %v4461 = vsel %vm4453, %v4460, 0.0
        %v4462 = vsel %vm848, %v4461, 0.0
        %4463 = vadd.xlane.f32.xlu0 %v4462
        %v4464 = vpop.xlane.xlu0 %4463
        %v4465 = vrot.slane %v4464, 4
        %v4466 = vadd.f32 %v4464, %v4465
        %v4467 = vrot.slane %v4466, 2
        %v4468 = vadd.f32 %v4466, %v4467
        %v4469 = vrot.slane %v4468, 1
        %v4470 = vadd.f32 %v4468, %v4469
        %s4471 = vtos %v4470
        %v4472 = vstv %s4471
        %v4473 = vadd.f32 %v4472, 0.0
        %vm4474 = vcmp.eq.s32.totalorder %v3811, 1
        %v4475 = vsel %vm4474, 1, 0
        %v4476 = vlaneseq
        %v4477 = vshrl.u32 %v4476, 7
        %v4478 = vsub.s32 0, %v4477
        %v4479 = vrot.slane %v4475, %v4478
        %vm4480 = vcmp.eq.s32.totalorder %v4479, 1
        %v4481 = vsel %vm4480, %v4160, 100.0
        %v4482 = vsel %vm4480, %v4161, 100.0
        %v4483 = vsel %vm4480, %v4162, 100.0
        %v4484 = vsel %vm4480, %v4163, 100.0
        %v4485 = vsel %vm4480, %v4164, 100.0
        %v4486 = vsel %vm4480, %v4165, 100.0
        %v4487 = vsel %vm4480, %v4166, 100.0
        %v4488 = vsel %vm4480, %v4167, 100.0
        %v4489 = vsel %vm4480, %v4168, 100.0
        %v4490 = vsel %vm4480, %v4169, 100.0
        %v4491 = vsel %vm4480, %v4170, 100.0
        %v4492 = vsel %vm4480, %v4171, 100.0
        %v4493 = vsel %vm4480, %v4172, 100.0
        %v4494 = vsel %vm4480, %v4173, 100.0
        %v4495 = vsel %vm4480, %v4174, 100.0
        %v4496 = vsel %vm4480, %v4175, 100.0
        %4497 = vmin.xlane.f32.xlu0 %v4481
        %v4498 = vpop.xlane.xlu0 %4497
        %4499 = vmin.xlane.f32.xlu0 %v4482
        %v4500 = vpop.xlane.xlu0 %4499
        %4501 = vmin.xlane.f32.xlu0 %v4483
        %v4502 = vpop.xlane.xlu0 %4501
        %4503 = vmin.xlane.f32.xlu0 %v4484
        %v4504 = vpop.xlane.xlu0 %4503
        %4505 = vmin.xlane.f32.xlu0 %v4485
        %v4506 = vpop.xlane.xlu0 %4505
        %4507 = vmin.xlane.f32.xlu0 %v4486
        %v4508 = vpop.xlane.xlu0 %4507
        %4509 = vmin.xlane.f32.xlu0 %v4487
        %v4510 = vpop.xlane.xlu0 %4509
        %4511 = vmin.xlane.f32.xlu0 %v4488
        %v4512 = vpop.xlane.xlu0 %4511
        %4513 = vmin.xlane.f32.xlu0 %v4489
        %v4514 = vpop.xlane.xlu0 %4513
        %4515 = vmin.xlane.f32.xlu0 %v4490
        %v4516 = vpop.xlane.xlu0 %4515
        %4517 = vmin.xlane.f32.xlu0 %v4491
        %v4518 = vpop.xlane.xlu0 %4517
        %4519 = vmin.xlane.f32.xlu0 %v4492
        %v4520 = vpop.xlane.xlu0 %4519
        %4521 = vmin.xlane.f32.xlu0 %v4493
        %v4522 = vpop.xlane.xlu0 %4521
        %4523 = vmin.xlane.f32.xlu0 %v4494
        %v4524 = vpop.xlane.xlu0 %4523
        %4525 = vmin.xlane.f32.xlu0 %v4495
        %v4526 = vpop.xlane.xlu0 %4525
        %4527 = vmin.xlane.f32.xlu0 %v4496
        %v4528 = vpop.xlane.xlu0 %4527
        %v4529 = vmin.f32 %v4498, 3e+38
        %v4530 = vmin.f32 %v4500, 3e+38
        %v4531 = vmin.f32 %v4502, 3e+38
        %v4532 = vmin.f32 %v4504, 3e+38
        %v4533 = vmin.f32 %v4506, 3e+38
        %v4534 = vmin.f32 %v4508, 3e+38
        %v4535 = vmin.f32 %v4510, 3e+38
        %v4536 = vmin.f32 %v4512, 3e+38
        %v4537 = vmin.f32 %v4514, 3e+38
        %v4538 = vmin.f32 %v4516, 3e+38
        %v4539 = vmin.f32 %v4518, 3e+38
        %v4540 = vmin.f32 %v4520, 3e+38
        %v4541 = vmin.f32 %v4522, 3e+38
        %v4542 = vmin.f32 %v4524, 3e+38
        %v4543 = vmin.f32 %v4526, 3e+38
        %v4544 = vmin.f32 %v4528, 3e+38
        %4545 = vset.pattern.permute.xlu0 1
        %4546 = vperm.xlu0 %4545, %v4335
        %v4547 = vpop.permute.xlu0 %4546
        %4548 = vset.pattern.permute.xlu0 1
        %4549 = vperm.xlu0 %4548, %v4336
        %v4550 = vpop.permute.xlu0 %4549
        %4551 = vset.pattern.permute.xlu0 1
        %4552 = vperm.xlu0 %4551, %v4337
        %v4553 = vpop.permute.xlu0 %4552
        %4554 = vset.pattern.permute.xlu0 1
        %4555 = vperm.xlu0 %4554, %v4338
        %v4556 = vpop.permute.xlu0 %4555
        %4557 = vset.pattern.permute.xlu0 1
        %4558 = vperm.xlu0 %4557, %v4339
        %v4559 = vpop.permute.xlu0 %4558
        %4560 = vset.pattern.permute.xlu0 1
        %4561 = vperm.xlu0 %4560, %v4340
        %v4562 = vpop.permute.xlu0 %4561
        %4563 = vset.pattern.permute.xlu0 1
        %4564 = vperm.xlu0 %4563, %v4341
        %v4565 = vpop.permute.xlu0 %4564
        %4566 = vset.pattern.permute.xlu0 1
        %4567 = vperm.xlu0 %4566, %v4342
        %v4568 = vpop.permute.xlu0 %4567
        %4569 = vset.pattern.permute.xlu0 1
        %4570 = vperm.xlu0 %4569, %v4343
        %v4571 = vpop.permute.xlu0 %4570
        %4572 = vset.pattern.permute.xlu0 1
        %4573 = vperm.xlu0 %4572, %v4344
        %v4574 = vpop.permute.xlu0 %4573
        %4575 = vset.pattern.permute.xlu0 1
        %4576 = vperm.xlu0 %4575, %v4345
        %v4577 = vpop.permute.xlu0 %4576
        %4578 = vset.pattern.permute.xlu0 1
        %4579 = vperm.xlu0 %4578, %v4346
        %v4580 = vpop.permute.xlu0 %4579
        %4581 = vset.pattern.permute.xlu0 1
        %4582 = vperm.xlu0 %4581, %v4347
        %v4583 = vpop.permute.xlu0 %4582
        %4584 = vset.pattern.permute.xlu0 1
        %4585 = vperm.xlu0 %4584, %v4348
        %v4586 = vpop.permute.xlu0 %4585
        %4587 = vset.pattern.permute.xlu0 1
        %4588 = vperm.xlu0 %4587, %v4349
        %v4589 = vpop.permute.xlu0 %4588
        %4590 = vset.pattern.permute.xlu0 1
        %4591 = vperm.xlu0 %4590, %v4350
        %v4592 = vpop.permute.xlu0 %4591
        %vm4593 = vcmp.eq.s32.totalorder %v4547, 1
        %vm4594 = vcmp.eq.s32.totalorder %v4550, 1
        %vm4595 = vcmp.eq.s32.totalorder %v4553, 1
        %vm4596 = vcmp.eq.s32.totalorder %v4556, 1
        %vm4597 = vcmp.eq.s32.totalorder %v4559, 1
        %vm4598 = vcmp.eq.s32.totalorder %v4562, 1
        %vm4599 = vcmp.eq.s32.totalorder %v4565, 1
        %vm4600 = vcmp.eq.s32.totalorder %v4568, 1
        %vm4601 = vcmp.eq.s32.totalorder %v4571, 1
        %vm4602 = vcmp.eq.s32.totalorder %v4574, 1
        %vm4603 = vcmp.eq.s32.totalorder %v4577, 1
        %vm4604 = vcmp.eq.s32.totalorder %v4580, 1
        %vm4605 = vcmp.eq.s32.totalorder %v4583, 1
        %vm4606 = vcmp.eq.s32.totalorder %v4586, 1
        %vm4607 = vcmp.eq.s32.totalorder %v4589, 1
        %vm4608 = vcmp.eq.s32.totalorder %v4592, 1
        %v4609 = vsel %vm4593, %v4160, 100.0
        %v4610 = vsel %vm4594, %v4161, 100.0
        %v4611 = vsel %vm4595, %v4162, 100.0
        %v4612 = vsel %vm4596, %v4163, 100.0
        %v4613 = vsel %vm4597, %v4164, 100.0
        %v4614 = vsel %vm4598, %v4165, 100.0
        %v4615 = vsel %vm4599, %v4166, 100.0
        %v4616 = vsel %vm4600, %v4167, 100.0
        %v4617 = vsel %vm4601, %v4168, 100.0
        %v4618 = vsel %vm4602, %v4169, 100.0
        %v4619 = vsel %vm4603, %v4170, 100.0
        %v4620 = vsel %vm4604, %v4171, 100.0
        %v4621 = vsel %vm4605, %v4172, 100.0
        %v4622 = vsel %vm4606, %v4173, 100.0
        %v4623 = vsel %vm4607, %v4174, 100.0
        %v4624 = vsel %vm4608, %v4175, 100.0
        %v4625 = vmin.f32 %v4609, %v4613
        %v4626 = vmin.f32 %v4610, %v4614
        %v4627 = vmin.f32 %v4611, %v4615
        %v4628 = vmin.f32 %v4612, %v4616
        %v4629 = vmin.f32 %v4625, %v4617
        %v4630 = vmin.f32 %v4626, %v4618
        %v4631 = vmin.f32 %v4627, %v4619
        %v4632 = vmin.f32 %v4628, %v4620
        %v4633 = vmin.f32 %v4629, %v4621
        %v4634 = vmin.f32 %v4630, %v4622
        %v4635 = vmin.f32 %v4631, %v4623
        %v4636 = vmin.f32 %v4632, %v4624
        %v4637 = vmin.f32 %v4633, %v4634
        %v4638 = vmin.f32 %v4635, %v4636
        %v4639 = vmin.f32 %v4637, %v4638
        %v4640 = vrot.slane %v4639, 4
        %v4641 = vmin.f32 %v4639, %v4640
        %v4642 = vrot.slane %v4641, 2
        %v4643 = vmin.f32 %v4641, %v4642
        %v4644 = vrot.slane %v4643, 1
        %v4645 = vmin.f32 %v4643, %v4644
        %vm4646 = vcmp.ne.f32.partialorder %v4645, 100.0
        %vm4647 = vmand %vm4474, %vm4646
        %v4648 = vrsqrt.pop %v4645
        %v4649 = vmul.f32 %v4645, %v4648
        %vm4650 = vcmp.eq.f32.partialorder %v4645, inf
        %v4651 = vsel %vm4650, %v4645, %v4649
        %vm4652 = vcmp.eq.f32.partialorder %v4645, 0.0
        %v4653 = vand.u32 %v4645, 2147483648
        %v4654 = vsel %vm4652, %v4653, %v4651
        %v4655 = vsel %vm4647, %v4654, 0.0
        %v4656 = vsel %vm848, %v4655, 0.0
        %4657 = vadd.xlane.f32.xlu0 %v4656
        %v4658 = vpop.xlane.xlu0 %4657
        %v4659 = vrot.slane %v4658, 4
        %v4660 = vadd.f32 %v4658, %v4659
        %v4661 = vrot.slane %v4660, 2
        %v4662 = vadd.f32 %v4660, %v4661
        %v4663 = vrot.slane %v4662, 1
        %v4664 = vadd.f32 %v4662, %v4663
        %s4665 = vtos %v4664
        %v4666 = vstv %s4665
        %v4667 = vadd.f32 %v4666, 0.0
        %vm4668 = vcmp.eq.s32.totalorder %v3811, 2
        %v4669 = vsel %vm4668, 1, 0
        %v4670 = vlaneseq
        %v4671 = vshrl.u32 %v4670, 7
        %v4672 = vsub.s32 0, %v4671
        %v4673 = vrot.slane %v4669, %v4672
        %vm4674 = vcmp.eq.s32.totalorder %v4673, 1
        %v4675 = vsel %vm4674, %v4160, 100.0
        %v4676 = vsel %vm4674, %v4161, 100.0
        %v4677 = vsel %vm4674, %v4162, 100.0
        %v4678 = vsel %vm4674, %v4163, 100.0
        %v4679 = vsel %vm4674, %v4164, 100.0
        %v4680 = vsel %vm4674, %v4165, 100.0
        %v4681 = vsel %vm4674, %v4166, 100.0
        %v4682 = vsel %vm4674, %v4167, 100.0
        %v4683 = vsel %vm4674, %v4168, 100.0
        %v4684 = vsel %vm4674, %v4169, 100.0
        %v4685 = vsel %vm4674, %v4170, 100.0
        %v4686 = vsel %vm4674, %v4171, 100.0
        %v4687 = vsel %vm4674, %v4172, 100.0
        %v4688 = vsel %vm4674, %v4173, 100.0
        %v4689 = vsel %vm4674, %v4174, 100.0
        %v4690 = vsel %vm4674, %v4175, 100.0
        %4691 = vmin.xlane.f32.xlu0 %v4675
        %v4692 = vpop.xlane.xlu0 %4691
        %4693 = vmin.xlane.f32.xlu0 %v4676
        %v4694 = vpop.xlane.xlu0 %4693
        %4695 = vmin.xlane.f32.xlu0 %v4677
        %v4696 = vpop.xlane.xlu0 %4695
        %4697 = vmin.xlane.f32.xlu0 %v4678
        %v4698 = vpop.xlane.xlu0 %4697
        %4699 = vmin.xlane.f32.xlu0 %v4679
        %v4700 = vpop.xlane.xlu0 %4699
        %4701 = vmin.xlane.f32.xlu0 %v4680
        %v4702 = vpop.xlane.xlu0 %4701
        %4703 = vmin.xlane.f32.xlu0 %v4681
        %v4704 = vpop.xlane.xlu0 %4703
        %4705 = vmin.xlane.f32.xlu0 %v4682
        %v4706 = vpop.xlane.xlu0 %4705
        %4707 = vmin.xlane.f32.xlu0 %v4683
        %v4708 = vpop.xlane.xlu0 %4707
        %4709 = vmin.xlane.f32.xlu0 %v4684
        %v4710 = vpop.xlane.xlu0 %4709
        %4711 = vmin.xlane.f32.xlu0 %v4685
        %v4712 = vpop.xlane.xlu0 %4711
        %4713 = vmin.xlane.f32.xlu0 %v4686
        %v4714 = vpop.xlane.xlu0 %4713
        %4715 = vmin.xlane.f32.xlu0 %v4687
        %v4716 = vpop.xlane.xlu0 %4715
        %4717 = vmin.xlane.f32.xlu0 %v4688
        %v4718 = vpop.xlane.xlu0 %4717
        %4719 = vmin.xlane.f32.xlu0 %v4689
        %v4720 = vpop.xlane.xlu0 %4719
        %4721 = vmin.xlane.f32.xlu0 %v4690
        %v4722 = vpop.xlane.xlu0 %4721
        %v4723 = vmin.f32 %v4692, 3e+38
        %v4724 = vmin.f32 %v4694, 3e+38
        %v4725 = vmin.f32 %v4696, 3e+38
        %v4726 = vmin.f32 %v4698, 3e+38
        %v4727 = vmin.f32 %v4700, 3e+38
        %v4728 = vmin.f32 %v4702, 3e+38
        %v4729 = vmin.f32 %v4704, 3e+38
        %v4730 = vmin.f32 %v4706, 3e+38
        %v4731 = vmin.f32 %v4708, 3e+38
        %v4732 = vmin.f32 %v4710, 3e+38
        %v4733 = vmin.f32 %v4712, 3e+38
        %v4734 = vmin.f32 %v4714, 3e+38
        %v4735 = vmin.f32 %v4716, 3e+38
        %v4736 = vmin.f32 %v4718, 3e+38
        %v4737 = vmin.f32 %v4720, 3e+38
        %v4738 = vmin.f32 %v4722, 3e+38
        %4739 = vset.pattern.permute.xlu0 2
        %4740 = vperm.xlu0 %4739, %v4335
        %v4741 = vpop.permute.xlu0 %4740
        %4742 = vset.pattern.permute.xlu0 2
        %4743 = vperm.xlu0 %4742, %v4336
        %v4744 = vpop.permute.xlu0 %4743
        %4745 = vset.pattern.permute.xlu0 2
        %4746 = vperm.xlu0 %4745, %v4337
        %v4747 = vpop.permute.xlu0 %4746
        %4748 = vset.pattern.permute.xlu0 2
        %4749 = vperm.xlu0 %4748, %v4338
        %v4750 = vpop.permute.xlu0 %4749
        %4751 = vset.pattern.permute.xlu0 2
        %4752 = vperm.xlu0 %4751, %v4339
        %v4753 = vpop.permute.xlu0 %4752
        %4754 = vset.pattern.permute.xlu0 2
        %4755 = vperm.xlu0 %4754, %v4340
        %v4756 = vpop.permute.xlu0 %4755
        %4757 = vset.pattern.permute.xlu0 2
        %4758 = vperm.xlu0 %4757, %v4341
        %v4759 = vpop.permute.xlu0 %4758
        %4760 = vset.pattern.permute.xlu0 2
        %4761 = vperm.xlu0 %4760, %v4342
        %v4762 = vpop.permute.xlu0 %4761
        %4763 = vset.pattern.permute.xlu0 2
        %4764 = vperm.xlu0 %4763, %v4343
        %v4765 = vpop.permute.xlu0 %4764
        %4766 = vset.pattern.permute.xlu0 2
        %4767 = vperm.xlu0 %4766, %v4344
        %v4768 = vpop.permute.xlu0 %4767
        %4769 = vset.pattern.permute.xlu0 2
        %4770 = vperm.xlu0 %4769, %v4345
        %v4771 = vpop.permute.xlu0 %4770
        %4772 = vset.pattern.permute.xlu0 2
        %4773 = vperm.xlu0 %4772, %v4346
        %v4774 = vpop.permute.xlu0 %4773
        %4775 = vset.pattern.permute.xlu0 2
        %4776 = vperm.xlu0 %4775, %v4347
        %v4777 = vpop.permute.xlu0 %4776
        %4778 = vset.pattern.permute.xlu0 2
        %4779 = vperm.xlu0 %4778, %v4348
        %v4780 = vpop.permute.xlu0 %4779
        %4781 = vset.pattern.permute.xlu0 2
        %4782 = vperm.xlu0 %4781, %v4349
        %v4783 = vpop.permute.xlu0 %4782
        %4784 = vset.pattern.permute.xlu0 2
        %4785 = vperm.xlu0 %4784, %v4350
        %v4786 = vpop.permute.xlu0 %4785
        %vm4787 = vcmp.eq.s32.totalorder %v4741, 1
        %vm4788 = vcmp.eq.s32.totalorder %v4744, 1
        %vm4789 = vcmp.eq.s32.totalorder %v4747, 1
        %vm4790 = vcmp.eq.s32.totalorder %v4750, 1
        %vm4791 = vcmp.eq.s32.totalorder %v4753, 1
        %vm4792 = vcmp.eq.s32.totalorder %v4756, 1
        %vm4793 = vcmp.eq.s32.totalorder %v4759, 1
        %vm4794 = vcmp.eq.s32.totalorder %v4762, 1
        %vm4795 = vcmp.eq.s32.totalorder %v4765, 1
        %vm4796 = vcmp.eq.s32.totalorder %v4768, 1
        %vm4797 = vcmp.eq.s32.totalorder %v4771, 1
        %vm4798 = vcmp.eq.s32.totalorder %v4774, 1
        %vm4799 = vcmp.eq.s32.totalorder %v4777, 1
        %vm4800 = vcmp.eq.s32.totalorder %v4780, 1
        %vm4801 = vcmp.eq.s32.totalorder %v4783, 1
        %vm4802 = vcmp.eq.s32.totalorder %v4786, 1
        %v4803 = vsel %vm4787, %v4160, 100.0
        %v4804 = vsel %vm4788, %v4161, 100.0
        %v4805 = vsel %vm4789, %v4162, 100.0
        %v4806 = vsel %vm4790, %v4163, 100.0
        %v4807 = vsel %vm4791, %v4164, 100.0
        %v4808 = vsel %vm4792, %v4165, 100.0
        %v4809 = vsel %vm4793, %v4166, 100.0
        %v4810 = vsel %vm4794, %v4167, 100.0
        %v4811 = vsel %vm4795, %v4168, 100.0
        %v4812 = vsel %vm4796, %v4169, 100.0
        %v4813 = vsel %vm4797, %v4170, 100.0
        %v4814 = vsel %vm4798, %v4171, 100.0
        %v4815 = vsel %vm4799, %v4172, 100.0
        %v4816 = vsel %vm4800, %v4173, 100.0
        %v4817 = vsel %vm4801, %v4174, 100.0
        %v4818 = vsel %vm4802, %v4175, 100.0
        %v4819 = vmin.f32 %v4803, %v4807
        %v4820 = vmin.f32 %v4804, %v4808
        %v4821 = vmin.f32 %v4805, %v4809
        %v4822 = vmin.f32 %v4806, %v4810
        %v4823 = vmin.f32 %v4819, %v4811
        %v4824 = vmin.f32 %v4820, %v4812
        %v4825 = vmin.f32 %v4821, %v4813
        %v4826 = vmin.f32 %v4822, %v4814
        %v4827 = vmin.f32 %v4823, %v4815
        %v4828 = vmin.f32 %v4824, %v4816
        %v4829 = vmin.f32 %v4825, %v4817
        %v4830 = vmin.f32 %v4826, %v4818
        %v4831 = vmin.f32 %v4827, %v4828
        %v4832 = vmin.f32 %v4829, %v4830
        %v4833 = vmin.f32 %v4831, %v4832
        %v4834 = vrot.slane %v4833, 4
        %v4835 = vmin.f32 %v4833, %v4834
        %v4836 = vrot.slane %v4835, 2
        %v4837 = vmin.f32 %v4835, %v4836
        %v4838 = vrot.slane %v4837, 1
        %v4839 = vmin.f32 %v4837, %v4838
        %vm4840 = vcmp.ne.f32.partialorder %v4839, 100.0
        %vm4841 = vmand %vm4668, %vm4840
        %v4842 = vrsqrt.pop %v4839
        %v4843 = vmul.f32 %v4839, %v4842
        %vm4844 = vcmp.eq.f32.partialorder %v4839, inf
        %v4845 = vsel %vm4844, %v4839, %v4843
        %vm4846 = vcmp.eq.f32.partialorder %v4839, 0.0
        %v4847 = vand.u32 %v4839, 2147483648
        %v4848 = vsel %vm4846, %v4847, %v4845
        %v4849 = vsel %vm4841, %v4848, 0.0
        %v4850 = vsel %vm848, %v4849, 0.0
        %4851 = vadd.xlane.f32.xlu0 %v4850
        %v4852 = vpop.xlane.xlu0 %4851
        %v4853 = vrot.slane %v4852, 4
        %v4854 = vadd.f32 %v4852, %v4853
        %v4855 = vrot.slane %v4854, 2
        %v4856 = vadd.f32 %v4854, %v4855
        %v4857 = vrot.slane %v4856, 1
        %v4858 = vadd.f32 %v4856, %v4857
        %s4859 = vtos %v4858
        %v4860 = vstv %s4859
        %v4861 = vadd.f32 %v4860, 0.0
        %vm4862 = vcmp.eq.s32.totalorder %v3811, 3
        %v4863 = vsel %vm4862, 1, 0
        %v4864 = vlaneseq
        %v4865 = vshrl.u32 %v4864, 7
        %v4866 = vsub.s32 0, %v4865
        %v4867 = vrot.slane %v4863, %v4866
        %vm4868 = vcmp.eq.s32.totalorder %v4867, 1
        %v4869 = vsel %vm4868, %v4160, 100.0
        %v4870 = vsel %vm4868, %v4161, 100.0
        %v4871 = vsel %vm4868, %v4162, 100.0
        %v4872 = vsel %vm4868, %v4163, 100.0
        %v4873 = vsel %vm4868, %v4164, 100.0
        %v4874 = vsel %vm4868, %v4165, 100.0
        %v4875 = vsel %vm4868, %v4166, 100.0
        %v4876 = vsel %vm4868, %v4167, 100.0
        %v4877 = vsel %vm4868, %v4168, 100.0
        %v4878 = vsel %vm4868, %v4169, 100.0
        %v4879 = vsel %vm4868, %v4170, 100.0
        %v4880 = vsel %vm4868, %v4171, 100.0
        %v4881 = vsel %vm4868, %v4172, 100.0
        %v4882 = vsel %vm4868, %v4173, 100.0
        %v4883 = vsel %vm4868, %v4174, 100.0
        %v4884 = vsel %vm4868, %v4175, 100.0
        %4885 = vmin.xlane.f32.xlu0 %v4869
        %v4886 = vpop.xlane.xlu0 %4885
        %4887 = vmin.xlane.f32.xlu0 %v4870
        %v4888 = vpop.xlane.xlu0 %4887
        %4889 = vmin.xlane.f32.xlu0 %v4871
        %v4890 = vpop.xlane.xlu0 %4889
        %4891 = vmin.xlane.f32.xlu0 %v4872
        %v4892 = vpop.xlane.xlu0 %4891
        %4893 = vmin.xlane.f32.xlu0 %v4873
        %v4894 = vpop.xlane.xlu0 %4893
        %4895 = vmin.xlane.f32.xlu0 %v4874
        %v4896 = vpop.xlane.xlu0 %4895
        %4897 = vmin.xlane.f32.xlu0 %v4875
        %v4898 = vpop.xlane.xlu0 %4897
        %4899 = vmin.xlane.f32.xlu0 %v4876
        %v4900 = vpop.xlane.xlu0 %4899
        %4901 = vmin.xlane.f32.xlu0 %v4877
        %v4902 = vpop.xlane.xlu0 %4901
        %4903 = vmin.xlane.f32.xlu0 %v4878
        %v4904 = vpop.xlane.xlu0 %4903
        %4905 = vmin.xlane.f32.xlu0 %v4879
        %v4906 = vpop.xlane.xlu0 %4905
        %4907 = vmin.xlane.f32.xlu0 %v4880
        %v4908 = vpop.xlane.xlu0 %4907
        %4909 = vmin.xlane.f32.xlu0 %v4881
        %v4910 = vpop.xlane.xlu0 %4909
        %4911 = vmin.xlane.f32.xlu0 %v4882
        %v4912 = vpop.xlane.xlu0 %4911
        %4913 = vmin.xlane.f32.xlu0 %v4883
        %v4914 = vpop.xlane.xlu0 %4913
        %4915 = vmin.xlane.f32.xlu0 %v4884
        %v4916 = vpop.xlane.xlu0 %4915
        %v4917 = vmin.f32 %v4886, 3e+38
        %v4918 = vmin.f32 %v4888, 3e+38
        %v4919 = vmin.f32 %v4890, 3e+38
        %v4920 = vmin.f32 %v4892, 3e+38
        %v4921 = vmin.f32 %v4894, 3e+38
        %v4922 = vmin.f32 %v4896, 3e+38
        %v4923 = vmin.f32 %v4898, 3e+38
        %v4924 = vmin.f32 %v4900, 3e+38
        %v4925 = vmin.f32 %v4902, 3e+38
        %v4926 = vmin.f32 %v4904, 3e+38
        %v4927 = vmin.f32 %v4906, 3e+38
        %v4928 = vmin.f32 %v4908, 3e+38
        %v4929 = vmin.f32 %v4910, 3e+38
        %v4930 = vmin.f32 %v4912, 3e+38
        %v4931 = vmin.f32 %v4914, 3e+38
        %v4932 = vmin.f32 %v4916, 3e+38
        %4933 = vset.pattern.permute.xlu0 3
        %4934 = vperm.xlu0 %4933, %v4335
        %v4935 = vpop.permute.xlu0 %4934
        %4936 = vset.pattern.permute.xlu0 3
        %4937 = vperm.xlu0 %4936, %v4336
        %v4938 = vpop.permute.xlu0 %4937
        %4939 = vset.pattern.permute.xlu0 3
        %4940 = vperm.xlu0 %4939, %v4337
        %v4941 = vpop.permute.xlu0 %4940
        %4942 = vset.pattern.permute.xlu0 3
        %4943 = vperm.xlu0 %4942, %v4338
        %v4944 = vpop.permute.xlu0 %4943
        %4945 = vset.pattern.permute.xlu0 3
        %4946 = vperm.xlu0 %4945, %v4339
        %v4947 = vpop.permute.xlu0 %4946
        %4948 = vset.pattern.permute.xlu0 3
        %4949 = vperm.xlu0 %4948, %v4340
        %v4950 = vpop.permute.xlu0 %4949
        %4951 = vset.pattern.permute.xlu0 3
        %4952 = vperm.xlu0 %4951, %v4341
        %v4953 = vpop.permute.xlu0 %4952
        %4954 = vset.pattern.permute.xlu0 3
        %4955 = vperm.xlu0 %4954, %v4342
        %v4956 = vpop.permute.xlu0 %4955
        %4957 = vset.pattern.permute.xlu0 3
        %4958 = vperm.xlu0 %4957, %v4343
        %v4959 = vpop.permute.xlu0 %4958
        %4960 = vset.pattern.permute.xlu0 3
        %4961 = vperm.xlu0 %4960, %v4344
        %v4962 = vpop.permute.xlu0 %4961
        %4963 = vset.pattern.permute.xlu0 3
        %4964 = vperm.xlu0 %4963, %v4345
        %v4965 = vpop.permute.xlu0 %4964
        %4966 = vset.pattern.permute.xlu0 3
        %4967 = vperm.xlu0 %4966, %v4346
        %v4968 = vpop.permute.xlu0 %4967
        %4969 = vset.pattern.permute.xlu0 3
        %4970 = vperm.xlu0 %4969, %v4347
        %v4971 = vpop.permute.xlu0 %4970
        %4972 = vset.pattern.permute.xlu0 3
        %4973 = vperm.xlu0 %4972, %v4348
        %v4974 = vpop.permute.xlu0 %4973
        %4975 = vset.pattern.permute.xlu0 3
        %4976 = vperm.xlu0 %4975, %v4349
        %v4977 = vpop.permute.xlu0 %4976
        %4978 = vset.pattern.permute.xlu0 3
        %4979 = vperm.xlu0 %4978, %v4350
        %v4980 = vpop.permute.xlu0 %4979
        %vm4981 = vcmp.eq.s32.totalorder %v4935, 1
        %vm4982 = vcmp.eq.s32.totalorder %v4938, 1
        %vm4983 = vcmp.eq.s32.totalorder %v4941, 1
        %vm4984 = vcmp.eq.s32.totalorder %v4944, 1
        %vm4985 = vcmp.eq.s32.totalorder %v4947, 1
        %vm4986 = vcmp.eq.s32.totalorder %v4950, 1
        %vm4987 = vcmp.eq.s32.totalorder %v4953, 1
        %vm4988 = vcmp.eq.s32.totalorder %v4956, 1
        %vm4989 = vcmp.eq.s32.totalorder %v4959, 1
        %vm4990 = vcmp.eq.s32.totalorder %v4962, 1
        %vm4991 = vcmp.eq.s32.totalorder %v4965, 1
        %vm4992 = vcmp.eq.s32.totalorder %v4968, 1
        %vm4993 = vcmp.eq.s32.totalorder %v4971, 1
        %vm4994 = vcmp.eq.s32.totalorder %v4974, 1
        %vm4995 = vcmp.eq.s32.totalorder %v4977, 1
        %vm4996 = vcmp.eq.s32.totalorder %v4980, 1
        %v4997 = vsel %vm4981, %v4160, 100.0
        %v4998 = vsel %vm4982, %v4161, 100.0
        %v4999 = vsel %vm4983, %v4162, 100.0
        %v5000 = vsel %vm4984, %v4163, 100.0
        %v5001 = vsel %vm4985, %v4164, 100.0
        %v5002 = vsel %vm4986, %v4165, 100.0
        %v5003 = vsel %vm4987, %v4166, 100.0
        %v5004 = vsel %vm4988, %v4167, 100.0
        %v5005 = vsel %vm4989, %v4168, 100.0
        %v5006 = vsel %vm4990, %v4169, 100.0
        %v5007 = vsel %vm4991, %v4170, 100.0
        %v5008 = vsel %vm4992, %v4171, 100.0
        %v5009 = vsel %vm4993, %v4172, 100.0
        %v5010 = vsel %vm4994, %v4173, 100.0
        %v5011 = vsel %vm4995, %v4174, 100.0
        %v5012 = vsel %vm4996, %v4175, 100.0
        %v5013 = vmin.f32 %v4997, %v5001
        %v5014 = vmin.f32 %v4998, %v5002
        %v5015 = vmin.f32 %v4999, %v5003
        %v5016 = vmin.f32 %v5000, %v5004
        %v5017 = vmin.f32 %v5013, %v5005
        %v5018 = vmin.f32 %v5014, %v5006
        %v5019 = vmin.f32 %v5015, %v5007
        %v5020 = vmin.f32 %v5016, %v5008
        %v5021 = vmin.f32 %v5017, %v5009
        %v5022 = vmin.f32 %v5018, %v5010
        %v5023 = vmin.f32 %v5019, %v5011
        %v5024 = vmin.f32 %v5020, %v5012
        %v5025 = vmin.f32 %v5021, %v5022
        %v5026 = vmin.f32 %v5023, %v5024
        %v5027 = vmin.f32 %v5025, %v5026
        %v5028 = vrot.slane %v5027, 4
        %v5029 = vmin.f32 %v5027, %v5028
        %v5030 = vrot.slane %v5029, 2
        %v5031 = vmin.f32 %v5029, %v5030
        %v5032 = vrot.slane %v5031, 1
        %v5033 = vmin.f32 %v5031, %v5032
        %vm5034 = vcmp.ne.f32.partialorder %v5033, 100.0
        %vm5035 = vmand %vm4862, %vm5034
        %v5036 = vrsqrt.pop %v5033
        %v5037 = vmul.f32 %v5033, %v5036
        %vm5038 = vcmp.eq.f32.partialorder %v5033, inf
        %v5039 = vsel %vm5038, %v5033, %v5037
        %vm5040 = vcmp.eq.f32.partialorder %v5033, 0.0
        %v5041 = vand.u32 %v5033, 2147483648
        %v5042 = vsel %vm5040, %v5041, %v5039
        %v5043 = vsel %vm5035, %v5042, 0.0
        %v5044 = vsel %vm848, %v5043, 0.0
        %5045 = vadd.xlane.f32.xlu0 %v5044
        %v5046 = vpop.xlane.xlu0 %5045
        %v5047 = vrot.slane %v5046, 4
        %v5048 = vadd.f32 %v5046, %v5047
        %v5049 = vrot.slane %v5048, 2
        %v5050 = vadd.f32 %v5048, %v5049
        %v5051 = vrot.slane %v5050, 1
        %v5052 = vadd.f32 %v5050, %v5051
        %s5053 = vtos %v5052
        %v5054 = vstv %s5053
        %v5055 = vadd.f32 %v5054, 0.0
        %vm5056 = vcmp.eq.s32.totalorder %v3811, 4
        %v5057 = vsel %vm5056, 1, 0
        %v5058 = vlaneseq
        %v5059 = vshrl.u32 %v5058, 7
        %v5060 = vsub.s32 0, %v5059
        %v5061 = vrot.slane %v5057, %v5060
        %vm5062 = vcmp.eq.s32.totalorder %v5061, 1
        %v5063 = vsel %vm5062, %v4160, 100.0
        %v5064 = vsel %vm5062, %v4161, 100.0
        %v5065 = vsel %vm5062, %v4162, 100.0
        %v5066 = vsel %vm5062, %v4163, 100.0
        %v5067 = vsel %vm5062, %v4164, 100.0
        %v5068 = vsel %vm5062, %v4165, 100.0
        %v5069 = vsel %vm5062, %v4166, 100.0
        %v5070 = vsel %vm5062, %v4167, 100.0
        %v5071 = vsel %vm5062, %v4168, 100.0
        %v5072 = vsel %vm5062, %v4169, 100.0
        %v5073 = vsel %vm5062, %v4170, 100.0
        %v5074 = vsel %vm5062, %v4171, 100.0
        %v5075 = vsel %vm5062, %v4172, 100.0
        %v5076 = vsel %vm5062, %v4173, 100.0
        %v5077 = vsel %vm5062, %v4174, 100.0
        %v5078 = vsel %vm5062, %v4175, 100.0
        %5079 = vmin.xlane.f32.xlu0 %v5063
        %v5080 = vpop.xlane.xlu0 %5079
        %5081 = vmin.xlane.f32.xlu0 %v5064
        %v5082 = vpop.xlane.xlu0 %5081
        %5083 = vmin.xlane.f32.xlu0 %v5065
        %v5084 = vpop.xlane.xlu0 %5083
        %5085 = vmin.xlane.f32.xlu0 %v5066
        %v5086 = vpop.xlane.xlu0 %5085
        %5087 = vmin.xlane.f32.xlu0 %v5067
        %v5088 = vpop.xlane.xlu0 %5087
        %5089 = vmin.xlane.f32.xlu0 %v5068
        %v5090 = vpop.xlane.xlu0 %5089
        %5091 = vmin.xlane.f32.xlu0 %v5069
        %v5092 = vpop.xlane.xlu0 %5091
        %5093 = vmin.xlane.f32.xlu0 %v5070
        %v5094 = vpop.xlane.xlu0 %5093
        %5095 = vmin.xlane.f32.xlu0 %v5071
        %v5096 = vpop.xlane.xlu0 %5095
        %5097 = vmin.xlane.f32.xlu0 %v5072
        %v5098 = vpop.xlane.xlu0 %5097
        %5099 = vmin.xlane.f32.xlu0 %v5073
        %v5100 = vpop.xlane.xlu0 %5099
        %5101 = vmin.xlane.f32.xlu0 %v5074
        %v5102 = vpop.xlane.xlu0 %5101
        %5103 = vmin.xlane.f32.xlu0 %v5075
        %v5104 = vpop.xlane.xlu0 %5103
        %5105 = vmin.xlane.f32.xlu0 %v5076
        %v5106 = vpop.xlane.xlu0 %5105
        %5107 = vmin.xlane.f32.xlu0 %v5077
        %v5108 = vpop.xlane.xlu0 %5107
        %5109 = vmin.xlane.f32.xlu0 %v5078
        %v5110 = vpop.xlane.xlu0 %5109
        %v5111 = vmin.f32 %v5080, 3e+38
        %v5112 = vmin.f32 %v5082, 3e+38
        %v5113 = vmin.f32 %v5084, 3e+38
        %v5114 = vmin.f32 %v5086, 3e+38
        %v5115 = vmin.f32 %v5088, 3e+38
        %v5116 = vmin.f32 %v5090, 3e+38
        %v5117 = vmin.f32 %v5092, 3e+38
        %v5118 = vmin.f32 %v5094, 3e+38
        %v5119 = vmin.f32 %v5096, 3e+38
        %v5120 = vmin.f32 %v5098, 3e+38
        %v5121 = vmin.f32 %v5100, 3e+38
        %v5122 = vmin.f32 %v5102, 3e+38
        %v5123 = vmin.f32 %v5104, 3e+38
        %v5124 = vmin.f32 %v5106, 3e+38
        %v5125 = vmin.f32 %v5108, 3e+38
        %v5126 = vmin.f32 %v5110, 3e+38
        %5127 = vset.pattern.permute.xlu0 4
        %5128 = vperm.xlu0 %5127, %v4335
        %v5129 = vpop.permute.xlu0 %5128
        %5130 = vset.pattern.permute.xlu0 4
        %5131 = vperm.xlu0 %5130, %v4336
        %v5132 = vpop.permute.xlu0 %5131
        %5133 = vset.pattern.permute.xlu0 4
        %5134 = vperm.xlu0 %5133, %v4337
        %v5135 = vpop.permute.xlu0 %5134
        %5136 = vset.pattern.permute.xlu0 4
        %5137 = vperm.xlu0 %5136, %v4338
        %v5138 = vpop.permute.xlu0 %5137
        %5139 = vset.pattern.permute.xlu0 4
        %5140 = vperm.xlu0 %5139, %v4339
        %v5141 = vpop.permute.xlu0 %5140
        %5142 = vset.pattern.permute.xlu0 4
        %5143 = vperm.xlu0 %5142, %v4340
        %v5144 = vpop.permute.xlu0 %5143
        %5145 = vset.pattern.permute.xlu0 4
        %5146 = vperm.xlu0 %5145, %v4341
        %v5147 = vpop.permute.xlu0 %5146
        %5148 = vset.pattern.permute.xlu0 4
        %5149 = vperm.xlu0 %5148, %v4342
        %v5150 = vpop.permute.xlu0 %5149
        %5151 = vset.pattern.permute.xlu0 4
        %5152 = vperm.xlu0 %5151, %v4343
        %v5153 = vpop.permute.xlu0 %5152
        %5154 = vset.pattern.permute.xlu0 4
        %5155 = vperm.xlu0 %5154, %v4344
        %v5156 = vpop.permute.xlu0 %5155
        %5157 = vset.pattern.permute.xlu0 4
        %5158 = vperm.xlu0 %5157, %v4345
        %v5159 = vpop.permute.xlu0 %5158
        %5160 = vset.pattern.permute.xlu0 4
        %5161 = vperm.xlu0 %5160, %v4346
        %v5162 = vpop.permute.xlu0 %5161
        %5163 = vset.pattern.permute.xlu0 4
        %5164 = vperm.xlu0 %5163, %v4347
        %v5165 = vpop.permute.xlu0 %5164
        %5166 = vset.pattern.permute.xlu0 4
        %5167 = vperm.xlu0 %5166, %v4348
        %v5168 = vpop.permute.xlu0 %5167
        %5169 = vset.pattern.permute.xlu0 4
        %5170 = vperm.xlu0 %5169, %v4349
        %v5171 = vpop.permute.xlu0 %5170
        %5172 = vset.pattern.permute.xlu0 4
        %5173 = vperm.xlu0 %5172, %v4350
        %v5174 = vpop.permute.xlu0 %5173
        %vm5175 = vcmp.eq.s32.totalorder %v5129, 1
        %vm5176 = vcmp.eq.s32.totalorder %v5132, 1
        %vm5177 = vcmp.eq.s32.totalorder %v5135, 1
        %vm5178 = vcmp.eq.s32.totalorder %v5138, 1
        %vm5179 = vcmp.eq.s32.totalorder %v5141, 1
        %vm5180 = vcmp.eq.s32.totalorder %v5144, 1
        %vm5181 = vcmp.eq.s32.totalorder %v5147, 1
        %vm5182 = vcmp.eq.s32.totalorder %v5150, 1
        %vm5183 = vcmp.eq.s32.totalorder %v5153, 1
        %vm5184 = vcmp.eq.s32.totalorder %v5156, 1
        %vm5185 = vcmp.eq.s32.totalorder %v5159, 1
        %vm5186 = vcmp.eq.s32.totalorder %v5162, 1
        %vm5187 = vcmp.eq.s32.totalorder %v5165, 1
        %vm5188 = vcmp.eq.s32.totalorder %v5168, 1
        %vm5189 = vcmp.eq.s32.totalorder %v5171, 1
        %vm5190 = vcmp.eq.s32.totalorder %v5174, 1
        %v5191 = vsel %vm5175, %v4160, 100.0
        %v5192 = vsel %vm5176, %v4161, 100.0
        %v5193 = vsel %vm5177, %v4162, 100.0
        %v5194 = vsel %vm5178, %v4163, 100.0
        %v5195 = vsel %vm5179, %v4164, 100.0
        %v5196 = vsel %vm5180, %v4165, 100.0
        %v5197 = vsel %vm5181, %v4166, 100.0
        %v5198 = vsel %vm5182, %v4167, 100.0
        %v5199 = vsel %vm5183, %v4168, 100.0
        %v5200 = vsel %vm5184, %v4169, 100.0
        %v5201 = vsel %vm5185, %v4170, 100.0
        %v5202 = vsel %vm5186, %v4171, 100.0
        %v5203 = vsel %vm5187, %v4172, 100.0
        %v5204 = vsel %vm5188, %v4173, 100.0
        %v5205 = vsel %vm5189, %v4174, 100.0
        %v5206 = vsel %vm5190, %v4175, 100.0
        %v5207 = vmin.f32 %v5191, %v5195
        %v5208 = vmin.f32 %v5192, %v5196
        %v5209 = vmin.f32 %v5193, %v5197
        %v5210 = vmin.f32 %v5194, %v5198
        %v5211 = vmin.f32 %v5207, %v5199
        %v5212 = vmin.f32 %v5208, %v5200
        %v5213 = vmin.f32 %v5209, %v5201
        %v5214 = vmin.f32 %v5210, %v5202
        %v5215 = vmin.f32 %v5211, %v5203
        %v5216 = vmin.f32 %v5212, %v5204
        %v5217 = vmin.f32 %v5213, %v5205
        %v5218 = vmin.f32 %v5214, %v5206
        %v5219 = vmin.f32 %v5215, %v5216
        %v5220 = vmin.f32 %v5217, %v5218
        %v5221 = vmin.f32 %v5219, %v5220
        %v5222 = vrot.slane %v5221, 4
        %v5223 = vmin.f32 %v5221, %v5222
        %v5224 = vrot.slane %v5223, 2
        %v5225 = vmin.f32 %v5223, %v5224
        %v5226 = vrot.slane %v5225, 1
        %v5227 = vmin.f32 %v5225, %v5226
        %vm5228 = vcmp.ne.f32.partialorder %v5227, 100.0
        %vm5229 = vmand %vm5056, %vm5228
        %v5230 = vrsqrt.pop %v5227
        %v5231 = vmul.f32 %v5227, %v5230
        %vm5232 = vcmp.eq.f32.partialorder %v5227, inf
        %v5233 = vsel %vm5232, %v5227, %v5231
        %vm5234 = vcmp.eq.f32.partialorder %v5227, 0.0
        %v5235 = vand.u32 %v5227, 2147483648
        %v5236 = vsel %vm5234, %v5235, %v5233
        %v5237 = vsel %vm5229, %v5236, 0.0
        %v5238 = vsel %vm848, %v5237, 0.0
        %5239 = vadd.xlane.f32.xlu0 %v5238
        %v5240 = vpop.xlane.xlu0 %5239
        %v5241 = vrot.slane %v5240, 4
        %v5242 = vadd.f32 %v5240, %v5241
        %v5243 = vrot.slane %v5242, 2
        %v5244 = vadd.f32 %v5242, %v5243
        %v5245 = vrot.slane %v5244, 1
        %v5246 = vadd.f32 %v5244, %v5245
        %s5247 = vtos %v5246
        %v5248 = vstv %s5247
        %v5249 = vadd.f32 %v5248, 0.0
        %vm5250 = vcmp.eq.s32.totalorder %v3811, 5
        %v5251 = vsel %vm5250, 1, 0
        %v5252 = vlaneseq
        %v5253 = vshrl.u32 %v5252, 7
        %v5254 = vsub.s32 0, %v5253
        %v5255 = vrot.slane %v5251, %v5254
        %vm5256 = vcmp.eq.s32.totalorder %v5255, 1
        %v5257 = vsel %vm5256, %v4160, 100.0
        %v5258 = vsel %vm5256, %v4161, 100.0
        %v5259 = vsel %vm5256, %v4162, 100.0
        %v5260 = vsel %vm5256, %v4163, 100.0
        %v5261 = vsel %vm5256, %v4164, 100.0
        %v5262 = vsel %vm5256, %v4165, 100.0
        %v5263 = vsel %vm5256, %v4166, 100.0
        %v5264 = vsel %vm5256, %v4167, 100.0
        %v5265 = vsel %vm5256, %v4168, 100.0
        %v5266 = vsel %vm5256, %v4169, 100.0
        %v5267 = vsel %vm5256, %v4170, 100.0
        %v5268 = vsel %vm5256, %v4171, 100.0
        %v5269 = vsel %vm5256, %v4172, 100.0
        %v5270 = vsel %vm5256, %v4173, 100.0
        %v5271 = vsel %vm5256, %v4174, 100.0
        %v5272 = vsel %vm5256, %v4175, 100.0
        %5273 = vmin.xlane.f32.xlu0 %v5257
        %v5274 = vpop.xlane.xlu0 %5273
        %5275 = vmin.xlane.f32.xlu0 %v5258
        %v5276 = vpop.xlane.xlu0 %5275
        %5277 = vmin.xlane.f32.xlu0 %v5259
        %v5278 = vpop.xlane.xlu0 %5277
        %5279 = vmin.xlane.f32.xlu0 %v5260
        %v5280 = vpop.xlane.xlu0 %5279
        %5281 = vmin.xlane.f32.xlu0 %v5261
        %v5282 = vpop.xlane.xlu0 %5281
        %5283 = vmin.xlane.f32.xlu0 %v5262
        %v5284 = vpop.xlane.xlu0 %5283
        %5285 = vmin.xlane.f32.xlu0 %v5263
        %v5286 = vpop.xlane.xlu0 %5285
        %5287 = vmin.xlane.f32.xlu0 %v5264
        %v5288 = vpop.xlane.xlu0 %5287
        %5289 = vmin.xlane.f32.xlu0 %v5265
        %v5290 = vpop.xlane.xlu0 %5289
        %5291 = vmin.xlane.f32.xlu0 %v5266
        %v5292 = vpop.xlane.xlu0 %5291
        %5293 = vmin.xlane.f32.xlu0 %v5267
        %v5294 = vpop.xlane.xlu0 %5293
        %5295 = vmin.xlane.f32.xlu0 %v5268
        %v5296 = vpop.xlane.xlu0 %5295
        %5297 = vmin.xlane.f32.xlu0 %v5269
        %v5298 = vpop.xlane.xlu0 %5297
        %5299 = vmin.xlane.f32.xlu0 %v5270
        %v5300 = vpop.xlane.xlu0 %5299
        %5301 = vmin.xlane.f32.xlu0 %v5271
        %v5302 = vpop.xlane.xlu0 %5301
        %5303 = vmin.xlane.f32.xlu0 %v5272
        %v5304 = vpop.xlane.xlu0 %5303
        %v5305 = vmin.f32 %v5274, 3e+38
        %v5306 = vmin.f32 %v5276, 3e+38
        %v5307 = vmin.f32 %v5278, 3e+38
        %v5308 = vmin.f32 %v5280, 3e+38
        %v5309 = vmin.f32 %v5282, 3e+38
        %v5310 = vmin.f32 %v5284, 3e+38
        %v5311 = vmin.f32 %v5286, 3e+38
        %v5312 = vmin.f32 %v5288, 3e+38
        %v5313 = vmin.f32 %v5290, 3e+38
        %v5314 = vmin.f32 %v5292, 3e+38
        %v5315 = vmin.f32 %v5294, 3e+38
        %v5316 = vmin.f32 %v5296, 3e+38
        %v5317 = vmin.f32 %v5298, 3e+38
        %v5318 = vmin.f32 %v5300, 3e+38
        %v5319 = vmin.f32 %v5302, 3e+38
        %v5320 = vmin.f32 %v5304, 3e+38
        %5321 = vset.pattern.permute.xlu0 5
        %5322 = vperm.xlu0 %5321, %v4335
        %v5323 = vpop.permute.xlu0 %5322
        %5324 = vset.pattern.permute.xlu0 5
        %5325 = vperm.xlu0 %5324, %v4336
        %v5326 = vpop.permute.xlu0 %5325
        %5327 = vset.pattern.permute.xlu0 5
        %5328 = vperm.xlu0 %5327, %v4337
        %v5329 = vpop.permute.xlu0 %5328
        %5330 = vset.pattern.permute.xlu0 5
        %5331 = vperm.xlu0 %5330, %v4338
        %v5332 = vpop.permute.xlu0 %5331
        %5333 = vset.pattern.permute.xlu0 5
        %5334 = vperm.xlu0 %5333, %v4339
        %v5335 = vpop.permute.xlu0 %5334
        %5336 = vset.pattern.permute.xlu0 5
        %5337 = vperm.xlu0 %5336, %v4340
        %v5338 = vpop.permute.xlu0 %5337
        %5339 = vset.pattern.permute.xlu0 5
        %5340 = vperm.xlu0 %5339, %v4341
        %v5341 = vpop.permute.xlu0 %5340
        %5342 = vset.pattern.permute.xlu0 5
        %5343 = vperm.xlu0 %5342, %v4342
        %v5344 = vpop.permute.xlu0 %5343
        %5345 = vset.pattern.permute.xlu0 5
        %5346 = vperm.xlu0 %5345, %v4343
        %v5347 = vpop.permute.xlu0 %5346
        %5348 = vset.pattern.permute.xlu0 5
        %5349 = vperm.xlu0 %5348, %v4344
        %v5350 = vpop.permute.xlu0 %5349
        %5351 = vset.pattern.permute.xlu0 5
        %5352 = vperm.xlu0 %5351, %v4345
        %v5353 = vpop.permute.xlu0 %5352
        %5354 = vset.pattern.permute.xlu0 5
        %5355 = vperm.xlu0 %5354, %v4346
        %v5356 = vpop.permute.xlu0 %5355
        %5357 = vset.pattern.permute.xlu0 5
        %5358 = vperm.xlu0 %5357, %v4347
        %v5359 = vpop.permute.xlu0 %5358
        %5360 = vset.pattern.permute.xlu0 5
        %5361 = vperm.xlu0 %5360, %v4348
        %v5362 = vpop.permute.xlu0 %5361
        %5363 = vset.pattern.permute.xlu0 5
        %5364 = vperm.xlu0 %5363, %v4349
        %v5365 = vpop.permute.xlu0 %5364
        %5366 = vset.pattern.permute.xlu0 5
        %5367 = vperm.xlu0 %5366, %v4350
        %v5368 = vpop.permute.xlu0 %5367
        %vm5369 = vcmp.eq.s32.totalorder %v5323, 1
        %vm5370 = vcmp.eq.s32.totalorder %v5326, 1
        %vm5371 = vcmp.eq.s32.totalorder %v5329, 1
        %vm5372 = vcmp.eq.s32.totalorder %v5332, 1
        %vm5373 = vcmp.eq.s32.totalorder %v5335, 1
        %vm5374 = vcmp.eq.s32.totalorder %v5338, 1
        %vm5375 = vcmp.eq.s32.totalorder %v5341, 1
        %vm5376 = vcmp.eq.s32.totalorder %v5344, 1
        %vm5377 = vcmp.eq.s32.totalorder %v5347, 1
        %vm5378 = vcmp.eq.s32.totalorder %v5350, 1
        %vm5379 = vcmp.eq.s32.totalorder %v5353, 1
        %vm5380 = vcmp.eq.s32.totalorder %v5356, 1
        %vm5381 = vcmp.eq.s32.totalorder %v5359, 1
        %vm5382 = vcmp.eq.s32.totalorder %v5362, 1
        %vm5383 = vcmp.eq.s32.totalorder %v5365, 1
        %vm5384 = vcmp.eq.s32.totalorder %v5368, 1
        %v5385 = vsel %vm5369, %v4160, 100.0
        %v5386 = vsel %vm5370, %v4161, 100.0
        %v5387 = vsel %vm5371, %v4162, 100.0
        %v5388 = vsel %vm5372, %v4163, 100.0
        %v5389 = vsel %vm5373, %v4164, 100.0
        %v5390 = vsel %vm5374, %v4165, 100.0
        %v5391 = vsel %vm5375, %v4166, 100.0
        %v5392 = vsel %vm5376, %v4167, 100.0
        %v5393 = vsel %vm5377, %v4168, 100.0
        %v5394 = vsel %vm5378, %v4169, 100.0
        %v5395 = vsel %vm5379, %v4170, 100.0
        %v5396 = vsel %vm5380, %v4171, 100.0
        %v5397 = vsel %vm5381, %v4172, 100.0
        %v5398 = vsel %vm5382, %v4173, 100.0
        %v5399 = vsel %vm5383, %v4174, 100.0
        %v5400 = vsel %vm5384, %v4175, 100.0
        %v5401 = vmin.f32 %v5385, %v5389
        %v5402 = vmin.f32 %v5386, %v5390
        %v5403 = vmin.f32 %v5387, %v5391
        %v5404 = vmin.f32 %v5388, %v5392
        %v5405 = vmin.f32 %v5401, %v5393
        %v5406 = vmin.f32 %v5402, %v5394
        %v5407 = vmin.f32 %v5403, %v5395
        %v5408 = vmin.f32 %v5404, %v5396
        %v5409 = vmin.f32 %v5405, %v5397
        %v5410 = vmin.f32 %v5406, %v5398
        %v5411 = vmin.f32 %v5407, %v5399
        %v5412 = vmin.f32 %v5408, %v5400
        %v5413 = vmin.f32 %v5409, %v5410
        %v5414 = vmin.f32 %v5411, %v5412
        %v5415 = vmin.f32 %v5413, %v5414
        %v5416 = vrot.slane %v5415, 4
        %v5417 = vmin.f32 %v5415, %v5416
        %v5418 = vrot.slane %v5417, 2
        %v5419 = vmin.f32 %v5417, %v5418
        %v5420 = vrot.slane %v5419, 1
        %v5421 = vmin.f32 %v5419, %v5420
        %vm5422 = vcmp.ne.f32.partialorder %v5421, 100.0
        %vm5423 = vmand %vm5250, %vm5422
        %v5424 = vrsqrt.pop %v5421
        %v5425 = vmul.f32 %v5421, %v5424
        %vm5426 = vcmp.eq.f32.partialorder %v5421, inf
        %v5427 = vsel %vm5426, %v5421, %v5425
        %vm5428 = vcmp.eq.f32.partialorder %v5421, 0.0
        %v5429 = vand.u32 %v5421, 2147483648
        %v5430 = vsel %vm5428, %v5429, %v5427
        %v5431 = vsel %vm5423, %v5430, 0.0
        %v5432 = vsel %vm848, %v5431, 0.0
        %5433 = vadd.xlane.f32.xlu0 %v5432
        %v5434 = vpop.xlane.xlu0 %5433
        %v5435 = vrot.slane %v5434, 4
        %v5436 = vadd.f32 %v5434, %v5435
        %v5437 = vrot.slane %v5436, 2
        %v5438 = vadd.f32 %v5436, %v5437
        %v5439 = vrot.slane %v5438, 1
        %v5440 = vadd.f32 %v5438, %v5439
        %s5441 = vtos %v5440
        %v5442 = vstv %s5441
        %v5443 = vadd.f32 %v5442, 0.0
        %v5444 = vrsqrt.pop %v4208
        %v5445 = vmul.f32 %v4208, %v5444
        %vm5446 = vcmp.eq.f32.partialorder %v4208, inf
        %v5447 = vsel %vm5446, %v4208, %v5445
        %vm5448 = vcmp.eq.f32.partialorder %v4208, 0.0
        %v5449 = vand.u32 %v4208, 2147483648
        %v5450 = vsel %vm5448, %v5449, %v5447
        %v5451 = vrsqrt.pop %v4209
        %v5452 = vmul.f32 %v4209, %v5451
        %vm5453 = vcmp.eq.f32.partialorder %v4209, inf
        %v5454 = vsel %vm5453, %v4209, %v5452
        %vm5455 = vcmp.eq.f32.partialorder %v4209, 0.0
        %v5456 = vand.u32 %v4209, 2147483648
        %v5457 = vsel %vm5455, %v5456, %v5454
        %v5458 = vrsqrt.pop %v4210
        %v5459 = vmul.f32 %v4210, %v5458
        %vm5460 = vcmp.eq.f32.partialorder %v4210, inf
        %v5461 = vsel %vm5460, %v4210, %v5459
        %vm5462 = vcmp.eq.f32.partialorder %v4210, 0.0
        %v5463 = vand.u32 %v4210, 2147483648
        %v5464 = vsel %vm5462, %v5463, %v5461
        %v5465 = vrsqrt.pop %v4211
        %v5466 = vmul.f32 %v4211, %v5465
        %vm5467 = vcmp.eq.f32.partialorder %v4211, inf
        %v5468 = vsel %vm5467, %v4211, %v5466
        %vm5469 = vcmp.eq.f32.partialorder %v4211, 0.0
        %v5470 = vand.u32 %v4211, 2147483648
        %v5471 = vsel %vm5469, %v5470, %v5468
        %v5472 = vrsqrt.pop %v4212
        %v5473 = vmul.f32 %v4212, %v5472
        %vm5474 = vcmp.eq.f32.partialorder %v4212, inf
        %v5475 = vsel %vm5474, %v4212, %v5473
        %vm5476 = vcmp.eq.f32.partialorder %v4212, 0.0
        %v5477 = vand.u32 %v4212, 2147483648
        %v5478 = vsel %vm5476, %v5477, %v5475
        %v5479 = vrsqrt.pop %v4213
        %v5480 = vmul.f32 %v4213, %v5479
        %vm5481 = vcmp.eq.f32.partialorder %v4213, inf
        %v5482 = vsel %vm5481, %v4213, %v5480
        %vm5483 = vcmp.eq.f32.partialorder %v4213, 0.0
        %v5484 = vand.u32 %v4213, 2147483648
        %v5485 = vsel %vm5483, %v5484, %v5482
        %v5486 = vrsqrt.pop %v4214
        %v5487 = vmul.f32 %v4214, %v5486
        %vm5488 = vcmp.eq.f32.partialorder %v4214, inf
        %v5489 = vsel %vm5488, %v4214, %v5487
        %vm5490 = vcmp.eq.f32.partialorder %v4214, 0.0
        %v5491 = vand.u32 %v4214, 2147483648
        %v5492 = vsel %vm5490, %v5491, %v5489
        %v5493 = vrsqrt.pop %v4215
        %v5494 = vmul.f32 %v4215, %v5493
        %vm5495 = vcmp.eq.f32.partialorder %v4215, inf
        %v5496 = vsel %vm5495, %v4215, %v5494
        %vm5497 = vcmp.eq.f32.partialorder %v4215, 0.0
        %v5498 = vand.u32 %v4215, 2147483648
        %v5499 = vsel %vm5497, %v5498, %v5496
        %v5500 = vrsqrt.pop %v4216
        %v5501 = vmul.f32 %v4216, %v5500
        %vm5502 = vcmp.eq.f32.partialorder %v4216, inf
        %v5503 = vsel %vm5502, %v4216, %v5501
        %vm5504 = vcmp.eq.f32.partialorder %v4216, 0.0
        %v5505 = vand.u32 %v4216, 2147483648
        %v5506 = vsel %vm5504, %v5505, %v5503
        %v5507 = vrsqrt.pop %v4217
        %v5508 = vmul.f32 %v4217, %v5507
        %vm5509 = vcmp.eq.f32.partialorder %v4217, inf
        %v5510 = vsel %vm5509, %v4217, %v5508
        %vm5511 = vcmp.eq.f32.partialorder %v4217, 0.0
        %v5512 = vand.u32 %v4217, 2147483648
        %v5513 = vsel %vm5511, %v5512, %v5510
        %v5514 = vrsqrt.pop %v4218
        %v5515 = vmul.f32 %v4218, %v5514
        %vm5516 = vcmp.eq.f32.partialorder %v4218, inf
        %v5517 = vsel %vm5516, %v4218, %v5515
        %vm5518 = vcmp.eq.f32.partialorder %v4218, 0.0
        %v5519 = vand.u32 %v4218, 2147483648
        %v5520 = vsel %vm5518, %v5519, %v5517
        %v5521 = vrsqrt.pop %v4219
        %v5522 = vmul.f32 %v4219, %v5521
        %vm5523 = vcmp.eq.f32.partialorder %v4219, inf
        %v5524 = vsel %vm5523, %v4219, %v5522
        %vm5525 = vcmp.eq.f32.partialorder %v4219, 0.0
        %v5526 = vand.u32 %v4219, 2147483648
        %v5527 = vsel %vm5525, %v5526, %v5524
        %v5528 = vrsqrt.pop %v4220
        %v5529 = vmul.f32 %v4220, %v5528
        %vm5530 = vcmp.eq.f32.partialorder %v4220, inf
        %v5531 = vsel %vm5530, %v4220, %v5529
        %vm5532 = vcmp.eq.f32.partialorder %v4220, 0.0
        %v5533 = vand.u32 %v4220, 2147483648
        %v5534 = vsel %vm5532, %v5533, %v5531
        %v5535 = vrsqrt.pop %v4221
        %v5536 = vmul.f32 %v4221, %v5535
        %vm5537 = vcmp.eq.f32.partialorder %v4221, inf
        %v5538 = vsel %vm5537, %v4221, %v5536
        %vm5539 = vcmp.eq.f32.partialorder %v4221, 0.0
        %v5540 = vand.u32 %v4221, 2147483648
        %v5541 = vsel %vm5539, %v5540, %v5538
        %v5542 = vrsqrt.pop %v4222
        %v5543 = vmul.f32 %v4222, %v5542
        %vm5544 = vcmp.eq.f32.partialorder %v4222, inf
        %v5545 = vsel %vm5544, %v4222, %v5543
        %vm5546 = vcmp.eq.f32.partialorder %v4222, 0.0
        %v5547 = vand.u32 %v4222, 2147483648
        %v5548 = vsel %vm5546, %v5547, %v5545
        %v5549 = vrsqrt.pop %v4223
        %v5550 = vmul.f32 %v4223, %v5549
        %vm5551 = vcmp.eq.f32.partialorder %v4223, inf
        %v5552 = vsel %vm5551, %v4223, %v5550
        %vm5553 = vcmp.eq.f32.partialorder %v4223, 0.0
        %v5554 = vand.u32 %v4223, 2147483648
        %v5555 = vsel %vm5553, %v5554, %v5552
        %v5556 = vsel %vm2153, %v5450, 0.0
        %v5557 = vsel %vm2153, %v5457, 0.0
        %v5558 = vadd.f32 %v5556, %v5557
        %v5559 = vsel %vm2153, %v5464, 0.0
        %v5560 = vadd.f32 %v5558, %v5559
        %v5561 = vsel %vm2153, %v5471, 0.0
        %v5562 = vadd.f32 %v5560, %v5561
        %v5563 = vsel %vm2153, %v5478, 0.0
        %v5564 = vadd.f32 %v5562, %v5563
        %v5565 = vsel %vm2153, %v5485, 0.0
        %v5566 = vadd.f32 %v5564, %v5565
        %v5567 = vsel %vm2153, %v5492, 0.0
        %v5568 = vadd.f32 %v5566, %v5567
        %v5569 = vsel %vm2153, %v5499, 0.0
        %v5570 = vadd.f32 %v5568, %v5569
        %v5571 = vsel %vm2153, %v5506, 0.0
        %v5572 = vadd.f32 %v5570, %v5571
        %v5573 = vsel %vm2153, %v5513, 0.0
        %v5574 = vadd.f32 %v5572, %v5573
        %v5575 = vsel %vm2153, %v5520, 0.0
        %v5576 = vadd.f32 %v5574, %v5575
        %v5577 = vsel %vm2153, %v5527, 0.0
        %v5578 = vadd.f32 %v5576, %v5577
        %v5579 = vsel %vm2153, %v5534, 0.0
        %v5580 = vadd.f32 %v5578, %v5579
        %v5581 = vsel %vm2153, %v5541, 0.0
        %v5582 = vadd.f32 %v5580, %v5581
        %v5583 = vsel %vm2153, %v5548, 0.0
        %v5584 = vadd.f32 %v5582, %v5583
        %v5585 = vsel %vm2153, %v5555, 0.0
        %v5586 = vadd.f32 %v5584, %v5585
        %5587 = vadd.xlane.f32.xlu0 %v5586
        %v5588 = vpop.xlane.xlu0 %5587
        %v5589 = vrot.slane %v5588, 4
        %v5590 = vadd.f32 %v5588, %v5589
        %v5591 = vrot.slane %v5590, 2
        %v5592 = vadd.f32 %v5590, %v5591
        %v5593 = vrot.slane %v5592, 1
        %v5594 = vadd.f32 %v5592, %v5593
        %s5595 = vtos %v5594
        %v5596 = vstv %s5595
        %v5597 = vadd.f32 %v4263, %v5596
        %vm5598 = vcmp.ne.f32.partialorder %v4319, 100.0
        %vm5599 = vcmp.ne.f32.partialorder %v4320, 100.0
        %vm5600 = vcmp.ne.f32.partialorder %v4321, 100.0
        %vm5601 = vcmp.ne.f32.partialorder %v4322, 100.0
        %vm5602 = vcmp.ne.f32.partialorder %v4323, 100.0
        %vm5603 = vcmp.ne.f32.partialorder %v4324, 100.0
        %vm5604 = vcmp.ne.f32.partialorder %v4325, 100.0
        %vm5605 = vcmp.ne.f32.partialorder %v4326, 100.0
        %vm5606 = vcmp.ne.f32.partialorder %v4327, 100.0
        %vm5607 = vcmp.ne.f32.partialorder %v4328, 100.0
        %vm5608 = vcmp.ne.f32.partialorder %v4329, 100.0
        %vm5609 = vcmp.ne.f32.partialorder %v4330, 100.0
        %vm5610 = vcmp.ne.f32.partialorder %v4331, 100.0
        %vm5611 = vcmp.ne.f32.partialorder %v4332, 100.0
        %vm5612 = vcmp.ne.f32.partialorder %v4333, 100.0
        %vm5613 = vcmp.ne.f32.partialorder %v4334, 100.0
        %vm5614 = vmand %vm3812, %vm5598
        %vm5615 = vmand %vm3813, %vm5599
        %vm5616 = vmand %vm3814, %vm5600
        %vm5617 = vmand %vm3815, %vm5601
        %vm5618 = vmand %vm3816, %vm5602
        %vm5619 = vmand %vm3817, %vm5603
        %vm5620 = vmand %vm3818, %vm5604
        %vm5621 = vmand %vm3819, %vm5605
        %vm5622 = vmand %vm3820, %vm5606
        %vm5623 = vmand %vm3821, %vm5607
        %vm5624 = vmand %vm3822, %vm5608
        %vm5625 = vmand %vm3823, %vm5609
        %vm5626 = vmand %vm3824, %vm5610
        %vm5627 = vmand %vm3825, %vm5611
        %vm5628 = vmand %vm3826, %vm5612
        %vm5629 = vmand %vm3827, %vm5613
        %v5630 = vrsqrt.pop %v4319
        %v5631 = vmul.f32 %v4319, %v5630
        %vm5632 = vcmp.eq.f32.partialorder %v4319, inf
        %v5633 = vsel %vm5632, %v4319, %v5631
        %vm5634 = vcmp.eq.f32.partialorder %v4319, 0.0
        %v5635 = vand.u32 %v4319, 2147483648
        %v5636 = vsel %vm5634, %v5635, %v5633
        %v5637 = vrsqrt.pop %v4320
        %v5638 = vmul.f32 %v4320, %v5637
        %vm5639 = vcmp.eq.f32.partialorder %v4320, inf
        %v5640 = vsel %vm5639, %v4320, %v5638
        %vm5641 = vcmp.eq.f32.partialorder %v4320, 0.0
        %v5642 = vand.u32 %v4320, 2147483648
        %v5643 = vsel %vm5641, %v5642, %v5640
        %v5644 = vrsqrt.pop %v4321
        %v5645 = vmul.f32 %v4321, %v5644
        %vm5646 = vcmp.eq.f32.partialorder %v4321, inf
        %v5647 = vsel %vm5646, %v4321, %v5645
        %vm5648 = vcmp.eq.f32.partialorder %v4321, 0.0
        %v5649 = vand.u32 %v4321, 2147483648
        %v5650 = vsel %vm5648, %v5649, %v5647
        %v5651 = vrsqrt.pop %v4322
        %v5652 = vmul.f32 %v4322, %v5651
        %vm5653 = vcmp.eq.f32.partialorder %v4322, inf
        %v5654 = vsel %vm5653, %v4322, %v5652
        %vm5655 = vcmp.eq.f32.partialorder %v4322, 0.0
        %v5656 = vand.u32 %v4322, 2147483648
        %v5657 = vsel %vm5655, %v5656, %v5654
        %v5658 = vrsqrt.pop %v4323
        %v5659 = vmul.f32 %v4323, %v5658
        %vm5660 = vcmp.eq.f32.partialorder %v4323, inf
        %v5661 = vsel %vm5660, %v4323, %v5659
        %vm5662 = vcmp.eq.f32.partialorder %v4323, 0.0
        %v5663 = vand.u32 %v4323, 2147483648
        %v5664 = vsel %vm5662, %v5663, %v5661
        %v5665 = vrsqrt.pop %v4324
        %v5666 = vmul.f32 %v4324, %v5665
        %vm5667 = vcmp.eq.f32.partialorder %v4324, inf
        %v5668 = vsel %vm5667, %v4324, %v5666
        %vm5669 = vcmp.eq.f32.partialorder %v4324, 0.0
        %v5670 = vand.u32 %v4324, 2147483648
        %v5671 = vsel %vm5669, %v5670, %v5668
        %v5672 = vrsqrt.pop %v4325
        %v5673 = vmul.f32 %v4325, %v5672
        %vm5674 = vcmp.eq.f32.partialorder %v4325, inf
        %v5675 = vsel %vm5674, %v4325, %v5673
        %vm5676 = vcmp.eq.f32.partialorder %v4325, 0.0
        %v5677 = vand.u32 %v4325, 2147483648
        %v5678 = vsel %vm5676, %v5677, %v5675
        %v5679 = vrsqrt.pop %v4326
        %v5680 = vmul.f32 %v4326, %v5679
        %vm5681 = vcmp.eq.f32.partialorder %v4326, inf
        %v5682 = vsel %vm5681, %v4326, %v5680
        %vm5683 = vcmp.eq.f32.partialorder %v4326, 0.0
        %v5684 = vand.u32 %v4326, 2147483648
        %v5685 = vsel %vm5683, %v5684, %v5682
        %v5686 = vrsqrt.pop %v4327
        %v5687 = vmul.f32 %v4327, %v5686
        %vm5688 = vcmp.eq.f32.partialorder %v4327, inf
        %v5689 = vsel %vm5688, %v4327, %v5687
        %vm5690 = vcmp.eq.f32.partialorder %v4327, 0.0
        %v5691 = vand.u32 %v4327, 2147483648
        %v5692 = vsel %vm5690, %v5691, %v5689
        %v5693 = vrsqrt.pop %v4328
        %v5694 = vmul.f32 %v4328, %v5693
        %vm5695 = vcmp.eq.f32.partialorder %v4328, inf
        %v5696 = vsel %vm5695, %v4328, %v5694
        %vm5697 = vcmp.eq.f32.partialorder %v4328, 0.0
        %v5698 = vand.u32 %v4328, 2147483648
        %v5699 = vsel %vm5697, %v5698, %v5696
        %v5700 = vrsqrt.pop %v4329
        %v5701 = vmul.f32 %v4329, %v5700
        %vm5702 = vcmp.eq.f32.partialorder %v4329, inf
        %v5703 = vsel %vm5702, %v4329, %v5701
        %vm5704 = vcmp.eq.f32.partialorder %v4329, 0.0
        %v5705 = vand.u32 %v4329, 2147483648
        %v5706 = vsel %vm5704, %v5705, %v5703
        %v5707 = vrsqrt.pop %v4330
        %v5708 = vmul.f32 %v4330, %v5707
        %vm5709 = vcmp.eq.f32.partialorder %v4330, inf
        %v5710 = vsel %vm5709, %v4330, %v5708
        %vm5711 = vcmp.eq.f32.partialorder %v4330, 0.0
        %v5712 = vand.u32 %v4330, 2147483648
        %v5713 = vsel %vm5711, %v5712, %v5710
        %v5714 = vrsqrt.pop %v4331
        %v5715 = vmul.f32 %v4331, %v5714
        %vm5716 = vcmp.eq.f32.partialorder %v4331, inf
        %v5717 = vsel %vm5716, %v4331, %v5715
        %vm5718 = vcmp.eq.f32.partialorder %v4331, 0.0
        %v5719 = vand.u32 %v4331, 2147483648
        %v5720 = vsel %vm5718, %v5719, %v5717
        %v5721 = vrsqrt.pop %v4332
        %v5722 = vmul.f32 %v4332, %v5721
        %vm5723 = vcmp.eq.f32.partialorder %v4332, inf
        %v5724 = vsel %vm5723, %v4332, %v5722
        %vm5725 = vcmp.eq.f32.partialorder %v4332, 0.0
        %v5726 = vand.u32 %v4332, 2147483648
        %v5727 = vsel %vm5725, %v5726, %v5724
        %v5728 = vrsqrt.pop %v4333
        %v5729 = vmul.f32 %v4333, %v5728
        %vm5730 = vcmp.eq.f32.partialorder %v4333, inf
        %v5731 = vsel %vm5730, %v4333, %v5729
        %vm5732 = vcmp.eq.f32.partialorder %v4333, 0.0
        %v5733 = vand.u32 %v4333, 2147483648
        %v5734 = vsel %vm5732, %v5733, %v5731
        %v5735 = vrsqrt.pop %v4334
        %v5736 = vmul.f32 %v4334, %v5735
        %vm5737 = vcmp.eq.f32.partialorder %v4334, inf
        %v5738 = vsel %vm5737, %v4334, %v5736
        %vm5739 = vcmp.eq.f32.partialorder %v4334, 0.0
        %v5740 = vand.u32 %v4334, 2147483648
        %v5741 = vsel %vm5739, %v5740, %v5738
        %v5742 = vsel %vm5614, %v5636, 0.0
        %v5743 = vsel %vm5615, %v5643, 0.0
        %v5744 = vsel %vm5616, %v5650, 0.0
        %v5745 = vsel %vm5617, %v5657, 0.0
        %v5746 = vsel %vm5618, %v5664, 0.0
        %v5747 = vsel %vm5619, %v5671, 0.0
        %v5748 = vsel %vm5620, %v5678, 0.0
        %v5749 = vsel %vm5621, %v5685, 0.0
        %v5750 = vsel %vm5622, %v5692, 0.0
        %v5751 = vsel %vm5623, %v5699, 0.0
        %v5752 = vsel %vm5624, %v5706, 0.0
        %v5753 = vsel %vm5625, %v5713, 0.0
        %v5754 = vsel %vm5626, %v5720, 0.0
        %v5755 = vsel %vm5627, %v5727, 0.0
        %v5756 = vsel %vm5628, %v5734, 0.0
        %v5757 = vsel %vm5629, %v5741, 0.0
        %v5758 = vsel %vm2153, %v5742, 0.0
        %v5759 = vsel %vm2153, %v5743, 0.0
        %v5760 = vadd.f32 %v5758, %v5759
        %v5761 = vsel %vm2153, %v5744, 0.0
        %v5762 = vadd.f32 %v5760, %v5761
        %v5763 = vsel %vm2153, %v5745, 0.0
        %v5764 = vadd.f32 %v5762, %v5763
        %v5765 = vsel %vm2153, %v5746, 0.0
        %v5766 = vadd.f32 %v5764, %v5765
        %v5767 = vsel %vm2153, %v5747, 0.0
        %v5768 = vadd.f32 %v5766, %v5767
        %v5769 = vsel %vm2153, %v5748, 0.0
        %v5770 = vadd.f32 %v5768, %v5769
        %v5771 = vsel %vm2153, %v5749, 0.0
        %v5772 = vadd.f32 %v5770, %v5771
        %v5773 = vsel %vm2153, %v5750, 0.0
        %v5774 = vadd.f32 %v5772, %v5773
        %v5775 = vsel %vm2153, %v5751, 0.0
        %v5776 = vadd.f32 %v5774, %v5775
        %v5777 = vsel %vm2153, %v5752, 0.0
        %v5778 = vadd.f32 %v5776, %v5777
        %v5779 = vsel %vm2153, %v5753, 0.0
        %v5780 = vadd.f32 %v5778, %v5779
        %v5781 = vsel %vm2153, %v5754, 0.0
        %v5782 = vadd.f32 %v5780, %v5781
        %v5783 = vsel %vm2153, %v5755, 0.0
        %v5784 = vadd.f32 %v5782, %v5783
        %v5785 = vsel %vm2153, %v5756, 0.0
        %v5786 = vadd.f32 %v5784, %v5785
        %v5787 = vsel %vm2153, %v5757, 0.0
        %v5788 = vadd.f32 %v5786, %v5787
        %5789 = vadd.xlane.f32.xlu0 %v5788
        %v5790 = vpop.xlane.xlu0 %5789
        %v5791 = vrot.slane %v5790, 4
        %v5792 = vadd.f32 %v5790, %v5791
        %v5793 = vrot.slane %v5792, 2
        %v5794 = vadd.f32 %v5792, %v5793
        %v5795 = vrot.slane %v5794, 1
        %v5796 = vadd.f32 %v5794, %v5795
        %s5797 = vtos %v5796
        %v5798 = vstv %s5797
        %v5799 = vadd.f32 %v5798, %v4473
        %vm5800 = vcmp.ne.f32.partialorder %v4529, 100.0
        %vm5801 = vcmp.ne.f32.partialorder %v4530, 100.0
        %vm5802 = vcmp.ne.f32.partialorder %v4531, 100.0
        %vm5803 = vcmp.ne.f32.partialorder %v4532, 100.0
        %vm5804 = vcmp.ne.f32.partialorder %v4533, 100.0
        %vm5805 = vcmp.ne.f32.partialorder %v4534, 100.0
        %vm5806 = vcmp.ne.f32.partialorder %v4535, 100.0
        %vm5807 = vcmp.ne.f32.partialorder %v4536, 100.0
        %vm5808 = vcmp.ne.f32.partialorder %v4537, 100.0
        %vm5809 = vcmp.ne.f32.partialorder %v4538, 100.0
        %vm5810 = vcmp.ne.f32.partialorder %v4539, 100.0
        %vm5811 = vcmp.ne.f32.partialorder %v4540, 100.0
        %vm5812 = vcmp.ne.f32.partialorder %v4541, 100.0
        %vm5813 = vcmp.ne.f32.partialorder %v4542, 100.0
        %vm5814 = vcmp.ne.f32.partialorder %v4543, 100.0
        %vm5815 = vcmp.ne.f32.partialorder %v4544, 100.0
        %vm5816 = vmand %vm3812, %vm5800
        %vm5817 = vmand %vm3813, %vm5801
        %vm5818 = vmand %vm3814, %vm5802
        %vm5819 = vmand %vm3815, %vm5803
        %vm5820 = vmand %vm3816, %vm5804
        %vm5821 = vmand %vm3817, %vm5805
        %vm5822 = vmand %vm3818, %vm5806
        %vm5823 = vmand %vm3819, %vm5807
        %vm5824 = vmand %vm3820, %vm5808
        %vm5825 = vmand %vm3821, %vm5809
        %vm5826 = vmand %vm3822, %vm5810
        %vm5827 = vmand %vm3823, %vm5811
        %vm5828 = vmand %vm3824, %vm5812
        %vm5829 = vmand %vm3825, %vm5813
        %vm5830 = vmand %vm3826, %vm5814
        %vm5831 = vmand %vm3827, %vm5815
        %v5832 = vrsqrt.pop %v4529
        %v5833 = vmul.f32 %v4529, %v5832
        %vm5834 = vcmp.eq.f32.partialorder %v4529, inf
        %v5835 = vsel %vm5834, %v4529, %v5833
        %vm5836 = vcmp.eq.f32.partialorder %v4529, 0.0
        %v5837 = vand.u32 %v4529, 2147483648
        %v5838 = vsel %vm5836, %v5837, %v5835
        %v5839 = vrsqrt.pop %v4530
        %v5840 = vmul.f32 %v4530, %v5839
        %vm5841 = vcmp.eq.f32.partialorder %v4530, inf
        %v5842 = vsel %vm5841, %v4530, %v5840
        %vm5843 = vcmp.eq.f32.partialorder %v4530, 0.0
        %v5844 = vand.u32 %v4530, 2147483648
        %v5845 = vsel %vm5843, %v5844, %v5842
        %v5846 = vrsqrt.pop %v4531
        %v5847 = vmul.f32 %v4531, %v5846
        %vm5848 = vcmp.eq.f32.partialorder %v4531, inf
        %v5849 = vsel %vm5848, %v4531, %v5847
        %vm5850 = vcmp.eq.f32.partialorder %v4531, 0.0
        %v5851 = vand.u32 %v4531, 2147483648
        %v5852 = vsel %vm5850, %v5851, %v5849
        %v5853 = vrsqrt.pop %v4532
        %v5854 = vmul.f32 %v4532, %v5853
        %vm5855 = vcmp.eq.f32.partialorder %v4532, inf
        %v5856 = vsel %vm5855, %v4532, %v5854
        %vm5857 = vcmp.eq.f32.partialorder %v4532, 0.0
        %v5858 = vand.u32 %v4532, 2147483648
        %v5859 = vsel %vm5857, %v5858, %v5856
        %v5860 = vrsqrt.pop %v4533
        %v5861 = vmul.f32 %v4533, %v5860
        %vm5862 = vcmp.eq.f32.partialorder %v4533, inf
        %v5863 = vsel %vm5862, %v4533, %v5861
        %vm5864 = vcmp.eq.f32.partialorder %v4533, 0.0
        %v5865 = vand.u32 %v4533, 2147483648
        %v5866 = vsel %vm5864, %v5865, %v5863
        %v5867 = vrsqrt.pop %v4534
        %v5868 = vmul.f32 %v4534, %v5867
        %vm5869 = vcmp.eq.f32.partialorder %v4534, inf
        %v5870 = vsel %vm5869, %v4534, %v5868
        %vm5871 = vcmp.eq.f32.partialorder %v4534, 0.0
        %v5872 = vand.u32 %v4534, 2147483648
        %v5873 = vsel %vm5871, %v5872, %v5870
        %v5874 = vrsqrt.pop %v4535
        %v5875 = vmul.f32 %v4535, %v5874
        %vm5876 = vcmp.eq.f32.partialorder %v4535, inf
        %v5877 = vsel %vm5876, %v4535, %v5875
        %vm5878 = vcmp.eq.f32.partialorder %v4535, 0.0
        %v5879 = vand.u32 %v4535, 2147483648
        %v5880 = vsel %vm5878, %v5879, %v5877
        %v5881 = vrsqrt.pop %v4536
        %v5882 = vmul.f32 %v4536, %v5881
        %vm5883 = vcmp.eq.f32.partialorder %v4536, inf
        %v5884 = vsel %vm5883, %v4536, %v5882
        %vm5885 = vcmp.eq.f32.partialorder %v4536, 0.0
        %v5886 = vand.u32 %v4536, 2147483648
        %v5887 = vsel %vm5885, %v5886, %v5884
        %v5888 = vrsqrt.pop %v4537
        %v5889 = vmul.f32 %v4537, %v5888
        %vm5890 = vcmp.eq.f32.partialorder %v4537, inf
        %v5891 = vsel %vm5890, %v4537, %v5889
        %vm5892 = vcmp.eq.f32.partialorder %v4537, 0.0
        %v5893 = vand.u32 %v4537, 2147483648
        %v5894 = vsel %vm5892, %v5893, %v5891
        %v5895 = vrsqrt.pop %v4538
        %v5896 = vmul.f32 %v4538, %v5895
        %vm5897 = vcmp.eq.f32.partialorder %v4538, inf
        %v5898 = vsel %vm5897, %v4538, %v5896
        %vm5899 = vcmp.eq.f32.partialorder %v4538, 0.0
        %v5900 = vand.u32 %v4538, 2147483648
        %v5901 = vsel %vm5899, %v5900, %v5898
        %v5902 = vrsqrt.pop %v4539
        %v5903 = vmul.f32 %v4539, %v5902
        %vm5904 = vcmp.eq.f32.partialorder %v4539, inf
        %v5905 = vsel %vm5904, %v4539, %v5903
        %vm5906 = vcmp.eq.f32.partialorder %v4539, 0.0
        %v5907 = vand.u32 %v4539, 2147483648
        %v5908 = vsel %vm5906, %v5907, %v5905
        %v5909 = vrsqrt.pop %v4540
        %v5910 = vmul.f32 %v4540, %v5909
        %vm5911 = vcmp.eq.f32.partialorder %v4540, inf
        %v5912 = vsel %vm5911, %v4540, %v5910
        %vm5913 = vcmp.eq.f32.partialorder %v4540, 0.0
        %v5914 = vand.u32 %v4540, 2147483648
        %v5915 = vsel %vm5913, %v5914, %v5912
        %v5916 = vrsqrt.pop %v4541
        %v5917 = vmul.f32 %v4541, %v5916
        %vm5918 = vcmp.eq.f32.partialorder %v4541, inf
        %v5919 = vsel %vm5918, %v4541, %v5917
        %vm5920 = vcmp.eq.f32.partialorder %v4541, 0.0
        %v5921 = vand.u32 %v4541, 2147483648
        %v5922 = vsel %vm5920, %v5921, %v5919
        %v5923 = vrsqrt.pop %v4542
        %v5924 = vmul.f32 %v4542, %v5923
        %vm5925 = vcmp.eq.f32.partialorder %v4542, inf
        %v5926 = vsel %vm5925, %v4542, %v5924
        %vm5927 = vcmp.eq.f32.partialorder %v4542, 0.0
        %v5928 = vand.u32 %v4542, 2147483648
        %v5929 = vsel %vm5927, %v5928, %v5926
        %v5930 = vrsqrt.pop %v4543
        %v5931 = vmul.f32 %v4543, %v5930
        %vm5932 = vcmp.eq.f32.partialorder %v4543, inf
        %v5933 = vsel %vm5932, %v4543, %v5931
        %vm5934 = vcmp.eq.f32.partialorder %v4543, 0.0
        %v5935 = vand.u32 %v4543, 2147483648
        %v5936 = vsel %vm5934, %v5935, %v5933
        %v5937 = vrsqrt.pop %v4544
        %v5938 = vmul.f32 %v4544, %v5937
        %vm5939 = vcmp.eq.f32.partialorder %v4544, inf
        %v5940 = vsel %vm5939, %v4544, %v5938
        %vm5941 = vcmp.eq.f32.partialorder %v4544, 0.0
        %v5942 = vand.u32 %v4544, 2147483648
        %v5943 = vsel %vm5941, %v5942, %v5940
        %v5944 = vsel %vm5816, %v5838, 0.0
        %v5945 = vsel %vm5817, %v5845, 0.0
        %v5946 = vsel %vm5818, %v5852, 0.0
        %v5947 = vsel %vm5819, %v5859, 0.0
        %v5948 = vsel %vm5820, %v5866, 0.0
        %v5949 = vsel %vm5821, %v5873, 0.0
        %v5950 = vsel %vm5822, %v5880, 0.0
        %v5951 = vsel %vm5823, %v5887, 0.0
        %v5952 = vsel %vm5824, %v5894, 0.0
        %v5953 = vsel %vm5825, %v5901, 0.0
        %v5954 = vsel %vm5826, %v5908, 0.0
        %v5955 = vsel %vm5827, %v5915, 0.0
        %v5956 = vsel %vm5828, %v5922, 0.0
        %v5957 = vsel %vm5829, %v5929, 0.0
        %v5958 = vsel %vm5830, %v5936, 0.0
        %v5959 = vsel %vm5831, %v5943, 0.0
        %5976 = vrot.lane.b32.xlu0 %v5944, 127
        %v5977 = vpop.permute.xlu0 %5976
        %5978 = vrot.lane.b32.xlu0 %v5945, 127
        %v5979 = vpop.permute.xlu0 %5978
        %5980 = vrot.lane.b32.xlu0 %v5946, 127
        %v5981 = vpop.permute.xlu0 %5980
        %5982 = vrot.lane.b32.xlu0 %v5947, 127
        %v5983 = vpop.permute.xlu0 %5982
        %5984 = vrot.lane.b32.xlu0 %v5948, 127
        %v5985 = vpop.permute.xlu0 %5984
        %5986 = vrot.lane.b32.xlu0 %v5949, 127
        %v5987 = vpop.permute.xlu0 %5986
        %5988 = vrot.lane.b32.xlu0 %v5950, 127
        %v5989 = vpop.permute.xlu0 %5988
        %5990 = vrot.lane.b32.xlu0 %v5951, 127
        %v5991 = vpop.permute.xlu0 %5990
        %5992 = vrot.lane.b32.xlu0 %v5952, 127
        %v5993 = vpop.permute.xlu0 %5992
        %5994 = vrot.lane.b32.xlu0 %v5953, 127
        %v5995 = vpop.permute.xlu0 %5994
        %5996 = vrot.lane.b32.xlu0 %v5954, 127
        %v5997 = vpop.permute.xlu0 %5996
        %5998 = vrot.lane.b32.xlu0 %v5955, 127
        %v5999 = vpop.permute.xlu0 %5998
        %6000 = vrot.lane.b32.xlu0 %v5956, 127
        %v6001 = vpop.permute.xlu0 %6000
        %6002 = vrot.lane.b32.xlu0 %v5957, 127
        %v6003 = vpop.permute.xlu0 %6002
        %6004 = vrot.lane.b32.xlu0 %v5958, 127
        %v6005 = vpop.permute.xlu0 %6004
        %6006 = vrot.lane.b32.xlu0 %v5959, 127
        %v6007 = vpop.permute.xlu0 %6006
        %v6024 = vsel %vm2153, %v5977, 0.0
        %v6025 = vsel %vm2153, %v5979, 0.0
        %v6026 = vadd.f32 %v6024, %v6025
        %v6027 = vsel %vm2153, %v5981, 0.0
        %v6028 = vadd.f32 %v6026, %v6027
        %v6029 = vsel %vm2153, %v5983, 0.0
        %v6030 = vadd.f32 %v6028, %v6029
        %v6031 = vsel %vm2153, %v5985, 0.0
        %v6032 = vadd.f32 %v6030, %v6031
        %v6033 = vsel %vm2153, %v5987, 0.0
        %v6034 = vadd.f32 %v6032, %v6033
        %v6035 = vsel %vm2153, %v5989, 0.0
        %v6036 = vadd.f32 %v6034, %v6035
        %v6037 = vsel %vm2153, %v5991, 0.0
        %v6038 = vadd.f32 %v6036, %v6037
        %v6039 = vsel %vm2153, %v5993, 0.0
        %v6040 = vadd.f32 %v6038, %v6039
        %v6041 = vsel %vm2153, %v5995, 0.0
        %v6042 = vadd.f32 %v6040, %v6041
        %v6043 = vsel %vm2153, %v5997, 0.0
        %v6044 = vadd.f32 %v6042, %v6043
        %v6045 = vsel %vm2153, %v5999, 0.0
        %v6046 = vadd.f32 %v6044, %v6045
        %v6047 = vsel %vm2153, %v6001, 0.0
        %v6048 = vadd.f32 %v6046, %v6047
        %v6049 = vsel %vm2153, %v6003, 0.0
        %v6050 = vadd.f32 %v6048, %v6049
        %v6051 = vsel %vm2153, %v6005, 0.0
        %v6052 = vadd.f32 %v6050, %v6051
        %v6053 = vsel %vm2153, %v6007, 0.0
        %v6054 = vadd.f32 %v6052, %v6053
        %6055 = vadd.xlane.f32.xlu0 %v6054
        %v6056 = vpop.xlane.xlu0 %6055
        %v6057 = vrot.slane %v6056, 4
        %v6058 = vadd.f32 %v6056, %v6057
        %v6059 = vrot.slane %v6058, 2
        %v6060 = vadd.f32 %v6058, %v6059
        %v6061 = vrot.slane %v6060, 1
        %v6062 = vadd.f32 %v6060, %v6061
        %s6063 = vtos %v6062
        %v6064 = vstv %s6063
        %v6065 = vadd.f32 %v6064, %v4667
        %vm6066 = vcmp.ne.f32.partialorder %v4723, 100.0
        %vm6067 = vcmp.ne.f32.partialorder %v4724, 100.0
        %vm6068 = vcmp.ne.f32.partialorder %v4725, 100.0
        %vm6069 = vcmp.ne.f32.partialorder %v4726, 100.0
        %vm6070 = vcmp.ne.f32.partialorder %v4727, 100.0
        %vm6071 = vcmp.ne.f32.partialorder %v4728, 100.0
        %vm6072 = vcmp.ne.f32.partialorder %v4729, 100.0
        %vm6073 = vcmp.ne.f32.partialorder %v4730, 100.0
        %vm6074 = vcmp.ne.f32.partialorder %v4731, 100.0
        %vm6075 = vcmp.ne.f32.partialorder %v4732, 100.0
        %vm6076 = vcmp.ne.f32.partialorder %v4733, 100.0
        %vm6077 = vcmp.ne.f32.partialorder %v4734, 100.0
        %vm6078 = vcmp.ne.f32.partialorder %v4735, 100.0
        %vm6079 = vcmp.ne.f32.partialorder %v4736, 100.0
        %vm6080 = vcmp.ne.f32.partialorder %v4737, 100.0
        %vm6081 = vcmp.ne.f32.partialorder %v4738, 100.0
        %vm6082 = vmand %vm3812, %vm6066
        %vm6083 = vmand %vm3813, %vm6067
        %vm6084 = vmand %vm3814, %vm6068
        %vm6085 = vmand %vm3815, %vm6069
        %vm6086 = vmand %vm3816, %vm6070
        %vm6087 = vmand %vm3817, %vm6071
        %vm6088 = vmand %vm3818, %vm6072
        %vm6089 = vmand %vm3819, %vm6073
        %vm6090 = vmand %vm3820, %vm6074
        %vm6091 = vmand %vm3821, %vm6075
        %vm6092 = vmand %vm3822, %vm6076
        %vm6093 = vmand %vm3823, %vm6077
        %vm6094 = vmand %vm3824, %vm6078
        %vm6095 = vmand %vm3825, %vm6079
        %vm6096 = vmand %vm3826, %vm6080
        %vm6097 = vmand %vm3827, %vm6081
        %v6098 = vrsqrt.pop %v4723
        %v6099 = vmul.f32 %v4723, %v6098
        %vm6100 = vcmp.eq.f32.partialorder %v4723, inf
        %v6101 = vsel %vm6100, %v4723, %v6099
        %vm6102 = vcmp.eq.f32.partialorder %v4723, 0.0
        %v6103 = vand.u32 %v4723, 2147483648
        %v6104 = vsel %vm6102, %v6103, %v6101
        %v6105 = vrsqrt.pop %v4724
        %v6106 = vmul.f32 %v4724, %v6105
        %vm6107 = vcmp.eq.f32.partialorder %v4724, inf
        %v6108 = vsel %vm6107, %v4724, %v6106
        %vm6109 = vcmp.eq.f32.partialorder %v4724, 0.0
        %v6110 = vand.u32 %v4724, 2147483648
        %v6111 = vsel %vm6109, %v6110, %v6108
        %v6112 = vrsqrt.pop %v4725
        %v6113 = vmul.f32 %v4725, %v6112
        %vm6114 = vcmp.eq.f32.partialorder %v4725, inf
        %v6115 = vsel %vm6114, %v4725, %v6113
        %vm6116 = vcmp.eq.f32.partialorder %v4725, 0.0
        %v6117 = vand.u32 %v4725, 2147483648
        %v6118 = vsel %vm6116, %v6117, %v6115
        %v6119 = vrsqrt.pop %v4726
        %v6120 = vmul.f32 %v4726, %v6119
        %vm6121 = vcmp.eq.f32.partialorder %v4726, inf
        %v6122 = vsel %vm6121, %v4726, %v6120
        %vm6123 = vcmp.eq.f32.partialorder %v4726, 0.0
        %v6124 = vand.u32 %v4726, 2147483648
        %v6125 = vsel %vm6123, %v6124, %v6122
        %v6126 = vrsqrt.pop %v4727
        %v6127 = vmul.f32 %v4727, %v6126
        %vm6128 = vcmp.eq.f32.partialorder %v4727, inf
        %v6129 = vsel %vm6128, %v4727, %v6127
        %vm6130 = vcmp.eq.f32.partialorder %v4727, 0.0
        %v6131 = vand.u32 %v4727, 2147483648
        %v6132 = vsel %vm6130, %v6131, %v6129
        %v6133 = vrsqrt.pop %v4728
        %v6134 = vmul.f32 %v4728, %v6133
        %vm6135 = vcmp.eq.f32.partialorder %v4728, inf
        %v6136 = vsel %vm6135, %v4728, %v6134
        %vm6137 = vcmp.eq.f32.partialorder %v4728, 0.0
        %v6138 = vand.u32 %v4728, 2147483648
        %v6139 = vsel %vm6137, %v6138, %v6136
        %v6140 = vrsqrt.pop %v4729
        %v6141 = vmul.f32 %v4729, %v6140
        %vm6142 = vcmp.eq.f32.partialorder %v4729, inf
        %v6143 = vsel %vm6142, %v4729, %v6141
        %vm6144 = vcmp.eq.f32.partialorder %v4729, 0.0
        %v6145 = vand.u32 %v4729, 2147483648
        %v6146 = vsel %vm6144, %v6145, %v6143
        %v6147 = vrsqrt.pop %v4730
        %v6148 = vmul.f32 %v4730, %v6147
        %vm6149 = vcmp.eq.f32.partialorder %v4730, inf
        %v6150 = vsel %vm6149, %v4730, %v6148
        %vm6151 = vcmp.eq.f32.partialorder %v4730, 0.0
        %v6152 = vand.u32 %v4730, 2147483648
        %v6153 = vsel %vm6151, %v6152, %v6150
        %v6154 = vrsqrt.pop %v4731
        %v6155 = vmul.f32 %v4731, %v6154
        %vm6156 = vcmp.eq.f32.partialorder %v4731, inf
        %v6157 = vsel %vm6156, %v4731, %v6155
        %vm6158 = vcmp.eq.f32.partialorder %v4731, 0.0
        %v6159 = vand.u32 %v4731, 2147483648
        %v6160 = vsel %vm6158, %v6159, %v6157
        %v6161 = vrsqrt.pop %v4732
        %v6162 = vmul.f32 %v4732, %v6161
        %vm6163 = vcmp.eq.f32.partialorder %v4732, inf
        %v6164 = vsel %vm6163, %v4732, %v6162
        %vm6165 = vcmp.eq.f32.partialorder %v4732, 0.0
        %v6166 = vand.u32 %v4732, 2147483648
        %v6167 = vsel %vm6165, %v6166, %v6164
        %v6168 = vrsqrt.pop %v4733
        %v6169 = vmul.f32 %v4733, %v6168
        %vm6170 = vcmp.eq.f32.partialorder %v4733, inf
        %v6171 = vsel %vm6170, %v4733, %v6169
        %vm6172 = vcmp.eq.f32.partialorder %v4733, 0.0
        %v6173 = vand.u32 %v4733, 2147483648
        %v6174 = vsel %vm6172, %v6173, %v6171
        %v6175 = vrsqrt.pop %v4734
        %v6176 = vmul.f32 %v4734, %v6175
        %vm6177 = vcmp.eq.f32.partialorder %v4734, inf
        %v6178 = vsel %vm6177, %v4734, %v6176
        %vm6179 = vcmp.eq.f32.partialorder %v4734, 0.0
        %v6180 = vand.u32 %v4734, 2147483648
        %v6181 = vsel %vm6179, %v6180, %v6178
        %v6182 = vrsqrt.pop %v4735
        %v6183 = vmul.f32 %v4735, %v6182
        %vm6184 = vcmp.eq.f32.partialorder %v4735, inf
        %v6185 = vsel %vm6184, %v4735, %v6183
        %vm6186 = vcmp.eq.f32.partialorder %v4735, 0.0
        %v6187 = vand.u32 %v4735, 2147483648
        %v6188 = vsel %vm6186, %v6187, %v6185
        %v6189 = vrsqrt.pop %v4736
        %v6190 = vmul.f32 %v4736, %v6189
        %vm6191 = vcmp.eq.f32.partialorder %v4736, inf
        %v6192 = vsel %vm6191, %v4736, %v6190
        %vm6193 = vcmp.eq.f32.partialorder %v4736, 0.0
        %v6194 = vand.u32 %v4736, 2147483648
        %v6195 = vsel %vm6193, %v6194, %v6192
        %v6196 = vrsqrt.pop %v4737
        %v6197 = vmul.f32 %v4737, %v6196
        %vm6198 = vcmp.eq.f32.partialorder %v4737, inf
        %v6199 = vsel %vm6198, %v4737, %v6197
        %vm6200 = vcmp.eq.f32.partialorder %v4737, 0.0
        %v6201 = vand.u32 %v4737, 2147483648
        %v6202 = vsel %vm6200, %v6201, %v6199
        %v6203 = vrsqrt.pop %v4738
        %v6204 = vmul.f32 %v4738, %v6203
        %vm6205 = vcmp.eq.f32.partialorder %v4738, inf
        %v6206 = vsel %vm6205, %v4738, %v6204
        %vm6207 = vcmp.eq.f32.partialorder %v4738, 0.0
        %v6208 = vand.u32 %v4738, 2147483648
        %v6209 = vsel %vm6207, %v6208, %v6206
        %v6210 = vsel %vm6082, %v6104, 0.0
        %v6211 = vsel %vm6083, %v6111, 0.0
        %v6212 = vsel %vm6084, %v6118, 0.0
        %v6213 = vsel %vm6085, %v6125, 0.0
        %v6214 = vsel %vm6086, %v6132, 0.0
        %v6215 = vsel %vm6087, %v6139, 0.0
        %v6216 = vsel %vm6088, %v6146, 0.0
        %v6217 = vsel %vm6089, %v6153, 0.0
        %v6218 = vsel %vm6090, %v6160, 0.0
        %v6219 = vsel %vm6091, %v6167, 0.0
        %v6220 = vsel %vm6092, %v6174, 0.0
        %v6221 = vsel %vm6093, %v6181, 0.0
        %v6222 = vsel %vm6094, %v6188, 0.0
        %v6223 = vsel %vm6095, %v6195, 0.0
        %v6224 = vsel %vm6096, %v6202, 0.0
        %v6225 = vsel %vm6097, %v6209, 0.0
        %6242 = vrot.lane.b32.xlu0 %v6210, 126
        %v6243 = vpop.permute.xlu0 %6242
        %6244 = vrot.lane.b32.xlu0 %v6211, 126
        %v6245 = vpop.permute.xlu0 %6244
        %6246 = vrot.lane.b32.xlu0 %v6212, 126
        %v6247 = vpop.permute.xlu0 %6246
        %6248 = vrot.lane.b32.xlu0 %v6213, 126
        %v6249 = vpop.permute.xlu0 %6248
        %6250 = vrot.lane.b32.xlu0 %v6214, 126
        %v6251 = vpop.permute.xlu0 %6250
        %6252 = vrot.lane.b32.xlu0 %v6215, 126
        %v6253 = vpop.permute.xlu0 %6252
        %6254 = vrot.lane.b32.xlu0 %v6216, 126
        %v6255 = vpop.permute.xlu0 %6254
        %6256 = vrot.lane.b32.xlu0 %v6217, 126
        %v6257 = vpop.permute.xlu0 %6256
        %6258 = vrot.lane.b32.xlu0 %v6218, 126
        %v6259 = vpop.permute.xlu0 %6258
        %6260 = vrot.lane.b32.xlu0 %v6219, 126
        %v6261 = vpop.permute.xlu0 %6260
        %6262 = vrot.lane.b32.xlu0 %v6220, 126
        %v6263 = vpop.permute.xlu0 %6262
        %6264 = vrot.lane.b32.xlu0 %v6221, 126
        %v6265 = vpop.permute.xlu0 %6264
        %6266 = vrot.lane.b32.xlu0 %v6222, 126
        %v6267 = vpop.permute.xlu0 %6266
        %6268 = vrot.lane.b32.xlu0 %v6223, 126
        %v6269 = vpop.permute.xlu0 %6268
        %6270 = vrot.lane.b32.xlu0 %v6224, 126
        %v6271 = vpop.permute.xlu0 %6270
        %6272 = vrot.lane.b32.xlu0 %v6225, 126
        %v6273 = vpop.permute.xlu0 %6272
        %v6290 = vsel %vm2153, %v6243, 0.0
        %v6291 = vsel %vm2153, %v6245, 0.0
        %v6292 = vadd.f32 %v6290, %v6291
        %v6293 = vsel %vm2153, %v6247, 0.0
        %v6294 = vadd.f32 %v6292, %v6293
        %v6295 = vsel %vm2153, %v6249, 0.0
        %v6296 = vadd.f32 %v6294, %v6295
        %v6297 = vsel %vm2153, %v6251, 0.0
        %v6298 = vadd.f32 %v6296, %v6297
        %v6299 = vsel %vm2153, %v6253, 0.0
        %v6300 = vadd.f32 %v6298, %v6299
        %v6301 = vsel %vm2153, %v6255, 0.0
        %v6302 = vadd.f32 %v6300, %v6301
        %v6303 = vsel %vm2153, %v6257, 0.0
        %v6304 = vadd.f32 %v6302, %v6303
        %v6305 = vsel %vm2153, %v6259, 0.0
        %v6306 = vadd.f32 %v6304, %v6305
        %v6307 = vsel %vm2153, %v6261, 0.0
        %v6308 = vadd.f32 %v6306, %v6307
        %v6309 = vsel %vm2153, %v6263, 0.0
        %v6310 = vadd.f32 %v6308, %v6309
        %v6311 = vsel %vm2153, %v6265, 0.0
        %v6312 = vadd.f32 %v6310, %v6311
        %v6313 = vsel %vm2153, %v6267, 0.0
        %v6314 = vadd.f32 %v6312, %v6313
        %v6315 = vsel %vm2153, %v6269, 0.0
        %v6316 = vadd.f32 %v6314, %v6315
        %v6317 = vsel %vm2153, %v6271, 0.0
        %v6318 = vadd.f32 %v6316, %v6317
        %v6319 = vsel %vm2153, %v6273, 0.0
        %v6320 = vadd.f32 %v6318, %v6319
        %6321 = vadd.xlane.f32.xlu0 %v6320
        %v6322 = vpop.xlane.xlu0 %6321
        %v6323 = vrot.slane %v6322, 4
        %v6324 = vadd.f32 %v6322, %v6323
        %v6325 = vrot.slane %v6324, 2
        %v6326 = vadd.f32 %v6324, %v6325
        %v6327 = vrot.slane %v6326, 1
        %v6328 = vadd.f32 %v6326, %v6327
        %s6329 = vtos %v6328
        %v6330 = vstv %s6329
        %v6331 = vadd.f32 %v6330, %v4861
        %vm6332 = vcmp.ne.f32.partialorder %v4917, 100.0
        %vm6333 = vcmp.ne.f32.partialorder %v4918, 100.0
        %vm6334 = vcmp.ne.f32.partialorder %v4919, 100.0
        %vm6335 = vcmp.ne.f32.partialorder %v4920, 100.0
        %vm6336 = vcmp.ne.f32.partialorder %v4921, 100.0
        %vm6337 = vcmp.ne.f32.partialorder %v4922, 100.0
        %vm6338 = vcmp.ne.f32.partialorder %v4923, 100.0
        %vm6339 = vcmp.ne.f32.partialorder %v4924, 100.0
        %vm6340 = vcmp.ne.f32.partialorder %v4925, 100.0
        %vm6341 = vcmp.ne.f32.partialorder %v4926, 100.0
        %vm6342 = vcmp.ne.f32.partialorder %v4927, 100.0
        %vm6343 = vcmp.ne.f32.partialorder %v4928, 100.0
        %vm6344 = vcmp.ne.f32.partialorder %v4929, 100.0
        %vm6345 = vcmp.ne.f32.partialorder %v4930, 100.0
        %vm6346 = vcmp.ne.f32.partialorder %v4931, 100.0
        %vm6347 = vcmp.ne.f32.partialorder %v4932, 100.0
        %vm6348 = vmand %vm3812, %vm6332
        %vm6349 = vmand %vm3813, %vm6333
        %vm6350 = vmand %vm3814, %vm6334
        %vm6351 = vmand %vm3815, %vm6335
        %vm6352 = vmand %vm3816, %vm6336
        %vm6353 = vmand %vm3817, %vm6337
        %vm6354 = vmand %vm3818, %vm6338
        %vm6355 = vmand %vm3819, %vm6339
        %vm6356 = vmand %vm3820, %vm6340
        %vm6357 = vmand %vm3821, %vm6341
        %vm6358 = vmand %vm3822, %vm6342
        %vm6359 = vmand %vm3823, %vm6343
        %vm6360 = vmand %vm3824, %vm6344
        %vm6361 = vmand %vm3825, %vm6345
        %vm6362 = vmand %vm3826, %vm6346
        %vm6363 = vmand %vm3827, %vm6347
        %v6364 = vrsqrt.pop %v4917
        %v6365 = vmul.f32 %v4917, %v6364
        %vm6366 = vcmp.eq.f32.partialorder %v4917, inf
        %v6367 = vsel %vm6366, %v4917, %v6365
        %vm6368 = vcmp.eq.f32.partialorder %v4917, 0.0
        %v6369 = vand.u32 %v4917, 2147483648
        %v6370 = vsel %vm6368, %v6369, %v6367
        %v6371 = vrsqrt.pop %v4918
        %v6372 = vmul.f32 %v4918, %v6371
        %vm6373 = vcmp.eq.f32.partialorder %v4918, inf
        %v6374 = vsel %vm6373, %v4918, %v6372
        %vm6375 = vcmp.eq.f32.partialorder %v4918, 0.0
        %v6376 = vand.u32 %v4918, 2147483648
        %v6377 = vsel %vm6375, %v6376, %v6374
        %v6378 = vrsqrt.pop %v4919
        %v6379 = vmul.f32 %v4919, %v6378
        %vm6380 = vcmp.eq.f32.partialorder %v4919, inf
        %v6381 = vsel %vm6380, %v4919, %v6379
        %vm6382 = vcmp.eq.f32.partialorder %v4919, 0.0
        %v6383 = vand.u32 %v4919, 2147483648
        %v6384 = vsel %vm6382, %v6383, %v6381
        %v6385 = vrsqrt.pop %v4920
        %v6386 = vmul.f32 %v4920, %v6385
        %vm6387 = vcmp.eq.f32.partialorder %v4920, inf
        %v6388 = vsel %vm6387, %v4920, %v6386
        %vm6389 = vcmp.eq.f32.partialorder %v4920, 0.0
        %v6390 = vand.u32 %v4920, 2147483648
        %v6391 = vsel %vm6389, %v6390, %v6388
        %v6392 = vrsqrt.pop %v4921
        %v6393 = vmul.f32 %v4921, %v6392
        %vm6394 = vcmp.eq.f32.partialorder %v4921, inf
        %v6395 = vsel %vm6394, %v4921, %v6393
        %vm6396 = vcmp.eq.f32.partialorder %v4921, 0.0
        %v6397 = vand.u32 %v4921, 2147483648
        %v6398 = vsel %vm6396, %v6397, %v6395
        %v6399 = vrsqrt.pop %v4922
        %v6400 = vmul.f32 %v4922, %v6399
        %vm6401 = vcmp.eq.f32.partialorder %v4922, inf
        %v6402 = vsel %vm6401, %v4922, %v6400
        %vm6403 = vcmp.eq.f32.partialorder %v4922, 0.0
        %v6404 = vand.u32 %v4922, 2147483648
        %v6405 = vsel %vm6403, %v6404, %v6402
        %v6406 = vrsqrt.pop %v4923
        %v6407 = vmul.f32 %v4923, %v6406
        %vm6408 = vcmp.eq.f32.partialorder %v4923, inf
        %v6409 = vsel %vm6408, %v4923, %v6407
        %vm6410 = vcmp.eq.f32.partialorder %v4923, 0.0
        %v6411 = vand.u32 %v4923, 2147483648
        %v6412 = vsel %vm6410, %v6411, %v6409
        %v6413 = vrsqrt.pop %v4924
        %v6414 = vmul.f32 %v4924, %v6413
        %vm6415 = vcmp.eq.f32.partialorder %v4924, inf
        %v6416 = vsel %vm6415, %v4924, %v6414
        %vm6417 = vcmp.eq.f32.partialorder %v4924, 0.0
        %v6418 = vand.u32 %v4924, 2147483648
        %v6419 = vsel %vm6417, %v6418, %v6416
        %v6420 = vrsqrt.pop %v4925
        %v6421 = vmul.f32 %v4925, %v6420
        %vm6422 = vcmp.eq.f32.partialorder %v4925, inf
        %v6423 = vsel %vm6422, %v4925, %v6421
        %vm6424 = vcmp.eq.f32.partialorder %v4925, 0.0
        %v6425 = vand.u32 %v4925, 2147483648
        %v6426 = vsel %vm6424, %v6425, %v6423
        %v6427 = vrsqrt.pop %v4926
        %v6428 = vmul.f32 %v4926, %v6427
        %vm6429 = vcmp.eq.f32.partialorder %v4926, inf
        %v6430 = vsel %vm6429, %v4926, %v6428
        %vm6431 = vcmp.eq.f32.partialorder %v4926, 0.0
        %v6432 = vand.u32 %v4926, 2147483648
        %v6433 = vsel %vm6431, %v6432, %v6430
        %v6434 = vrsqrt.pop %v4927
        %v6435 = vmul.f32 %v4927, %v6434
        %vm6436 = vcmp.eq.f32.partialorder %v4927, inf
        %v6437 = vsel %vm6436, %v4927, %v6435
        %vm6438 = vcmp.eq.f32.partialorder %v4927, 0.0
        %v6439 = vand.u32 %v4927, 2147483648
        %v6440 = vsel %vm6438, %v6439, %v6437
        %v6441 = vrsqrt.pop %v4928
        %v6442 = vmul.f32 %v4928, %v6441
        %vm6443 = vcmp.eq.f32.partialorder %v4928, inf
        %v6444 = vsel %vm6443, %v4928, %v6442
        %vm6445 = vcmp.eq.f32.partialorder %v4928, 0.0
        %v6446 = vand.u32 %v4928, 2147483648
        %v6447 = vsel %vm6445, %v6446, %v6444
        %v6448 = vrsqrt.pop %v4929
        %v6449 = vmul.f32 %v4929, %v6448
        %vm6450 = vcmp.eq.f32.partialorder %v4929, inf
        %v6451 = vsel %vm6450, %v4929, %v6449
        %vm6452 = vcmp.eq.f32.partialorder %v4929, 0.0
        %v6453 = vand.u32 %v4929, 2147483648
        %v6454 = vsel %vm6452, %v6453, %v6451
        %v6455 = vrsqrt.pop %v4930
        %v6456 = vmul.f32 %v4930, %v6455
        %vm6457 = vcmp.eq.f32.partialorder %v4930, inf
        %v6458 = vsel %vm6457, %v4930, %v6456
        %vm6459 = vcmp.eq.f32.partialorder %v4930, 0.0
        %v6460 = vand.u32 %v4930, 2147483648
        %v6461 = vsel %vm6459, %v6460, %v6458
        %v6462 = vrsqrt.pop %v4931
        %v6463 = vmul.f32 %v4931, %v6462
        %vm6464 = vcmp.eq.f32.partialorder %v4931, inf
        %v6465 = vsel %vm6464, %v4931, %v6463
        %vm6466 = vcmp.eq.f32.partialorder %v4931, 0.0
        %v6467 = vand.u32 %v4931, 2147483648
        %v6468 = vsel %vm6466, %v6467, %v6465
        %v6469 = vrsqrt.pop %v4932
        %v6470 = vmul.f32 %v4932, %v6469
        %vm6471 = vcmp.eq.f32.partialorder %v4932, inf
        %v6472 = vsel %vm6471, %v4932, %v6470
        %vm6473 = vcmp.eq.f32.partialorder %v4932, 0.0
        %v6474 = vand.u32 %v4932, 2147483648
        %v6475 = vsel %vm6473, %v6474, %v6472
        %v6476 = vsel %vm6348, %v6370, 0.0
        %v6477 = vsel %vm6349, %v6377, 0.0
        %v6478 = vsel %vm6350, %v6384, 0.0
        %v6479 = vsel %vm6351, %v6391, 0.0
        %v6480 = vsel %vm6352, %v6398, 0.0
        %v6481 = vsel %vm6353, %v6405, 0.0
        %v6482 = vsel %vm6354, %v6412, 0.0
        %v6483 = vsel %vm6355, %v6419, 0.0
        %v6484 = vsel %vm6356, %v6426, 0.0
        %v6485 = vsel %vm6357, %v6433, 0.0
        %v6486 = vsel %vm6358, %v6440, 0.0
        %v6487 = vsel %vm6359, %v6447, 0.0
        %v6488 = vsel %vm6360, %v6454, 0.0
        %v6489 = vsel %vm6361, %v6461, 0.0
        %v6490 = vsel %vm6362, %v6468, 0.0
        %v6491 = vsel %vm6363, %v6475, 0.0
        %6508 = vrot.lane.b32.xlu0 %v6476, 125
        %v6509 = vpop.permute.xlu0 %6508
        %6510 = vrot.lane.b32.xlu0 %v6477, 125
        %v6511 = vpop.permute.xlu0 %6510
        %6512 = vrot.lane.b32.xlu0 %v6478, 125
        %v6513 = vpop.permute.xlu0 %6512
        %6514 = vrot.lane.b32.xlu0 %v6479, 125
        %v6515 = vpop.permute.xlu0 %6514
        %6516 = vrot.lane.b32.xlu0 %v6480, 125
        %v6517 = vpop.permute.xlu0 %6516
        %6518 = vrot.lane.b32.xlu0 %v6481, 125
        %v6519 = vpop.permute.xlu0 %6518
        %6520 = vrot.lane.b32.xlu0 %v6482, 125
        %v6521 = vpop.permute.xlu0 %6520
        %6522 = vrot.lane.b32.xlu0 %v6483, 125
        %v6523 = vpop.permute.xlu0 %6522
        %6524 = vrot.lane.b32.xlu0 %v6484, 125
        %v6525 = vpop.permute.xlu0 %6524
        %6526 = vrot.lane.b32.xlu0 %v6485, 125
        %v6527 = vpop.permute.xlu0 %6526
        %6528 = vrot.lane.b32.xlu0 %v6486, 125
        %v6529 = vpop.permute.xlu0 %6528
        %6530 = vrot.lane.b32.xlu0 %v6487, 125
        %v6531 = vpop.permute.xlu0 %6530
        %6532 = vrot.lane.b32.xlu0 %v6488, 125
        %v6533 = vpop.permute.xlu0 %6532
        %6534 = vrot.lane.b32.xlu0 %v6489, 125
        %v6535 = vpop.permute.xlu0 %6534
        %6536 = vrot.lane.b32.xlu0 %v6490, 125
        %v6537 = vpop.permute.xlu0 %6536
        %6538 = vrot.lane.b32.xlu0 %v6491, 125
        %v6539 = vpop.permute.xlu0 %6538
        %v6556 = vsel %vm2153, %v6509, 0.0
        %v6557 = vsel %vm2153, %v6511, 0.0
        %v6558 = vadd.f32 %v6556, %v6557
        %v6559 = vsel %vm2153, %v6513, 0.0
        %v6560 = vadd.f32 %v6558, %v6559
        %v6561 = vsel %vm2153, %v6515, 0.0
        %v6562 = vadd.f32 %v6560, %v6561
        %v6563 = vsel %vm2153, %v6517, 0.0
        %v6564 = vadd.f32 %v6562, %v6563
        %v6565 = vsel %vm2153, %v6519, 0.0
        %v6566 = vadd.f32 %v6564, %v6565
        %v6567 = vsel %vm2153, %v6521, 0.0
        %v6568 = vadd.f32 %v6566, %v6567
        %v6569 = vsel %vm2153, %v6523, 0.0
        %v6570 = vadd.f32 %v6568, %v6569
        %v6571 = vsel %vm2153, %v6525, 0.0
        %v6572 = vadd.f32 %v6570, %v6571
        %v6573 = vsel %vm2153, %v6527, 0.0
        %v6574 = vadd.f32 %v6572, %v6573
        %v6575 = vsel %vm2153, %v6529, 0.0
        %v6576 = vadd.f32 %v6574, %v6575
        %v6577 = vsel %vm2153, %v6531, 0.0
        %v6578 = vadd.f32 %v6576, %v6577
        %v6579 = vsel %vm2153, %v6533, 0.0
        %v6580 = vadd.f32 %v6578, %v6579
        %v6581 = vsel %vm2153, %v6535, 0.0
        %v6582 = vadd.f32 %v6580, %v6581
        %v6583 = vsel %vm2153, %v6537, 0.0
        %v6584 = vadd.f32 %v6582, %v6583
        %v6585 = vsel %vm2153, %v6539, 0.0
        %v6586 = vadd.f32 %v6584, %v6585
        %6587 = vadd.xlane.f32.xlu0 %v6586
        %v6588 = vpop.xlane.xlu0 %6587
        %v6589 = vrot.slane %v6588, 4
        %v6590 = vadd.f32 %v6588, %v6589
        %v6591 = vrot.slane %v6590, 2
        %v6592 = vadd.f32 %v6590, %v6591
        %v6593 = vrot.slane %v6592, 1
        %v6594 = vadd.f32 %v6592, %v6593
        %s6595 = vtos %v6594
        %v6596 = vstv %s6595
        %v6597 = vadd.f32 %v6596, %v5055
        %vm6598 = vcmp.ne.f32.partialorder %v5111, 100.0
        %vm6599 = vcmp.ne.f32.partialorder %v5112, 100.0
        %vm6600 = vcmp.ne.f32.partialorder %v5113, 100.0
        %vm6601 = vcmp.ne.f32.partialorder %v5114, 100.0
        %vm6602 = vcmp.ne.f32.partialorder %v5115, 100.0
        %vm6603 = vcmp.ne.f32.partialorder %v5116, 100.0
        %vm6604 = vcmp.ne.f32.partialorder %v5117, 100.0
        %vm6605 = vcmp.ne.f32.partialorder %v5118, 100.0
        %vm6606 = vcmp.ne.f32.partialorder %v5119, 100.0
        %vm6607 = vcmp.ne.f32.partialorder %v5120, 100.0
        %vm6608 = vcmp.ne.f32.partialorder %v5121, 100.0
        %vm6609 = vcmp.ne.f32.partialorder %v5122, 100.0
        %vm6610 = vcmp.ne.f32.partialorder %v5123, 100.0
        %vm6611 = vcmp.ne.f32.partialorder %v5124, 100.0
        %vm6612 = vcmp.ne.f32.partialorder %v5125, 100.0
        %vm6613 = vcmp.ne.f32.partialorder %v5126, 100.0
        %vm6614 = vmand %vm3812, %vm6598
        %vm6615 = vmand %vm3813, %vm6599
        %vm6616 = vmand %vm3814, %vm6600
        %vm6617 = vmand %vm3815, %vm6601
        %vm6618 = vmand %vm3816, %vm6602
        %vm6619 = vmand %vm3817, %vm6603
        %vm6620 = vmand %vm3818, %vm6604
        %vm6621 = vmand %vm3819, %vm6605
        %vm6622 = vmand %vm3820, %vm6606
        %vm6623 = vmand %vm3821, %vm6607
        %vm6624 = vmand %vm3822, %vm6608
        %vm6625 = vmand %vm3823, %vm6609
        %vm6626 = vmand %vm3824, %vm6610
        %vm6627 = vmand %vm3825, %vm6611
        %vm6628 = vmand %vm3826, %vm6612
        %vm6629 = vmand %vm3827, %vm6613
        %v6630 = vrsqrt.pop %v5111
        %v6631 = vmul.f32 %v5111, %v6630
        %vm6632 = vcmp.eq.f32.partialorder %v5111, inf
        %v6633 = vsel %vm6632, %v5111, %v6631
        %vm6634 = vcmp.eq.f32.partialorder %v5111, 0.0
        %v6635 = vand.u32 %v5111, 2147483648
        %v6636 = vsel %vm6634, %v6635, %v6633
        %v6637 = vrsqrt.pop %v5112
        %v6638 = vmul.f32 %v5112, %v6637
        %vm6639 = vcmp.eq.f32.partialorder %v5112, inf
        %v6640 = vsel %vm6639, %v5112, %v6638
        %vm6641 = vcmp.eq.f32.partialorder %v5112, 0.0
        %v6642 = vand.u32 %v5112, 2147483648
        %v6643 = vsel %vm6641, %v6642, %v6640
        %v6644 = vrsqrt.pop %v5113
        %v6645 = vmul.f32 %v5113, %v6644
        %vm6646 = vcmp.eq.f32.partialorder %v5113, inf
        %v6647 = vsel %vm6646, %v5113, %v6645
        %vm6648 = vcmp.eq.f32.partialorder %v5113, 0.0
        %v6649 = vand.u32 %v5113, 2147483648
        %v6650 = vsel %vm6648, %v6649, %v6647
        %v6651 = vrsqrt.pop %v5114
        %v6652 = vmul.f32 %v5114, %v6651
        %vm6653 = vcmp.eq.f32.partialorder %v5114, inf
        %v6654 = vsel %vm6653, %v5114, %v6652
        %vm6655 = vcmp.eq.f32.partialorder %v5114, 0.0
        %v6656 = vand.u32 %v5114, 2147483648
        %v6657 = vsel %vm6655, %v6656, %v6654
        %v6658 = vrsqrt.pop %v5115
        %v6659 = vmul.f32 %v5115, %v6658
        %vm6660 = vcmp.eq.f32.partialorder %v5115, inf
        %v6661 = vsel %vm6660, %v5115, %v6659
        %vm6662 = vcmp.eq.f32.partialorder %v5115, 0.0
        %v6663 = vand.u32 %v5115, 2147483648
        %v6664 = vsel %vm6662, %v6663, %v6661
        %v6665 = vrsqrt.pop %v5116
        %v6666 = vmul.f32 %v5116, %v6665
        %vm6667 = vcmp.eq.f32.partialorder %v5116, inf
        %v6668 = vsel %vm6667, %v5116, %v6666
        %vm6669 = vcmp.eq.f32.partialorder %v5116, 0.0
        %v6670 = vand.u32 %v5116, 2147483648
        %v6671 = vsel %vm6669, %v6670, %v6668
        %v6672 = vrsqrt.pop %v5117
        %v6673 = vmul.f32 %v5117, %v6672
        %vm6674 = vcmp.eq.f32.partialorder %v5117, inf
        %v6675 = vsel %vm6674, %v5117, %v6673
        %vm6676 = vcmp.eq.f32.partialorder %v5117, 0.0
        %v6677 = vand.u32 %v5117, 2147483648
        %v6678 = vsel %vm6676, %v6677, %v6675
        %v6679 = vrsqrt.pop %v5118
        %v6680 = vmul.f32 %v5118, %v6679
        %vm6681 = vcmp.eq.f32.partialorder %v5118, inf
        %v6682 = vsel %vm6681, %v5118, %v6680
        %vm6683 = vcmp.eq.f32.partialorder %v5118, 0.0
        %v6684 = vand.u32 %v5118, 2147483648
        %v6685 = vsel %vm6683, %v6684, %v6682
        %v6686 = vrsqrt.pop %v5119
        %v6687 = vmul.f32 %v5119, %v6686
        %vm6688 = vcmp.eq.f32.partialorder %v5119, inf
        %v6689 = vsel %vm6688, %v5119, %v6687
        %vm6690 = vcmp.eq.f32.partialorder %v5119, 0.0
        %v6691 = vand.u32 %v5119, 2147483648
        %v6692 = vsel %vm6690, %v6691, %v6689
        %v6693 = vrsqrt.pop %v5120
        %v6694 = vmul.f32 %v5120, %v6693
        %vm6695 = vcmp.eq.f32.partialorder %v5120, inf
        %v6696 = vsel %vm6695, %v5120, %v6694
        %vm6697 = vcmp.eq.f32.partialorder %v5120, 0.0
        %v6698 = vand.u32 %v5120, 2147483648
        %v6699 = vsel %vm6697, %v6698, %v6696
        %v6700 = vrsqrt.pop %v5121
        %v6701 = vmul.f32 %v5121, %v6700
        %vm6702 = vcmp.eq.f32.partialorder %v5121, inf
        %v6703 = vsel %vm6702, %v5121, %v6701
        %vm6704 = vcmp.eq.f32.partialorder %v5121, 0.0
        %v6705 = vand.u32 %v5121, 2147483648
        %v6706 = vsel %vm6704, %v6705, %v6703
        %v6707 = vrsqrt.pop %v5122
        %v6708 = vmul.f32 %v5122, %v6707
        %vm6709 = vcmp.eq.f32.partialorder %v5122, inf
        %v6710 = vsel %vm6709, %v5122, %v6708
        %vm6711 = vcmp.eq.f32.partialorder %v5122, 0.0
        %v6712 = vand.u32 %v5122, 2147483648
        %v6713 = vsel %vm6711, %v6712, %v6710
        %v6714 = vrsqrt.pop %v5123
        %v6715 = vmul.f32 %v5123, %v6714
        %vm6716 = vcmp.eq.f32.partialorder %v5123, inf
        %v6717 = vsel %vm6716, %v5123, %v6715
        %vm6718 = vcmp.eq.f32.partialorder %v5123, 0.0
        %v6719 = vand.u32 %v5123, 2147483648
        %v6720 = vsel %vm6718, %v6719, %v6717
        %v6721 = vrsqrt.pop %v5124
        %v6722 = vmul.f32 %v5124, %v6721
        %vm6723 = vcmp.eq.f32.partialorder %v5124, inf
        %v6724 = vsel %vm6723, %v5124, %v6722
        %vm6725 = vcmp.eq.f32.partialorder %v5124, 0.0
        %v6726 = vand.u32 %v5124, 2147483648
        %v6727 = vsel %vm6725, %v6726, %v6724
        %v6728 = vrsqrt.pop %v5125
        %v6729 = vmul.f32 %v5125, %v6728
        %vm6730 = vcmp.eq.f32.partialorder %v5125, inf
        %v6731 = vsel %vm6730, %v5125, %v6729
        %vm6732 = vcmp.eq.f32.partialorder %v5125, 0.0
        %v6733 = vand.u32 %v5125, 2147483648
        %v6734 = vsel %vm6732, %v6733, %v6731
        %v6735 = vrsqrt.pop %v5126
        %v6736 = vmul.f32 %v5126, %v6735
        %vm6737 = vcmp.eq.f32.partialorder %v5126, inf
        %v6738 = vsel %vm6737, %v5126, %v6736
        %vm6739 = vcmp.eq.f32.partialorder %v5126, 0.0
        %v6740 = vand.u32 %v5126, 2147483648
        %v6741 = vsel %vm6739, %v6740, %v6738
        %v6742 = vsel %vm6614, %v6636, 0.0
        %v6743 = vsel %vm6615, %v6643, 0.0
        %v6744 = vsel %vm6616, %v6650, 0.0
        %v6745 = vsel %vm6617, %v6657, 0.0
        %v6746 = vsel %vm6618, %v6664, 0.0
        %v6747 = vsel %vm6619, %v6671, 0.0
        %v6748 = vsel %vm6620, %v6678, 0.0
        %v6749 = vsel %vm6621, %v6685, 0.0
        %v6750 = vsel %vm6622, %v6692, 0.0
        %v6751 = vsel %vm6623, %v6699, 0.0
        %v6752 = vsel %vm6624, %v6706, 0.0
        %v6753 = vsel %vm6625, %v6713, 0.0
        %v6754 = vsel %vm6626, %v6720, 0.0
        %v6755 = vsel %vm6627, %v6727, 0.0
        %v6756 = vsel %vm6628, %v6734, 0.0
        %v6757 = vsel %vm6629, %v6741, 0.0
        %6774 = vrot.lane.b32.xlu0 %v6742, 124
        %v6775 = vpop.permute.xlu0 %6774
        %6776 = vrot.lane.b32.xlu0 %v6743, 124
        %v6777 = vpop.permute.xlu0 %6776
        %6778 = vrot.lane.b32.xlu0 %v6744, 124
        %v6779 = vpop.permute.xlu0 %6778
        %6780 = vrot.lane.b32.xlu0 %v6745, 124
        %v6781 = vpop.permute.xlu0 %6780
        %6782 = vrot.lane.b32.xlu0 %v6746, 124
        %v6783 = vpop.permute.xlu0 %6782
        %6784 = vrot.lane.b32.xlu0 %v6747, 124
        %v6785 = vpop.permute.xlu0 %6784
        %6786 = vrot.lane.b32.xlu0 %v6748, 124
        %v6787 = vpop.permute.xlu0 %6786
        %6788 = vrot.lane.b32.xlu0 %v6749, 124
        %v6789 = vpop.permute.xlu0 %6788
        %6790 = vrot.lane.b32.xlu0 %v6750, 124
        %v6791 = vpop.permute.xlu0 %6790
        %6792 = vrot.lane.b32.xlu0 %v6751, 124
        %v6793 = vpop.permute.xlu0 %6792
        %6794 = vrot.lane.b32.xlu0 %v6752, 124
        %v6795 = vpop.permute.xlu0 %6794
        %6796 = vrot.lane.b32.xlu0 %v6753, 124
        %v6797 = vpop.permute.xlu0 %6796
        %6798 = vrot.lane.b32.xlu0 %v6754, 124
        %v6799 = vpop.permute.xlu0 %6798
        %6800 = vrot.lane.b32.xlu0 %v6755, 124
        %v6801 = vpop.permute.xlu0 %6800
        %6802 = vrot.lane.b32.xlu0 %v6756, 124
        %v6803 = vpop.permute.xlu0 %6802
        %6804 = vrot.lane.b32.xlu0 %v6757, 124
        %v6805 = vpop.permute.xlu0 %6804
        %v6822 = vsel %vm2153, %v6775, 0.0
        %v6823 = vsel %vm2153, %v6777, 0.0
        %v6824 = vadd.f32 %v6822, %v6823
        %v6825 = vsel %vm2153, %v6779, 0.0
        %v6826 = vadd.f32 %v6824, %v6825
        %v6827 = vsel %vm2153, %v6781, 0.0
        %v6828 = vadd.f32 %v6826, %v6827
        %v6829 = vsel %vm2153, %v6783, 0.0
        %v6830 = vadd.f32 %v6828, %v6829
        %v6831 = vsel %vm2153, %v6785, 0.0
        %v6832 = vadd.f32 %v6830, %v6831
        %v6833 = vsel %vm2153, %v6787, 0.0
        %v6834 = vadd.f32 %v6832, %v6833
        %v6835 = vsel %vm2153, %v6789, 0.0
        %v6836 = vadd.f32 %v6834, %v6835
        %v6837 = vsel %vm2153, %v6791, 0.0
        %v6838 = vadd.f32 %v6836, %v6837
        %v6839 = vsel %vm2153, %v6793, 0.0
        %v6840 = vadd.f32 %v6838, %v6839
        %v6841 = vsel %vm2153, %v6795, 0.0
        %v6842 = vadd.f32 %v6840, %v6841
        %v6843 = vsel %vm2153, %v6797, 0.0
        %v6844 = vadd.f32 %v6842, %v6843
        %v6845 = vsel %vm2153, %v6799, 0.0
        %v6846 = vadd.f32 %v6844, %v6845
        %v6847 = vsel %vm2153, %v6801, 0.0
        %v6848 = vadd.f32 %v6846, %v6847
        %v6849 = vsel %vm2153, %v6803, 0.0
        %v6850 = vadd.f32 %v6848, %v6849
        %v6851 = vsel %vm2153, %v6805, 0.0
        %v6852 = vadd.f32 %v6850, %v6851
        %6853 = vadd.xlane.f32.xlu0 %v6852
        %v6854 = vpop.xlane.xlu0 %6853
        %v6855 = vrot.slane %v6854, 4
        %v6856 = vadd.f32 %v6854, %v6855
        %v6857 = vrot.slane %v6856, 2
        %v6858 = vadd.f32 %v6856, %v6857
        %v6859 = vrot.slane %v6858, 1
        %v6860 = vadd.f32 %v6858, %v6859
        %s6861 = vtos %v6860
        %v6862 = vstv %s6861
        %v6863 = vadd.f32 %v6862, %v5249
        %vm6864 = vcmp.ne.f32.partialorder %v5305, 100.0
        %vm6865 = vcmp.ne.f32.partialorder %v5306, 100.0
        %vm6866 = vcmp.ne.f32.partialorder %v5307, 100.0
        %vm6867 = vcmp.ne.f32.partialorder %v5308, 100.0
        %vm6868 = vcmp.ne.f32.partialorder %v5309, 100.0
        %vm6869 = vcmp.ne.f32.partialorder %v5310, 100.0
        %vm6870 = vcmp.ne.f32.partialorder %v5311, 100.0
        %vm6871 = vcmp.ne.f32.partialorder %v5312, 100.0
        %vm6872 = vcmp.ne.f32.partialorder %v5313, 100.0
        %vm6873 = vcmp.ne.f32.partialorder %v5314, 100.0
        %vm6874 = vcmp.ne.f32.partialorder %v5315, 100.0
        %vm6875 = vcmp.ne.f32.partialorder %v5316, 100.0
        %vm6876 = vcmp.ne.f32.partialorder %v5317, 100.0
        %vm6877 = vcmp.ne.f32.partialorder %v5318, 100.0
        %vm6878 = vcmp.ne.f32.partialorder %v5319, 100.0
        %vm6879 = vcmp.ne.f32.partialorder %v5320, 100.0
        %vm6880 = vmand %vm3812, %vm6864
        %vm6881 = vmand %vm3813, %vm6865
        %vm6882 = vmand %vm3814, %vm6866
        %vm6883 = vmand %vm3815, %vm6867
        %vm6884 = vmand %vm3816, %vm6868
        %vm6885 = vmand %vm3817, %vm6869
        %vm6886 = vmand %vm3818, %vm6870
        %vm6887 = vmand %vm3819, %vm6871
        %vm6888 = vmand %vm3820, %vm6872
        %vm6889 = vmand %vm3821, %vm6873
        %vm6890 = vmand %vm3822, %vm6874
        %vm6891 = vmand %vm3823, %vm6875
        %vm6892 = vmand %vm3824, %vm6876
        %vm6893 = vmand %vm3825, %vm6877
        %vm6894 = vmand %vm3826, %vm6878
        %vm6895 = vmand %vm3827, %vm6879
        %v6896 = vrsqrt.pop %v5305
        %v6897 = vmul.f32 %v5305, %v6896
        %vm6898 = vcmp.eq.f32.partialorder %v5305, inf
        %v6899 = vsel %vm6898, %v5305, %v6897
        %vm6900 = vcmp.eq.f32.partialorder %v5305, 0.0
        %v6901 = vand.u32 %v5305, 2147483648
        %v6902 = vsel %vm6900, %v6901, %v6899
        %v6903 = vrsqrt.pop %v5306
        %v6904 = vmul.f32 %v5306, %v6903
        %vm6905 = vcmp.eq.f32.partialorder %v5306, inf
        %v6906 = vsel %vm6905, %v5306, %v6904
        %vm6907 = vcmp.eq.f32.partialorder %v5306, 0.0
        %v6908 = vand.u32 %v5306, 2147483648
        %v6909 = vsel %vm6907, %v6908, %v6906
        %v6910 = vrsqrt.pop %v5307
        %v6911 = vmul.f32 %v5307, %v6910
        %vm6912 = vcmp.eq.f32.partialorder %v5307, inf
        %v6913 = vsel %vm6912, %v5307, %v6911
        %vm6914 = vcmp.eq.f32.partialorder %v5307, 0.0
        %v6915 = vand.u32 %v5307, 2147483648
        %v6916 = vsel %vm6914, %v6915, %v6913
        %v6917 = vrsqrt.pop %v5308
        %v6918 = vmul.f32 %v5308, %v6917
        %vm6919 = vcmp.eq.f32.partialorder %v5308, inf
        %v6920 = vsel %vm6919, %v5308, %v6918
        %vm6921 = vcmp.eq.f32.partialorder %v5308, 0.0
        %v6922 = vand.u32 %v5308, 2147483648
        %v6923 = vsel %vm6921, %v6922, %v6920
        %v6924 = vrsqrt.pop %v5309
        %v6925 = vmul.f32 %v5309, %v6924
        %vm6926 = vcmp.eq.f32.partialorder %v5309, inf
        %v6927 = vsel %vm6926, %v5309, %v6925
        %vm6928 = vcmp.eq.f32.partialorder %v5309, 0.0
        %v6929 = vand.u32 %v5309, 2147483648
        %v6930 = vsel %vm6928, %v6929, %v6927
        %v6931 = vrsqrt.pop %v5310
        %v6932 = vmul.f32 %v5310, %v6931
        %vm6933 = vcmp.eq.f32.partialorder %v5310, inf
        %v6934 = vsel %vm6933, %v5310, %v6932
        %vm6935 = vcmp.eq.f32.partialorder %v5310, 0.0
        %v6936 = vand.u32 %v5310, 2147483648
        %v6937 = vsel %vm6935, %v6936, %v6934
        %v6938 = vrsqrt.pop %v5311
        %v6939 = vmul.f32 %v5311, %v6938
        %vm6940 = vcmp.eq.f32.partialorder %v5311, inf
        %v6941 = vsel %vm6940, %v5311, %v6939
        %vm6942 = vcmp.eq.f32.partialorder %v5311, 0.0
        %v6943 = vand.u32 %v5311, 2147483648
        %v6944 = vsel %vm6942, %v6943, %v6941
        %v6945 = vrsqrt.pop %v5312
        %v6946 = vmul.f32 %v5312, %v6945
        %vm6947 = vcmp.eq.f32.partialorder %v5312, inf
        %v6948 = vsel %vm6947, %v5312, %v6946
        %vm6949 = vcmp.eq.f32.partialorder %v5312, 0.0
        %v6950 = vand.u32 %v5312, 2147483648
        %v6951 = vsel %vm6949, %v6950, %v6948
        %v6952 = vrsqrt.pop %v5313
        %v6953 = vmul.f32 %v5313, %v6952
        %vm6954 = vcmp.eq.f32.partialorder %v5313, inf
        %v6955 = vsel %vm6954, %v5313, %v6953
        %vm6956 = vcmp.eq.f32.partialorder %v5313, 0.0
        %v6957 = vand.u32 %v5313, 2147483648
        %v6958 = vsel %vm6956, %v6957, %v6955
        %v6959 = vrsqrt.pop %v5314
        %v6960 = vmul.f32 %v5314, %v6959
        %vm6961 = vcmp.eq.f32.partialorder %v5314, inf
        %v6962 = vsel %vm6961, %v5314, %v6960
        %vm6963 = vcmp.eq.f32.partialorder %v5314, 0.0
        %v6964 = vand.u32 %v5314, 2147483648
        %v6965 = vsel %vm6963, %v6964, %v6962
        %v6966 = vrsqrt.pop %v5315
        %v6967 = vmul.f32 %v5315, %v6966
        %vm6968 = vcmp.eq.f32.partialorder %v5315, inf
        %v6969 = vsel %vm6968, %v5315, %v6967
        %vm6970 = vcmp.eq.f32.partialorder %v5315, 0.0
        %v6971 = vand.u32 %v5315, 2147483648
        %v6972 = vsel %vm6970, %v6971, %v6969
        %v6973 = vrsqrt.pop %v5316
        %v6974 = vmul.f32 %v5316, %v6973
        %vm6975 = vcmp.eq.f32.partialorder %v5316, inf
        %v6976 = vsel %vm6975, %v5316, %v6974
        %vm6977 = vcmp.eq.f32.partialorder %v5316, 0.0
        %v6978 = vand.u32 %v5316, 2147483648
        %v6979 = vsel %vm6977, %v6978, %v6976
        %v6980 = vrsqrt.pop %v5317
        %v6981 = vmul.f32 %v5317, %v6980
        %vm6982 = vcmp.eq.f32.partialorder %v5317, inf
        %v6983 = vsel %vm6982, %v5317, %v6981
        %vm6984 = vcmp.eq.f32.partialorder %v5317, 0.0
        %v6985 = vand.u32 %v5317, 2147483648
        %v6986 = vsel %vm6984, %v6985, %v6983
        %v6987 = vrsqrt.pop %v5318
        %v6988 = vmul.f32 %v5318, %v6987
        %vm6989 = vcmp.eq.f32.partialorder %v5318, inf
        %v6990 = vsel %vm6989, %v5318, %v6988
        %vm6991 = vcmp.eq.f32.partialorder %v5318, 0.0
        %v6992 = vand.u32 %v5318, 2147483648
        %v6993 = vsel %vm6991, %v6992, %v6990
        %v6994 = vrsqrt.pop %v5319
        %v6995 = vmul.f32 %v5319, %v6994
        %vm6996 = vcmp.eq.f32.partialorder %v5319, inf
        %v6997 = vsel %vm6996, %v5319, %v6995
        %vm6998 = vcmp.eq.f32.partialorder %v5319, 0.0
        %v6999 = vand.u32 %v5319, 2147483648
        %v7000 = vsel %vm6998, %v6999, %v6997
        %v7001 = vrsqrt.pop %v5320
        %v7002 = vmul.f32 %v5320, %v7001
        %vm7003 = vcmp.eq.f32.partialorder %v5320, inf
        %v7004 = vsel %vm7003, %v5320, %v7002
        %vm7005 = vcmp.eq.f32.partialorder %v5320, 0.0
        %v7006 = vand.u32 %v5320, 2147483648
        %v7007 = vsel %vm7005, %v7006, %v7004
        %v7008 = vsel %vm6880, %v6902, 0.0
        %v7009 = vsel %vm6881, %v6909, 0.0
        %v7010 = vsel %vm6882, %v6916, 0.0
        %v7011 = vsel %vm6883, %v6923, 0.0
        %v7012 = vsel %vm6884, %v6930, 0.0
        %v7013 = vsel %vm6885, %v6937, 0.0
        %v7014 = vsel %vm6886, %v6944, 0.0
        %v7015 = vsel %vm6887, %v6951, 0.0
        %v7016 = vsel %vm6888, %v6958, 0.0
        %v7017 = vsel %vm6889, %v6965, 0.0
        %v7018 = vsel %vm6890, %v6972, 0.0
        %v7019 = vsel %vm6891, %v6979, 0.0
        %v7020 = vsel %vm6892, %v6986, 0.0
        %v7021 = vsel %vm6893, %v6993, 0.0
        %v7022 = vsel %vm6894, %v7000, 0.0
        %v7023 = vsel %vm6895, %v7007, 0.0
        %7040 = vrot.lane.b32.xlu0 %v7008, 123
        %v7041 = vpop.permute.xlu0 %7040
        %7042 = vrot.lane.b32.xlu0 %v7009, 123
        %v7043 = vpop.permute.xlu0 %7042
        %7044 = vrot.lane.b32.xlu0 %v7010, 123
        %v7045 = vpop.permute.xlu0 %7044
        %7046 = vrot.lane.b32.xlu0 %v7011, 123
        %v7047 = vpop.permute.xlu0 %7046
        %7048 = vrot.lane.b32.xlu0 %v7012, 123
        %v7049 = vpop.permute.xlu0 %7048
        %7050 = vrot.lane.b32.xlu0 %v7013, 123
        %v7051 = vpop.permute.xlu0 %7050
        %7052 = vrot.lane.b32.xlu0 %v7014, 123
        %v7053 = vpop.permute.xlu0 %7052
        %7054 = vrot.lane.b32.xlu0 %v7015, 123
        %v7055 = vpop.permute.xlu0 %7054
        %7056 = vrot.lane.b32.xlu0 %v7016, 123
        %v7057 = vpop.permute.xlu0 %7056
        %7058 = vrot.lane.b32.xlu0 %v7017, 123
        %v7059 = vpop.permute.xlu0 %7058
        %7060 = vrot.lane.b32.xlu0 %v7018, 123
        %v7061 = vpop.permute.xlu0 %7060
        %7062 = vrot.lane.b32.xlu0 %v7019, 123
        %v7063 = vpop.permute.xlu0 %7062
        %7064 = vrot.lane.b32.xlu0 %v7020, 123
        %v7065 = vpop.permute.xlu0 %7064
        %7066 = vrot.lane.b32.xlu0 %v7021, 123
        %v7067 = vpop.permute.xlu0 %7066
        %7068 = vrot.lane.b32.xlu0 %v7022, 123
        %v7069 = vpop.permute.xlu0 %7068
        %7070 = vrot.lane.b32.xlu0 %v7023, 123
        %v7071 = vpop.permute.xlu0 %7070
        %v7088 = vsel %vm2153, %v7041, 0.0
        %v7089 = vsel %vm2153, %v7043, 0.0
        %v7090 = vadd.f32 %v7088, %v7089
        %v7091 = vsel %vm2153, %v7045, 0.0
        %v7092 = vadd.f32 %v7090, %v7091
        %v7093 = vsel %vm2153, %v7047, 0.0
        %v7094 = vadd.f32 %v7092, %v7093
        %v7095 = vsel %vm2153, %v7049, 0.0
        %v7096 = vadd.f32 %v7094, %v7095
        %v7097 = vsel %vm2153, %v7051, 0.0
        %v7098 = vadd.f32 %v7096, %v7097
        %v7099 = vsel %vm2153, %v7053, 0.0
        %v7100 = vadd.f32 %v7098, %v7099
        %v7101 = vsel %vm2153, %v7055, 0.0
        %v7102 = vadd.f32 %v7100, %v7101
        %v7103 = vsel %vm2153, %v7057, 0.0
        %v7104 = vadd.f32 %v7102, %v7103
        %v7105 = vsel %vm2153, %v7059, 0.0
        %v7106 = vadd.f32 %v7104, %v7105
        %v7107 = vsel %vm2153, %v7061, 0.0
        %v7108 = vadd.f32 %v7106, %v7107
        %v7109 = vsel %vm2153, %v7063, 0.0
        %v7110 = vadd.f32 %v7108, %v7109
        %v7111 = vsel %vm2153, %v7065, 0.0
        %v7112 = vadd.f32 %v7110, %v7111
        %v7113 = vsel %vm2153, %v7067, 0.0
        %v7114 = vadd.f32 %v7112, %v7113
        %v7115 = vsel %vm2153, %v7069, 0.0
        %v7116 = vadd.f32 %v7114, %v7115
        %v7117 = vsel %vm2153, %v7071, 0.0
        %v7118 = vadd.f32 %v7116, %v7117
        %7119 = vadd.xlane.f32.xlu0 %v7118
        %v7120 = vpop.xlane.xlu0 %7119
        %v7121 = vrot.slane %v7120, 4
        %v7122 = vadd.f32 %v7120, %v7121
        %v7123 = vrot.slane %v7122, 2
        %v7124 = vadd.f32 %v7122, %v7123
        %v7125 = vrot.slane %v7124, 1
        %v7126 = vadd.f32 %v7124, %v7125
        %s7127 = vtos %v7126
        %v7128 = vstv %s7127
        %v7129 = vadd.f32 %v7128, %v5443
        %s7130 = scalar_lea.vmem %s362, 24
        %v7131 = vld [vmem:[%s7130] sm:$0xff]
        %v7132 = vld [vmem:[%s7130 + $0x8] sm:$0xff]
        %v7133 = vld [vmem:[%s7130 + $0x10] sm:$0x1f]
        %s7134 = scalar_lea.vmem %s369, 24
        %v7135 = vld [vmem:[%s7134] sm:$0xff]
        %v7136 = vld [vmem:[%s7134 + $0x8] sm:$0xff]
        %v7137 = vld [vmem:[%s7134 + $0x10] sm:$0x1f]
        %v7138 = vsub.f32 %v7131, %v7135
        %v7139 = vsub.f32 %v7132, %v7136
        %v7140 = vsub.f32 %v7133, %v7137
        %v7141 = vmul.f32 %v7138, %v7138
        %v7142 = vmul.f32 %v7139, %v7139
        %v7143 = vmul.f32 %v7140, %v7140
        %v7144 = vsel %vm3740, %v7141, 0.0
        %v7145 = vsel %vm3740, %v7142, 0.0
        %v7146 = vadd.f32 %v7144, %v7145
        %v7147 = vsel %vm3744, %v7143, 0.0
        %v7148 = vadd.f32 %v7146, %v7147
        %7149 = vadd.xlane.f32.xlu0 %v7148
        %v7150 = vpop.xlane.xlu0 %7149
        %v7151 = vrot.slane %v7150, 4
        %v7152 = vadd.f32 %v7150, %v7151
        %v7153 = vrot.slane %v7152, 2
        %v7154 = vadd.f32 %v7152, %v7153
        %v7155 = vrot.slane %v7154, 1
        %v7156 = vadd.f32 %v7154, %v7155
        %s7157 = vtos %v7156
        %v7158 = vsel %vm3756, %v5597, 0.0
        %v7159 = vstv %s7157
        %v7160 = vsel %vm3758, %v7159, %v7158
        %v7161 = vsel %vm3761, %v5799, %v7160
        %v7162 = vsel %vm3763, %v6065, %v7161
        %v7163 = vsel %vm3765, %v6331, %v7162
        %v7164 = vsel %vm3767, %v6597, %v7163
        %v7165 = vsel %vm3769, %v6863, %v7164
        %v7166 = vsel %vm3771, %v7129, %v7165
        %s7167 = scalar_lea.vmem %s331, 1 [#allocation2]
        %7168 = vst [vmem:[%s7167] sm:$0x1] %v7166
        %s7169 = sand.u32 %s184, 1
        %s7170 = scalar_lea.sflag [#allocation3], %s7169
        %s7171 = sand.u32 %s184, 1
        %s7172 = smul.addr %s7171, 2
        %s7173 = scalar_lea.vmem [#allocation2], %s7172
        // Predicated region
        $region45: #{tpu_custom_call.1} parent=43 // pred_check
          %p7174 = pneg %p194
        $region46: #{tpu_custom_call.1} parent=43 // pred_check_branch
          %7176 = sbr.rel (%p7174) target = $region48
        $region47: #{tpu_custom_call.1} parent=43 // pred_region
          %s7177 = smul.u32 2, %s20
          %s7179 = ssub.s32 32, 32
          %7180 = vsyncadd %s7170, %s7179
          %s7181 = smul.addr %s7177, 16
          %s7182 = scalar_lea.hbm %s6, %s7181
          %s7183 = sshll.u32 %s7173, 4
          %s7184 = int_to_ptr.vmem [resolvable:$true] %s7183
          %7189 = dma.vmem_to_hbm [thread:$0]  %s7184, 32, %s7182, %s7170, 16, 16, 1
        $region48: #{tpu_custom_call.1} parent=43 // pred_fallthru
          _
      $region44: #{tpu_custom_call.1} parent=5 // pred_fallthru
        _
      %p7190 = scmp.le.s32.totalorder 2, %s15
      // Predicated region
      $region49: #{tpu_custom_call.1} parent=5 // pred_check
        %p7191 = pneg %p7190
      $region50: #{tpu_custom_call.1} parent=5 // pred_check_branch
        %7193 = sbr.rel (%p7191) target = $region52
      $region51: #{tpu_custom_call.1} parent=5 // pred_region
        %s7194 = ssub.s32 %s15, 2
        // Predicated region
        $region53: #{tpu_custom_call.1} parent=51 // pred_check
          %p7195 = pneg %p200
        $region54: #{tpu_custom_call.1} parent=51 // pred_check_branch
          %7197 = sbr.rel (%p7195) target = $region56
        $region55: #{tpu_custom_call.1} parent=51 // pred_region
          %s7198 = sand.u32 %s185, 1
          %s7199 = scalar_lea.sflag [#allocation3], %s7198
          %s7200 = sand.u32 %s185, 1
          %s7201 = smul.addr %s7200, 2
          %s7202 = scalar_lea.vmem [#allocation2], %s7201
          %7203 = dma.done %s7199, 32
        $region56: #{tpu_custom_call.1} parent=51 // pred_fallthru
          _
      $region52: #{tpu_custom_call.1} parent=5 // pred_fallthru
        _
    $region6: #{tpu_custom_call.1} parent=1 // loop_footer
      %s19 = sadd.s32 1, %s15
    $region7: #{tpu_custom_call.1} parent=1 // loop_footer_branch
      %14 = sbr.rel target = $region3
    $region8: #{tpu_custom_call.1} parent=1 // loop_exit
      _
    %7204 = vsyncpa [#allocation3], 1
    %s7205 = scalar_lea.sflag [#allocation3], 1
    %7206 = vsyncpa %s7205, 1

</llo_original>
